<compile_context>
chip_gen: v6e
topology: v6e:2x2x1
jax: 0.10.0
libtpu: 0.0.40
codegen_flags: <defaults>
</compile_context>

<pallas_src>
import functools

import jax
import jax.numpy as jnp
from jax.experimental import pallas as pl
from jax.experimental.pallas import tpu as pltpu

LRELU_SLOPE = 0.1
BN_EPS = 1e-5
_TAIL_ROWS = 8   # extra scratch rows so all 9 shifted row-slices stay in-bounds


def _leaky_relu(x):
    return jnp.where(x > 0, x, LRELU_SLOPE * x)


def _round_up(x, m):
    return (x + m - 1) // m * m


# ---------------------------------------------------------------------------
# Fused kernel.  One grid step = one (row-tile of one image) slab, flattened
# to 2D with the padded width wp = round_up(W+2, 8) as the row stride:
#   x_ref : (p_rows, C)          bf16  replicate-padded input slab, p_rows=(th+2)*wp
#   w1_ref: (C, Cmid)            bf16  1x1 weight (BN scale folded)
#   b1_ref: (1, Cmid)            f32
#   w2_ref: (9, Cmid, C)         bf16  3x3 weights, tap k = 3*dy + dx (BN folded)
#   b2_ref: (1, C)               f32
#   o_ref : (q_rows, C)          bf16  output on the padded-width grid, q_rows=th*wp
#                                      (columns >= W of each row are garbage,
#                                       dropped by the wrapper)
#   h_ref : (p_rows+8, Cmid)     bf16  VMEM scratch: 1x1-conv output
#   acc_ref:(q_rows, C)          f32   VMEM scratch: 3x3 accumulator
# ---------------------------------------------------------------------------
def _fused_resblock_kernel(x_ref, w1_ref, b1_ref, w2_ref, b2_ref, o_ref,
                           h_ref, acc_ref, *, wp, q_rows, use_residual):
    p_rows = x_ref.shape[0]

    # ---- 1x1 conv -> bias -> LeakyReLU, written once to the bf16 scratch ----
    h = jnp.dot(x_ref[...], w1_ref[...], preferred_element_type=jnp.float32)
    h_ref[pl.ds(0, p_rows), :] = _leaky_relu(h + b1_ref[...]).astype(jnp.bfloat16)
    # Tail rows only ever feed the dropped garbage columns; zero them so they
    # are well-defined (no stale-VMEM NaN/Inf).
    h_ref[pl.ds(p_rows, _TAIL_ROWS), :] = jnp.zeros(
        (_TAIL_ROWS, h_ref.shape[1]), jnp.bfloat16)

    # ---- 3x3 conv: 9 row-shifted MXU matmuls accumulated into f32 scratch ---
    for k in range(9):
        off = (k // 3) * wp + (k % 3)                        # static tap offset
        term = jnp.dot(h_ref[pl.ds(off, q_rows), :], w2_ref[k],
                       preferred_element_type=jnp.float32)
        if k == 0:
            acc_ref[...] = term
        else:
            acc_ref[...] += term

    # ---- bias -> LeakyReLU -> residual epilogue (f32) ------------------------
    y = _leaky_relu(acc_ref[...] + b2_ref[...])
    if use_residual:
        # centre of the padded slab == original x of this tile; slice the Ref
        # then cast (no full-slab f32 temporary).
        y = y + x_ref[pl.ds(wp + 1, q_rows), :].astype(jnp.float32)
    o_ref[...] = y.astype(o_ref.dtype)


def _fused_call(slab, w1, b1, w2, b2, *, wp, q_rows, use_residual, vmem_limit):
    g, p_rows, c = slab.shape
    cmid = w1.shape[1]
    kernel = functools.partial(_fused_resblock_kernel, wp=wp, q_rows=q_rows,
                               use_residual=use_residual)
    # NOTE: weight index_maps are constant, so their tiles are fetched once and
    # stay grid-resident (no per-step re-DMA).
    return pl.pallas_call(
        kernel,
        out_shape=jax.ShapeDtypeStruct((g, q_rows, c), jnp.bfloat16),
        grid=(g,),
        in_specs=[
            pl.BlockSpec((None, p_rows, c), lambda i: (i, 0, 0)),   # activation slab
            pl.BlockSpec((c, cmid), lambda i: (0, 0)),              # w1
            pl.BlockSpec((1, cmid), lambda i: (0, 0)),              # b1
            pl.BlockSpec((9, cmid, c), lambda i: (0, 0, 0)),        # w2
            pl.BlockSpec((1, c), lambda i: (0, 0)),                 # b2
        ],
        out_specs=pl.BlockSpec((None, q_rows, c), lambda i: (i, 0, 0)),
        scratch_shapes=[
            pltpu.VMEM((p_rows + _TAIL_ROWS, cmid), jnp.bfloat16),  # h (bf16)
            pltpu.VMEM((q_rows, c), jnp.float32),                   # 3x3 accumulator
        ],
        compiler_params=pltpu.CompilerParams(
            dimension_semantics=("parallel",),
            vmem_limit_bytes=vmem_limit,
        ),
    )(slab, w1, b1, w2, b2)


# ---------------------------------------------------------------------------
# Generation-aware VMEM budget and row-tile selection.
# ---------------------------------------------------------------------------
def _vmem_budget_bytes():
    try:
        cap = pltpu.get_tpu_info().vmem_capacity_bytes
    except Exception:
        cap = 64 * 1024 * 1024          # conservative (v7x per-core VMEM)
    return max(min(cap * 3 // 4, 96 * 1024 * 1024), 32 * 1024 * 1024)


def _step_vmem_bytes(th, wp, c, cmid):
    p_rows = (th + 2) * wp
    q_rows = th * wp
    return (2 * p_rows * c * 2                       # double-buffered bf16 input slab
            + 2 * q_rows * c * 2                     # double-buffered bf16 output
            + (p_rows + _TAIL_ROWS) * cmid * 2       # bf16 h scratch
            + q_rows * c * 4                         # f32 accumulator scratch
            + 2 * (9 * cmid * c + c * cmid) * 2      # weights (assume 2 buffers)
            + 2 * (cmid + c) * 4                     # biases
            + 2 * q_rows * c * 4)                    # f32 epilogue temps headroom


def _auto_row_tile(n, h, w, c, cmid, budget):
    wp = _round_up(w + 2, 8)
    divisors = sorted([t for t in range(1, h + 1) if h % t == 0], reverse=True)
    fitting = [t for t in divisors if _step_vmem_bytes(t, wp, c, cmid) <= budget]
    if not fitting:
        return divisors[-1]
    multi = [t for t in fitting if n * (h // t) >= 2]   # >=2 grid steps (v7x 2 TCs)
    return multi[0] if multi else fitting[0]


# ---------------------------------------------------------------------------
# Glue (plain JAX): replicate padding + (optional) overlapping row-tile slabs.
# ---------------------------------------------------------------------------
def _build_row_slabs(xb, row_tile, wp):
    # xb: (N, H, W, C) bf16 -> (N*nT, (row_tile+2)*wp, C) bf16
    n, h, w, c = xb.shape
    nt = h // row_tile
    xp = jnp.pad(xb, ((0, 0), (1, 1), (1, 1), (0, 0)), mode="edge")  # replicate pad
    if wp > w + 2:
        xp = jnp.pad(xp, ((0, 0), (0, 0), (0, wp - (w + 2)), (0, 0)))  # width align
    if nt == 1:
        return xp.reshape(n, (h + 2) * wp, c)        # whole image: no stack needed
    slabs = jnp.stack(
        [xp[:, t * row_tile:t * row_tile + row_tile + 2] for t in range(nt)], axis=1)
    return slabs.reshape(n * nt, (row_tile + 2) * wp, c)


def residual_block_forward(x_nchw, params, use_residual=True, row_tile=None):
    n, c, h, w = x_nchw.shape
    cmid = params[0]["w1"].shape[1]
    wp = _round_up(w + 2, 8)
    budget = _vmem_budget_bytes()
    th = row_tile if row_tile is not None else _auto_row_tile(n, h, w, c, cmid, budget)
    assert h % th == 0, "row_tile must divide H"
    nt = h // th
    q_rows = th * wp

    xb = jnp.transpose(x_nchw, (0, 2, 3, 1)).astype(jnp.bfloat16)    # NHWC, bf16 carry
    for p in params:
        slab = _build_row_slabs(xb, th, wp)
        out = _fused_call(slab, p["w1"], p["b1"], p["w2"], p["b2"],
                          wp=wp, q_rows=q_rows, use_residual=use_residual,
                          vmem_limit=budget)
        # drop the garbage columns living on the padded-width output grid
        xb = out.reshape(n, nt, th, wp, c)[:, :, :, :w, :].reshape(n, h, w, c)
    return jnp.transpose(xb.astype(jnp.float32), (0, 3, 1, 2))        # back to NCHW f32


# ---------------------------------------------------------------------------
# Parameters: raw PyTorch-like init + BN folding / bf16 cast (shared by the
# Pallas path and the reference so matmul operands are identical).
# ---------------------------------------------------------------------------
def _bn_stats(key, c):
    kg, kb, km, kv = jax.random.split(key, 4)
    gamma = 0.5 + jax.random.uniform(kg, (c,), jnp.float32)
    beta = 0.1 * jax.random.normal(kb, (c,), jnp.float32)
    mean = 0.1 * jax.random.normal(km, (c,), jnp.float32)
    var = 0.5 + jax.random.uniform(kv, (c,), jnp.float32)
    scale = gamma / jnp.sqrt(var + BN_EPS)
    bias = beta - mean * scale
    return scale, bias


def init_params(key, channels, num_repeats):
    params = []
    cmid = channels // 2
    for _ in range(num_repeats):
        key, k1, k2, k3, k4 = jax.random.split(key, 5)
        w1 = 0.1 * jax.random.normal(k1, (channels, cmid), jnp.float32)        # 1x1 (Cin,Cout)
        s1, b1 = _bn_stats(k2, cmid)
        w2 = 0.1 * jax.random.normal(k3, (3, 3, cmid, channels), jnp.float32)  # HWIO
        s2, b2 = _bn_stats(k4, channels)
        params.append(dict(w1=w1, s1=s1, b1=b1, w2=w2, s2=s2, b2=b2))
    return params


def prepare_params(params):
    prepared = []
    for p in params:
        c, cmid = p["w1"].shape
        w1 = (p["w1"] * p["s1"][None, :]).astype(jnp.bfloat16)
        w2 = (p["w2"] * p["s2"][None, None, None, :]).reshape(9, cmid, c).astype(jnp.bfloat16)
        prepared.append(dict(
            w1=w1, b1=p["b1"].reshape(1, cmid).astype(jnp.float32),
            w2=w2, b2=p["b2"].reshape(1, c).astype(jnp.float32)))
    return prepared


# ---------------------------------------------------------------------------
# Pure-JAX reference (lax.conv) using the same bf16 operands / f32 accumulation.
# ---------------------------------------------------------------------------
def reference_forward(x_nchw, prepared, use_residual=True):
    dn = ("NHWC", "HWIO", "NHWC")
    xb = jnp.transpose(x_nchw, (0, 2, 3, 1)).astype(jnp.bfloat16)
    for p in prepared:
        c, cmid = p["w1"].shape
        h = jax.lax.conv_general_dilated(
            xb, p["w1"].reshape(1, 1, c, cmid), (1, 1), "VALID",
            dimension_numbers=dn, preferred_element_type=jnp.float32)
        h = _leaky_relu(h + p["b1"].reshape(1, 1, 1, cmid)).astype(jnp.bfloat16)
        hp = jnp.pad(h, ((0, 0), (1, 1), (1, 1), (0, 0)), mode="edge")
        y = jax.lax.conv_general_dilated(
            hp, p["w2"].reshape(3, 3, cmid, c), (1, 1), "VALID",
            dimension_numbers=dn, preferred_element_type=jnp.float32)
        y = _leaky_relu(y + p["b2"].reshape(1, 1, 1, c))
        if use_residual:
            y = y + xb.astype(jnp.float32)
        xb = y.astype(jnp.bfloat16)
    return jnp.transpose(xb.astype(jnp.float32), (0, 3, 1, 2))


if __name__ == "__main__":
    key = jax.random.PRNGKey(0)
    kx, kp = jax.random.split(key)

    N, C, H, W = 2, 4, 16, 16            # channels must be even (channels // 2)
    num_repeats = 2
    x = jax.random.normal(kx, (N, C, H, W), jnp.float32)      # PyTorch NCHW input
    params = prepare_params(init_params(kp, C, num_repeats))

    ref = reference_forward(x, params, use_residual=True)

    # Exercise both the auto (whole-image) path and the explicit row-tile path.
    for rt in (None, 8):
        fwd = jax.jit(functools.partial(residual_block_forward,
                                        use_residual=True, row_tile=rt))
        out = jax.block_until_ready(fwd(x, params))
        assert out.shape == (N, C, H, W)
        assert jnp.allclose(out, ref, rtol=1e-2, atol=1e-2), \
            f"mismatch vs reference (row_tile={rt})"

    print("KERNEL_OK")
</pallas_src>

<mosaic_0001>
module attributes {stable_mosaic.version = 11 : i64} {
  func.func @_fused_resblock_kernel(%arg0: i32, %arg1: memref<1x432x4xbf16, #tpu.memory_space<vmem>>, %arg2: memref<4x2xbf16, #tpu.memory_space<vmem>>, %arg3: memref<1x2xf32, #tpu.memory_space<vmem>>, %arg4: memref<9x2x4xbf16, #tpu.memory_space<vmem>>, %arg5: memref<1x4xf32, #tpu.memory_space<vmem>>, %arg6: memref<1x384x4xbf16, #tpu.memory_space<vmem>>, %arg7: memref<440x2xbf16, #tpu.memory_space<vmem>>, %arg8: memref<384x4xf32, #tpu.memory_space<vmem>>) attributes {dimension_semantics = [#tpu.dimension_semantics<parallel>], iteration_bounds = array<i64: 2>, scalar_prefetch = 0 : i64, scratch_operands = 2 : i64, tpu.core_type = #tpu.core_type<tc>, window_params = [{transform_indices = @transform_0, window_bounds = array<i64: 1, 432, 4>}, {pipeline_mode = #tpu.pipeline_mode<synchronous>, transform_indices = @transform_1, window_bounds = array<i64: 4, 2>}, {pipeline_mode = #tpu.pipeline_mode<synchronous>, transform_indices = @transform_2, window_bounds = array<i64: 1, 2>}, {pipeline_mode = #tpu.pipeline_mode<synchronous>, transform_indices = @transform_3, window_bounds = array<i64: 9, 2, 4>}, {pipeline_mode = #tpu.pipeline_mode<synchronous>, transform_indices = @transform_4, window_bounds = array<i64: 1, 4>}, {transform_indices = @transform_5, window_bounds = array<i64: 1, 384, 4>}]} {
    %c0 = arith.constant 0 : index
    %c0_0 = arith.constant 0 : index
    %c0_1 = arith.constant 0 : index
    %0 = vector.load %arg1[%c0, %c0_0, %c0_1] : memref<1x432x4xbf16, #tpu.memory_space<vmem>>, vector<1x432x4xbf16>
    %1 = vector.shape_cast %0 : vector<1x432x4xbf16> to vector<432x4xbf16>
    %c0_2 = arith.constant 0 : index
    %c0_3 = arith.constant 0 : index
    %2 = vector.load %arg2[%c0_2, %c0_3] : memref<4x2xbf16, #tpu.memory_space<vmem>>, vector<4x2xbf16>
    %cst = arith.constant dense<0.000000e+00> : vector<432x2xf32>
    %3 = tpu.matmul %1, %2, %cst {dimension_numbers = #tpu.dot_dimension_numbers<[1], [0], [0], [1], [0, 0, 1, 1], [], []>} : vector<432x4xbf16>, vector<4x2xbf16>, vector<432x2xf32> -> vector<432x2xf32>
    %c0_4 = arith.constant 0 : index
    %c0_5 = arith.constant 0 : index
    %4 = vector.load %arg3[%c0_4, %c0_5] : memref<1x2xf32, #tpu.memory_space<vmem>>, vector<1x2xf32>
    %5 = vector.broadcast %4 : vector<1x2xf32> to vector<432x2xf32>
    %6 = arith.addf %3, %5 : vector<432x2xf32>
    %cst_6 = arith.constant 0.000000e+00 : f32
    %7 = vector.broadcast %cst_6 : f32 to vector<432x2xf32>
    %8 = arith.cmpf ogt, %6, %7 : vector<432x2xf32>
    %cst_7 = arith.constant 1.000000e-01 : f32
    %9 = vector.broadcast %cst_7 : f32 to vector<432x2xf32>
    %10 = arith.mulf %9, %6 : vector<432x2xf32>
    %11 = arith.select %8, %6, %10 : vector<432x2xi1>, vector<432x2xf32>
    %12 = arith.truncf %11 : vector<432x2xf32> to vector<432x2xbf16>
    %c0_8 = arith.constant 0 : index
    %c0_9 = arith.constant 0 : index
    %13 = vector.load %arg7[%c0_8, %c0_9] : memref<440x2xbf16, #tpu.memory_space<vmem>>, vector<432x2xbf16>
    tpu.vector_store %arg7[%c0_8, %c0_9], %12 {strides = array<i32>} : memref<440x2xbf16, #tpu.memory_space<vmem>>, vector<432x2xbf16>,
    %cst_10 = arith.constant 0.000000e+00 : bf16
    %14 = vector.broadcast %cst_10 : bf16 to vector<8x2xbf16>
    %c432 = arith.constant 432 : index
    %c0_11 = arith.constant 0 : index
    %15 = vector.load %arg7[%c432, %c0_11] : memref<440x2xbf16, #tpu.memory_space<vmem>>, vector<8x2xbf16>
    tpu.vector_store %arg7[%c432, %c0_11], %14 {strides = array<i32>} : memref<440x2xbf16, #tpu.memory_space<vmem>>, vector<8x2xbf16>,
    %c0_12 = arith.constant 0 : index
    %c0_13 = arith.constant 0 : index
    %16 = vector.load %arg7[%c0_12, %c0_13] : memref<440x2xbf16, #tpu.memory_space<vmem>>, vector<384x2xbf16>
    %c0_14 = arith.constant 0 : index
    %c0_15 = arith.constant 0 : index
    %c0_16 = arith.constant 0 : index
    %17 = vector.load %arg4[%c0_14, %c0_15, %c0_16] : memref<9x2x4xbf16, #tpu.memory_space<vmem>>, vector<1x2x4xbf16>
    %18 = vector.shape_cast %17 : vector<1x2x4xbf16> to vector<2x4xbf16>
    %cst_17 = arith.constant dense<0.000000e+00> : vector<384x4xf32>
    %19 = tpu.matmul %16, %18, %cst_17 {dimension_numbers = #tpu.dot_dimension_numbers<[1], [0], [0], [1], [0, 0, 1, 1], [], []>} : vector<384x2xbf16>, vector<2x4xbf16>, vector<384x4xf32> -> vector<384x4xf32>
    %c0_18 = arith.constant 0 : index
    %c0_19 = arith.constant 0 : index
    %20 = vector.load %arg8[%c0_18, %c0_19] : memref<384x4xf32, #tpu.memory_space<vmem>>, vector<384x4xf32>
    tpu.vector_store %arg8[%c0_18, %c0_19], %19 {strides = array<i32>} : memref<384x4xf32, #tpu.memory_space<vmem>>, vector<384x4xf32>,
    %c1 = arith.constant 1 : index
    %c0_20 = arith.constant 0 : index
    %21 = vector.load %arg7[%c1, %c0_20] : memref<440x2xbf16, #tpu.memory_space<vmem>>, vector<384x2xbf16>
    %c1_21 = arith.constant 1 : index
    %c0_22 = arith.constant 0 : index
    %c0_23 = arith.constant 0 : index
    %22 = vector.load %arg4[%c1_21, %c0_22, %c0_23] : memref<9x2x4xbf16, #tpu.memory_space<vmem>>, vector<1x2x4xbf16>
    %23 = vector.shape_cast %22 : vector<1x2x4xbf16> to vector<2x4xbf16>
    %cst_24 = arith.constant dense<0.000000e+00> : vector<384x4xf32>
    %24 = tpu.matmul %21, %23, %cst_24 {dimension_numbers = #tpu.dot_dimension_numbers<[1], [0], [0], [1], [0, 0, 1, 1], [], []>} : vector<384x2xbf16>, vector<2x4xbf16>, vector<384x4xf32> -> vector<384x4xf32>
    %c0_25 = arith.constant 0 : index
    %c0_26 = arith.constant 0 : index
    %25 = vector.load %arg8[%c0_25, %c0_26] : memref<384x4xf32, #tpu.memory_space<vmem>>, vector<384x4xf32>
    %26 = arith.addf %25, %24 : vector<384x4xf32>
    %c0_27 = arith.constant 0 : index
    %c0_28 = arith.constant 0 : index
    %27 = vector.load %arg8[%c0_27, %c0_28] : memref<384x4xf32, #tpu.memory_space<vmem>>, vector<384x4xf32>
    tpu.vector_store %arg8[%c0_27, %c0_28], %26 {strides = array<i32>} : memref<384x4xf32, #tpu.memory_space<vmem>>, vector<384x4xf32>,
    %c2 = arith.constant 2 : index
    %c0_29 = arith.constant 0 : index
    %28 = vector.load %arg7[%c2, %c0_29] : memref<440x2xbf16, #tpu.memory_space<vmem>>, vector<384x2xbf16>
    %c2_30 = arith.constant 2 : index
    %c0_31 = arith.constant 0 : index
    %c0_32 = arith.constant 0 : index
    %29 = vector.load %arg4[%c2_30, %c0_31, %c0_32] : memref<9x2x4xbf16, #tpu.memory_space<vmem>>, vector<1x2x4xbf16>
    %30 = vector.shape_cast %29 : vector<1x2x4xbf16> to vector<2x4xbf16>
    %cst_33 = arith.constant dense<0.000000e+00> : vector<384x4xf32>
    %31 = tpu.matmul %28, %30, %cst_33 {dimension_numbers = #tpu.dot_dimension_numbers<[1], [0], [0], [1], [0, 0, 1, 1], [], []>} : vector<384x2xbf16>, vector<2x4xbf16>, vector<384x4xf32> -> vector<384x4xf32>
    %c0_34 = arith.constant 0 : index
    %c0_35 = arith.constant 0 : index
    %32 = vector.load %arg8[%c0_34, %c0_35] : memref<384x4xf32, #tpu.memory_space<vmem>>, vector<384x4xf32>
    %33 = arith.addf %32, %31 : vector<384x4xf32>
    %c0_36 = arith.constant 0 : index
    %c0_37 = arith.constant 0 : index
    %34 = vector.load %arg8[%c0_36, %c0_37] : memref<384x4xf32, #tpu.memory_space<vmem>>, vector<384x4xf32>
    tpu.vector_store %arg8[%c0_36, %c0_37], %33 {strides = array<i32>} : memref<384x4xf32, #tpu.memory_space<vmem>>, vector<384x4xf32>,
    %c24 = arith.constant 24 : index
    %c0_38 = arith.constant 0 : index
    %35 = vector.load %arg7[%c24, %c0_38] : memref<440x2xbf16, #tpu.memory_space<vmem>>, vector<384x2xbf16>
    %c3 = arith.constant 3 : index
    %c0_39 = arith.constant 0 : index
    %c0_40 = arith.constant 0 : index
    %36 = vector.load %arg4[%c3, %c0_39, %c0_40] : memref<9x2x4xbf16, #tpu.memory_space<vmem>>, vector<1x2x4xbf16>
    %37 = vector.shape_cast %36 : vector<1x2x4xbf16> to vector<2x4xbf16>
    %cst_41 = arith.constant dense<0.000000e+00> : vector<384x4xf32>
    %38 = tpu.matmul %35, %37, %cst_41 {dimension_numbers = #tpu.dot_dimension_numbers<[1], [0], [0], [1], [0, 0, 1, 1], [], []>} : vector<384x2xbf16>, vector<2x4xbf16>, vector<384x4xf32> -> vector<384x4xf32>
    %c0_42 = arith.constant 0 : index
    %c0_43 = arith.constant 0 : index
    %39 = vector.load %arg8[%c0_42, %c0_43] : memref<384x4xf32, #tpu.memory_space<vmem>>, vector<384x4xf32>
    %40 = arith.addf %39, %38 : vector<384x4xf32>
    %c0_44 = arith.constant 0 : index
    %c0_45 = arith.constant 0 : index
    %41 = vector.load %arg8[%c0_44, %c0_45] : memref<384x4xf32, #tpu.memory_space<vmem>>, vector<384x4xf32>
    tpu.vector_store %arg8[%c0_44, %c0_45], %40 {strides = array<i32>} : memref<384x4xf32, #tpu.memory_space<vmem>>, vector<384x4xf32>,
    %c25 = arith.constant 25 : index
    %c0_46 = arith.constant 0 : index
    %42 = vector.load %arg7[%c25, %c0_46] : memref<440x2xbf16, #tpu.memory_space<vmem>>, vector<384x2xbf16>
    %c4 = arith.constant 4 : index
    %c0_47 = arith.constant 0 : index
    %c0_48 = arith.constant 0 : index
    %43 = vector.load %arg4[%c4, %c0_47, %c0_48] : memref<9x2x4xbf16, #tpu.memory_space<vmem>>, vector<1x2x4xbf16>
    %44 = vector.shape_cast %43 : vector<1x2x4xbf16> to vector<2x4xbf16>
    %cst_49 = arith.constant dense<0.000000e+00> : vector<384x4xf32>
    %45 = tpu.matmul %42, %44, %cst_49 {dimension_numbers = #tpu.dot_dimension_numbers<[1], [0], [0], [1], [0, 0, 1, 1], [], []>} : vector<384x2xbf16>, vector<2x4xbf16>, vector<384x4xf32> -> vector<384x4xf32>
    %c0_50 = arith.constant 0 : index
    %c0_51 = arith.constant 0 : index
    %46 = vector.load %arg8[%c0_50, %c0_51] : memref<384x4xf32, #tpu.memory_space<vmem>>, vector<384x4xf32>
    %47 = arith.addf %46, %45 : vector<384x4xf32>
    %c0_52 = arith.constant 0 : index
    %c0_53 = arith.constant 0 : index
    %48 = vector.load %arg8[%c0_52, %c0_53] : memref<384x4xf32, #tpu.memory_space<vmem>>, vector<384x4xf32>
    tpu.vector_store %arg8[%c0_52, %c0_53], %47 {strides = array<i32>} : memref<384x4xf32, #tpu.memory_space<vmem>>, vector<384x4xf32>,
    %c26 = arith.constant 26 : index
    %c0_54 = arith.constant 0 : index
    %49 = vector.load %arg7[%c26, %c0_54] : memref<440x2xbf16, #tpu.memory_space<vmem>>, vector<384x2xbf16>
    %c5 = arith.constant 5 : index
    %c0_55 = arith.constant 0 : index
    %c0_56 = arith.constant 0 : index
    %50 = vector.load %arg4[%c5, %c0_55, %c0_56] : memref<9x2x4xbf16, #tpu.memory_space<vmem>>, vector<1x2x4xbf16>
    %51 = vector.shape_cast %50 : vector<1x2x4xbf16> to vector<2x4xbf16>
    %cst_57 = arith.constant dense<0.000000e+00> : vector<384x4xf32>
    %52 = tpu.matmul %49, %51, %cst_57 {dimension_numbers = #tpu.dot_dimension_numbers<[1], [0], [0], [1], [0, 0, 1, 1], [], []>} : vector<384x2xbf16>, vector<2x4xbf16>, vector<384x4xf32> -> vector<384x4xf32>
    %c0_58 = arith.constant 0 : index
    %c0_59 = arith.constant 0 : index
    %53 = vector.load %arg8[%c0_58, %c0_59] : memref<384x4xf32, #tpu.memory_space<vmem>>, vector<384x4xf32>
    %54 = arith.addf %53, %52 : vector<384x4xf32>
    %c0_60 = arith.constant 0 : index
    %c0_61 = arith.constant 0 : index
    %55 = vector.load %arg8[%c0_60, %c0_61] : memref<384x4xf32, #tpu.memory_space<vmem>>, vector<384x4xf32>
    tpu.vector_store %arg8[%c0_60, %c0_61], %54 {strides = array<i32>} : memref<384x4xf32, #tpu.memory_space<vmem>>, vector<384x4xf32>,
    %c48 = arith.constant 48 : index
    %c0_62 = arith.constant 0 : index
    %56 = vector.load %arg7[%c48, %c0_62] : memref<440x2xbf16, #tpu.memory_space<vmem>>, vector<384x2xbf16>
    %c6 = arith.constant 6 : index
    %c0_63 = arith.constant 0 : index
    %c0_64 = arith.constant 0 : index
    %57 = vector.load %arg4[%c6, %c0_63, %c0_64] : memref<9x2x4xbf16, #tpu.memory_space<vmem>>, vector<1x2x4xbf16>
    %58 = vector.shape_cast %57 : vector<1x2x4xbf16> to vector<2x4xbf16>
    %cst_65 = arith.constant dense<0.000000e+00> : vector<384x4xf32>
    %59 = tpu.matmul %56, %58, %cst_65 {dimension_numbers = #tpu.dot_dimension_numbers<[1], [0], [0], [1], [0, 0, 1, 1], [], []>} : vector<384x2xbf16>, vector<2x4xbf16>, vector<384x4xf32> -> vector<384x4xf32>
    %c0_66 = arith.constant 0 : index
    %c0_67 = arith.constant 0 : index
    %60 = vector.load %arg8[%c0_66, %c0_67] : memref<384x4xf32, #tpu.memory_space<vmem>>, vector<384x4xf32>
    %61 = arith.addf %60, %59 : vector<384x4xf32>
    %c0_68 = arith.constant 0 : index
    %c0_69 = arith.constant 0 : index
    %62 = vector.load %arg8[%c0_68, %c0_69] : memref<384x4xf32, #tpu.memory_space<vmem>>, vector<384x4xf32>
    tpu.vector_store %arg8[%c0_68, %c0_69], %61 {strides = array<i32>} : memref<384x4xf32, #tpu.memory_space<vmem>>, vector<384x4xf32>,
    %c49 = arith.constant 49 : index
    %c0_70 = arith.constant 0 : index
    %63 = vector.load %arg7[%c49, %c0_70] : memref<440x2xbf16, #tpu.memory_space<vmem>>, vector<384x2xbf16>
    %c7 = arith.constant 7 : index
    %c0_71 = arith.constant 0 : index
    %c0_72 = arith.constant 0 : index
    %64 = vector.load %arg4[%c7, %c0_71, %c0_72] : memref<9x2x4xbf16, #tpu.memory_space<vmem>>, vector<1x2x4xbf16>
    %65 = vector.shape_cast %64 : vector<1x2x4xbf16> to vector<2x4xbf16>
    %cst_73 = arith.constant dense<0.000000e+00> : vector<384x4xf32>
    %66 = tpu.matmul %63, %65, %cst_73 {dimension_numbers = #tpu.dot_dimension_numbers<[1], [0], [0], [1], [0, 0, 1, 1], [], []>} : vector<384x2xbf16>, vector<2x4xbf16>, vector<384x4xf32> -> vector<384x4xf32>
    %c0_74 = arith.constant 0 : index
    %c0_75 = arith.constant 0 : index
    %67 = vector.load %arg8[%c0_74, %c0_75] : memref<384x4xf32, #tpu.memory_space<vmem>>, vector<384x4xf32>
    %68 = arith.addf %67, %66 : vector<384x4xf32>
    %c0_76 = arith.constant 0 : index
    %c0_77 = arith.constant 0 : index
    %69 = vector.load %arg8[%c0_76, %c0_77] : memref<384x4xf32, #tpu.memory_space<vmem>>, vector<384x4xf32>
    tpu.vector_store %arg8[%c0_76, %c0_77], %68 {strides = array<i32>} : memref<384x4xf32, #tpu.memory_space<vmem>>, vector<384x4xf32>,
    %c50 = arith.constant 50 : index
    %c0_78 = arith.constant 0 : index
    %70 = vector.load %arg7[%c50, %c0_78] : memref<440x2xbf16, #tpu.memory_space<vmem>>, vector<384x2xbf16>
    %c8 = arith.constant 8 : index
    %c0_79 = arith.constant 0 : index
    %c0_80 = arith.constant 0 : index
    %71 = vector.load %arg4[%c8, %c0_79, %c0_80] : memref<9x2x4xbf16, #tpu.memory_space<vmem>>, vector<1x2x4xbf16>
    %72 = vector.shape_cast %71 : vector<1x2x4xbf16> to vector<2x4xbf16>
    %cst_81 = arith.constant dense<0.000000e+00> : vector<384x4xf32>
    %73 = tpu.matmul %70, %72, %cst_81 {dimension_numbers = #tpu.dot_dimension_numbers<[1], [0], [0], [1], [0, 0, 1, 1], [], []>} : vector<384x2xbf16>, vector<2x4xbf16>, vector<384x4xf32> -> vector<384x4xf32>
    %c0_82 = arith.constant 0 : index
    %c0_83 = arith.constant 0 : index
    %74 = vector.load %arg8[%c0_82, %c0_83] : memref<384x4xf32, #tpu.memory_space<vmem>>, vector<384x4xf32>
    %75 = arith.addf %74, %73 : vector<384x4xf32>
    %c0_84 = arith.constant 0 : index
    %c0_85 = arith.constant 0 : index
    %76 = vector.load %arg8[%c0_84, %c0_85] : memref<384x4xf32, #tpu.memory_space<vmem>>, vector<384x4xf32>
    tpu.vector_store %arg8[%c0_84, %c0_85], %75 {strides = array<i32>} : memref<384x4xf32, #tpu.memory_space<vmem>>, vector<384x4xf32>,
    %c0_86 = arith.constant 0 : index
    %c0_87 = arith.constant 0 : index
    %77 = vector.load %arg8[%c0_86, %c0_87] : memref<384x4xf32, #tpu.memory_space<vmem>>, vector<384x4xf32>
    %c0_88 = arith.constant 0 : index
    %c0_89 = arith.constant 0 : index
    %78 = vector.load %arg5[%c0_88, %c0_89] : memref<1x4xf32, #tpu.memory_space<vmem>>, vector<1x4xf32>
    %79 = vector.broadcast %78 : vector<1x4xf32> to vector<384x4xf32>
    %80 = arith.addf %77, %79 : vector<384x4xf32>
    %cst_90 = arith.constant 0.000000e+00 : f32
    %81 = vector.broadcast %cst_90 : f32 to vector<384x4xf32>
    %82 = arith.cmpf ogt, %80, %81 : vector<384x4xf32>
    %cst_91 = arith.constant 1.000000e-01 : f32
    %83 = vector.broadcast %cst_91 : f32 to vector<384x4xf32>
    %84 = arith.mulf %83, %80 : vector<384x4xf32>
    %85 = arith.select %82, %80, %84 : vector<384x4xi1>, vector<384x4xf32>
    %c0_92 = arith.constant 0 : index
    %c25_93 = arith.constant 25 : index
    %c0_94 = arith.constant 0 : index
    %86 = vector.load %arg1[%c0_92, %c25_93, %c0_94] : memref<1x432x4xbf16, #tpu.memory_space<vmem>>, vector<1x384x4xbf16>
    %87 = vector.shape_cast %86 : vector<1x384x4xbf16> to vector<384x4xbf16>
    %88 = arith.extf %87 : vector<384x4xbf16> to vector<384x4xf32>
    %89 = arith.addf %85, %88 : vector<384x4xf32>
    %90 = arith.truncf %89 : vector<384x4xf32> to vector<384x4xbf16>
    %c0_95 = arith.constant 0 : index
    %c0_96 = arith.constant 0 : index
    %c0_97 = arith.constant 0 : index
    %91 = vector.load %arg6[%c0_95, %c0_96, %c0_97] : memref<1x384x4xbf16, #tpu.memory_space<vmem>>, vector<1x384x4xbf16>
    %92 = vector.shape_cast %91 : vector<1x384x4xbf16> to vector<384x4xbf16>
    %93 = vector.shape_cast %90 : vector<384x4xbf16> to vector<1x384x4xbf16>
    tpu.vector_store %arg6[%c0_95, %c0_96, %c0_97], %93 {strides = array<i32>} : memref<1x384x4xbf16, #tpu.memory_space<vmem>>, vector<1x384x4xbf16>,
    return
  }
  func.func @transform_0(%arg0: i32) -> (i32, i32, i32) {
    %c0_i32 = arith.constant 0 : i32
    %c0_i32_0 = arith.constant 0 : i32
    %c0_i32_1 = arith.constant 0 : i32
    return %arg0, %c0_i32, %c0_i32_0 : i32, i32, i32
  }
  func.func @transform_1(%arg0: i32) -> (i32, i32) {
    %c0_i32 = arith.constant 0 : i32
    %c0_i32_0 = arith.constant 0 : i32
    %c0_i32_1 = arith.constant 0 : i32
    return %c0_i32, %c0_i32_0 : i32, i32
  }
  func.func @transform_2(%arg0: i32) -> (i32, i32) {
    %c0_i32 = arith.constant 0 : i32
    %c0_i32_0 = arith.constant 0 : i32
    %c0_i32_1 = arith.constant 0 : i32
    return %c0_i32, %c0_i32_0 : i32, i32
  }
  func.func @transform_3(%arg0: i32) -> (i32, i32, i32) {
    %c0_i32 = arith.constant 0 : i32
    %c0_i32_0 = arith.constant 0 : i32
    %c0_i32_1 = arith.constant 0 : i32
    %c0_i32_2 = arith.constant 0 : i32
    return %c0_i32, %c0_i32_0, %c0_i32_1 : i32, i32, i32
  }
  func.func @transform_4(%arg0: i32) -> (i32, i32) {
    %c0_i32 = arith.constant 0 : i32
    %c0_i32_0 = arith.constant 0 : i32
    %c0_i32_1 = arith.constant 0 : i32
    return %c0_i32, %c0_i32_0 : i32, i32
  }
  func.func @transform_5(%arg0: i32) -> (i32, i32, i32) {
    %c0_i32 = arith.constant 0 : i32
    %c0_i32_0 = arith.constant 0 : i32
    %c0_i32_1 = arith.constant 0 : i32
    return %arg0, %c0_i32, %c0_i32_0 : i32, i32, i32
  }
}

</mosaic_0001>

<llo_original>
// kernel: residual_block_forward.2
$region0: #{residual_block_forward.2}
  #allocation0 [shape = 'u32[]', space=smem, size = 0x4, offset = 0x4, fixed_abs, tag = 'smem constant byte address 0x4 - core index']
  #allocation1 [shape = 'u32[144,128]{1,0:T(1,128)}', space=vmem, size = 0x12000, scoped, tag = 'internal scratch']
  #allocation2 [shape = 'bf16[440,2]{1,0:T(8,128)(2,1)}', space=vmem, size = 0x1b800, scoped, tag = 'scratch operand']
  #allocation3 [shape = 'f32[384,4]{1,0:T(8,128)}', space=vmem, size = 0x30000, scoped, tag = 'scratch operand']
  %s0 = inlined_call_operand.vmem [shape: bf16[2,432,4], index: 0, kind: input, shape index: {}]
  %s1 = inlined_call_operand.vmem [shape: bf16[4,2], index: 1, kind: input, shape index: {}]
  %s2 = inlined_call_operand.vmem [shape: f32[1,2], index: 2, kind: input, shape index: {}]
  %s3 = inlined_call_operand.vmem [shape: bf16[9,2,4], index: 3, kind: input, shape index: {}]
  %s4 = inlined_call_operand.vmem [shape: f32[1,4], index: 4, kind: input, shape index: {}]
  %s5 = inlined_call_operand.vmem [shape: bf16[2,384,4], index: 5, kind: output, shape index: {}]
  %s6 = sld [smem:[#allocation0]]
  $region53: #{residual_block_forward.2} parent=0
    _
  %s8 = ssub.s32 1, %s6
  %s9 = scalar_select 0, %s8, %s6
  loop: start=0, step=1, limit=4
  $region2: #{residual_block_forward.2} parent=0 // loop_pre_header
    _
  $region3: #{residual_block_forward.2} parent=0 // loop_header
    %s11 = sphi 0, %s15
    %p12 = scmp.ge.s32.totalorder %s11, 4
    %s21 = sphi 0, %s23
    %s24 = sphi 0, %s21
    %s25 = sphi 0, %s24
    %s41 = sphi 0, %s25
    %s45 = sphi 0, %s45
    %s47 = sphi 0, %s45
    %s48 = sphi 0, %s47
    %s62 = sphi 0, %s48
    %s66 = sphi 0, %s66
    %s68 = sphi 0, %s66
    %s69 = sphi 0, %s68
    %s83 = sphi 0, %s69
    %s87 = sphi 0, %s87
    %s89 = sphi 0, %s87
    %s90 = sphi 0, %s89
    %s104 = sphi 0, %s90
    %s108 = sphi 0, %s108
    %s110 = sphi 0, %s108
    %s111 = sphi 0, %s110
    %s125 = sphi 0, %s111
    %s131 = sphi 0, %s133
    %s134 = sphi 0, %s131
    %s135 = sphi 0, %s134
    %s151 = sphi 0, %s135
  $region4: #{residual_block_forward.2} parent=0 // loop_header_branch
    %14 = sbr.rel (%p12) target = $region8
  $region5: #{residual_block_forward.2} parent=0 // loop_body
    %s16 = ssub.s32 %s11, 1
    %s17 = ssub.s32 %s11, 2
    %s18 = sadd.s32 %s11, 1
    %s19 = ssub.s32 %s11, %s18
    %p20 = scmp.eq.s32.totalorder %s19, 0
    %s22 = sadd.s32 %s21, 1
    %s23 = scalar_select %p20, %s21, %s22
    %p26 = pneg %p20
    %p27 = scmp.eq.s32.totalorder %s11, 1
    %p28 = por %p26, %p27
    %p29 = scmp.ne.s32.totalorder %s21, %s24
    %p30 = scmp.eq.s32.totalorder %s11, 0
    %p31 = por %p29, %p30
    %p32 = scmp.ne.s32.totalorder %s21, %s24
    %p33 = scmp.eq.s32.totalorder %s16, 1
    %p34 = por %p32, %p33
    %p35 = scmp.ne.s32.totalorder %s24, %s25
    %p36 = scmp.eq.s32.totalorder %s16, 0
    %p37 = por %p35, %p36
    %p38 = scmp.ne.s32.totalorder %s24, %s25
    %p39 = scmp.eq.s32.totalorder %s17, 1
    %p40 = por %p38, %p39
    %p42 = scmp.ne.s32.totalorder %s25, %s41
    %p43 = scmp.eq.s32.totalorder %s17, 0
    %p44 = por %p42, %p43
    %s46 = sadd.s32 %s45, 1
    %p49 = scmp.eq.s32.totalorder %s11, 1
    %p50 = scmp.ne.s32.totalorder %s45, %s47
    %p51 = scmp.eq.s32.totalorder %s11, 0
    %p52 = por %p50, %p51
    %p53 = scmp.ne.s32.totalorder %s45, %s47
    %p54 = scmp.eq.s32.totalorder %s16, 1
    %p55 = por %p53, %p54
    %p56 = scmp.ne.s32.totalorder %s47, %s48
    %p57 = scmp.eq.s32.totalorder %s16, 0
    %p58 = por %p56, %p57
    %p59 = scmp.ne.s32.totalorder %s47, %s48
    %p60 = scmp.eq.s32.totalorder %s17, 1
    %p61 = por %p59, %p60
    %p63 = scmp.ne.s32.totalorder %s48, %s62
    %p64 = scmp.eq.s32.totalorder %s17, 0
    %p65 = por %p63, %p64
    %s67 = sadd.s32 %s66, 1
    %p70 = scmp.eq.s32.totalorder %s11, 1
    %p71 = scmp.ne.s32.totalorder %s66, %s68
    %p72 = scmp.eq.s32.totalorder %s11, 0
    %p73 = por %p71, %p72
    %p74 = scmp.ne.s32.totalorder %s66, %s68
    %p75 = scmp.eq.s32.totalorder %s16, 1
    %p76 = por %p74, %p75
    %p77 = scmp.ne.s32.totalorder %s68, %s69
    %p78 = scmp.eq.s32.totalorder %s16, 0
    %p79 = por %p77, %p78
    %p80 = scmp.ne.s32.totalorder %s68, %s69
    %p81 = scmp.eq.s32.totalorder %s17, 1
    %p82 = por %p80, %p81
    %p84 = scmp.ne.s32.totalorder %s69, %s83
    %p85 = scmp.eq.s32.totalorder %s17, 0
    %p86 = por %p84, %p85
    %s88 = sadd.s32 %s87, 1
    %p91 = scmp.eq.s32.totalorder %s11, 1
    %p92 = scmp.ne.s32.totalorder %s87, %s89
    %p93 = scmp.eq.s32.totalorder %s11, 0
    %p94 = por %p92, %p93
    %p95 = scmp.ne.s32.totalorder %s87, %s89
    %p96 = scmp.eq.s32.totalorder %s16, 1
    %p97 = por %p95, %p96
    %p98 = scmp.ne.s32.totalorder %s89, %s90
    %p99 = scmp.eq.s32.totalorder %s16, 0
    %p100 = por %p98, %p99
    %p101 = scmp.ne.s32.totalorder %s89, %s90
    %p102 = scmp.eq.s32.totalorder %s17, 1
    %p103 = por %p101, %p102
    %p105 = scmp.ne.s32.totalorder %s90, %s104
    %p106 = scmp.eq.s32.totalorder %s17, 0
    %p107 = por %p105, %p106
    %s109 = sadd.s32 %s108, 1
    %p112 = scmp.eq.s32.totalorder %s11, 1
    %p113 = scmp.ne.s32.totalorder %s108, %s110
    %p114 = scmp.eq.s32.totalorder %s11, 0
    %p115 = por %p113, %p114
    %p116 = scmp.ne.s32.totalorder %s108, %s110
    %p117 = scmp.eq.s32.totalorder %s16, 1
    %p118 = por %p116, %p117
    %p119 = scmp.ne.s32.totalorder %s110, %s111
    %p120 = scmp.eq.s32.totalorder %s16, 0
    %p121 = por %p119, %p120
    %p122 = scmp.ne.s32.totalorder %s110, %s111
    %p123 = scmp.eq.s32.totalorder %s17, 1
    %p124 = por %p122, %p123
    %p126 = scmp.ne.s32.totalorder %s111, %s125
    %p127 = scmp.eq.s32.totalorder %s17, 0
    %p128 = por %p126, %p127
    %s129 = ssub.s32 %s11, %s18
    %p130 = scmp.eq.s32.totalorder %s129, 0
    %s132 = sadd.s32 %s131, 1
    %s133 = scalar_select %p130, %s131, %s132
    %p136 = pneg %p130
    %p137 = scmp.eq.s32.totalorder %s11, 1
    %p138 = por %p136, %p137
    %p139 = scmp.ne.s32.totalorder %s131, %s134
    %p140 = scmp.eq.s32.totalorder %s11, 0
    %p141 = por %p139, %p140
    %p142 = scmp.ne.s32.totalorder %s131, %s134
    %p143 = scmp.eq.s32.totalorder %s16, 1
    %p144 = por %p142, %p143
    %p145 = scmp.ne.s32.totalorder %s134, %s135
    %p146 = scmp.eq.s32.totalorder %s16, 0
    %p147 = por %p145, %p146
    %p148 = scmp.ne.s32.totalorder %s134, %s135
    %p149 = scmp.eq.s32.totalorder %s17, 1
    %p150 = por %p148, %p149
    %p152 = scmp.ne.s32.totalorder %s135, %s151
    %p153 = scmp.eq.s32.totalorder %s17, 0
    %p154 = por %p152, %p153
    %p155 = scmp.le.s32.totalorder 1, %s11
    %p156 = scmp.lt.s32.totalorder %s11, 3
    %p157 = pnand %p155, %p156
    %p158 = pneg %p157
    // Predicated region
    $region9: #{residual_block_forward.2} parent=5 // pred_check
      _
    $region10: #{residual_block_forward.2} parent=5 // pred_check_branch
      %160 = sbr.rel (%p157) target = $region12
    $region11: #{residual_block_forward.2} parent=5 // pred_region
      %s161 = ssub.s32 %s11, 1
      // Predicated region
      $region13: #{residual_block_forward.2} parent=11 // pred_check
        %p162 = pneg %p58
      $region14: #{residual_block_forward.2} parent=11 // pred_check_branch
        %164 = sbr.rel (%p162) target = $region16
      $region15: #{residual_block_forward.2} parent=11 // pred_region
        _
      $region16: #{residual_block_forward.2} parent=11 // pred_fallthru
        _
      // Predicated region
      $region17: #{residual_block_forward.2} parent=11 // pred_check
        %p165 = pneg %p79
      $region18: #{residual_block_forward.2} parent=11 // pred_check_branch
        %167 = sbr.rel (%p165) target = $region20
      $region19: #{residual_block_forward.2} parent=11 // pred_region
        _
      $region20: #{residual_block_forward.2} parent=11 // pred_fallthru
        _
      // Predicated region
      $region21: #{residual_block_forward.2} parent=11 // pred_check
        %p168 = pneg %p100
      $region22: #{residual_block_forward.2} parent=11 // pred_check_branch
        %170 = sbr.rel (%p168) target = $region24
      $region23: #{residual_block_forward.2} parent=11 // pred_region
        _
      $region24: #{residual_block_forward.2} parent=11 // pred_fallthru
        _
      // Predicated region
      $region25: #{residual_block_forward.2} parent=11 // pred_check
        %p171 = pneg %p121
      $region26: #{residual_block_forward.2} parent=11 // pred_check_branch
        %173 = sbr.rel (%p171) target = $region28
      $region27: #{residual_block_forward.2} parent=11 // pred_region
        _
      $region28: #{residual_block_forward.2} parent=11 // pred_fallthru
        _
    $region12: #{residual_block_forward.2} parent=5 // pred_fallthru
      _
    %p174 = scmp.lt.s32.totalorder %s11, 2
    // Predicated region
    $region29: #{residual_block_forward.2} parent=5 // pred_check
      %p175 = pneg %p174
    $region30: #{residual_block_forward.2} parent=5 // pred_check_branch
      %177 = sbr.rel (%p175) target = $region32
    $region31: #{residual_block_forward.2} parent=5 // pred_region
      // Predicated region
      $region33: #{residual_block_forward.2} parent=31 // pred_check
        %p178 = pneg %p31
      $region34: #{residual_block_forward.2} parent=31 // pred_check_branch
        %180 = sbr.rel (%p178) target = $region36
      $region35: #{residual_block_forward.2} parent=31 // pred_region
        %p181 = scmp.lt.s32.totalorder %s11, 1
        %s182 = scalar_select %p181, %s11, 1
        %s183 = smul.addr %s182, 54
        %s184 = smul.addr %s183, 4
        %s185 = scalar_lea.vmem %s0, %s184
      $region36: #{residual_block_forward.2} parent=31 // pred_fallthru
        _
    $region32: #{residual_block_forward.2} parent=5 // pred_fallthru
      _
    %p186 = scmp.le.s32.totalorder 1, %s11
    %p187 = scmp.lt.s32.totalorder %s11, 3
    %p188 = pnand %p186, %p187
    %p189 = pneg %p188
    // Predicated region
    $region37: #{residual_block_forward.2} parent=5 // pred_check
      _
    $region38: #{residual_block_forward.2} parent=5 // pred_check_branch
      %191 = sbr.rel (%p188) target = $region40
    $region39: #{residual_block_forward.2} parent=5 // pred_region
      %s192 = ssub.s32 %s11, 1
      %p193 = scmp.lt.s32.totalorder %s16, 1
      %s194 = scalar_select %p193, %s16, 1
      %s195 = smul.addr %s194, 54
      %s196 = smul.addr %s195, 4
      %s197 = scalar_lea.vmem %s0, %s196
      %p198 = pneg %p37
      %p199 = pneg %p34
      %p200 = pneg %p58
      %p201 = pneg %p55
      %p202 = pneg %p79
      %p203 = pneg %p76
      %p204 = pneg %p100
      %p205 = pneg %p97
      %p206 = pneg %p121
      %p207 = pneg %p118
      %p208 = pneg %p147
      %p209 = pneg %p144
      %p210 = scmp.lt.s32.totalorder %s16, 1
      %s211 = scalar_select %p210, %s16, 1
      %s212 = smul.addr %s211, 48
      %s213 = smul.addr %s212, 4
      %s214 = scalar_lea.vmem %s5, %s213
      %p215 = scmp.lt.s32.totalorder %s16, 1
      %s216 = scalar_select %p215, %s16, 1
      %s217 = smul.addr %s216, 54
      %s218 = smul.addr %s217, 4
      %s219 = scalar_lea.vmem %s0, %s218
      %p220 = scmp.lt.s32.totalorder %s16, 1
      %s221 = scalar_select %p220, %s16, 1
      %s222 = smul.addr %s221, 48
      %s223 = smul.addr %s222, 4
      %s224 = scalar_lea.vmem %s5, %s223
      %v226 = vld [vmem:[%s219] sm:$0xf]
      %v227 = vld [vmem:[%s219 + $0x4] sm:$0xf]
      %v228 = vld [vmem:[%s219 + $0x8] sm:$0xf]
      %v229 = vld [vmem:[%s219 + $0xc] sm:$0xf]
      %v230 = vld [vmem:[%s219 + $0x10] sm:$0xf]
      %v231 = vld [vmem:[%s219 + $0x14] sm:$0xf]
      %v232 = vld [vmem:[%s219 + $0x18] sm:$0xf]
      %v233 = vld [vmem:[%s219 + $0x1c] sm:$0xf]
      %v234 = vld [vmem:[%s219 + $0x20] sm:$0xf]
      %v235 = vld [vmem:[%s219 + $0x24] sm:$0xf]
      %v236 = vld [vmem:[%s219 + $0x28] sm:$0xf]
      %v237 = vld [vmem:[%s219 + $0x2c] sm:$0xf]
      %v238 = vld [vmem:[%s219 + $0x30] sm:$0xf]
      %v239 = vld [vmem:[%s219 + $0x34] sm:$0xf]
      %v240 = vld [vmem:[%s219 + $0x38] sm:$0xf]
      %v241 = vld [vmem:[%s219 + $0x3c] sm:$0xf]
      %v242 = vld [vmem:[%s219 + $0x40] sm:$0xf]
      %v243 = vld [vmem:[%s219 + $0x44] sm:$0xf]
      %v244 = vld [vmem:[%s219 + $0x48] sm:$0xf]
      %v245 = vld [vmem:[%s219 + $0x4c] sm:$0xf]
      %v246 = vld [vmem:[%s219 + $0x50] sm:$0xf]
      %v247 = vld [vmem:[%s219 + $0x54] sm:$0xf]
      %v248 = vld [vmem:[%s219 + $0x58] sm:$0xf]
      %v249 = vld [vmem:[%s219 + $0x5c] sm:$0xf]
      %v250 = vld [vmem:[%s219 + $0x60] sm:$0xf]
      %v251 = vld [vmem:[%s219 + $0x64] sm:$0xf]
      %v252 = vld [vmem:[%s219 + $0x68] sm:$0xf]
      %v253 = vld [vmem:[%s219 + $0x6c] sm:$0xf]
      %v254 = vld [vmem:[%s219 + $0x70] sm:$0xf]
      %v255 = vld [vmem:[%s219 + $0x74] sm:$0xf]
      %v256 = vld [vmem:[%s219 + $0x78] sm:$0xf]
      %v257 = vld [vmem:[%s219 + $0x7c] sm:$0xf]
      %v258 = vld [vmem:[%s219 + $0x80] sm:$0xf]
      %v259 = vld [vmem:[%s219 + $0x84] sm:$0xf]
      %v260 = vld [vmem:[%s219 + $0x88] sm:$0xf]
      %v261 = vld [vmem:[%s219 + $0x8c] sm:$0xf]
      %v262 = vld [vmem:[%s219 + $0x90] sm:$0xf]
      %v263 = vld [vmem:[%s219 + $0x94] sm:$0xf]
      %v264 = vld [vmem:[%s219 + $0x98] sm:$0xf]
      %v265 = vld [vmem:[%s219 + $0x9c] sm:$0xf]
      %v266 = vld [vmem:[%s219 + $0xa0] sm:$0xf]
      %v267 = vld [vmem:[%s219 + $0xa4] sm:$0xf]
      %v268 = vld [vmem:[%s219 + $0xa8] sm:$0xf]
      %v269 = vld [vmem:[%s219 + $0xac] sm:$0xf]
      %v270 = vld [vmem:[%s219 + $0xb0] sm:$0xf]
      %v271 = vld [vmem:[%s219 + $0xb4] sm:$0xf]
      %v272 = vld [vmem:[%s219 + $0xb8] sm:$0xf]
      %v273 = vld [vmem:[%s219 + $0xbc] sm:$0xf]
      %v274 = vld [vmem:[%s219 + $0xc0] sm:$0xf]
      %v275 = vld [vmem:[%s219 + $0xc4] sm:$0xf]
      %v276 = vld [vmem:[%s219 + $0xc8] sm:$0xf]
      %v277 = vld [vmem:[%s219 + $0xcc] sm:$0xf]
      %v278 = vld [vmem:[%s219 + $0xd0] sm:$0xf]
      %v279 = vld [vmem:[%s219 + $0xd4] sm:$0xf]
      %v280 = vld [vmem:[%s1] sm:$0x3]
      %v281 = vld [vmem:[%s2] sm:$0x1]
      %v283 = vlaneseq
      %v284 = vshrl.u32 %v283, 7
      %v285 = vsub.s32 0, %v284
      %v286 = vrot.slane %v281, %v285
      %v342 = vunpack.c.l.b16 %v226
      %v343 = vunpack.c.l.b16 %v227
      %v344 = vunpack.c.l.b16 %v228
      %v345 = vunpack.c.l.b16 %v229
      %v346 = vunpack.c.l.b16 %v230
      %v347 = vunpack.c.l.b16 %v231
      %v348 = vunpack.c.l.b16 %v232
      %v349 = vunpack.c.l.b16 %v233
      %v350 = vunpack.c.l.b16 %v234
      %v351 = vunpack.c.l.b16 %v235
      %v352 = vunpack.c.l.b16 %v236
      %v353 = vunpack.c.l.b16 %v237
      %v354 = vunpack.c.l.b16 %v238
      %v355 = vunpack.c.l.b16 %v239
      %v356 = vunpack.c.l.b16 %v240
      %v357 = vunpack.c.l.b16 %v241
      %v358 = vunpack.c.l.b16 %v242
      %v359 = vunpack.c.l.b16 %v243
      %v360 = vunpack.c.l.b16 %v244
      %v361 = vunpack.c.l.b16 %v245
      %v362 = vunpack.c.l.b16 %v246
      %v363 = vunpack.c.l.b16 %v247
      %v364 = vunpack.c.l.b16 %v248
      %v365 = vunpack.c.l.b16 %v249
      %v366 = vunpack.c.l.b16 %v250
      %v367 = vunpack.c.l.b16 %v251
      %v368 = vunpack.c.l.b16 %v252
      %v369 = vunpack.c.l.b16 %v253
      %v370 = vunpack.c.l.b16 %v254
      %v371 = vunpack.c.l.b16 %v255
      %v372 = vunpack.c.l.b16 %v256
      %v373 = vunpack.c.l.b16 %v257
      %v374 = vunpack.c.l.b16 %v258
      %v375 = vunpack.c.l.b16 %v259
      %v376 = vunpack.c.l.b16 %v260
      %v377 = vunpack.c.l.b16 %v261
      %v378 = vunpack.c.l.b16 %v262
      %v379 = vunpack.c.l.b16 %v263
      %v380 = vunpack.c.l.b16 %v264
      %v381 = vunpack.c.l.b16 %v265
      %v382 = vunpack.c.l.b16 %v266
      %v383 = vunpack.c.l.b16 %v267
      %v384 = vunpack.c.l.b16 %v268
      %v385 = vunpack.c.l.b16 %v269
      %v386 = vunpack.c.l.b16 %v270
      %v387 = vunpack.c.l.b16 %v271
      %v388 = vunpack.c.l.b16 %v272
      %v389 = vunpack.c.l.b16 %v273
      %v390 = vunpack.c.l.b16 %v274
      %v391 = vunpack.c.l.b16 %v275
      %v392 = vunpack.c.l.b16 %v276
      %v393 = vunpack.c.l.b16 %v277
      %v394 = vunpack.c.l.b16 %v278
      %v395 = vunpack.c.l.b16 %v279
      %v396 = vpack.c.b16 %v343, %v342
      %v397 = vpack.c.b16 %v345, %v344
      %v398 = vpack.c.b16 %v347, %v346
      %v399 = vpack.c.b16 %v349, %v348
      %v400 = vpack.c.b16 %v351, %v350
      %v401 = vpack.c.b16 %v353, %v352
      %v402 = vpack.c.b16 %v355, %v354
      %v403 = vpack.c.b16 %v357, %v356
      %v404 = vpack.c.b16 %v359, %v358
      %v405 = vpack.c.b16 %v361, %v360
      %v406 = vpack.c.b16 %v363, %v362
      %v407 = vpack.c.b16 %v365, %v364
      %v408 = vpack.c.b16 %v367, %v366
      %v409 = vpack.c.b16 %v369, %v368
      %v410 = vpack.c.b16 %v371, %v370
      %v411 = vpack.c.b16 %v373, %v372
      %v412 = vpack.c.b16 %v375, %v374
      %v413 = vpack.c.b16 %v377, %v376
      %v414 = vpack.c.b16 %v379, %v378
      %v415 = vpack.c.b16 %v381, %v380
      %v416 = vpack.c.b16 %v383, %v382
      %v417 = vpack.c.b16 %v385, %v384
      %v418 = vpack.c.b16 %v387, %v386
      %v419 = vpack.c.b16 %v389, %v388
      %v420 = vpack.c.b16 %v391, %v390
      %v421 = vpack.c.b16 %v393, %v392
      %v422 = vpack.c.b16 %v395, %v394
      %vm423 = vcmask 31744
      %v425 = vsel %vm423, %v396, 0
      %v428 = vsel %vm423, %v397, 0
      %v431 = vsel %vm423, %v398, 0
      %v434 = vsel %vm423, %v399, 0
      %v437 = vsel %vm423, %v400, 0
      %v440 = vsel %vm423, %v401, 0
      %v443 = vsel %vm423, %v402, 0
      %v446 = vsel %vm423, %v403, 0
      %v449 = vsel %vm423, %v404, 0
      %v452 = vsel %vm423, %v405, 0
      %v455 = vsel %vm423, %v406, 0
      %v458 = vsel %vm423, %v407, 0
      %v461 = vsel %vm423, %v408, 0
      %v464 = vsel %vm423, %v409, 0
      %v467 = vsel %vm423, %v410, 0
      %v470 = vsel %vm423, %v411, 0
      %v473 = vsel %vm423, %v412, 0
      %v476 = vsel %vm423, %v413, 0
      %v479 = vsel %vm423, %v414, 0
      %v482 = vsel %vm423, %v415, 0
      %v485 = vsel %vm423, %v416, 0
      %v488 = vsel %vm423, %v417, 0
      %v491 = vsel %vm423, %v418, 0
      %v494 = vsel %vm423, %v419, 0
      %v497 = vsel %vm423, %v420, 0
      %v500 = vsel %vm423, %v421, 0
      %v503 = vsel %vm423, %v422, 0
      %vm505 = vcmask 1041408
      %v507 = vsel %vm505, %v280, 0
      %509 = vmatprep.subr.bf16.mxu0 0
      %510 = vmatpush1.bf16.msra.mxu0 0
      %511 = vmatprep.subr.bf16.mxu0 0
      %512 = vmatpush1.bf16.msra.mxu0 0
      %513 = vmatprep.subr.bf16.mxu0 0
      %514 = vmatpush1.bf16.msra.mxu0 0
      %515 = vmatprep.subr.bf16.mxu0 0
      %516 = vmatpush1.bf16.msra.mxu0 0
      %517 = vmatprep.subr.bf16.mxu0 0
      %518 = vmatpush1.bf16.msra.mxu0 0
      %519 = vmatprep.subr.bf16.mxu0 0
      %520 = vmatpush1.bf16.msra.mxu0 0
      %521 = vmatprep.subr.bf16.mxu0 0
      %522 = vmatpush1.bf16.msra.mxu0 0
      %523 = vmatprep.subr.bf16.mxu0 0
      %524 = vmatpush1.bf16.msra.mxu0 %v507
      %525 = vmatprep.subr.bf16.mxu0 0
      %526 = vmatpush2.bf16.msra.mxu0 0
      %527 = vmatprep.subr.bf16.mxu0 0
      %528 = vmatpush2.bf16.msra.mxu0 0
      %529 = vmatprep.subr.bf16.mxu0 0
      %530 = vmatpush2.bf16.msra.mxu0 0
      %531 = vmatprep.subr.bf16.mxu0 0
      %532 = vmatpush2.bf16.msra.mxu0 0
      %533 = vmatprep.subr.bf16.mxu0 0
      %534 = vmatpush2.bf16.msra.mxu0 0
      %535 = vmatprep.subr.bf16.mxu0 0
      %536 = vmatpush2.bf16.msra.mxu0 0
      %537 = vmatprep.subr.bf16.mxu0 0
      %538 = vmatpush2.bf16.msra.mxu0 0
      %539 = vmatprep.subr.bf16.mxu0 0
      %540 = vmatpush2.bf16.msra.mxu0 0
      %541 = vmatprep.mubr.bf16.mxu0 0
      %542 = vmatmul.mubr.bf16.gmra.mxu0 %v425
      %v543 = vpop.f32.mrf.mxu0
      %v544 = vadd.f32 %v286, %v543
      %v545 = vpop.f32.mrf.mxu0
      %v546 = vpop.f32.mrf.mxu0
      %v547 = vadd.f32 %v286, %v546
      %v548 = vpop.f32.mrf.mxu0
      %549 = vmatprep.mubr.bf16.mxu0 0
      %550 = vmatmul.mubr.bf16.gmra.mxu0 %v428
      %v551 = vpop.f32.mrf.mxu0
      %v552 = vadd.f32 %v286, %v551
      %v553 = vpop.f32.mrf.mxu0
      %v554 = vpop.f32.mrf.mxu0
      %v555 = vadd.f32 %v286, %v554
      %v556 = vpop.f32.mrf.mxu0
      %557 = vmatprep.mubr.bf16.mxu0 0
      %558 = vmatmul.mubr.bf16.gmra.mxu0 %v431
      %v559 = vpop.f32.mrf.mxu0
      %v560 = vadd.f32 %v286, %v559
      %v561 = vpop.f32.mrf.mxu0
      %v562 = vpop.f32.mrf.mxu0
      %v563 = vadd.f32 %v286, %v562
      %v564 = vpop.f32.mrf.mxu0
      %565 = vmatprep.mubr.bf16.mxu0 0
      %566 = vmatmul.mubr.bf16.gmra.mxu0 %v434
      %v567 = vpop.f32.mrf.mxu0
      %v568 = vadd.f32 %v286, %v567
      %v569 = vpop.f32.mrf.mxu0
      %v570 = vpop.f32.mrf.mxu0
      %v571 = vadd.f32 %v286, %v570
      %v572 = vpop.f32.mrf.mxu0
      %573 = vmatprep.mubr.bf16.mxu0 0
      %574 = vmatmul.mubr.bf16.gmra.mxu0 %v437
      %v575 = vpop.f32.mrf.mxu0
      %v576 = vadd.f32 %v286, %v575
      %v577 = vpop.f32.mrf.mxu0
      %v578 = vpop.f32.mrf.mxu0
      %v579 = vadd.f32 %v286, %v578
      %v580 = vpop.f32.mrf.mxu0
      %581 = vmatprep.mubr.bf16.mxu0 0
      %582 = vmatmul.mubr.bf16.gmra.mxu0 %v440
      %v583 = vpop.f32.mrf.mxu0
      %v584 = vadd.f32 %v286, %v583
      %v585 = vpop.f32.mrf.mxu0
      %v586 = vpop.f32.mrf.mxu0
      %v587 = vadd.f32 %v286, %v586
      %v588 = vpop.f32.mrf.mxu0
      %589 = vmatprep.mubr.bf16.mxu0 0
      %590 = vmatmul.mubr.bf16.gmra.mxu0 %v443
      %v591 = vpop.f32.mrf.mxu0
      %v592 = vadd.f32 %v286, %v591
      %v593 = vpop.f32.mrf.mxu0
      %v594 = vpop.f32.mrf.mxu0
      %v595 = vadd.f32 %v286, %v594
      %v596 = vpop.f32.mrf.mxu0
      %597 = vmatprep.mubr.bf16.mxu0 0
      %598 = vmatmul.mubr.bf16.gmra.mxu0 %v446
      %v599 = vpop.f32.mrf.mxu0
      %v600 = vadd.f32 %v286, %v599
      %v601 = vpop.f32.mrf.mxu0
      %v602 = vpop.f32.mrf.mxu0
      %v603 = vadd.f32 %v286, %v602
      %v604 = vpop.f32.mrf.mxu0
      %605 = vmatprep.mubr.bf16.mxu0 0
      %606 = vmatmul.mubr.bf16.gmra.mxu0 %v449
      %v607 = vpop.f32.mrf.mxu0
      %v608 = vadd.f32 %v286, %v607
      %v609 = vpop.f32.mrf.mxu0
      %v610 = vpop.f32.mrf.mxu0
      %v611 = vadd.f32 %v286, %v610
      %v612 = vpop.f32.mrf.mxu0
      %613 = vmatprep.mubr.bf16.mxu0 0
      %614 = vmatmul.mubr.bf16.gmra.mxu0 %v452
      %v615 = vpop.f32.mrf.mxu0
      %v616 = vadd.f32 %v286, %v615
      %v617 = vpop.f32.mrf.mxu0
      %v618 = vpop.f32.mrf.mxu0
      %v619 = vadd.f32 %v286, %v618
      %v620 = vpop.f32.mrf.mxu0
      %621 = vmatprep.mubr.bf16.mxu0 0
      %622 = vmatmul.mubr.bf16.gmra.mxu0 %v455
      %v623 = vpop.f32.mrf.mxu0
      %v624 = vadd.f32 %v286, %v623
      %v625 = vpop.f32.mrf.mxu0
      %v626 = vpop.f32.mrf.mxu0
      %v627 = vadd.f32 %v286, %v626
      %v628 = vpop.f32.mrf.mxu0
      %629 = vmatprep.mubr.bf16.mxu0 0
      %630 = vmatmul.mubr.bf16.gmra.mxu0 %v458
      %v631 = vpop.f32.mrf.mxu0
      %v632 = vadd.f32 %v286, %v631
      %v633 = vpop.f32.mrf.mxu0
      %v634 = vpop.f32.mrf.mxu0
      %v635 = vadd.f32 %v286, %v634
      %v636 = vpop.f32.mrf.mxu0
      %637 = vmatprep.mubr.bf16.mxu0 0
      %638 = vmatmul.mubr.bf16.gmra.mxu0 %v461
      %v639 = vpop.f32.mrf.mxu0
      %v640 = vadd.f32 %v286, %v639
      %v641 = vpop.f32.mrf.mxu0
      %v642 = vpop.f32.mrf.mxu0
      %v643 = vadd.f32 %v286, %v642
      %v644 = vpop.f32.mrf.mxu0
      %645 = vmatprep.mubr.bf16.mxu0 0
      %646 = vmatmul.mubr.bf16.gmra.mxu0 %v464
      %v647 = vpop.f32.mrf.mxu0
      %v648 = vadd.f32 %v286, %v647
      %v649 = vpop.f32.mrf.mxu0
      %v650 = vpop.f32.mrf.mxu0
      %v651 = vadd.f32 %v286, %v650
      %v652 = vpop.f32.mrf.mxu0
      %653 = vmatprep.mubr.bf16.mxu0 0
      %654 = vmatmul.mubr.bf16.gmra.mxu0 %v467
      %v655 = vpop.f32.mrf.mxu0
      %v656 = vadd.f32 %v286, %v655
      %v657 = vpop.f32.mrf.mxu0
      %v658 = vpop.f32.mrf.mxu0
      %v659 = vadd.f32 %v286, %v658
      %v660 = vpop.f32.mrf.mxu0
      %661 = vmatprep.mubr.bf16.mxu0 0
      %662 = vmatmul.mubr.bf16.gmra.mxu0 %v470
      %v663 = vpop.f32.mrf.mxu0
      %v664 = vadd.f32 %v286, %v663
      %v665 = vpop.f32.mrf.mxu0
      %v666 = vpop.f32.mrf.mxu0
      %v667 = vadd.f32 %v286, %v666
      %v668 = vpop.f32.mrf.mxu0
      %669 = vmatprep.mubr.bf16.mxu0 0
      %670 = vmatmul.mubr.bf16.gmra.mxu0 %v473
      %v671 = vpop.f32.mrf.mxu0
      %v672 = vadd.f32 %v286, %v671
      %v673 = vpop.f32.mrf.mxu0
      %v674 = vpop.f32.mrf.mxu0
      %v675 = vadd.f32 %v286, %v674
      %v676 = vpop.f32.mrf.mxu0
      %677 = vmatprep.mubr.bf16.mxu0 0
      %678 = vmatmul.mubr.bf16.gmra.mxu0 %v476
      %v679 = vpop.f32.mrf.mxu0
      %v680 = vadd.f32 %v286, %v679
      %v681 = vpop.f32.mrf.mxu0
      %v682 = vpop.f32.mrf.mxu0
      %v683 = vadd.f32 %v286, %v682
      %v684 = vpop.f32.mrf.mxu0
      %685 = vmatprep.mubr.bf16.mxu0 0
      %686 = vmatmul.mubr.bf16.gmra.mxu0 %v479
      %v687 = vpop.f32.mrf.mxu0
      %v688 = vadd.f32 %v286, %v687
      %v689 = vpop.f32.mrf.mxu0
      %v690 = vpop.f32.mrf.mxu0
      %v691 = vadd.f32 %v286, %v690
      %v692 = vpop.f32.mrf.mxu0
      %693 = vmatprep.mubr.bf16.mxu0 0
      %694 = vmatmul.mubr.bf16.gmra.mxu0 %v482
      %v695 = vpop.f32.mrf.mxu0
      %v696 = vadd.f32 %v286, %v695
      %v697 = vpop.f32.mrf.mxu0
      %v698 = vpop.f32.mrf.mxu0
      %v699 = vadd.f32 %v286, %v698
      %v700 = vpop.f32.mrf.mxu0
      %701 = vmatprep.mubr.bf16.mxu0 0
      %702 = vmatmul.mubr.bf16.gmra.mxu0 %v485
      %v703 = vpop.f32.mrf.mxu0
      %v704 = vadd.f32 %v286, %v703
      %v705 = vpop.f32.mrf.mxu0
      %v706 = vpop.f32.mrf.mxu0
      %v707 = vadd.f32 %v286, %v706
      %v708 = vpop.f32.mrf.mxu0
      %709 = vmatprep.mubr.bf16.mxu0 0
      %710 = vmatmul.mubr.bf16.gmra.mxu0 %v488
      %v711 = vpop.f32.mrf.mxu0
      %v712 = vadd.f32 %v286, %v711
      %v713 = vpop.f32.mrf.mxu0
      %v714 = vpop.f32.mrf.mxu0
      %v715 = vadd.f32 %v286, %v714
      %v716 = vpop.f32.mrf.mxu0
      %717 = vmatprep.mubr.bf16.mxu0 0
      %718 = vmatmul.mubr.bf16.gmra.mxu0 %v491
      %v719 = vpop.f32.mrf.mxu0
      %v720 = vadd.f32 %v286, %v719
      %v721 = vpop.f32.mrf.mxu0
      %v722 = vpop.f32.mrf.mxu0
      %v723 = vadd.f32 %v286, %v722
      %v724 = vpop.f32.mrf.mxu0
      %725 = vmatprep.mubr.bf16.mxu0 0
      %726 = vmatmul.mubr.bf16.gmra.mxu0 %v494
      %v727 = vpop.f32.mrf.mxu0
      %v728 = vadd.f32 %v286, %v727
      %v729 = vpop.f32.mrf.mxu0
      %v730 = vpop.f32.mrf.mxu0
      %v731 = vadd.f32 %v286, %v730
      %v732 = vpop.f32.mrf.mxu0
      %733 = vmatprep.mubr.bf16.mxu0 0
      %734 = vmatmul.mubr.bf16.gmra.mxu0 %v497
      %v735 = vpop.f32.mrf.mxu0
      %v736 = vadd.f32 %v286, %v735
      %v737 = vpop.f32.mrf.mxu0
      %v738 = vpop.f32.mrf.mxu0
      %v739 = vadd.f32 %v286, %v738
      %v740 = vpop.f32.mrf.mxu0
      %741 = vmatprep.mubr.bf16.mxu0 0
      %742 = vmatmul.mubr.bf16.gmra.mxu0 %v500
      %v743 = vpop.f32.mrf.mxu0
      %v744 = vadd.f32 %v286, %v743
      %v745 = vpop.f32.mrf.mxu0
      %v746 = vpop.f32.mrf.mxu0
      %v747 = vadd.f32 %v286, %v746
      %v748 = vpop.f32.mrf.mxu0
      %749 = vmatprep.mubr.bf16.mxu0 0
      %750 = vmatmul.mubr.bf16.gmra.mxu0 %v503
      %v751 = vpop.f32.mrf.mxu0
      %v752 = vadd.f32 %v286, %v751
      %v753 = vpop.f32.mrf.mxu0
      %v754 = vpop.f32.mrf.mxu0
      %v755 = vadd.f32 %v286, %v754
      %v756 = vpop.f32.mrf.mxu0
      %757 = vdwg.mxu0
      %vm758 = vcmp.gt.f32.partialorder %v544, 0.0
      %vm759 = vcmp.gt.f32.partialorder %v547, 0.0
      %vm760 = vcmp.gt.f32.partialorder %v552, 0.0
      %vm761 = vcmp.gt.f32.partialorder %v555, 0.0
      %vm762 = vcmp.gt.f32.partialorder %v560, 0.0
      %vm763 = vcmp.gt.f32.partialorder %v563, 0.0
      %vm764 = vcmp.gt.f32.partialorder %v568, 0.0
      %vm765 = vcmp.gt.f32.partialorder %v571, 0.0
      %vm766 = vcmp.gt.f32.partialorder %v576, 0.0
      %vm767 = vcmp.gt.f32.partialorder %v579, 0.0
      %vm768 = vcmp.gt.f32.partialorder %v584, 0.0
      %vm769 = vcmp.gt.f32.partialorder %v587, 0.0
      %vm770 = vcmp.gt.f32.partialorder %v592, 0.0
      %vm771 = vcmp.gt.f32.partialorder %v595, 0.0
      %vm772 = vcmp.gt.f32.partialorder %v600, 0.0
      %vm773 = vcmp.gt.f32.partialorder %v603, 0.0
      %vm774 = vcmp.gt.f32.partialorder %v608, 0.0
      %vm775 = vcmp.gt.f32.partialorder %v611, 0.0
      %vm776 = vcmp.gt.f32.partialorder %v616, 0.0
      %vm777 = vcmp.gt.f32.partialorder %v619, 0.0
      %vm778 = vcmp.gt.f32.partialorder %v624, 0.0
      %vm779 = vcmp.gt.f32.partialorder %v627, 0.0
      %vm780 = vcmp.gt.f32.partialorder %v632, 0.0
      %vm781 = vcmp.gt.f32.partialorder %v635, 0.0
      %vm782 = vcmp.gt.f32.partialorder %v640, 0.0
      %vm783 = vcmp.gt.f32.partialorder %v643, 0.0
      %vm784 = vcmp.gt.f32.partialorder %v648, 0.0
      %vm785 = vcmp.gt.f32.partialorder %v651, 0.0
      %vm786 = vcmp.gt.f32.partialorder %v656, 0.0
      %vm787 = vcmp.gt.f32.partialorder %v659, 0.0
      %vm788 = vcmp.gt.f32.partialorder %v664, 0.0
      %vm789 = vcmp.gt.f32.partialorder %v667, 0.0
      %vm790 = vcmp.gt.f32.partialorder %v672, 0.0
      %vm791 = vcmp.gt.f32.partialorder %v675, 0.0
      %vm792 = vcmp.gt.f32.partialorder %v680, 0.0
      %vm793 = vcmp.gt.f32.partialorder %v683, 0.0
      %vm794 = vcmp.gt.f32.partialorder %v688, 0.0
      %vm795 = vcmp.gt.f32.partialorder %v691, 0.0
      %vm796 = vcmp.gt.f32.partialorder %v696, 0.0
      %vm797 = vcmp.gt.f32.partialorder %v699, 0.0
      %vm798 = vcmp.gt.f32.partialorder %v704, 0.0
      %vm799 = vcmp.gt.f32.partialorder %v707, 0.0
      %vm800 = vcmp.gt.f32.partialorder %v712, 0.0
      %vm801 = vcmp.gt.f32.partialorder %v715, 0.0
      %vm802 = vcmp.gt.f32.partialorder %v720, 0.0
      %vm803 = vcmp.gt.f32.partialorder %v723, 0.0
      %vm804 = vcmp.gt.f32.partialorder %v728, 0.0
      %vm805 = vcmp.gt.f32.partialorder %v731, 0.0
      %vm806 = vcmp.gt.f32.partialorder %v736, 0.0
      %vm807 = vcmp.gt.f32.partialorder %v739, 0.0
      %vm808 = vcmp.gt.f32.partialorder %v744, 0.0
      %vm809 = vcmp.gt.f32.partialorder %v747, 0.0
      %vm810 = vcmp.gt.f32.partialorder %v752, 0.0
      %vm811 = vcmp.gt.f32.partialorder %v755, 0.0
      %v812 = vmul.f32 %v544, 0.1
      %v813 = vmul.f32 %v547, 0.1
      %v814 = vmul.f32 %v552, 0.1
      %v815 = vmul.f32 %v555, 0.1
      %v816 = vmul.f32 %v560, 0.1
      %v817 = vmul.f32 %v563, 0.1
      %v818 = vmul.f32 %v568, 0.1
      %v819 = vmul.f32 %v571, 0.1
      %v820 = vmul.f32 %v576, 0.1
      %v821 = vmul.f32 %v579, 0.1
      %v822 = vmul.f32 %v584, 0.1
      %v823 = vmul.f32 %v587, 0.1
      %v824 = vmul.f32 %v592, 0.1
      %v825 = vmul.f32 %v595, 0.1
      %v826 = vmul.f32 %v600, 0.1
      %v827 = vmul.f32 %v603, 0.1
      %v828 = vmul.f32 %v608, 0.1
      %v829 = vmul.f32 %v611, 0.1
      %v830 = vmul.f32 %v616, 0.1
      %v831 = vmul.f32 %v619, 0.1
      %v832 = vmul.f32 %v624, 0.1
      %v833 = vmul.f32 %v627, 0.1
      %v834 = vmul.f32 %v632, 0.1
      %v835 = vmul.f32 %v635, 0.1
      %v836 = vmul.f32 %v640, 0.1
      %v837 = vmul.f32 %v643, 0.1
      %v838 = vmul.f32 %v648, 0.1
      %v839 = vmul.f32 %v651, 0.1
      %v840 = vmul.f32 %v656, 0.1
      %v841 = vmul.f32 %v659, 0.1
      %v842 = vmul.f32 %v664, 0.1
      %v843 = vmul.f32 %v667, 0.1
      %v844 = vmul.f32 %v672, 0.1
      %v845 = vmul.f32 %v675, 0.1
      %v846 = vmul.f32 %v680, 0.1
      %v847 = vmul.f32 %v683, 0.1
      %v848 = vmul.f32 %v688, 0.1
      %v849 = vmul.f32 %v691, 0.1
      %v850 = vmul.f32 %v696, 0.1
      %v851 = vmul.f32 %v699, 0.1
      %v852 = vmul.f32 %v704, 0.1
      %v853 = vmul.f32 %v707, 0.1
      %v854 = vmul.f32 %v712, 0.1
      %v855 = vmul.f32 %v715, 0.1
      %v856 = vmul.f32 %v720, 0.1
      %v857 = vmul.f32 %v723, 0.1
      %v858 = vmul.f32 %v728, 0.1
      %v859 = vmul.f32 %v731, 0.1
      %v860 = vmul.f32 %v736, 0.1
      %v861 = vmul.f32 %v739, 0.1
      %v862 = vmul.f32 %v744, 0.1
      %v863 = vmul.f32 %v747, 0.1
      %v864 = vmul.f32 %v752, 0.1
      %v865 = vmul.f32 %v755, 0.1
      %v866 = vsel %vm758, %v544, %v812
      %v867 = vsel %vm759, %v547, %v813
      %v868 = vsel %vm760, %v552, %v814
      %v869 = vsel %vm761, %v555, %v815
      %v870 = vsel %vm762, %v560, %v816
      %v871 = vsel %vm763, %v563, %v817
      %v872 = vsel %vm764, %v568, %v818
      %v873 = vsel %vm765, %v571, %v819
      %v874 = vsel %vm766, %v576, %v820
      %v875 = vsel %vm767, %v579, %v821
      %v876 = vsel %vm768, %v584, %v822
      %v877 = vsel %vm769, %v587, %v823
      %v878 = vsel %vm770, %v592, %v824
      %v879 = vsel %vm771, %v595, %v825
      %v880 = vsel %vm772, %v600, %v826
      %v881 = vsel %vm773, %v603, %v827
      %v882 = vsel %vm774, %v608, %v828
      %v883 = vsel %vm775, %v611, %v829
      %v884 = vsel %vm776, %v616, %v830
      %v885 = vsel %vm777, %v619, %v831
      %v886 = vsel %vm778, %v624, %v832
      %v887 = vsel %vm779, %v627, %v833
      %v888 = vsel %vm780, %v632, %v834
      %v889 = vsel %vm781, %v635, %v835
      %v890 = vsel %vm782, %v640, %v836
      %v891 = vsel %vm783, %v643, %v837
      %v892 = vsel %vm784, %v648, %v838
      %v893 = vsel %vm785, %v651, %v839
      %v894 = vsel %vm786, %v656, %v840
      %v895 = vsel %vm787, %v659, %v841
      %v896 = vsel %vm788, %v664, %v842
      %v897 = vsel %vm789, %v667, %v843
      %v898 = vsel %vm790, %v672, %v844
      %v899 = vsel %vm791, %v675, %v845
      %v900 = vsel %vm792, %v680, %v846
      %v901 = vsel %vm793, %v683, %v847
      %v902 = vsel %vm794, %v688, %v848
      %v903 = vsel %vm795, %v691, %v849
      %v904 = vsel %vm796, %v696, %v850
      %v905 = vsel %vm797, %v699, %v851
      %v906 = vsel %vm798, %v704, %v852
      %v907 = vsel %vm799, %v707, %v853
      %v908 = vsel %vm800, %v712, %v854
      %v909 = vsel %vm801, %v715, %v855
      %v910 = vsel %vm802, %v720, %v856
      %v911 = vsel %vm803, %v723, %v857
      %v912 = vsel %vm804, %v728, %v858
      %v913 = vsel %vm805, %v731, %v859
      %v914 = vsel %vm806, %v736, %v860
      %v915 = vsel %vm807, %v739, %v861
      %v916 = vsel %vm808, %v744, %v862
      %v917 = vsel %vm809, %v747, %v863
      %v918 = vsel %vm810, %v752, %v864
      %v919 = vsel %vm811, %v755, %v865
      %v920 = vpack.c.bf16 %v867, %v866
      %v921 = vpack.c.bf16 %v869, %v868
      %v922 = vpack.c.bf16 %v871, %v870
      %v923 = vpack.c.bf16 %v873, %v872
      %v924 = vpack.c.bf16 %v875, %v874
      %v925 = vpack.c.bf16 %v877, %v876
      %v926 = vpack.c.bf16 %v879, %v878
      %v927 = vpack.c.bf16 %v881, %v880
      %v928 = vpack.c.bf16 %v883, %v882
      %v929 = vpack.c.bf16 %v885, %v884
      %v930 = vpack.c.bf16 %v887, %v886
      %v931 = vpack.c.bf16 %v889, %v888
      %v932 = vpack.c.bf16 %v891, %v890
      %v933 = vpack.c.bf16 %v893, %v892
      %v934 = vpack.c.bf16 %v895, %v894
      %v935 = vpack.c.bf16 %v897, %v896
      %v936 = vpack.c.bf16 %v899, %v898
      %v937 = vpack.c.bf16 %v901, %v900
      %v938 = vpack.c.bf16 %v903, %v902
      %v939 = vpack.c.bf16 %v905, %v904
      %v940 = vpack.c.bf16 %v907, %v906
      %v941 = vpack.c.bf16 %v909, %v908
      %v942 = vpack.c.bf16 %v911, %v910
      %v943 = vpack.c.bf16 %v913, %v912
      %v944 = vpack.c.bf16 %v915, %v914
      %v945 = vpack.c.bf16 %v917, %v916
      %v946 = vpack.c.bf16 %v919, %v918
      %v974 = vunpack.c.l.b16 %v920
      %v975 = vunpack.c.h.b16 %v920
      %v976 = vunpack.c.l.b16 %v921
      %v977 = vunpack.c.h.b16 %v921
      %v978 = vunpack.c.l.b16 %v922
      %v979 = vunpack.c.h.b16 %v922
      %v980 = vunpack.c.l.b16 %v923
      %v981 = vunpack.c.h.b16 %v923
      %v982 = vunpack.c.l.b16 %v924
      %v983 = vunpack.c.h.b16 %v924
      %v984 = vunpack.c.l.b16 %v925
      %v985 = vunpack.c.h.b16 %v925
      %v986 = vunpack.c.l.b16 %v926
      %v987 = vunpack.c.h.b16 %v926
      %v988 = vunpack.c.l.b16 %v927
      %v989 = vunpack.c.h.b16 %v927
      %v990 = vunpack.c.l.b16 %v928
      %v991 = vunpack.c.h.b16 %v928
      %v992 = vunpack.c.l.b16 %v929
      %v993 = vunpack.c.h.b16 %v929
      %v994 = vunpack.c.l.b16 %v930
      %v995 = vunpack.c.h.b16 %v930
      %v996 = vunpack.c.l.b16 %v931
      %v997 = vunpack.c.h.b16 %v931
      %v998 = vunpack.c.l.b16 %v932
      %v999 = vunpack.c.h.b16 %v932
      %v1000 = vunpack.c.l.b16 %v933
      %v1001 = vunpack.c.h.b16 %v933
      %v1002 = vunpack.c.l.b16 %v934
      %v1003 = vunpack.c.h.b16 %v934
      %v1004 = vunpack.c.l.b16 %v935
      %v1005 = vunpack.c.h.b16 %v935
      %v1006 = vunpack.c.l.b16 %v936
      %v1007 = vunpack.c.h.b16 %v936
      %v1008 = vunpack.c.l.b16 %v937
      %v1009 = vunpack.c.h.b16 %v937
      %v1010 = vunpack.c.l.b16 %v938
      %v1011 = vunpack.c.h.b16 %v938
      %v1012 = vunpack.c.l.b16 %v939
      %v1013 = vunpack.c.h.b16 %v939
      %v1014 = vunpack.c.l.b16 %v940
      %v1015 = vunpack.c.h.b16 %v940
      %v1016 = vunpack.c.l.b16 %v941
      %v1017 = vunpack.c.h.b16 %v941
      %v1018 = vunpack.c.l.b16 %v942
      %v1019 = vunpack.c.h.b16 %v942
      %v1020 = vunpack.c.l.b16 %v943
      %v1021 = vunpack.c.h.b16 %v943
      %v1022 = vunpack.c.l.b16 %v944
      %v1023 = vunpack.c.h.b16 %v944
      %v1024 = vunpack.c.l.b16 %v945
      %v1025 = vunpack.c.h.b16 %v945
      %v1026 = vunpack.c.l.b16 %v946
      %v1027 = vunpack.c.h.b16 %v946
      %v1028 = vpack.c.b16 %v974, %v974
      %v1029 = vpack.c.b16 %v975, %v975
      %v1030 = vpack.c.b16 %v976, %v976
      %v1031 = vpack.c.b16 %v977, %v977
      %v1032 = vpack.c.b16 %v978, %v978
      %v1033 = vpack.c.b16 %v979, %v979
      %v1034 = vpack.c.b16 %v980, %v980
      %v1035 = vpack.c.b16 %v981, %v981
      %v1036 = vpack.c.b16 %v982, %v982
      %v1037 = vpack.c.b16 %v983, %v983
      %v1038 = vpack.c.b16 %v984, %v984
      %v1039 = vpack.c.b16 %v985, %v985
      %v1040 = vpack.c.b16 %v986, %v986
      %v1041 = vpack.c.b16 %v987, %v987
      %v1042 = vpack.c.b16 %v988, %v988
      %v1043 = vpack.c.b16 %v989, %v989
      %v1044 = vpack.c.b16 %v990, %v990
      %v1045 = vpack.c.b16 %v991, %v991
      %v1046 = vpack.c.b16 %v992, %v992
      %v1047 = vpack.c.b16 %v993, %v993
      %v1048 = vpack.c.b16 %v994, %v994
      %v1049 = vpack.c.b16 %v995, %v995
      %v1050 = vpack.c.b16 %v996, %v996
      %v1051 = vpack.c.b16 %v997, %v997
      %v1052 = vpack.c.b16 %v998, %v998
      %v1053 = vpack.c.b16 %v999, %v999
      %v1054 = vpack.c.b16 %v1000, %v1000
      %v1055 = vpack.c.b16 %v1001, %v1001
      %v1056 = vpack.c.b16 %v1002, %v1002
      %v1057 = vpack.c.b16 %v1003, %v1003
      %v1058 = vpack.c.b16 %v1004, %v1004
      %v1059 = vpack.c.b16 %v1005, %v1005
      %v1060 = vpack.c.b16 %v1006, %v1006
      %v1061 = vpack.c.b16 %v1007, %v1007
      %v1062 = vpack.c.b16 %v1008, %v1008
      %v1063 = vpack.c.b16 %v1009, %v1009
      %v1064 = vpack.c.b16 %v1010, %v1010
      %v1065 = vpack.c.b16 %v1011, %v1011
      %v1066 = vpack.c.b16 %v1012, %v1012
      %v1067 = vpack.c.b16 %v1013, %v1013
      %v1068 = vpack.c.b16 %v1014, %v1014
      %v1069 = vpack.c.b16 %v1015, %v1015
      %v1070 = vpack.c.b16 %v1016, %v1016
      %v1071 = vpack.c.b16 %v1017, %v1017
      %v1072 = vpack.c.b16 %v1018, %v1018
      %v1073 = vpack.c.b16 %v1019, %v1019
      %v1074 = vpack.c.b16 %v1020, %v1020
      %v1075 = vpack.c.b16 %v1021, %v1021
      %v1076 = vpack.c.b16 %v1022, %v1022
      %v1077 = vpack.c.b16 %v1023, %v1023
      %v1078 = vpack.c.b16 %v1024, %v1024
      %v1079 = vpack.c.b16 %v1025, %v1025
      %v1080 = vpack.c.b16 %v1026, %v1026
      %v1081 = vpack.c.b16 %v1027, %v1027
      %vm1136 = vcmask 11264
      %1137 = vst.msk [vmem:[#allocation2] sm:$0xf] %vm1136, %v1028
      %1138 = vst.msk [vmem:[#allocation2 + $0x4] sm:$0xf] %vm1136, %v1029
      %1139 = vst.msk [vmem:[#allocation2 + $0x8] sm:$0xf] %vm1136, %v1030
      %1140 = vst.msk [vmem:[#allocation2 + $0xc] sm:$0xf] %vm1136, %v1031
      %1141 = vst.msk [vmem:[#allocation2 + $0x10] sm:$0xf] %vm1136, %v1032
      %1142 = vst.msk [vmem:[#allocation2 + $0x14] sm:$0xf] %vm1136, %v1033
      %1143 = vst.msk [vmem:[#allocation2 + $0x18] sm:$0xf] %vm1136, %v1034
      %1144 = vst.msk [vmem:[#allocation2 + $0x1c] sm:$0xf] %vm1136, %v1035
      %1145 = vst.msk [vmem:[#allocation2 + $0x20] sm:$0xf] %vm1136, %v1036
      %1146 = vst.msk [vmem:[#allocation2 + $0x24] sm:$0xf] %vm1136, %v1037
      %1147 = vst.msk [vmem:[#allocation2 + $0x28] sm:$0xf] %vm1136, %v1038
      %1148 = vst.msk [vmem:[#allocation2 + $0x2c] sm:$0xf] %vm1136, %v1039
      %1149 = vst.msk [vmem:[#allocation2 + $0x30] sm:$0xf] %vm1136, %v1040
      %1150 = vst.msk [vmem:[#allocation2 + $0x34] sm:$0xf] %vm1136, %v1041
      %1151 = vst.msk [vmem:[#allocation2 + $0x38] sm:$0xf] %vm1136, %v1042
      %1152 = vst.msk [vmem:[#allocation2 + $0x3c] sm:$0xf] %vm1136, %v1043
      %1153 = vst.msk [vmem:[#allocation2 + $0x40] sm:$0xf] %vm1136, %v1044
      %1154 = vst.msk [vmem:[#allocation2 + $0x44] sm:$0xf] %vm1136, %v1045
      %1155 = vst.msk [vmem:[#allocation2 + $0x48] sm:$0xf] %vm1136, %v1046
      %1156 = vst.msk [vmem:[#allocation2 + $0x4c] sm:$0xf] %vm1136, %v1047
      %1157 = vst.msk [vmem:[#allocation2 + $0x50] sm:$0xf] %vm1136, %v1048
      %1158 = vst.msk [vmem:[#allocation2 + $0x54] sm:$0xf] %vm1136, %v1049
      %1159 = vst.msk [vmem:[#allocation2 + $0x58] sm:$0xf] %vm1136, %v1050
      %1160 = vst.msk [vmem:[#allocation2 + $0x5c] sm:$0xf] %vm1136, %v1051
      %1161 = vst.msk [vmem:[#allocation2 + $0x60] sm:$0xf] %vm1136, %v1052
      %1162 = vst.msk [vmem:[#allocation2 + $0x64] sm:$0xf] %vm1136, %v1053
      %1163 = vst.msk [vmem:[#allocation2 + $0x68] sm:$0xf] %vm1136, %v1054
      %1164 = vst.msk [vmem:[#allocation2 + $0x6c] sm:$0xf] %vm1136, %v1055
      %1165 = vst.msk [vmem:[#allocation2 + $0x70] sm:$0xf] %vm1136, %v1056
      %1166 = vst.msk [vmem:[#allocation2 + $0x74] sm:$0xf] %vm1136, %v1057
      %1167 = vst.msk [vmem:[#allocation2 + $0x78] sm:$0xf] %vm1136, %v1058
      %1168 = vst.msk [vmem:[#allocation2 + $0x7c] sm:$0xf] %vm1136, %v1059
      %1169 = vst.msk [vmem:[#allocation2 + $0x80] sm:$0xf] %vm1136, %v1060
      %1170 = vst.msk [vmem:[#allocation2 + $0x84] sm:$0xf] %vm1136, %v1061
      %1171 = vst.msk [vmem:[#allocation2 + $0x88] sm:$0xf] %vm1136, %v1062
      %1172 = vst.msk [vmem:[#allocation2 + $0x8c] sm:$0xf] %vm1136, %v1063
      %1173 = vst.msk [vmem:[#allocation2 + $0x90] sm:$0xf] %vm1136, %v1064
      %1174 = vst.msk [vmem:[#allocation2 + $0x94] sm:$0xf] %vm1136, %v1065
      %1175 = vst.msk [vmem:[#allocation2 + $0x98] sm:$0xf] %vm1136, %v1066
      %1176 = vst.msk [vmem:[#allocation2 + $0x9c] sm:$0xf] %vm1136, %v1067
      %1177 = vst.msk [vmem:[#allocation2 + $0xa0] sm:$0xf] %vm1136, %v1068
      %1178 = vst.msk [vmem:[#allocation2 + $0xa4] sm:$0xf] %vm1136, %v1069
      %1179 = vst.msk [vmem:[#allocation2 + $0xa8] sm:$0xf] %vm1136, %v1070
      %1180 = vst.msk [vmem:[#allocation2 + $0xac] sm:$0xf] %vm1136, %v1071
      %1181 = vst.msk [vmem:[#allocation2 + $0xb0] sm:$0xf] %vm1136, %v1072
      %1182 = vst.msk [vmem:[#allocation2 + $0xb4] sm:$0xf] %vm1136, %v1073
      %1183 = vst.msk [vmem:[#allocation2 + $0xb8] sm:$0xf] %vm1136, %v1074
      %1184 = vst.msk [vmem:[#allocation2 + $0xbc] sm:$0xf] %vm1136, %v1075
      %1185 = vst.msk [vmem:[#allocation2 + $0xc0] sm:$0xf] %vm1136, %v1076
      %1186 = vst.msk [vmem:[#allocation2 + $0xc4] sm:$0xf] %vm1136, %v1077
      %1187 = vst.msk [vmem:[#allocation2 + $0xc8] sm:$0xf] %vm1136, %v1078
      %1188 = vst.msk [vmem:[#allocation2 + $0xcc] sm:$0xf] %vm1136, %v1079
      %1189 = vst.msk [vmem:[#allocation2 + $0xd0] sm:$0xf] %vm1136, %v1080
      %1190 = vst.msk [vmem:[#allocation2 + $0xd4] sm:$0xf] %vm1136, %v1081
      %1191 = vst.msk [vmem:[#allocation2 + $0xd8] sm:$0xf] %vm1136, 0
      %v1192 = vld [vmem:[#allocation2] sm:$0xf]
      %v1193 = vld [vmem:[#allocation2 + $0x4] sm:$0xf]
      %v1194 = vld [vmem:[#allocation2 + $0x8] sm:$0xf]
      %v1195 = vld [vmem:[#allocation2 + $0xc] sm:$0xf]
      %v1196 = vld [vmem:[#allocation2 + $0x10] sm:$0xf]
      %v1197 = vld [vmem:[#allocation2 + $0x14] sm:$0xf]
      %v1198 = vld [vmem:[#allocation2 + $0x18] sm:$0xf]
      %v1199 = vld [vmem:[#allocation2 + $0x1c] sm:$0xf]
      %v1200 = vld [vmem:[#allocation2 + $0x20] sm:$0xf]
      %v1201 = vld [vmem:[#allocation2 + $0x24] sm:$0xf]
      %v1202 = vld [vmem:[#allocation2 + $0x28] sm:$0xf]
      %v1203 = vld [vmem:[#allocation2 + $0x2c] sm:$0xf]
      %v1204 = vld [vmem:[#allocation2 + $0x30] sm:$0xf]
      %v1205 = vld [vmem:[#allocation2 + $0x34] sm:$0xf]
      %v1206 = vld [vmem:[#allocation2 + $0x38] sm:$0xf]
      %v1207 = vld [vmem:[#allocation2 + $0x3c] sm:$0xf]
      %v1208 = vld [vmem:[#allocation2 + $0x40] sm:$0xf]
      %v1209 = vld [vmem:[#allocation2 + $0x44] sm:$0xf]
      %v1210 = vld [vmem:[#allocation2 + $0x48] sm:$0xf]
      %v1211 = vld [vmem:[#allocation2 + $0x4c] sm:$0xf]
      %v1212 = vld [vmem:[#allocation2 + $0x50] sm:$0xf]
      %v1213 = vld [vmem:[#allocation2 + $0x54] sm:$0xf]
      %v1214 = vld [vmem:[#allocation2 + $0x58] sm:$0xf]
      %v1215 = vld [vmem:[#allocation2 + $0x5c] sm:$0xf]
      %v1216 = vld [vmem:[#allocation2 + $0x60] sm:$0xf]
      %v1217 = vld [vmem:[#allocation2 + $0x64] sm:$0xf]
      %v1218 = vld [vmem:[#allocation2 + $0x68] sm:$0xf]
      %v1219 = vld [vmem:[#allocation2 + $0x6c] sm:$0xf]
      %v1220 = vld [vmem:[#allocation2 + $0x70] sm:$0xf]
      %v1221 = vld [vmem:[#allocation2 + $0x74] sm:$0xf]
      %v1222 = vld [vmem:[#allocation2 + $0x78] sm:$0xf]
      %v1223 = vld [vmem:[#allocation2 + $0x7c] sm:$0xf]
      %v1224 = vld [vmem:[#allocation2 + $0x80] sm:$0xf]
      %v1225 = vld [vmem:[#allocation2 + $0x84] sm:$0xf]
      %v1226 = vld [vmem:[#allocation2 + $0x88] sm:$0xf]
      %v1227 = vld [vmem:[#allocation2 + $0x8c] sm:$0xf]
      %v1228 = vld [vmem:[#allocation2 + $0x90] sm:$0xf]
      %v1229 = vld [vmem:[#allocation2 + $0x94] sm:$0xf]
      %v1230 = vld [vmem:[#allocation2 + $0x98] sm:$0xf]
      %v1231 = vld [vmem:[#allocation2 + $0x9c] sm:$0xf]
      %v1232 = vld [vmem:[#allocation2 + $0xa0] sm:$0xf]
      %v1233 = vld [vmem:[#allocation2 + $0xa4] sm:$0xf]
      %v1234 = vld [vmem:[#allocation2 + $0xa8] sm:$0xf]
      %v1235 = vld [vmem:[#allocation2 + $0xac] sm:$0xf]
      %v1236 = vld [vmem:[#allocation2 + $0xb0] sm:$0xf]
      %v1237 = vld [vmem:[#allocation2 + $0xb4] sm:$0xf]
      %v1238 = vld [vmem:[#allocation2 + $0xb8] sm:$0xf]
      %v1239 = vld [vmem:[#allocation2 + $0xbc] sm:$0xf]
      %v1240 = vld [vmem:[%s3] sm:$0x1]
      %v1289 = vunpack.c.l.b16 %v1192
      %v1290 = vunpack.c.l.b16 %v1193
      %v1291 = vunpack.c.l.b16 %v1194
      %v1292 = vunpack.c.l.b16 %v1195
      %v1293 = vunpack.c.l.b16 %v1196
      %v1294 = vunpack.c.l.b16 %v1197
      %v1295 = vunpack.c.l.b16 %v1198
      %v1296 = vunpack.c.l.b16 %v1199
      %v1297 = vunpack.c.l.b16 %v1200
      %v1298 = vunpack.c.l.b16 %v1201
      %v1299 = vunpack.c.l.b16 %v1202
      %v1300 = vunpack.c.l.b16 %v1203
      %v1301 = vunpack.c.l.b16 %v1204
      %v1302 = vunpack.c.l.b16 %v1205
      %v1303 = vunpack.c.l.b16 %v1206
      %v1304 = vunpack.c.l.b16 %v1207
      %v1305 = vunpack.c.l.b16 %v1208
      %v1306 = vunpack.c.l.b16 %v1209
      %v1307 = vunpack.c.l.b16 %v1210
      %v1308 = vunpack.c.l.b16 %v1211
      %v1309 = vunpack.c.l.b16 %v1212
      %v1310 = vunpack.c.l.b16 %v1213
      %v1311 = vunpack.c.l.b16 %v1214
      %v1312 = vunpack.c.l.b16 %v1215
      %v1313 = vunpack.c.l.b16 %v1216
      %v1314 = vunpack.c.l.b16 %v1217
      %v1315 = vunpack.c.l.b16 %v1218
      %v1316 = vunpack.c.l.b16 %v1219
      %v1317 = vunpack.c.l.b16 %v1220
      %v1318 = vunpack.c.l.b16 %v1221
      %v1319 = vunpack.c.l.b16 %v1222
      %v1320 = vunpack.c.l.b16 %v1223
      %v1321 = vunpack.c.l.b16 %v1224
      %v1322 = vunpack.c.l.b16 %v1225
      %v1323 = vunpack.c.l.b16 %v1226
      %v1324 = vunpack.c.l.b16 %v1227
      %v1325 = vunpack.c.l.b16 %v1228
      %v1326 = vunpack.c.l.b16 %v1229
      %v1327 = vunpack.c.l.b16 %v1230
      %v1328 = vunpack.c.l.b16 %v1231
      %v1329 = vunpack.c.l.b16 %v1232
      %v1330 = vunpack.c.l.b16 %v1233
      %v1331 = vunpack.c.l.b16 %v1234
      %v1332 = vunpack.c.l.b16 %v1235
      %v1333 = vunpack.c.l.b16 %v1236
      %v1334 = vunpack.c.l.b16 %v1237
      %v1335 = vunpack.c.l.b16 %v1238
      %v1336 = vunpack.c.l.b16 %v1239
      %v1337 = vpack.c.b16 %v1290, %v1289
      %v1338 = vpack.c.b16 %v1292, %v1291
      %v1339 = vpack.c.b16 %v1294, %v1293
      %v1340 = vpack.c.b16 %v1296, %v1295
      %v1341 = vpack.c.b16 %v1298, %v1297
      %v1342 = vpack.c.b16 %v1300, %v1299
      %v1343 = vpack.c.b16 %v1302, %v1301
      %v1344 = vpack.c.b16 %v1304, %v1303
      %v1345 = vpack.c.b16 %v1306, %v1305
      %v1346 = vpack.c.b16 %v1308, %v1307
      %v1347 = vpack.c.b16 %v1310, %v1309
      %v1348 = vpack.c.b16 %v1312, %v1311
      %v1349 = vpack.c.b16 %v1314, %v1313
      %v1350 = vpack.c.b16 %v1316, %v1315
      %v1351 = vpack.c.b16 %v1318, %v1317
      %v1352 = vpack.c.b16 %v1320, %v1319
      %v1353 = vpack.c.b16 %v1322, %v1321
      %v1354 = vpack.c.b16 %v1324, %v1323
      %v1355 = vpack.c.b16 %v1326, %v1325
      %v1356 = vpack.c.b16 %v1328, %v1327
      %v1357 = vpack.c.b16 %v1330, %v1329
      %v1358 = vpack.c.b16 %v1332, %v1331
      %v1359 = vpack.c.b16 %v1334, %v1333
      %v1360 = vpack.c.b16 %v1336, %v1335
      %vm1361 = vcmask 15360
      %v1363 = vsel %vm1361, %v1337, 0
      %v1366 = vsel %vm1361, %v1338, 0
      %v1369 = vsel %vm1361, %v1339, 0
      %v1372 = vsel %vm1361, %v1340, 0
      %v1375 = vsel %vm1361, %v1341, 0
      %v1378 = vsel %vm1361, %v1342, 0
      %v1381 = vsel %vm1361, %v1343, 0
      %v1384 = vsel %vm1361, %v1344, 0
      %v1387 = vsel %vm1361, %v1345, 0
      %v1390 = vsel %vm1361, %v1346, 0
      %v1393 = vsel %vm1361, %v1347, 0
      %v1396 = vsel %vm1361, %v1348, 0
      %v1399 = vsel %vm1361, %v1349, 0
      %v1402 = vsel %vm1361, %v1350, 0
      %v1405 = vsel %vm1361, %v1351, 0
      %v1408 = vsel %vm1361, %v1352, 0
      %v1411 = vsel %vm1361, %v1353, 0
      %v1414 = vsel %vm1361, %v1354, 0
      %v1417 = vsel %vm1361, %v1355, 0
      %v1420 = vsel %vm1361, %v1356, 0
      %v1423 = vsel %vm1361, %v1357, 0
      %v1426 = vsel %vm1361, %v1358, 0
      %v1429 = vsel %vm1361, %v1359, 0
      %v1432 = vsel %vm1361, %v1360, 0
      %vm1434 = vcmask 1040384
      %v1436 = vsel %vm1434, %v1240, 0
      %1438 = vmatprep.subr.bf16.mxu0 0
      %1439 = vmatpush1.bf16.msra.mxu0 0
      %1440 = vmatprep.subr.bf16.mxu0 0
      %1441 = vmatpush1.bf16.msra.mxu0 0
      %1442 = vmatprep.subr.bf16.mxu0 0
      %1443 = vmatpush1.bf16.msra.mxu0 0
      %1444 = vmatprep.subr.bf16.mxu0 0
      %1445 = vmatpush1.bf16.msra.mxu0 0
      %1446 = vmatprep.subr.bf16.mxu0 0
      %1447 = vmatpush1.bf16.msra.mxu0 0
      %1448 = vmatprep.subr.bf16.mxu0 0
      %1449 = vmatpush1.bf16.msra.mxu0 0
      %1450 = vmatprep.subr.bf16.mxu0 0
      %1451 = vmatpush1.bf16.msra.mxu0 0
      %1452 = vmatprep.subr.bf16.mxu0 0
      %1453 = vmatpush1.bf16.msra.mxu0 %v1436
      %1454 = vmatprep.subr.bf16.mxu0 0
      %1455 = vmatpush2.bf16.msra.mxu0 0
      %1456 = vmatprep.subr.bf16.mxu0 0
      %1457 = vmatpush2.bf16.msra.mxu0 0
      %1458 = vmatprep.subr.bf16.mxu0 0
      %1459 = vmatpush2.bf16.msra.mxu0 0
      %1460 = vmatprep.subr.bf16.mxu0 0
      %1461 = vmatpush2.bf16.msra.mxu0 0
      %1462 = vmatprep.subr.bf16.mxu0 0
      %1463 = vmatpush2.bf16.msra.mxu0 0
      %1464 = vmatprep.subr.bf16.mxu0 0
      %1465 = vmatpush2.bf16.msra.mxu0 0
      %1466 = vmatprep.subr.bf16.mxu0 0
      %1467 = vmatpush2.bf16.msra.mxu0 0
      %1468 = vmatprep.subr.bf16.mxu0 0
      %1469 = vmatpush2.bf16.msra.mxu0 0
      %1470 = vmatprep.mubr.bf16.mxu0 0
      %1471 = vmatmul.mubr.bf16.gmra.mxu0 %v1363
      %v1472 = vpop.f32.mrf.mxu0
      %v1473 = vadd.f32 0.0, %v1472
      %v1474 = vpop.f32.mrf.mxu0
      %v1475 = vpop.f32.mrf.mxu0
      %v1476 = vadd.f32 0.0, %v1475
      %v1477 = vpop.f32.mrf.mxu0
      %1478 = vmatprep.mubr.bf16.mxu0 0
      %1479 = vmatmul.mubr.bf16.gmra.mxu0 %v1366
      %v1480 = vpop.f32.mrf.mxu0
      %v1481 = vadd.f32 0.0, %v1480
      %v1482 = vpop.f32.mrf.mxu0
      %v1483 = vpop.f32.mrf.mxu0
      %v1484 = vadd.f32 0.0, %v1483
      %v1485 = vpop.f32.mrf.mxu0
      %1486 = vmatprep.mubr.bf16.mxu0 0
      %1487 = vmatmul.mubr.bf16.gmra.mxu0 %v1369
      %v1488 = vpop.f32.mrf.mxu0
      %v1489 = vadd.f32 0.0, %v1488
      %v1490 = vpop.f32.mrf.mxu0
      %v1491 = vpop.f32.mrf.mxu0
      %v1492 = vadd.f32 0.0, %v1491
      %v1493 = vpop.f32.mrf.mxu0
      %1494 = vmatprep.mubr.bf16.mxu0 0
      %1495 = vmatmul.mubr.bf16.gmra.mxu0 %v1372
      %v1496 = vpop.f32.mrf.mxu0
      %v1497 = vadd.f32 0.0, %v1496
      %v1498 = vpop.f32.mrf.mxu0
      %v1499 = vpop.f32.mrf.mxu0
      %v1500 = vadd.f32 0.0, %v1499
      %v1501 = vpop.f32.mrf.mxu0
      %1502 = vmatprep.mubr.bf16.mxu0 0
      %1503 = vmatmul.mubr.bf16.gmra.mxu0 %v1375
      %v1504 = vpop.f32.mrf.mxu0
      %v1505 = vadd.f32 0.0, %v1504
      %v1506 = vpop.f32.mrf.mxu0
      %v1507 = vpop.f32.mrf.mxu0
      %v1508 = vadd.f32 0.0, %v1507
      %v1509 = vpop.f32.mrf.mxu0
      %1510 = vmatprep.mubr.bf16.mxu0 0
      %1511 = vmatmul.mubr.bf16.gmra.mxu0 %v1378
      %v1512 = vpop.f32.mrf.mxu0
      %v1513 = vadd.f32 0.0, %v1512
      %v1514 = vpop.f32.mrf.mxu0
      %v1515 = vpop.f32.mrf.mxu0
      %v1516 = vadd.f32 0.0, %v1515
      %v1517 = vpop.f32.mrf.mxu0
      %1518 = vmatprep.mubr.bf16.mxu0 0
      %1519 = vmatmul.mubr.bf16.gmra.mxu0 %v1381
      %v1520 = vpop.f32.mrf.mxu0
      %v1521 = vadd.f32 0.0, %v1520
      %v1522 = vpop.f32.mrf.mxu0
      %v1523 = vpop.f32.mrf.mxu0
      %v1524 = vadd.f32 0.0, %v1523
      %v1525 = vpop.f32.mrf.mxu0
      %1526 = vmatprep.mubr.bf16.mxu0 0
      %1527 = vmatmul.mubr.bf16.gmra.mxu0 %v1384
      %v1528 = vpop.f32.mrf.mxu0
      %v1529 = vadd.f32 0.0, %v1528
      %v1530 = vpop.f32.mrf.mxu0
      %v1531 = vpop.f32.mrf.mxu0
      %v1532 = vadd.f32 0.0, %v1531
      %v1533 = vpop.f32.mrf.mxu0
      %1534 = vmatprep.mubr.bf16.mxu0 0
      %1535 = vmatmul.mubr.bf16.gmra.mxu0 %v1387
      %v1536 = vpop.f32.mrf.mxu0
      %v1537 = vadd.f32 0.0, %v1536
      %v1538 = vpop.f32.mrf.mxu0
      %v1539 = vpop.f32.mrf.mxu0
      %v1540 = vadd.f32 0.0, %v1539
      %v1541 = vpop.f32.mrf.mxu0
      %1542 = vmatprep.mubr.bf16.mxu0 0
      %1543 = vmatmul.mubr.bf16.gmra.mxu0 %v1390
      %v1544 = vpop.f32.mrf.mxu0
      %v1545 = vadd.f32 0.0, %v1544
      %v1546 = vpop.f32.mrf.mxu0
      %v1547 = vpop.f32.mrf.mxu0
      %v1548 = vadd.f32 0.0, %v1547
      %v1549 = vpop.f32.mrf.mxu0
      %1550 = vmatprep.mubr.bf16.mxu0 0
      %1551 = vmatmul.mubr.bf16.gmra.mxu0 %v1393
      %v1552 = vpop.f32.mrf.mxu0
      %v1553 = vadd.f32 0.0, %v1552
      %v1554 = vpop.f32.mrf.mxu0
      %v1555 = vpop.f32.mrf.mxu0
      %v1556 = vadd.f32 0.0, %v1555
      %v1557 = vpop.f32.mrf.mxu0
      %1558 = vmatprep.mubr.bf16.mxu0 0
      %1559 = vmatmul.mubr.bf16.gmra.mxu0 %v1396
      %v1560 = vpop.f32.mrf.mxu0
      %v1561 = vadd.f32 0.0, %v1560
      %v1562 = vpop.f32.mrf.mxu0
      %v1563 = vpop.f32.mrf.mxu0
      %v1564 = vadd.f32 0.0, %v1563
      %v1565 = vpop.f32.mrf.mxu0
      %1566 = vmatprep.mubr.bf16.mxu0 0
      %1567 = vmatmul.mubr.bf16.gmra.mxu0 %v1399
      %v1568 = vpop.f32.mrf.mxu0
      %v1569 = vadd.f32 0.0, %v1568
      %v1570 = vpop.f32.mrf.mxu0
      %v1571 = vpop.f32.mrf.mxu0
      %v1572 = vadd.f32 0.0, %v1571
      %v1573 = vpop.f32.mrf.mxu0
      %1574 = vmatprep.mubr.bf16.mxu0 0
      %1575 = vmatmul.mubr.bf16.gmra.mxu0 %v1402
      %v1576 = vpop.f32.mrf.mxu0
      %v1577 = vadd.f32 0.0, %v1576
      %v1578 = vpop.f32.mrf.mxu0
      %v1579 = vpop.f32.mrf.mxu0
      %v1580 = vadd.f32 0.0, %v1579
      %v1581 = vpop.f32.mrf.mxu0
      %1582 = vmatprep.mubr.bf16.mxu0 0
      %1583 = vmatmul.mubr.bf16.gmra.mxu0 %v1405
      %v1584 = vpop.f32.mrf.mxu0
      %v1585 = vadd.f32 0.0, %v1584
      %v1586 = vpop.f32.mrf.mxu0
      %v1587 = vpop.f32.mrf.mxu0
      %v1588 = vadd.f32 0.0, %v1587
      %v1589 = vpop.f32.mrf.mxu0
      %1590 = vmatprep.mubr.bf16.mxu0 0
      %1591 = vmatmul.mubr.bf16.gmra.mxu0 %v1408
      %v1592 = vpop.f32.mrf.mxu0
      %v1593 = vadd.f32 0.0, %v1592
      %v1594 = vpop.f32.mrf.mxu0
      %v1595 = vpop.f32.mrf.mxu0
      %v1596 = vadd.f32 0.0, %v1595
      %v1597 = vpop.f32.mrf.mxu0
      %1598 = vmatprep.mubr.bf16.mxu0 0
      %1599 = vmatmul.mubr.bf16.gmra.mxu0 %v1411
      %v1600 = vpop.f32.mrf.mxu0
      %v1601 = vadd.f32 0.0, %v1600
      %v1602 = vpop.f32.mrf.mxu0
      %v1603 = vpop.f32.mrf.mxu0
      %v1604 = vadd.f32 0.0, %v1603
      %v1605 = vpop.f32.mrf.mxu0
      %1606 = vmatprep.mubr.bf16.mxu0 0
      %1607 = vmatmul.mubr.bf16.gmra.mxu0 %v1414
      %v1608 = vpop.f32.mrf.mxu0
      %v1609 = vadd.f32 0.0, %v1608
      %v1610 = vpop.f32.mrf.mxu0
      %v1611 = vpop.f32.mrf.mxu0
      %v1612 = vadd.f32 0.0, %v1611
      %v1613 = vpop.f32.mrf.mxu0
      %1614 = vmatprep.mubr.bf16.mxu0 0
      %1615 = vmatmul.mubr.bf16.gmra.mxu0 %v1417
      %v1616 = vpop.f32.mrf.mxu0
      %v1617 = vadd.f32 0.0, %v1616
      %v1618 = vpop.f32.mrf.mxu0
      %v1619 = vpop.f32.mrf.mxu0
      %v1620 = vadd.f32 0.0, %v1619
      %v1621 = vpop.f32.mrf.mxu0
      %1622 = vmatprep.mubr.bf16.mxu0 0
      %1623 = vmatmul.mubr.bf16.gmra.mxu0 %v1420
      %v1624 = vpop.f32.mrf.mxu0
      %v1625 = vadd.f32 0.0, %v1624
      %v1626 = vpop.f32.mrf.mxu0
      %v1627 = vpop.f32.mrf.mxu0
      %v1628 = vadd.f32 0.0, %v1627
      %v1629 = vpop.f32.mrf.mxu0
      %1630 = vmatprep.mubr.bf16.mxu0 0
      %1631 = vmatmul.mubr.bf16.gmra.mxu0 %v1423
      %v1632 = vpop.f32.mrf.mxu0
      %v1633 = vadd.f32 0.0, %v1632
      %v1634 = vpop.f32.mrf.mxu0
      %v1635 = vpop.f32.mrf.mxu0
      %v1636 = vadd.f32 0.0, %v1635
      %v1637 = vpop.f32.mrf.mxu0
      %1638 = vmatprep.mubr.bf16.mxu0 0
      %1639 = vmatmul.mubr.bf16.gmra.mxu0 %v1426
      %v1640 = vpop.f32.mrf.mxu0
      %v1641 = vadd.f32 0.0, %v1640
      %v1642 = vpop.f32.mrf.mxu0
      %v1643 = vpop.f32.mrf.mxu0
      %v1644 = vadd.f32 0.0, %v1643
      %v1645 = vpop.f32.mrf.mxu0
      %1646 = vmatprep.mubr.bf16.mxu0 0
      %1647 = vmatmul.mubr.bf16.gmra.mxu0 %v1429
      %v1648 = vpop.f32.mrf.mxu0
      %v1649 = vadd.f32 0.0, %v1648
      %v1650 = vpop.f32.mrf.mxu0
      %v1651 = vpop.f32.mrf.mxu0
      %v1652 = vadd.f32 0.0, %v1651
      %v1653 = vpop.f32.mrf.mxu0
      %1654 = vmatprep.mubr.bf16.mxu0 0
      %1655 = vmatmul.mubr.bf16.gmra.mxu0 %v1432
      %v1656 = vpop.f32.mrf.mxu0
      %v1657 = vadd.f32 0.0, %v1656
      %v1658 = vpop.f32.mrf.mxu0
      %v1659 = vpop.f32.mrf.mxu0
      %v1660 = vadd.f32 0.0, %v1659
      %v1661 = vpop.f32.mrf.mxu0
      %1662 = vdwg.mxu0
      %1663 = vst.msk [vmem:[#allocation3] sm:$0xff] %vm423, %v1473
      %1664 = vst.msk [vmem:[#allocation3 + $0x8] sm:$0xff] %vm423, %v1476
      %1665 = vst.msk [vmem:[#allocation3 + $0x10] sm:$0xff] %vm423, %v1481
      %1666 = vst.msk [vmem:[#allocation3 + $0x18] sm:$0xff] %vm423, %v1484
      %1667 = vst.msk [vmem:[#allocation3 + $0x20] sm:$0xff] %vm423, %v1489
      %1668 = vst.msk [vmem:[#allocation3 + $0x28] sm:$0xff] %vm423, %v1492
      %1669 = vst.msk [vmem:[#allocation3 + $0x30] sm:$0xff] %vm423, %v1497
      %1670 = vst.msk [vmem:[#allocation3 + $0x38] sm:$0xff] %vm423, %v1500
      %1671 = vst.msk [vmem:[#allocation3 + $0x40] sm:$0xff] %vm423, %v1505
      %1672 = vst.msk [vmem:[#allocation3 + $0x48] sm:$0xff] %vm423, %v1508
      %1673 = vst.msk [vmem:[#allocation3 + $0x50] sm:$0xff] %vm423, %v1513
      %1674 = vst.msk [vmem:[#allocation3 + $0x58] sm:$0xff] %vm423, %v1516
      %1675 = vst.msk [vmem:[#allocation3 + $0x60] sm:$0xff] %vm423, %v1521
      %1676 = vst.msk [vmem:[#allocation3 + $0x68] sm:$0xff] %vm423, %v1524
      %1677 = vst.msk [vmem:[#allocation3 + $0x70] sm:$0xff] %vm423, %v1529
      %1678 = vst.msk [vmem:[#allocation3 + $0x78] sm:$0xff] %vm423, %v1532
      %1679 = vst.msk [vmem:[#allocation3 + $0x80] sm:$0xff] %vm423, %v1537
      %1680 = vst.msk [vmem:[#allocation3 + $0x88] sm:$0xff] %vm423, %v1540
      %1681 = vst.msk [vmem:[#allocation3 + $0x90] sm:$0xff] %vm423, %v1545
      %1682 = vst.msk [vmem:[#allocation3 + $0x98] sm:$0xff] %vm423, %v1548
      %1683 = vst.msk [vmem:[#allocation3 + $0xa0] sm:$0xff] %vm423, %v1553
      %1684 = vst.msk [vmem:[#allocation3 + $0xa8] sm:$0xff] %vm423, %v1556
      %1685 = vst.msk [vmem:[#allocation3 + $0xb0] sm:$0xff] %vm423, %v1561
      %1686 = vst.msk [vmem:[#allocation3 + $0xb8] sm:$0xff] %vm423, %v1564
      %1687 = vst.msk [vmem:[#allocation3 + $0xc0] sm:$0xff] %vm423, %v1569
      %1688 = vst.msk [vmem:[#allocation3 + $0xc8] sm:$0xff] %vm423, %v1572
      %1689 = vst.msk [vmem:[#allocation3 + $0xd0] sm:$0xff] %vm423, %v1577
      %1690 = vst.msk [vmem:[#allocation3 + $0xd8] sm:$0xff] %vm423, %v1580
      %1691 = vst.msk [vmem:[#allocation3 + $0xe0] sm:$0xff] %vm423, %v1585
      %1692 = vst.msk [vmem:[#allocation3 + $0xe8] sm:$0xff] %vm423, %v1588
      %1693 = vst.msk [vmem:[#allocation3 + $0xf0] sm:$0xff] %vm423, %v1593
      %1694 = vst.msk [vmem:[#allocation3 + $0xf8] sm:$0xff] %vm423, %v1596
      %1695 = vst.msk [vmem:[#allocation3 + $0x100] sm:$0xff] %vm423, %v1601
      %1696 = vst.msk [vmem:[#allocation3 + $0x108] sm:$0xff] %vm423, %v1604
      %1697 = vst.msk [vmem:[#allocation3 + $0x110] sm:$0xff] %vm423, %v1609
      %1698 = vst.msk [vmem:[#allocation3 + $0x118] sm:$0xff] %vm423, %v1612
      %1699 = vst.msk [vmem:[#allocation3 + $0x120] sm:$0xff] %vm423, %v1617
      %1700 = vst.msk [vmem:[#allocation3 + $0x128] sm:$0xff] %vm423, %v1620
      %1701 = vst.msk [vmem:[#allocation3 + $0x130] sm:$0xff] %vm423, %v1625
      %1702 = vst.msk [vmem:[#allocation3 + $0x138] sm:$0xff] %vm423, %v1628
      %1703 = vst.msk [vmem:[#allocation3 + $0x140] sm:$0xff] %vm423, %v1633
      %1704 = vst.msk [vmem:[#allocation3 + $0x148] sm:$0xff] %vm423, %v1636
      %1705 = vst.msk [vmem:[#allocation3 + $0x150] sm:$0xff] %vm423, %v1641
      %1706 = vst.msk [vmem:[#allocation3 + $0x158] sm:$0xff] %vm423, %v1644
      %1707 = vst.msk [vmem:[#allocation3 + $0x160] sm:$0xff] %vm423, %v1649
      %1708 = vst.msk [vmem:[#allocation3 + $0x168] sm:$0xff] %vm423, %v1652
      %1709 = vst.msk [vmem:[#allocation3 + $0x170] sm:$0xff] %vm423, %v1657
      %1710 = vst.msk [vmem:[#allocation3 + $0x178] sm:$0xff] %vm423, %v1660
      %v1711 = vld [vmem:[#allocation2] sm:$0xf]
      %v1712 = vld [vmem:[#allocation2 + $0x4] sm:$0xf]
      %v1713 = vld [vmem:[#allocation2 + $0x8] sm:$0xf]
      %v1714 = vld [vmem:[#allocation2 + $0xc] sm:$0xf]
      %v1715 = vld [vmem:[#allocation2 + $0x10] sm:$0xf]
      %v1716 = vld [vmem:[#allocation2 + $0x14] sm:$0xf]
      %v1717 = vld [vmem:[#allocation2 + $0x18] sm:$0xf]
      %v1718 = vld [vmem:[#allocation2 + $0x1c] sm:$0xf]
      %v1719 = vld [vmem:[#allocation2 + $0x20] sm:$0xf]
      %v1720 = vld [vmem:[#allocation2 + $0x24] sm:$0xf]
      %v1721 = vld [vmem:[#allocation2 + $0x28] sm:$0xf]
      %v1722 = vld [vmem:[#allocation2 + $0x2c] sm:$0xf]
      %v1723 = vld [vmem:[#allocation2 + $0x30] sm:$0xf]
      %v1724 = vld [vmem:[#allocation2 + $0x34] sm:$0xf]
      %v1725 = vld [vmem:[#allocation2 + $0x38] sm:$0xf]
      %v1726 = vld [vmem:[#allocation2 + $0x3c] sm:$0xf]
      %v1727 = vld [vmem:[#allocation2 + $0x40] sm:$0xf]
      %v1728 = vld [vmem:[#allocation2 + $0x44] sm:$0xf]
      %v1729 = vld [vmem:[#allocation2 + $0x48] sm:$0xf]
      %v1730 = vld [vmem:[#allocation2 + $0x4c] sm:$0xf]
      %v1731 = vld [vmem:[#allocation2 + $0x50] sm:$0xf]
      %v1732 = vld [vmem:[#allocation2 + $0x54] sm:$0xf]
      %v1733 = vld [vmem:[#allocation2 + $0x58] sm:$0xf]
      %v1734 = vld [vmem:[#allocation2 + $0x5c] sm:$0xf]
      %v1735 = vld [vmem:[#allocation2 + $0x60] sm:$0xf]
      %v1736 = vld [vmem:[#allocation2 + $0x64] sm:$0xf]
      %v1737 = vld [vmem:[#allocation2 + $0x68] sm:$0xf]
      %v1738 = vld [vmem:[#allocation2 + $0x6c] sm:$0xf]
      %v1739 = vld [vmem:[#allocation2 + $0x70] sm:$0xf]
      %v1740 = vld [vmem:[#allocation2 + $0x74] sm:$0xf]
      %v1741 = vld [vmem:[#allocation2 + $0x78] sm:$0xf]
      %v1742 = vld [vmem:[#allocation2 + $0x7c] sm:$0xf]
      %v1743 = vld [vmem:[#allocation2 + $0x80] sm:$0xf]
      %v1744 = vld [vmem:[#allocation2 + $0x84] sm:$0xf]
      %v1745 = vld [vmem:[#allocation2 + $0x88] sm:$0xf]
      %v1746 = vld [vmem:[#allocation2 + $0x8c] sm:$0xf]
      %v1747 = vld [vmem:[#allocation2 + $0x90] sm:$0xf]
      %v1748 = vld [vmem:[#allocation2 + $0x94] sm:$0xf]
      %v1749 = vld [vmem:[#allocation2 + $0x98] sm:$0xf]
      %v1750 = vld [vmem:[#allocation2 + $0x9c] sm:$0xf]
      %v1751 = vld [vmem:[#allocation2 + $0xa0] sm:$0xf]
      %v1752 = vld [vmem:[#allocation2 + $0xa4] sm:$0xf]
      %v1753 = vld [vmem:[#allocation2 + $0xa8] sm:$0xf]
      %v1754 = vld [vmem:[#allocation2 + $0xac] sm:$0xf]
      %v1755 = vld [vmem:[#allocation2 + $0xb0] sm:$0xf]
      %v1756 = vld [vmem:[#allocation2 + $0xb4] sm:$0xf]
      %v1757 = vld [vmem:[#allocation2 + $0xb8] sm:$0xf]
      %v1758 = vld [vmem:[#allocation2 + $0xbc] sm:$0xf]
      %v1759 = vld [vmem:[#allocation2 + $0xc0] sm:$0x1]
      %s1760 = scalar_lea.vmem %s3, 1
      %v1761 = vld [vmem:[%s1760] sm:$0x1]
      %v1811 = vunpack.c.l.b16 %v1711
      %v1812 = vunpack.c.l.b16 %v1712
      %v1813 = vunpack.c.l.b16 %v1713
      %v1814 = vunpack.c.l.b16 %v1714
      %v1815 = vunpack.c.l.b16 %v1715
      %v1816 = vunpack.c.l.b16 %v1716
      %v1817 = vunpack.c.l.b16 %v1717
      %v1818 = vunpack.c.l.b16 %v1718
      %v1819 = vunpack.c.l.b16 %v1719
      %v1820 = vunpack.c.l.b16 %v1720
      %v1821 = vunpack.c.l.b16 %v1721
      %v1822 = vunpack.c.l.b16 %v1722
      %v1823 = vunpack.c.l.b16 %v1723
      %v1824 = vunpack.c.l.b16 %v1724
      %v1825 = vunpack.c.l.b16 %v1725
      %v1826 = vunpack.c.l.b16 %v1726
      %v1827 = vunpack.c.l.b16 %v1727
      %v1828 = vunpack.c.l.b16 %v1728
      %v1829 = vunpack.c.l.b16 %v1729
      %v1830 = vunpack.c.l.b16 %v1730
      %v1831 = vunpack.c.l.b16 %v1731
      %v1832 = vunpack.c.l.b16 %v1732
      %v1833 = vunpack.c.l.b16 %v1733
      %v1834 = vunpack.c.l.b16 %v1734
      %v1835 = vunpack.c.l.b16 %v1735
      %v1836 = vunpack.c.l.b16 %v1736
      %v1837 = vunpack.c.l.b16 %v1737
      %v1838 = vunpack.c.l.b16 %v1738
      %v1839 = vunpack.c.l.b16 %v1739
      %v1840 = vunpack.c.l.b16 %v1740
      %v1841 = vunpack.c.l.b16 %v1741
      %v1842 = vunpack.c.l.b16 %v1742
      %v1843 = vunpack.c.l.b16 %v1743
      %v1844 = vunpack.c.l.b16 %v1744
      %v1845 = vunpack.c.l.b16 %v1745
      %v1846 = vunpack.c.l.b16 %v1746
      %v1847 = vunpack.c.l.b16 %v1747
      %v1848 = vunpack.c.l.b16 %v1748
      %v1849 = vunpack.c.l.b16 %v1749
      %v1850 = vunpack.c.l.b16 %v1750
      %v1851 = vunpack.c.l.b16 %v1751
      %v1852 = vunpack.c.l.b16 %v1752
      %v1853 = vunpack.c.l.b16 %v1753
      %v1854 = vunpack.c.l.b16 %v1754
      %v1855 = vunpack.c.l.b16 %v1755
      %v1856 = vunpack.c.l.b16 %v1756
      %v1857 = vunpack.c.l.b16 %v1757
      %v1858 = vunpack.c.l.b16 %v1758
      %v1859 = vunpack.c.l.b16 %v1759
      %v1860 = vpack.c.b16 %v1812, %v1811
      %v1861 = vpack.c.b16 %v1814, %v1813
      %v1862 = vpack.c.b16 %v1816, %v1815
      %v1863 = vpack.c.b16 %v1818, %v1817
      %v1864 = vpack.c.b16 %v1820, %v1819
      %v1865 = vpack.c.b16 %v1822, %v1821
      %v1866 = vpack.c.b16 %v1824, %v1823
      %v1867 = vpack.c.b16 %v1826, %v1825
      %v1868 = vpack.c.b16 %v1828, %v1827
      %v1869 = vpack.c.b16 %v1830, %v1829
      %v1870 = vpack.c.b16 %v1832, %v1831
      %v1871 = vpack.c.b16 %v1834, %v1833
      %v1872 = vpack.c.b16 %v1836, %v1835
      %v1873 = vpack.c.b16 %v1838, %v1837
      %v1874 = vpack.c.b16 %v1840, %v1839
      %v1875 = vpack.c.b16 %v1842, %v1841
      %v1876 = vpack.c.b16 %v1844, %v1843
      %v1877 = vpack.c.b16 %v1846, %v1845
      %v1878 = vpack.c.b16 %v1848, %v1847
      %v1879 = vpack.c.b16 %v1850, %v1849
      %v1880 = vpack.c.b16 %v1852, %v1851
      %v1881 = vpack.c.b16 %v1854, %v1853
      %v1882 = vpack.c.b16 %v1856, %v1855
      %v1883 = vpack.c.b16 %v1858, %v1857
      %v1884 = vpack.c.b16 %v1859, %v1859
      %vm1885 = vsmask.f32 7424
      %v1887 = vshrl.u32 %v1860, 16
      %v1889 = vshll.u32 %v1860, 16
      %v1891 = vrot.slane %v1889, 1
      %v1892 = vor.u32 %v1887, %v1891
      %v1894 = vshll.u32 %v1861, 16
      %v1896 = vrot.slane %v1894, 1
      %v1897 = vsel %vm1885, %v1892, %v1896
      %v1898 = vshrl.u32 %v1861, 16
      %v1900 = vor.u32 %v1898, %v1896
      %v1902 = vshll.u32 %v1862, 16
      %v1904 = vrot.slane %v1902, 1
      %v1905 = vsel %vm1885, %v1900, %v1904
      %v1906 = vshrl.u32 %v1862, 16
      %v1908 = vor.u32 %v1906, %v1904
      %v1910 = vshll.u32 %v1863, 16
      %v1912 = vrot.slane %v1910, 1
      %v1913 = vsel %vm1885, %v1908, %v1912
      %v1914 = vshrl.u32 %v1863, 16
      %v1916 = vor.u32 %v1914, %v1912
      %v1918 = vshll.u32 %v1864, 16
      %v1920 = vrot.slane %v1918, 1
      %v1921 = vsel %vm1885, %v1916, %v1920
      %v1922 = vshrl.u32 %v1864, 16
      %v1924 = vor.u32 %v1922, %v1920
      %v1926 = vshll.u32 %v1865, 16
      %v1928 = vrot.slane %v1926, 1
      %v1929 = vsel %vm1885, %v1924, %v1928
      %v1930 = vshrl.u32 %v1865, 16
      %v1932 = vor.u32 %v1930, %v1928
      %v1934 = vshll.u32 %v1866, 16
      %v1936 = vrot.slane %v1934, 1
      %v1937 = vsel %vm1885, %v1932, %v1936
      %v1938 = vshrl.u32 %v1866, 16
      %v1940 = vor.u32 %v1938, %v1936
      %v1942 = vshll.u32 %v1867, 16
      %v1944 = vrot.slane %v1942, 1
      %v1945 = vsel %vm1885, %v1940, %v1944
      %v1946 = vshrl.u32 %v1867, 16
      %v1948 = vor.u32 %v1946, %v1944
      %v1950 = vshll.u32 %v1868, 16
      %v1952 = vrot.slane %v1950, 1
      %v1953 = vsel %vm1885, %v1948, %v1952
      %v1954 = vshrl.u32 %v1868, 16
      %v1956 = vor.u32 %v1954, %v1952
      %v1958 = vshll.u32 %v1869, 16
      %v1960 = vrot.slane %v1958, 1
      %v1961 = vsel %vm1885, %v1956, %v1960
      %v1962 = vshrl.u32 %v1869, 16
      %v1964 = vor.u32 %v1962, %v1960
      %v1966 = vshll.u32 %v1870, 16
      %v1968 = vrot.slane %v1966, 1
      %v1969 = vsel %vm1885, %v1964, %v1968
      %v1970 = vshrl.u32 %v1870, 16
      %v1972 = vor.u32 %v1970, %v1968
      %v1974 = vshll.u32 %v1871, 16
      %v1976 = vrot.slane %v1974, 1
      %v1977 = vsel %vm1885, %v1972, %v1976
      %v1978 = vshrl.u32 %v1871, 16
      %v1980 = vor.u32 %v1978, %v1976
      %v1982 = vshll.u32 %v1872, 16
      %v1984 = vrot.slane %v1982, 1
      %v1985 = vsel %vm1885, %v1980, %v1984
      %v1986 = vshrl.u32 %v1872, 16
      %v1988 = vor.u32 %v1986, %v1984
      %v1990 = vshll.u32 %v1873, 16
      %v1992 = vrot.slane %v1990, 1
      %v1993 = vsel %vm1885, %v1988, %v1992
      %v1994 = vshrl.u32 %v1873, 16
      %v1996 = vor.u32 %v1994, %v1992
      %v1998 = vshll.u32 %v1874, 16
      %v2000 = vrot.slane %v1998, 1
      %v2001 = vsel %vm1885, %v1996, %v2000
      %v2002 = vshrl.u32 %v1874, 16
      %v2004 = vor.u32 %v2002, %v2000
      %v2006 = vshll.u32 %v1875, 16
      %v2008 = vrot.slane %v2006, 1
      %v2009 = vsel %vm1885, %v2004, %v2008
      %v2010 = vshrl.u32 %v1875, 16
      %v2012 = vor.u32 %v2010, %v2008
      %v2014 = vshll.u32 %v1876, 16
      %v2016 = vrot.slane %v2014, 1
      %v2017 = vsel %vm1885, %v2012, %v2016
      %v2018 = vshrl.u32 %v1876, 16
      %v2020 = vor.u32 %v2018, %v2016
      %v2022 = vshll.u32 %v1877, 16
      %v2024 = vrot.slane %v2022, 1
      %v2025 = vsel %vm1885, %v2020, %v2024
      %v2026 = vshrl.u32 %v1877, 16
      %v2028 = vor.u32 %v2026, %v2024
      %v2030 = vshll.u32 %v1878, 16
      %v2032 = vrot.slane %v2030, 1
      %v2033 = vsel %vm1885, %v2028, %v2032
      %v2034 = vshrl.u32 %v1878, 16
      %v2036 = vor.u32 %v2034, %v2032
      %v2038 = vshll.u32 %v1879, 16
      %v2040 = vrot.slane %v2038, 1
      %v2041 = vsel %vm1885, %v2036, %v2040
      %v2042 = vshrl.u32 %v1879, 16
      %v2044 = vor.u32 %v2042, %v2040
      %v2046 = vshll.u32 %v1880, 16
      %v2048 = vrot.slane %v2046, 1
      %v2049 = vsel %vm1885, %v2044, %v2048
      %v2050 = vshrl.u32 %v1880, 16
      %v2052 = vor.u32 %v2050, %v2048
      %v2054 = vshll.u32 %v1881, 16
      %v2056 = vrot.slane %v2054, 1
      %v2057 = vsel %vm1885, %v2052, %v2056
      %v2058 = vshrl.u32 %v1881, 16
      %v2060 = vor.u32 %v2058, %v2056
      %v2062 = vshll.u32 %v1882, 16
      %v2064 = vrot.slane %v2062, 1
      %v2065 = vsel %vm1885, %v2060, %v2064
      %v2066 = vshrl.u32 %v1882, 16
      %v2068 = vor.u32 %v2066, %v2064
      %v2070 = vshll.u32 %v1883, 16
      %v2072 = vrot.slane %v2070, 1
      %v2073 = vsel %vm1885, %v2068, %v2072
      %v2074 = vshrl.u32 %v1883, 16
      %v2076 = vor.u32 %v2074, %v2072
      %v2078 = vshll.u32 %v1884, 16
      %v2080 = vrot.slane %v2078, 1
      %v2081 = vsel %vm1885, %v2076, %v2080
      %v2083 = vsel %vm1361, %v1897, 0
      %v2086 = vsel %vm1361, %v1905, 0
      %v2089 = vsel %vm1361, %v1913, 0
      %v2092 = vsel %vm1361, %v1921, 0
      %v2095 = vsel %vm1361, %v1929, 0
      %v2098 = vsel %vm1361, %v1937, 0
      %v2101 = vsel %vm1361, %v1945, 0
      %v2104 = vsel %vm1361, %v1953, 0
      %v2107 = vsel %vm1361, %v1961, 0
      %v2110 = vsel %vm1361, %v1969, 0
      %v2113 = vsel %vm1361, %v1977, 0
      %v2116 = vsel %vm1361, %v1985, 0
      %v2119 = vsel %vm1361, %v1993, 0
      %v2122 = vsel %vm1361, %v2001, 0
      %v2125 = vsel %vm1361, %v2009, 0
      %v2128 = vsel %vm1361, %v2017, 0
      %v2131 = vsel %vm1361, %v2025, 0
      %v2134 = vsel %vm1361, %v2033, 0
      %v2137 = vsel %vm1361, %v2041, 0
      %v2140 = vsel %vm1361, %v2049, 0
      %v2143 = vsel %vm1361, %v2057, 0
      %v2146 = vsel %vm1361, %v2065, 0
      %v2149 = vsel %vm1361, %v2073, 0
      %v2152 = vsel %vm1361, %v2081, 0
      %v2155 = vsel %vm1434, %v1761, 0
      %2157 = vmatprep.subr.bf16.mxu0 0
      %2158 = vmatpush1.bf16.msra.mxu0 0
      %2159 = vmatprep.subr.bf16.mxu0 0
      %2160 = vmatpush1.bf16.msra.mxu0 0
      %2161 = vmatprep.subr.bf16.mxu0 0
      %2162 = vmatpush1.bf16.msra.mxu0 0
      %2163 = vmatprep.subr.bf16.mxu0 0
      %2164 = vmatpush1.bf16.msra.mxu0 0
      %2165 = vmatprep.subr.bf16.mxu0 0
      %2166 = vmatpush1.bf16.msra.mxu0 0
      %2167 = vmatprep.subr.bf16.mxu0 0
      %2168 = vmatpush1.bf16.msra.mxu0 0
      %2169 = vmatprep.subr.bf16.mxu0 0
      %2170 = vmatpush1.bf16.msra.mxu0 0
      %2171 = vmatprep.subr.bf16.mxu0 0
      %2172 = vmatpush1.bf16.msra.mxu0 %v2155
      %2173 = vmatprep.subr.bf16.mxu0 0
      %2174 = vmatpush2.bf16.msra.mxu0 0
      %2175 = vmatprep.subr.bf16.mxu0 0
      %2176 = vmatpush2.bf16.msra.mxu0 0
      %2177 = vmatprep.subr.bf16.mxu0 0
      %2178 = vmatpush2.bf16.msra.mxu0 0
      %2179 = vmatprep.subr.bf16.mxu0 0
      %2180 = vmatpush2.bf16.msra.mxu0 0
      %2181 = vmatprep.subr.bf16.mxu0 0
      %2182 = vmatpush2.bf16.msra.mxu0 0
      %2183 = vmatprep.subr.bf16.mxu0 0
      %2184 = vmatpush2.bf16.msra.mxu0 0
      %2185 = vmatprep.subr.bf16.mxu0 0
      %2186 = vmatpush2.bf16.msra.mxu0 0
      %2187 = vmatprep.subr.bf16.mxu0 0
      %2188 = vmatpush2.bf16.msra.mxu0 0
      %2189 = vmatprep.mubr.bf16.mxu0 0
      %2190 = vmatmul.mubr.bf16.gmra.mxu0 %v2083
      %v2191 = vpop.f32.mrf.mxu0
      %v2192 = vadd.f32 0.0, %v2191
      %v2193 = vpop.f32.mrf.mxu0
      %v2194 = vpop.f32.mrf.mxu0
      %v2195 = vadd.f32 0.0, %v2194
      %v2196 = vpop.f32.mrf.mxu0
      %2197 = vmatprep.mubr.bf16.mxu0 0
      %2198 = vmatmul.mubr.bf16.gmra.mxu0 %v2086
      %v2199 = vpop.f32.mrf.mxu0
      %v2200 = vadd.f32 0.0, %v2199
      %v2201 = vpop.f32.mrf.mxu0
      %v2202 = vpop.f32.mrf.mxu0
      %v2203 = vadd.f32 0.0, %v2202
      %v2204 = vpop.f32.mrf.mxu0
      %2205 = vmatprep.mubr.bf16.mxu0 0
      %2206 = vmatmul.mubr.bf16.gmra.mxu0 %v2089
      %v2207 = vpop.f32.mrf.mxu0
      %v2208 = vadd.f32 0.0, %v2207
      %v2209 = vpop.f32.mrf.mxu0
      %v2210 = vpop.f32.mrf.mxu0
      %v2211 = vadd.f32 0.0, %v2210
      %v2212 = vpop.f32.mrf.mxu0
      %2213 = vmatprep.mubr.bf16.mxu0 0
      %2214 = vmatmul.mubr.bf16.gmra.mxu0 %v2092
      %v2215 = vpop.f32.mrf.mxu0
      %v2216 = vadd.f32 0.0, %v2215
      %v2217 = vpop.f32.mrf.mxu0
      %v2218 = vpop.f32.mrf.mxu0
      %v2219 = vadd.f32 0.0, %v2218
      %v2220 = vpop.f32.mrf.mxu0
      %2221 = vmatprep.mubr.bf16.mxu0 0
      %2222 = vmatmul.mubr.bf16.gmra.mxu0 %v2095
      %v2223 = vpop.f32.mrf.mxu0
      %v2224 = vadd.f32 0.0, %v2223
      %v2225 = vpop.f32.mrf.mxu0
      %v2226 = vpop.f32.mrf.mxu0
      %v2227 = vadd.f32 0.0, %v2226
      %v2228 = vpop.f32.mrf.mxu0
      %2229 = vmatprep.mubr.bf16.mxu0 0
      %2230 = vmatmul.mubr.bf16.gmra.mxu0 %v2098
      %v2231 = vpop.f32.mrf.mxu0
      %v2232 = vadd.f32 0.0, %v2231
      %v2233 = vpop.f32.mrf.mxu0
      %v2234 = vpop.f32.mrf.mxu0
      %v2235 = vadd.f32 0.0, %v2234
      %v2236 = vpop.f32.mrf.mxu0
      %2237 = vmatprep.mubr.bf16.mxu0 0
      %2238 = vmatmul.mubr.bf16.gmra.mxu0 %v2101
      %v2239 = vpop.f32.mrf.mxu0
      %v2240 = vadd.f32 0.0, %v2239
      %v2241 = vpop.f32.mrf.mxu0
      %v2242 = vpop.f32.mrf.mxu0
      %v2243 = vadd.f32 0.0, %v2242
      %v2244 = vpop.f32.mrf.mxu0
      %2245 = vmatprep.mubr.bf16.mxu0 0
      %2246 = vmatmul.mubr.bf16.gmra.mxu0 %v2104
      %v2247 = vpop.f32.mrf.mxu0
      %v2248 = vadd.f32 0.0, %v2247
      %v2249 = vpop.f32.mrf.mxu0
      %v2250 = vpop.f32.mrf.mxu0
      %v2251 = vadd.f32 0.0, %v2250
      %v2252 = vpop.f32.mrf.mxu0
      %2253 = vmatprep.mubr.bf16.mxu0 0
      %2254 = vmatmul.mubr.bf16.gmra.mxu0 %v2107
      %v2255 = vpop.f32.mrf.mxu0
      %v2256 = vadd.f32 0.0, %v2255
      %v2257 = vpop.f32.mrf.mxu0
      %v2258 = vpop.f32.mrf.mxu0
      %v2259 = vadd.f32 0.0, %v2258
      %v2260 = vpop.f32.mrf.mxu0
      %2261 = vmatprep.mubr.bf16.mxu0 0
      %2262 = vmatmul.mubr.bf16.gmra.mxu0 %v2110
      %v2263 = vpop.f32.mrf.mxu0
      %v2264 = vadd.f32 0.0, %v2263
      %v2265 = vpop.f32.mrf.mxu0
      %v2266 = vpop.f32.mrf.mxu0
      %v2267 = vadd.f32 0.0, %v2266
      %v2268 = vpop.f32.mrf.mxu0
      %2269 = vmatprep.mubr.bf16.mxu0 0
      %2270 = vmatmul.mubr.bf16.gmra.mxu0 %v2113
      %v2271 = vpop.f32.mrf.mxu0
      %v2272 = vadd.f32 0.0, %v2271
      %v2273 = vpop.f32.mrf.mxu0
      %v2274 = vpop.f32.mrf.mxu0
      %v2275 = vadd.f32 0.0, %v2274
      %v2276 = vpop.f32.mrf.mxu0
      %2277 = vmatprep.mubr.bf16.mxu0 0
      %2278 = vmatmul.mubr.bf16.gmra.mxu0 %v2116
      %v2279 = vpop.f32.mrf.mxu0
      %v2280 = vadd.f32 0.0, %v2279
      %v2281 = vpop.f32.mrf.mxu0
      %v2282 = vpop.f32.mrf.mxu0
      %v2283 = vadd.f32 0.0, %v2282
      %v2284 = vpop.f32.mrf.mxu0
      %2285 = vmatprep.mubr.bf16.mxu0 0
      %2286 = vmatmul.mubr.bf16.gmra.mxu0 %v2119
      %v2287 = vpop.f32.mrf.mxu0
      %v2288 = vadd.f32 0.0, %v2287
      %v2289 = vpop.f32.mrf.mxu0
      %v2290 = vpop.f32.mrf.mxu0
      %v2291 = vadd.f32 0.0, %v2290
      %v2292 = vpop.f32.mrf.mxu0
      %2293 = vmatprep.mubr.bf16.mxu0 0
      %2294 = vmatmul.mubr.bf16.gmra.mxu0 %v2122
      %v2295 = vpop.f32.mrf.mxu0
      %v2296 = vadd.f32 0.0, %v2295
      %v2297 = vpop.f32.mrf.mxu0
      %v2298 = vpop.f32.mrf.mxu0
      %v2299 = vadd.f32 0.0, %v2298
      %v2300 = vpop.f32.mrf.mxu0
      %2301 = vmatprep.mubr.bf16.mxu0 0
      %2302 = vmatmul.mubr.bf16.gmra.mxu0 %v2125
      %v2303 = vpop.f32.mrf.mxu0
      %v2304 = vadd.f32 0.0, %v2303
      %v2305 = vpop.f32.mrf.mxu0
      %v2306 = vpop.f32.mrf.mxu0
      %v2307 = vadd.f32 0.0, %v2306
      %v2308 = vpop.f32.mrf.mxu0
      %2309 = vmatprep.mubr.bf16.mxu0 0
      %2310 = vmatmul.mubr.bf16.gmra.mxu0 %v2128
      %v2311 = vpop.f32.mrf.mxu0
      %v2312 = vadd.f32 0.0, %v2311
      %v2313 = vpop.f32.mrf.mxu0
      %v2314 = vpop.f32.mrf.mxu0
      %v2315 = vadd.f32 0.0, %v2314
      %v2316 = vpop.f32.mrf.mxu0
      %2317 = vmatprep.mubr.bf16.mxu0 0
      %2318 = vmatmul.mubr.bf16.gmra.mxu0 %v2131
      %v2319 = vpop.f32.mrf.mxu0
      %v2320 = vadd.f32 0.0, %v2319
      %v2321 = vpop.f32.mrf.mxu0
      %v2322 = vpop.f32.mrf.mxu0
      %v2323 = vadd.f32 0.0, %v2322
      %v2324 = vpop.f32.mrf.mxu0
      %2325 = vmatprep.mubr.bf16.mxu0 0
      %2326 = vmatmul.mubr.bf16.gmra.mxu0 %v2134
      %v2327 = vpop.f32.mrf.mxu0
      %v2328 = vadd.f32 0.0, %v2327
      %v2329 = vpop.f32.mrf.mxu0
      %v2330 = vpop.f32.mrf.mxu0
      %v2331 = vadd.f32 0.0, %v2330
      %v2332 = vpop.f32.mrf.mxu0
      %2333 = vmatprep.mubr.bf16.mxu0 0
      %2334 = vmatmul.mubr.bf16.gmra.mxu0 %v2137
      %v2335 = vpop.f32.mrf.mxu0
      %v2336 = vadd.f32 0.0, %v2335
      %v2337 = vpop.f32.mrf.mxu0
      %v2338 = vpop.f32.mrf.mxu0
      %v2339 = vadd.f32 0.0, %v2338
      %v2340 = vpop.f32.mrf.mxu0
      %2341 = vmatprep.mubr.bf16.mxu0 0
      %2342 = vmatmul.mubr.bf16.gmra.mxu0 %v2140
      %v2343 = vpop.f32.mrf.mxu0
      %v2344 = vadd.f32 0.0, %v2343
      %v2345 = vpop.f32.mrf.mxu0
      %v2346 = vpop.f32.mrf.mxu0
      %v2347 = vadd.f32 0.0, %v2346
      %v2348 = vpop.f32.mrf.mxu0
      %2349 = vmatprep.mubr.bf16.mxu0 0
      %2350 = vmatmul.mubr.bf16.gmra.mxu0 %v2143
      %v2351 = vpop.f32.mrf.mxu0
      %v2352 = vadd.f32 0.0, %v2351
      %v2353 = vpop.f32.mrf.mxu0
      %v2354 = vpop.f32.mrf.mxu0
      %v2355 = vadd.f32 0.0, %v2354
      %v2356 = vpop.f32.mrf.mxu0
      %2357 = vmatprep.mubr.bf16.mxu0 0
      %2358 = vmatmul.mubr.bf16.gmra.mxu0 %v2146
      %v2359 = vpop.f32.mrf.mxu0
      %v2360 = vadd.f32 0.0, %v2359
      %v2361 = vpop.f32.mrf.mxu0
      %v2362 = vpop.f32.mrf.mxu0
      %v2363 = vadd.f32 0.0, %v2362
      %v2364 = vpop.f32.mrf.mxu0
      %2365 = vmatprep.mubr.bf16.mxu0 0
      %2366 = vmatmul.mubr.bf16.gmra.mxu0 %v2149
      %v2367 = vpop.f32.mrf.mxu0
      %v2368 = vadd.f32 0.0, %v2367
      %v2369 = vpop.f32.mrf.mxu0
      %v2370 = vpop.f32.mrf.mxu0
      %v2371 = vadd.f32 0.0, %v2370
      %v2372 = vpop.f32.mrf.mxu0
      %2373 = vmatprep.mubr.bf16.mxu0 0
      %2374 = vmatmul.mubr.bf16.gmra.mxu0 %v2152
      %v2375 = vpop.f32.mrf.mxu0
      %v2376 = vadd.f32 0.0, %v2375
      %v2377 = vpop.f32.mrf.mxu0
      %v2378 = vpop.f32.mrf.mxu0
      %v2379 = vadd.f32 0.0, %v2378
      %v2380 = vpop.f32.mrf.mxu0
      %2381 = vdwg.mxu0
      %v2382 = vld [vmem:[#allocation3] sm:$0xff]
      %v2383 = vld [vmem:[#allocation3 + $0x8] sm:$0xff]
      %v2384 = vld [vmem:[#allocation3 + $0x10] sm:$0xff]
      %v2385 = vld [vmem:[#allocation3 + $0x18] sm:$0xff]
      %v2386 = vld [vmem:[#allocation3 + $0x20] sm:$0xff]
      %v2387 = vld [vmem:[#allocation3 + $0x28] sm:$0xff]
      %v2388 = vld [vmem:[#allocation3 + $0x30] sm:$0xff]
      %v2389 = vld [vmem:[#allocation3 + $0x38] sm:$0xff]
      %v2390 = vld [vmem:[#allocation3 + $0x40] sm:$0xff]
      %v2391 = vld [vmem:[#allocation3 + $0x48] sm:$0xff]
      %v2392 = vld [vmem:[#allocation3 + $0x50] sm:$0xff]
      %v2393 = vld [vmem:[#allocation3 + $0x58] sm:$0xff]
      %v2394 = vld [vmem:[#allocation3 + $0x60] sm:$0xff]
      %v2395 = vld [vmem:[#allocation3 + $0x68] sm:$0xff]
      %v2396 = vld [vmem:[#allocation3 + $0x70] sm:$0xff]
      %v2397 = vld [vmem:[#allocation3 + $0x78] sm:$0xff]
      %v2398 = vld [vmem:[#allocation3 + $0x80] sm:$0xff]
      %v2399 = vld [vmem:[#allocation3 + $0x88] sm:$0xff]
      %v2400 = vld [vmem:[#allocation3 + $0x90] sm:$0xff]
      %v2401 = vld [vmem:[#allocation3 + $0x98] sm:$0xff]
      %v2402 = vld [vmem:[#allocation3 + $0xa0] sm:$0xff]
      %v2403 = vld [vmem:[#allocation3 + $0xa8] sm:$0xff]
      %v2404 = vld [vmem:[#allocation3 + $0xb0] sm:$0xff]
      %v2405 = vld [vmem:[#allocation3 + $0xb8] sm:$0xff]
      %v2406 = vld [vmem:[#allocation3 + $0xc0] sm:$0xff]
      %v2407 = vld [vmem:[#allocation3 + $0xc8] sm:$0xff]
      %v2408 = vld [vmem:[#allocation3 + $0xd0] sm:$0xff]
      %v2409 = vld [vmem:[#allocation3 + $0xd8] sm:$0xff]
      %v2410 = vld [vmem:[#allocation3 + $0xe0] sm:$0xff]
      %v2411 = vld [vmem:[#allocation3 + $0xe8] sm:$0xff]
      %v2412 = vld [vmem:[#allocation3 + $0xf0] sm:$0xff]
      %v2413 = vld [vmem:[#allocation3 + $0xf8] sm:$0xff]
      %v2414 = vld [vmem:[#allocation3 + $0x100] sm:$0xff]
      %v2415 = vld [vmem:[#allocation3 + $0x108] sm:$0xff]
      %v2416 = vld [vmem:[#allocation3 + $0x110] sm:$0xff]
      %v2417 = vld [vmem:[#allocation3 + $0x118] sm:$0xff]
      %v2418 = vld [vmem:[#allocation3 + $0x120] sm:$0xff]
      %v2419 = vld [vmem:[#allocation3 + $0x128] sm:$0xff]
      %v2420 = vld [vmem:[#allocation3 + $0x130] sm:$0xff]
      %v2421 = vld [vmem:[#allocation3 + $0x138] sm:$0xff]
      %v2422 = vld [vmem:[#allocation3 + $0x140] sm:$0xff]
      %v2423 = vld [vmem:[#allocation3 + $0x148] sm:$0xff]
      %v2424 = vld [vmem:[#allocation3 + $0x150] sm:$0xff]
      %v2425 = vld [vmem:[#allocation3 + $0x158] sm:$0xff]
      %v2426 = vld [vmem:[#allocation3 + $0x160] sm:$0xff]
      %v2427 = vld [vmem:[#allocation3 + $0x168] sm:$0xff]
      %v2428 = vld [vmem:[#allocation3 + $0x170] sm:$0xff]
      %v2429 = vld [vmem:[#allocation3 + $0x178] sm:$0xff]
      %v2430 = vadd.f32 %v2382, %v2192
      %v2431 = vadd.f32 %v2383, %v2195
      %v2432 = vadd.f32 %v2384, %v2200
      %v2433 = vadd.f32 %v2385, %v2203
      %v2434 = vadd.f32 %v2386, %v2208
      %v2435 = vadd.f32 %v2387, %v2211
      %v2436 = vadd.f32 %v2388, %v2216
      %v2437 = vadd.f32 %v2389, %v2219
      %v2438 = vadd.f32 %v2390, %v2224
      %v2439 = vadd.f32 %v2391, %v2227
      %v2440 = vadd.f32 %v2392, %v2232
      %v2441 = vadd.f32 %v2393, %v2235
      %v2442 = vadd.f32 %v2394, %v2240
      %v2443 = vadd.f32 %v2395, %v2243
      %v2444 = vadd.f32 %v2396, %v2248
      %v2445 = vadd.f32 %v2397, %v2251
      %v2446 = vadd.f32 %v2398, %v2256
      %v2447 = vadd.f32 %v2399, %v2259
      %v2448 = vadd.f32 %v2400, %v2264
      %v2449 = vadd.f32 %v2401, %v2267
      %v2450 = vadd.f32 %v2402, %v2272
      %v2451 = vadd.f32 %v2403, %v2275
      %v2452 = vadd.f32 %v2404, %v2280
      %v2453 = vadd.f32 %v2405, %v2283
      %v2454 = vadd.f32 %v2406, %v2288
      %v2455 = vadd.f32 %v2407, %v2291
      %v2456 = vadd.f32 %v2408, %v2296
      %v2457 = vadd.f32 %v2409, %v2299
      %v2458 = vadd.f32 %v2410, %v2304
      %v2459 = vadd.f32 %v2411, %v2307
      %v2460 = vadd.f32 %v2412, %v2312
      %v2461 = vadd.f32 %v2413, %v2315
      %v2462 = vadd.f32 %v2414, %v2320
      %v2463 = vadd.f32 %v2415, %v2323
      %v2464 = vadd.f32 %v2416, %v2328
      %v2465 = vadd.f32 %v2417, %v2331
      %v2466 = vadd.f32 %v2418, %v2336
      %v2467 = vadd.f32 %v2419, %v2339
      %v2468 = vadd.f32 %v2420, %v2344
      %v2469 = vadd.f32 %v2421, %v2347
      %v2470 = vadd.f32 %v2422, %v2352
      %v2471 = vadd.f32 %v2423, %v2355
      %v2472 = vadd.f32 %v2424, %v2360
      %v2473 = vadd.f32 %v2425, %v2363
      %v2474 = vadd.f32 %v2426, %v2368
      %v2475 = vadd.f32 %v2427, %v2371
      %v2476 = vadd.f32 %v2428, %v2376
      %v2477 = vadd.f32 %v2429, %v2379
      %2478 = vst.msk [vmem:[#allocation3] sm:$0xff] %vm423, %v2430
      %2479 = vst.msk [vmem:[#allocation3 + $0x8] sm:$0xff] %vm423, %v2431
      %2480 = vst.msk [vmem:[#allocation3 + $0x10] sm:$0xff] %vm423, %v2432
      %2481 = vst.msk [vmem:[#allocation3 + $0x18] sm:$0xff] %vm423, %v2433
      %2482 = vst.msk [vmem:[#allocation3 + $0x20] sm:$0xff] %vm423, %v2434
      %2483 = vst.msk [vmem:[#allocation3 + $0x28] sm:$0xff] %vm423, %v2435
      %2484 = vst.msk [vmem:[#allocation3 + $0x30] sm:$0xff] %vm423, %v2436
      %2485 = vst.msk [vmem:[#allocation3 + $0x38] sm:$0xff] %vm423, %v2437
      %2486 = vst.msk [vmem:[#allocation3 + $0x40] sm:$0xff] %vm423, %v2438
      %2487 = vst.msk [vmem:[#allocation3 + $0x48] sm:$0xff] %vm423, %v2439
      %2488 = vst.msk [vmem:[#allocation3 + $0x50] sm:$0xff] %vm423, %v2440
      %2489 = vst.msk [vmem:[#allocation3 + $0x58] sm:$0xff] %vm423, %v2441
      %2490 = vst.msk [vmem:[#allocation3 + $0x60] sm:$0xff] %vm423, %v2442
      %2491 = vst.msk [vmem:[#allocation3 + $0x68] sm:$0xff] %vm423, %v2443
      %2492 = vst.msk [vmem:[#allocation3 + $0x70] sm:$0xff] %vm423, %v2444
      %2493 = vst.msk [vmem:[#allocation3 + $0x78] sm:$0xff] %vm423, %v2445
      %2494 = vst.msk [vmem:[#allocation3 + $0x80] sm:$0xff] %vm423, %v2446
      %2495 = vst.msk [vmem:[#allocation3 + $0x88] sm:$0xff] %vm423, %v2447
      %2496 = vst.msk [vmem:[#allocation3 + $0x90] sm:$0xff] %vm423, %v2448
      %2497 = vst.msk [vmem:[#allocation3 + $0x98] sm:$0xff] %vm423, %v2449
      %2498 = vst.msk [vmem:[#allocation3 + $0xa0] sm:$0xff] %vm423, %v2450
      %2499 = vst.msk [vmem:[#allocation3 + $0xa8] sm:$0xff] %vm423, %v2451
      %2500 = vst.msk [vmem:[#allocation3 + $0xb0] sm:$0xff] %vm423, %v2452
      %2501 = vst.msk [vmem:[#allocation3 + $0xb8] sm:$0xff] %vm423, %v2453
      %2502 = vst.msk [vmem:[#allocation3 + $0xc0] sm:$0xff] %vm423, %v2454
      %2503 = vst.msk [vmem:[#allocation3 + $0xc8] sm:$0xff] %vm423, %v2455
      %2504 = vst.msk [vmem:[#allocation3 + $0xd0] sm:$0xff] %vm423, %v2456
      %2505 = vst.msk [vmem:[#allocation3 + $0xd8] sm:$0xff] %vm423, %v2457
      %2506 = vst.msk [vmem:[#allocation3 + $0xe0] sm:$0xff] %vm423, %v2458
      %2507 = vst.msk [vmem:[#allocation3 + $0xe8] sm:$0xff] %vm423, %v2459
      %2508 = vst.msk [vmem:[#allocation3 + $0xf0] sm:$0xff] %vm423, %v2460
      %2509 = vst.msk [vmem:[#allocation3 + $0xf8] sm:$0xff] %vm423, %v2461
      %2510 = vst.msk [vmem:[#allocation3 + $0x100] sm:$0xff] %vm423, %v2462
      %2511 = vst.msk [vmem:[#allocation3 + $0x108] sm:$0xff] %vm423, %v2463
      %2512 = vst.msk [vmem:[#allocation3 + $0x110] sm:$0xff] %vm423, %v2464
      %2513 = vst.msk [vmem:[#allocation3 + $0x118] sm:$0xff] %vm423, %v2465
      %2514 = vst.msk [vmem:[#allocation3 + $0x120] sm:$0xff] %vm423, %v2466
      %2515 = vst.msk [vmem:[#allocation3 + $0x128] sm:$0xff] %vm423, %v2467
      %2516 = vst.msk [vmem:[#allocation3 + $0x130] sm:$0xff] %vm423, %v2468
      %2517 = vst.msk [vmem:[#allocation3 + $0x138] sm:$0xff] %vm423, %v2469
      %2518 = vst.msk [vmem:[#allocation3 + $0x140] sm:$0xff] %vm423, %v2470
      %2519 = vst.msk [vmem:[#allocation3 + $0x148] sm:$0xff] %vm423, %v2471
      %2520 = vst.msk [vmem:[#allocation3 + $0x150] sm:$0xff] %vm423, %v2472
      %2521 = vst.msk [vmem:[#allocation3 + $0x158] sm:$0xff] %vm423, %v2473
      %2522 = vst.msk [vmem:[#allocation3 + $0x160] sm:$0xff] %vm423, %v2474
      %2523 = vst.msk [vmem:[#allocation3 + $0x168] sm:$0xff] %vm423, %v2475
      %2524 = vst.msk [vmem:[#allocation3 + $0x170] sm:$0xff] %vm423, %v2476
      %2525 = vst.msk [vmem:[#allocation3 + $0x178] sm:$0xff] %vm423, %v2477
      %v2526 = vld [vmem:[#allocation2] sm:$0xe]
      %v2527 = vld [vmem:[#allocation2 + $0x4] sm:$0xf]
      %v2528 = vld [vmem:[#allocation2 + $0x8] sm:$0xf]
      %v2529 = vld [vmem:[#allocation2 + $0xc] sm:$0xf]
      %v2530 = vld [vmem:[#allocation2 + $0x10] sm:$0xf]
      %v2531 = vld [vmem:[#allocation2 + $0x14] sm:$0xf]
      %v2532 = vld [vmem:[#allocation2 + $0x18] sm:$0xf]
      %v2533 = vld [vmem:[#allocation2 + $0x1c] sm:$0xf]
      %v2534 = vld [vmem:[#allocation2 + $0x20] sm:$0xf]
      %v2535 = vld [vmem:[#allocation2 + $0x24] sm:$0xf]
      %v2536 = vld [vmem:[#allocation2 + $0x28] sm:$0xf]
      %v2537 = vld [vmem:[#allocation2 + $0x2c] sm:$0xf]
      %v2538 = vld [vmem:[#allocation2 + $0x30] sm:$0xf]
      %v2539 = vld [vmem:[#allocation2 + $0x34] sm:$0xf]
      %v2540 = vld [vmem:[#allocation2 + $0x38] sm:$0xf]
      %v2541 = vld [vmem:[#allocation2 + $0x3c] sm:$0xf]
      %v2542 = vld [vmem:[#allocation2 + $0x40] sm:$0xf]
      %v2543 = vld [vmem:[#allocation2 + $0x44] sm:$0xf]
      %v2544 = vld [vmem:[#allocation2 + $0x48] sm:$0xf]
      %v2545 = vld [vmem:[#allocation2 + $0x4c] sm:$0xf]
      %v2546 = vld [vmem:[#allocation2 + $0x50] sm:$0xf]
      %v2547 = vld [vmem:[#allocation2 + $0x54] sm:$0xf]
      %v2548 = vld [vmem:[#allocation2 + $0x58] sm:$0xf]
      %v2549 = vld [vmem:[#allocation2 + $0x5c] sm:$0xf]
      %v2550 = vld [vmem:[#allocation2 + $0x60] sm:$0xf]
      %v2551 = vld [vmem:[#allocation2 + $0x64] sm:$0xf]
      %v2552 = vld [vmem:[#allocation2 + $0x68] sm:$0xf]
      %v2553 = vld [vmem:[#allocation2 + $0x6c] sm:$0xf]
      %v2554 = vld [vmem:[#allocation2 + $0x70] sm:$0xf]
      %v2555 = vld [vmem:[#allocation2 + $0x74] sm:$0xf]
      %v2556 = vld [vmem:[#allocation2 + $0x78] sm:$0xf]
      %v2557 = vld [vmem:[#allocation2 + $0x7c] sm:$0xf]
      %v2558 = vld [vmem:[#allocation2 + $0x80] sm:$0xf]
      %v2559 = vld [vmem:[#allocation2 + $0x84] sm:$0xf]
      %v2560 = vld [vmem:[#allocation2 + $0x88] sm:$0xf]
      %v2561 = vld [vmem:[#allocation2 + $0x8c] sm:$0xf]
      %v2562 = vld [vmem:[#allocation2 + $0x90] sm:$0xf]
      %v2563 = vld [vmem:[#allocation2 + $0x94] sm:$0xf]
      %v2564 = vld [vmem:[#allocation2 + $0x98] sm:$0xf]
      %v2565 = vld [vmem:[#allocation2 + $0x9c] sm:$0xf]
      %v2566 = vld [vmem:[#allocation2 + $0xa0] sm:$0xf]
      %v2567 = vld [vmem:[#allocation2 + $0xa4] sm:$0xf]
      %v2568 = vld [vmem:[#allocation2 + $0xa8] sm:$0xf]
      %v2569 = vld [vmem:[#allocation2 + $0xac] sm:$0xf]
      %v2570 = vld [vmem:[#allocation2 + $0xb0] sm:$0xf]
      %v2571 = vld [vmem:[#allocation2 + $0xb4] sm:$0xf]
      %v2572 = vld [vmem:[#allocation2 + $0xb8] sm:$0xf]
      %v2573 = vld [vmem:[#allocation2 + $0xbc] sm:$0xf]
      %v2574 = vld [vmem:[#allocation2 + $0xc0] sm:$0x1]
      %s2575 = scalar_lea.vmem %s3, 2
      %v2576 = vld [vmem:[%s2575] sm:$0x1]
      %v2626 = vunpack.c.l.b16 %v2526
      %v2627 = vunpack.c.l.b16 %v2527
      %v2628 = vunpack.c.l.b16 %v2528
      %v2629 = vunpack.c.l.b16 %v2529
      %v2630 = vunpack.c.l.b16 %v2530
      %v2631 = vunpack.c.l.b16 %v2531
      %v2632 = vunpack.c.l.b16 %v2532
      %v2633 = vunpack.c.l.b16 %v2533
      %v2634 = vunpack.c.l.b16 %v2534
      %v2635 = vunpack.c.l.b16 %v2535
      %v2636 = vunpack.c.l.b16 %v2536
      %v2637 = vunpack.c.l.b16 %v2537
      %v2638 = vunpack.c.l.b16 %v2538
      %v2639 = vunpack.c.l.b16 %v2539
      %v2640 = vunpack.c.l.b16 %v2540
      %v2641 = vunpack.c.l.b16 %v2541
      %v2642 = vunpack.c.l.b16 %v2542
      %v2643 = vunpack.c.l.b16 %v2543
      %v2644 = vunpack.c.l.b16 %v2544
      %v2645 = vunpack.c.l.b16 %v2545
      %v2646 = vunpack.c.l.b16 %v2546
      %v2647 = vunpack.c.l.b16 %v2547
      %v2648 = vunpack.c.l.b16 %v2548
      %v2649 = vunpack.c.l.b16 %v2549
      %v2650 = vunpack.c.l.b16 %v2550
      %v2651 = vunpack.c.l.b16 %v2551
      %v2652 = vunpack.c.l.b16 %v2552
      %v2653 = vunpack.c.l.b16 %v2553
      %v2654 = vunpack.c.l.b16 %v2554
      %v2655 = vunpack.c.l.b16 %v2555
      %v2656 = vunpack.c.l.b16 %v2556
      %v2657 = vunpack.c.l.b16 %v2557
      %v2658 = vunpack.c.l.b16 %v2558
      %v2659 = vunpack.c.l.b16 %v2559
      %v2660 = vunpack.c.l.b16 %v2560
      %v2661 = vunpack.c.l.b16 %v2561
      %v2662 = vunpack.c.l.b16 %v2562
      %v2663 = vunpack.c.l.b16 %v2563
      %v2664 = vunpack.c.l.b16 %v2564
      %v2665 = vunpack.c.l.b16 %v2565
      %v2666 = vunpack.c.l.b16 %v2566
      %v2667 = vunpack.c.l.b16 %v2567
      %v2668 = vunpack.c.l.b16 %v2568
      %v2669 = vunpack.c.l.b16 %v2569
      %v2670 = vunpack.c.l.b16 %v2570
      %v2671 = vunpack.c.l.b16 %v2571
      %v2672 = vunpack.c.l.b16 %v2572
      %v2673 = vunpack.c.l.b16 %v2573
      %v2674 = vunpack.c.l.b16 %v2574
      %v2675 = vpack.c.b16 %v2627, %v2626
      %v2676 = vpack.c.b16 %v2629, %v2628
      %v2677 = vpack.c.b16 %v2631, %v2630
      %v2678 = vpack.c.b16 %v2633, %v2632
      %v2679 = vpack.c.b16 %v2635, %v2634
      %v2680 = vpack.c.b16 %v2637, %v2636
      %v2681 = vpack.c.b16 %v2639, %v2638
      %v2682 = vpack.c.b16 %v2641, %v2640
      %v2683 = vpack.c.b16 %v2643, %v2642
      %v2684 = vpack.c.b16 %v2645, %v2644
      %v2685 = vpack.c.b16 %v2647, %v2646
      %v2686 = vpack.c.b16 %v2649, %v2648
      %v2687 = vpack.c.b16 %v2651, %v2650
      %v2688 = vpack.c.b16 %v2653, %v2652
      %v2689 = vpack.c.b16 %v2655, %v2654
      %v2690 = vpack.c.b16 %v2657, %v2656
      %v2691 = vpack.c.b16 %v2659, %v2658
      %v2692 = vpack.c.b16 %v2661, %v2660
      %v2693 = vpack.c.b16 %v2663, %v2662
      %v2694 = vpack.c.b16 %v2665, %v2664
      %v2695 = vpack.c.b16 %v2667, %v2666
      %v2696 = vpack.c.b16 %v2669, %v2668
      %v2697 = vpack.c.b16 %v2671, %v2670
      %v2698 = vpack.c.b16 %v2673, %v2672
      %v2699 = vpack.c.b16 %v2674, %v2674
      %vm2700 = vcmask 1046528
      %v2701 = vrot.slane %v2675, 1
      %v2702 = vrot.slane %v2676, 1
      %v2703 = vsel %vm2700, %v2701, %v2702
      %v2704 = vrot.slane %v2677, 1
      %v2705 = vsel %vm2700, %v2702, %v2704
      %v2706 = vrot.slane %v2678, 1
      %v2707 = vsel %vm2700, %v2704, %v2706
      %v2708 = vrot.slane %v2679, 1
      %v2709 = vsel %vm2700, %v2706, %v2708
      %v2710 = vrot.slane %v2680, 1
      %v2711 = vsel %vm2700, %v2708, %v2710
      %v2712 = vrot.slane %v2681, 1
      %v2713 = vsel %vm2700, %v2710, %v2712
      %v2714 = vrot.slane %v2682, 1
      %v2715 = vsel %vm2700, %v2712, %v2714
      %v2716 = vrot.slane %v2683, 1
      %v2717 = vsel %vm2700, %v2714, %v2716
      %v2718 = vrot.slane %v2684, 1
      %v2719 = vsel %vm2700, %v2716, %v2718
      %v2720 = vrot.slane %v2685, 1
      %v2721 = vsel %vm2700, %v2718, %v2720
      %v2722 = vrot.slane %v2686, 1
      %v2723 = vsel %vm2700, %v2720, %v2722
      %v2724 = vrot.slane %v2687, 1
      %v2725 = vsel %vm2700, %v2722, %v2724
      %v2726 = vrot.slane %v2688, 1
      %v2727 = vsel %vm2700, %v2724, %v2726
      %v2728 = vrot.slane %v2689, 1
      %v2729 = vsel %vm2700, %v2726, %v2728
      %v2730 = vrot.slane %v2690, 1
      %v2731 = vsel %vm2700, %v2728, %v2730
      %v2732 = vrot.slane %v2691, 1
      %v2733 = vsel %vm2700, %v2730, %v2732
      %v2734 = vrot.slane %v2692, 1
      %v2735 = vsel %vm2700, %v2732, %v2734
      %v2736 = vrot.slane %v2693, 1
      %v2737 = vsel %vm2700, %v2734, %v2736
      %v2738 = vrot.slane %v2694, 1
      %v2739 = vsel %vm2700, %v2736, %v2738
      %v2740 = vrot.slane %v2695, 1
      %v2741 = vsel %vm2700, %v2738, %v2740
      %v2742 = vrot.slane %v2696, 1
      %v2743 = vsel %vm2700, %v2740, %v2742
      %v2744 = vrot.slane %v2697, 1
      %v2745 = vsel %vm2700, %v2742, %v2744
      %v2746 = vrot.slane %v2698, 1
      %v2747 = vsel %vm2700, %v2744, %v2746
      %v2748 = vrot.slane %v2699, 1
      %v2749 = vsel %vm2700, %v2746, %v2748
      %v2751 = vsel %vm1361, %v2703, 0
      %v2754 = vsel %vm1361, %v2705, 0
      %v2757 = vsel %vm1361, %v2707, 0
      %v2760 = vsel %vm1361, %v2709, 0
      %v2763 = vsel %vm1361, %v2711, 0
      %v2766 = vsel %vm1361, %v2713, 0
      %v2769 = vsel %vm1361, %v2715, 0
      %v2772 = vsel %vm1361, %v2717, 0
      %v2775 = vsel %vm1361, %v2719, 0
      %v2778 = vsel %vm1361, %v2721, 0
      %v2781 = vsel %vm1361, %v2723, 0
      %v2784 = vsel %vm1361, %v2725, 0
      %v2787 = vsel %vm1361, %v2727, 0
      %v2790 = vsel %vm1361, %v2729, 0
      %v2793 = vsel %vm1361, %v2731, 0
      %v2796 = vsel %vm1361, %v2733, 0
      %v2799 = vsel %vm1361, %v2735, 0
      %v2802 = vsel %vm1361, %v2737, 0
      %v2805 = vsel %vm1361, %v2739, 0
      %v2808 = vsel %vm1361, %v2741, 0
      %v2811 = vsel %vm1361, %v2743, 0
      %v2814 = vsel %vm1361, %v2745, 0
      %v2817 = vsel %vm1361, %v2747, 0
      %v2820 = vsel %vm1361, %v2749, 0
      %v2823 = vsel %vm1434, %v2576, 0
      %2825 = vmatprep.subr.bf16.mxu0 0
      %2826 = vmatpush1.bf16.msra.mxu0 0
      %2827 = vmatprep.subr.bf16.mxu0 0
      %2828 = vmatpush1.bf16.msra.mxu0 0
      %2829 = vmatprep.subr.bf16.mxu0 0
      %2830 = vmatpush1.bf16.msra.mxu0 0
      %2831 = vmatprep.subr.bf16.mxu0 0
      %2832 = vmatpush1.bf16.msra.mxu0 0
      %2833 = vmatprep.subr.bf16.mxu0 0
      %2834 = vmatpush1.bf16.msra.mxu0 0
      %2835 = vmatprep.subr.bf16.mxu0 0
      %2836 = vmatpush1.bf16.msra.mxu0 0
      %2837 = vmatprep.subr.bf16.mxu0 0
      %2838 = vmatpush1.bf16.msra.mxu0 0
      %2839 = vmatprep.subr.bf16.mxu0 0
      %2840 = vmatpush1.bf16.msra.mxu0 %v2823
      %2841 = vmatprep.subr.bf16.mxu0 0
      %2842 = vmatpush2.bf16.msra.mxu0 0
      %2843 = vmatprep.subr.bf16.mxu0 0
      %2844 = vmatpush2.bf16.msra.mxu0 0
      %2845 = vmatprep.subr.bf16.mxu0 0
      %2846 = vmatpush2.bf16.msra.mxu0 0
      %2847 = vmatprep.subr.bf16.mxu0 0
      %2848 = vmatpush2.bf16.msra.mxu0 0
      %2849 = vmatprep.subr.bf16.mxu0 0
      %2850 = vmatpush2.bf16.msra.mxu0 0
      %2851 = vmatprep.subr.bf16.mxu0 0
      %2852 = vmatpush2.bf16.msra.mxu0 0
      %2853 = vmatprep.subr.bf16.mxu0 0
      %2854 = vmatpush2.bf16.msra.mxu0 0
      %2855 = vmatprep.subr.bf16.mxu0 0
      %2856 = vmatpush2.bf16.msra.mxu0 0
      %2857 = vmatprep.mubr.bf16.mxu0 0
      %2858 = vmatmul.mubr.bf16.gmra.mxu0 %v2751
      %v2859 = vpop.f32.mrf.mxu0
      %v2860 = vadd.f32 0.0, %v2859
      %v2861 = vpop.f32.mrf.mxu0
      %v2862 = vpop.f32.mrf.mxu0
      %v2863 = vadd.f32 0.0, %v2862
      %v2864 = vpop.f32.mrf.mxu0
      %2865 = vmatprep.mubr.bf16.mxu0 0
      %2866 = vmatmul.mubr.bf16.gmra.mxu0 %v2754
      %v2867 = vpop.f32.mrf.mxu0
      %v2868 = vadd.f32 0.0, %v2867
      %v2869 = vpop.f32.mrf.mxu0
      %v2870 = vpop.f32.mrf.mxu0
      %v2871 = vadd.f32 0.0, %v2870
      %v2872 = vpop.f32.mrf.mxu0
      %2873 = vmatprep.mubr.bf16.mxu0 0
      %2874 = vmatmul.mubr.bf16.gmra.mxu0 %v2757
      %v2875 = vpop.f32.mrf.mxu0
      %v2876 = vadd.f32 0.0, %v2875
      %v2877 = vpop.f32.mrf.mxu0
      %v2878 = vpop.f32.mrf.mxu0
      %v2879 = vadd.f32 0.0, %v2878
      %v2880 = vpop.f32.mrf.mxu0
      %2881 = vmatprep.mubr.bf16.mxu0 0
      %2882 = vmatmul.mubr.bf16.gmra.mxu0 %v2760
      %v2883 = vpop.f32.mrf.mxu0
      %v2884 = vadd.f32 0.0, %v2883
      %v2885 = vpop.f32.mrf.mxu0
      %v2886 = vpop.f32.mrf.mxu0
      %v2887 = vadd.f32 0.0, %v2886
      %v2888 = vpop.f32.mrf.mxu0
      %2889 = vmatprep.mubr.bf16.mxu0 0
      %2890 = vmatmul.mubr.bf16.gmra.mxu0 %v2763
      %v2891 = vpop.f32.mrf.mxu0
      %v2892 = vadd.f32 0.0, %v2891
      %v2893 = vpop.f32.mrf.mxu0
      %v2894 = vpop.f32.mrf.mxu0
      %v2895 = vadd.f32 0.0, %v2894
      %v2896 = vpop.f32.mrf.mxu0
      %2897 = vmatprep.mubr.bf16.mxu0 0
      %2898 = vmatmul.mubr.bf16.gmra.mxu0 %v2766
      %v2899 = vpop.f32.mrf.mxu0
      %v2900 = vadd.f32 0.0, %v2899
      %v2901 = vpop.f32.mrf.mxu0
      %v2902 = vpop.f32.mrf.mxu0
      %v2903 = vadd.f32 0.0, %v2902
      %v2904 = vpop.f32.mrf.mxu0
      %2905 = vmatprep.mubr.bf16.mxu0 0
      %2906 = vmatmul.mubr.bf16.gmra.mxu0 %v2769
      %v2907 = vpop.f32.mrf.mxu0
      %v2908 = vadd.f32 0.0, %v2907
      %v2909 = vpop.f32.mrf.mxu0
      %v2910 = vpop.f32.mrf.mxu0
      %v2911 = vadd.f32 0.0, %v2910
      %v2912 = vpop.f32.mrf.mxu0
      %2913 = vmatprep.mubr.bf16.mxu0 0
      %2914 = vmatmul.mubr.bf16.gmra.mxu0 %v2772
      %v2915 = vpop.f32.mrf.mxu0
      %v2916 = vadd.f32 0.0, %v2915
      %v2917 = vpop.f32.mrf.mxu0
      %v2918 = vpop.f32.mrf.mxu0
      %v2919 = vadd.f32 0.0, %v2918
      %v2920 = vpop.f32.mrf.mxu0
      %2921 = vmatprep.mubr.bf16.mxu0 0
      %2922 = vmatmul.mubr.bf16.gmra.mxu0 %v2775
      %v2923 = vpop.f32.mrf.mxu0
      %v2924 = vadd.f32 0.0, %v2923
      %v2925 = vpop.f32.mrf.mxu0
      %v2926 = vpop.f32.mrf.mxu0
      %v2927 = vadd.f32 0.0, %v2926
      %v2928 = vpop.f32.mrf.mxu0
      %2929 = vmatprep.mubr.bf16.mxu0 0
      %2930 = vmatmul.mubr.bf16.gmra.mxu0 %v2778
      %v2931 = vpop.f32.mrf.mxu0
      %v2932 = vadd.f32 0.0, %v2931
      %v2933 = vpop.f32.mrf.mxu0
      %v2934 = vpop.f32.mrf.mxu0
      %v2935 = vadd.f32 0.0, %v2934
      %v2936 = vpop.f32.mrf.mxu0
      %2937 = vmatprep.mubr.bf16.mxu0 0
      %2938 = vmatmul.mubr.bf16.gmra.mxu0 %v2781
      %v2939 = vpop.f32.mrf.mxu0
      %v2940 = vadd.f32 0.0, %v2939
      %v2941 = vpop.f32.mrf.mxu0
      %v2942 = vpop.f32.mrf.mxu0
      %v2943 = vadd.f32 0.0, %v2942
      %v2944 = vpop.f32.mrf.mxu0
      %2945 = vmatprep.mubr.bf16.mxu0 0
      %2946 = vmatmul.mubr.bf16.gmra.mxu0 %v2784
      %v2947 = vpop.f32.mrf.mxu0
      %v2948 = vadd.f32 0.0, %v2947
      %v2949 = vpop.f32.mrf.mxu0
      %v2950 = vpop.f32.mrf.mxu0
      %v2951 = vadd.f32 0.0, %v2950
      %v2952 = vpop.f32.mrf.mxu0
      %2953 = vmatprep.mubr.bf16.mxu0 0
      %2954 = vmatmul.mubr.bf16.gmra.mxu0 %v2787
      %v2955 = vpop.f32.mrf.mxu0
      %v2956 = vadd.f32 0.0, %v2955
      %v2957 = vpop.f32.mrf.mxu0
      %v2958 = vpop.f32.mrf.mxu0
      %v2959 = vadd.f32 0.0, %v2958
      %v2960 = vpop.f32.mrf.mxu0
      %2961 = vmatprep.mubr.bf16.mxu0 0
      %2962 = vmatmul.mubr.bf16.gmra.mxu0 %v2790
      %v2963 = vpop.f32.mrf.mxu0
      %v2964 = vadd.f32 0.0, %v2963
      %v2965 = vpop.f32.mrf.mxu0
      %v2966 = vpop.f32.mrf.mxu0
      %v2967 = vadd.f32 0.0, %v2966
      %v2968 = vpop.f32.mrf.mxu0
      %2969 = vmatprep.mubr.bf16.mxu0 0
      %2970 = vmatmul.mubr.bf16.gmra.mxu0 %v2793
      %v2971 = vpop.f32.mrf.mxu0
      %v2972 = vadd.f32 0.0, %v2971
      %v2973 = vpop.f32.mrf.mxu0
      %v2974 = vpop.f32.mrf.mxu0
      %v2975 = vadd.f32 0.0, %v2974
      %v2976 = vpop.f32.mrf.mxu0
      %2977 = vmatprep.mubr.bf16.mxu0 0
      %2978 = vmatmul.mubr.bf16.gmra.mxu0 %v2796
      %v2979 = vpop.f32.mrf.mxu0
      %v2980 = vadd.f32 0.0, %v2979
      %v2981 = vpop.f32.mrf.mxu0
      %v2982 = vpop.f32.mrf.mxu0
      %v2983 = vadd.f32 0.0, %v2982
      %v2984 = vpop.f32.mrf.mxu0
      %2985 = vmatprep.mubr.bf16.mxu0 0
      %2986 = vmatmul.mubr.bf16.gmra.mxu0 %v2799
      %v2987 = vpop.f32.mrf.mxu0
      %v2988 = vadd.f32 0.0, %v2987
      %v2989 = vpop.f32.mrf.mxu0
      %v2990 = vpop.f32.mrf.mxu0
      %v2991 = vadd.f32 0.0, %v2990
      %v2992 = vpop.f32.mrf.mxu0
      %2993 = vmatprep.mubr.bf16.mxu0 0
      %2994 = vmatmul.mubr.bf16.gmra.mxu0 %v2802
      %v2995 = vpop.f32.mrf.mxu0
      %v2996 = vadd.f32 0.0, %v2995
      %v2997 = vpop.f32.mrf.mxu0
      %v2998 = vpop.f32.mrf.mxu0
      %v2999 = vadd.f32 0.0, %v2998
      %v3000 = vpop.f32.mrf.mxu0
      %3001 = vmatprep.mubr.bf16.mxu0 0
      %3002 = vmatmul.mubr.bf16.gmra.mxu0 %v2805
      %v3003 = vpop.f32.mrf.mxu0
      %v3004 = vadd.f32 0.0, %v3003
      %v3005 = vpop.f32.mrf.mxu0
      %v3006 = vpop.f32.mrf.mxu0
      %v3007 = vadd.f32 0.0, %v3006
      %v3008 = vpop.f32.mrf.mxu0
      %3009 = vmatprep.mubr.bf16.mxu0 0
      %3010 = vmatmul.mubr.bf16.gmra.mxu0 %v2808
      %v3011 = vpop.f32.mrf.mxu0
      %v3012 = vadd.f32 0.0, %v3011
      %v3013 = vpop.f32.mrf.mxu0
      %v3014 = vpop.f32.mrf.mxu0
      %v3015 = vadd.f32 0.0, %v3014
      %v3016 = vpop.f32.mrf.mxu0
      %3017 = vmatprep.mubr.bf16.mxu0 0
      %3018 = vmatmul.mubr.bf16.gmra.mxu0 %v2811
      %v3019 = vpop.f32.mrf.mxu0
      %v3020 = vadd.f32 0.0, %v3019
      %v3021 = vpop.f32.mrf.mxu0
      %v3022 = vpop.f32.mrf.mxu0
      %v3023 = vadd.f32 0.0, %v3022
      %v3024 = vpop.f32.mrf.mxu0
      %3025 = vmatprep.mubr.bf16.mxu0 0
      %3026 = vmatmul.mubr.bf16.gmra.mxu0 %v2814
      %v3027 = vpop.f32.mrf.mxu0
      %v3028 = vadd.f32 0.0, %v3027
      %v3029 = vpop.f32.mrf.mxu0
      %v3030 = vpop.f32.mrf.mxu0
      %v3031 = vadd.f32 0.0, %v3030
      %v3032 = vpop.f32.mrf.mxu0
      %3033 = vmatprep.mubr.bf16.mxu0 0
      %3034 = vmatmul.mubr.bf16.gmra.mxu0 %v2817
      %v3035 = vpop.f32.mrf.mxu0
      %v3036 = vadd.f32 0.0, %v3035
      %v3037 = vpop.f32.mrf.mxu0
      %v3038 = vpop.f32.mrf.mxu0
      %v3039 = vadd.f32 0.0, %v3038
      %v3040 = vpop.f32.mrf.mxu0
      %3041 = vmatprep.mubr.bf16.mxu0 0
      %3042 = vmatmul.mubr.bf16.gmra.mxu0 %v2820
      %v3043 = vpop.f32.mrf.mxu0
      %v3044 = vadd.f32 0.0, %v3043
      %v3045 = vpop.f32.mrf.mxu0
      %v3046 = vpop.f32.mrf.mxu0
      %v3047 = vadd.f32 0.0, %v3046
      %v3048 = vpop.f32.mrf.mxu0
      %3049 = vdwg.mxu0
      %v3050 = vld [vmem:[#allocation3] sm:$0xff]
      %v3051 = vld [vmem:[#allocation3 + $0x8] sm:$0xff]
      %v3052 = vld [vmem:[#allocation3 + $0x10] sm:$0xff]
      %v3053 = vld [vmem:[#allocation3 + $0x18] sm:$0xff]
      %v3054 = vld [vmem:[#allocation3 + $0x20] sm:$0xff]
      %v3055 = vld [vmem:[#allocation3 + $0x28] sm:$0xff]
      %v3056 = vld [vmem:[#allocation3 + $0x30] sm:$0xff]
      %v3057 = vld [vmem:[#allocation3 + $0x38] sm:$0xff]
      %v3058 = vld [vmem:[#allocation3 + $0x40] sm:$0xff]
      %v3059 = vld [vmem:[#allocation3 + $0x48] sm:$0xff]
      %v3060 = vld [vmem:[#allocation3 + $0x50] sm:$0xff]
      %v3061 = vld [vmem:[#allocation3 + $0x58] sm:$0xff]
      %v3062 = vld [vmem:[#allocation3 + $0x60] sm:$0xff]
      %v3063 = vld [vmem:[#allocation3 + $0x68] sm:$0xff]
      %v3064 = vld [vmem:[#allocation3 + $0x70] sm:$0xff]
      %v3065 = vld [vmem:[#allocation3 + $0x78] sm:$0xff]
      %v3066 = vld [vmem:[#allocation3 + $0x80] sm:$0xff]
      %v3067 = vld [vmem:[#allocation3 + $0x88] sm:$0xff]
      %v3068 = vld [vmem:[#allocation3 + $0x90] sm:$0xff]
      %v3069 = vld [vmem:[#allocation3 + $0x98] sm:$0xff]
      %v3070 = vld [vmem:[#allocation3 + $0xa0] sm:$0xff]
      %v3071 = vld [vmem:[#allocation3 + $0xa8] sm:$0xff]
      %v3072 = vld [vmem:[#allocation3 + $0xb0] sm:$0xff]
      %v3073 = vld [vmem:[#allocation3 + $0xb8] sm:$0xff]
      %v3074 = vld [vmem:[#allocation3 + $0xc0] sm:$0xff]
      %v3075 = vld [vmem:[#allocation3 + $0xc8] sm:$0xff]
      %v3076 = vld [vmem:[#allocation3 + $0xd0] sm:$0xff]
      %v3077 = vld [vmem:[#allocation3 + $0xd8] sm:$0xff]
      %v3078 = vld [vmem:[#allocation3 + $0xe0] sm:$0xff]
      %v3079 = vld [vmem:[#allocation3 + $0xe8] sm:$0xff]
      %v3080 = vld [vmem:[#allocation3 + $0xf0] sm:$0xff]
      %v3081 = vld [vmem:[#allocation3 + $0xf8] sm:$0xff]
      %v3082 = vld [vmem:[#allocation3 + $0x100] sm:$0xff]
      %v3083 = vld [vmem:[#allocation3 + $0x108] sm:$0xff]
      %v3084 = vld [vmem:[#allocation3 + $0x110] sm:$0xff]
      %v3085 = vld [vmem:[#allocation3 + $0x118] sm:$0xff]
      %v3086 = vld [vmem:[#allocation3 + $0x120] sm:$0xff]
      %v3087 = vld [vmem:[#allocation3 + $0x128] sm:$0xff]
      %v3088 = vld [vmem:[#allocation3 + $0x130] sm:$0xff]
      %v3089 = vld [vmem:[#allocation3 + $0x138] sm:$0xff]
      %v3090 = vld [vmem:[#allocation3 + $0x140] sm:$0xff]
      %v3091 = vld [vmem:[#allocation3 + $0x148] sm:$0xff]
      %v3092 = vld [vmem:[#allocation3 + $0x150] sm:$0xff]
      %v3093 = vld [vmem:[#allocation3 + $0x158] sm:$0xff]
      %v3094 = vld [vmem:[#allocation3 + $0x160] sm:$0xff]
      %v3095 = vld [vmem:[#allocation3 + $0x168] sm:$0xff]
      %v3096 = vld [vmem:[#allocation3 + $0x170] sm:$0xff]
      %v3097 = vld [vmem:[#allocation3 + $0x178] sm:$0xff]
      %v3098 = vadd.f32 %v3050, %v2860
      %v3099 = vadd.f32 %v3051, %v2863
      %v3100 = vadd.f32 %v3052, %v2868
      %v3101 = vadd.f32 %v3053, %v2871
      %v3102 = vadd.f32 %v3054, %v2876
      %v3103 = vadd.f32 %v3055, %v2879
      %v3104 = vadd.f32 %v3056, %v2884
      %v3105 = vadd.f32 %v3057, %v2887
      %v3106 = vadd.f32 %v3058, %v2892
      %v3107 = vadd.f32 %v3059, %v2895
      %v3108 = vadd.f32 %v3060, %v2900
      %v3109 = vadd.f32 %v3061, %v2903
      %v3110 = vadd.f32 %v3062, %v2908
      %v3111 = vadd.f32 %v3063, %v2911
      %v3112 = vadd.f32 %v3064, %v2916
      %v3113 = vadd.f32 %v3065, %v2919
      %v3114 = vadd.f32 %v3066, %v2924
      %v3115 = vadd.f32 %v3067, %v2927
      %v3116 = vadd.f32 %v3068, %v2932
      %v3117 = vadd.f32 %v3069, %v2935
      %v3118 = vadd.f32 %v3070, %v2940
      %v3119 = vadd.f32 %v3071, %v2943
      %v3120 = vadd.f32 %v3072, %v2948
      %v3121 = vadd.f32 %v3073, %v2951
      %v3122 = vadd.f32 %v3074, %v2956
      %v3123 = vadd.f32 %v3075, %v2959
      %v3124 = vadd.f32 %v3076, %v2964
      %v3125 = vadd.f32 %v3077, %v2967
      %v3126 = vadd.f32 %v3078, %v2972
      %v3127 = vadd.f32 %v3079, %v2975
      %v3128 = vadd.f32 %v3080, %v2980
      %v3129 = vadd.f32 %v3081, %v2983
      %v3130 = vadd.f32 %v3082, %v2988
      %v3131 = vadd.f32 %v3083, %v2991
      %v3132 = vadd.f32 %v3084, %v2996
      %v3133 = vadd.f32 %v3085, %v2999
      %v3134 = vadd.f32 %v3086, %v3004
      %v3135 = vadd.f32 %v3087, %v3007
      %v3136 = vadd.f32 %v3088, %v3012
      %v3137 = vadd.f32 %v3089, %v3015
      %v3138 = vadd.f32 %v3090, %v3020
      %v3139 = vadd.f32 %v3091, %v3023
      %v3140 = vadd.f32 %v3092, %v3028
      %v3141 = vadd.f32 %v3093, %v3031
      %v3142 = vadd.f32 %v3094, %v3036
      %v3143 = vadd.f32 %v3095, %v3039
      %v3144 = vadd.f32 %v3096, %v3044
      %v3145 = vadd.f32 %v3097, %v3047
      %3146 = vst.msk [vmem:[#allocation3] sm:$0xff] %vm423, %v3098
      %3147 = vst.msk [vmem:[#allocation3 + $0x8] sm:$0xff] %vm423, %v3099
      %3148 = vst.msk [vmem:[#allocation3 + $0x10] sm:$0xff] %vm423, %v3100
      %3149 = vst.msk [vmem:[#allocation3 + $0x18] sm:$0xff] %vm423, %v3101
      %3150 = vst.msk [vmem:[#allocation3 + $0x20] sm:$0xff] %vm423, %v3102
      %3151 = vst.msk [vmem:[#allocation3 + $0x28] sm:$0xff] %vm423, %v3103
      %3152 = vst.msk [vmem:[#allocation3 + $0x30] sm:$0xff] %vm423, %v3104
      %3153 = vst.msk [vmem:[#allocation3 + $0x38] sm:$0xff] %vm423, %v3105
      %3154 = vst.msk [vmem:[#allocation3 + $0x40] sm:$0xff] %vm423, %v3106
      %3155 = vst.msk [vmem:[#allocation3 + $0x48] sm:$0xff] %vm423, %v3107
      %3156 = vst.msk [vmem:[#allocation3 + $0x50] sm:$0xff] %vm423, %v3108
      %3157 = vst.msk [vmem:[#allocation3 + $0x58] sm:$0xff] %vm423, %v3109
      %3158 = vst.msk [vmem:[#allocation3 + $0x60] sm:$0xff] %vm423, %v3110
      %3159 = vst.msk [vmem:[#allocation3 + $0x68] sm:$0xff] %vm423, %v3111
      %3160 = vst.msk [vmem:[#allocation3 + $0x70] sm:$0xff] %vm423, %v3112
      %3161 = vst.msk [vmem:[#allocation3 + $0x78] sm:$0xff] %vm423, %v3113
      %3162 = vst.msk [vmem:[#allocation3 + $0x80] sm:$0xff] %vm423, %v3114
      %3163 = vst.msk [vmem:[#allocation3 + $0x88] sm:$0xff] %vm423, %v3115
      %3164 = vst.msk [vmem:[#allocation3 + $0x90] sm:$0xff] %vm423, %v3116
      %3165 = vst.msk [vmem:[#allocation3 + $0x98] sm:$0xff] %vm423, %v3117
      %3166 = vst.msk [vmem:[#allocation3 + $0xa0] sm:$0xff] %vm423, %v3118
      %3167 = vst.msk [vmem:[#allocation3 + $0xa8] sm:$0xff] %vm423, %v3119
      %3168 = vst.msk [vmem:[#allocation3 + $0xb0] sm:$0xff] %vm423, %v3120
      %3169 = vst.msk [vmem:[#allocation3 + $0xb8] sm:$0xff] %vm423, %v3121
      %3170 = vst.msk [vmem:[#allocation3 + $0xc0] sm:$0xff] %vm423, %v3122
      %3171 = vst.msk [vmem:[#allocation3 + $0xc8] sm:$0xff] %vm423, %v3123
      %3172 = vst.msk [vmem:[#allocation3 + $0xd0] sm:$0xff] %vm423, %v3124
      %3173 = vst.msk [vmem:[#allocation3 + $0xd8] sm:$0xff] %vm423, %v3125
      %3174 = vst.msk [vmem:[#allocation3 + $0xe0] sm:$0xff] %vm423, %v3126
      %3175 = vst.msk [vmem:[#allocation3 + $0xe8] sm:$0xff] %vm423, %v3127
      %3176 = vst.msk [vmem:[#allocation3 + $0xf0] sm:$0xff] %vm423, %v3128
      %3177 = vst.msk [vmem:[#allocation3 + $0xf8] sm:$0xff] %vm423, %v3129
      %3178 = vst.msk [vmem:[#allocation3 + $0x100] sm:$0xff] %vm423, %v3130
      %3179 = vst.msk [vmem:[#allocation3 + $0x108] sm:$0xff] %vm423, %v3131
      %3180 = vst.msk [vmem:[#allocation3 + $0x110] sm:$0xff] %vm423, %v3132
      %3181 = vst.msk [vmem:[#allocation3 + $0x118] sm:$0xff] %vm423, %v3133
      %3182 = vst.msk [vmem:[#allocation3 + $0x120] sm:$0xff] %vm423, %v3134
      %3183 = vst.msk [vmem:[#allocation3 + $0x128] sm:$0xff] %vm423, %v3135
      %3184 = vst.msk [vmem:[#allocation3 + $0x130] sm:$0xff] %vm423, %v3136
      %3185 = vst.msk [vmem:[#allocation3 + $0x138] sm:$0xff] %vm423, %v3137
      %3186 = vst.msk [vmem:[#allocation3 + $0x140] sm:$0xff] %vm423, %v3138
      %3187 = vst.msk [vmem:[#allocation3 + $0x148] sm:$0xff] %vm423, %v3139
      %3188 = vst.msk [vmem:[#allocation3 + $0x150] sm:$0xff] %vm423, %v3140
      %3189 = vst.msk [vmem:[#allocation3 + $0x158] sm:$0xff] %vm423, %v3141
      %3190 = vst.msk [vmem:[#allocation3 + $0x160] sm:$0xff] %vm423, %v3142
      %3191 = vst.msk [vmem:[#allocation3 + $0x168] sm:$0xff] %vm423, %v3143
      %3192 = vst.msk [vmem:[#allocation3 + $0x170] sm:$0xff] %vm423, %v3144
      %3193 = vst.msk [vmem:[#allocation3 + $0x178] sm:$0xff] %vm423, %v3145
      %v3194 = vld [vmem:[#allocation2 + $0xc] sm:$0xf]
      %v3195 = vld [vmem:[#allocation2 + $0x10] sm:$0xf]
      %v3196 = vld [vmem:[#allocation2 + $0x14] sm:$0xf]
      %v3197 = vld [vmem:[#allocation2 + $0x18] sm:$0xf]
      %v3198 = vld [vmem:[#allocation2 + $0x1c] sm:$0xf]
      %v3199 = vld [vmem:[#allocation2 + $0x20] sm:$0xf]
      %v3200 = vld [vmem:[#allocation2 + $0x24] sm:$0xf]
      %v3201 = vld [vmem:[#allocation2 + $0x28] sm:$0xf]
      %v3202 = vld [vmem:[#allocation2 + $0x2c] sm:$0xf]
      %v3203 = vld [vmem:[#allocation2 + $0x30] sm:$0xf]
      %v3204 = vld [vmem:[#allocation2 + $0x34] sm:$0xf]
      %v3205 = vld [vmem:[#allocation2 + $0x38] sm:$0xf]
      %v3206 = vld [vmem:[#allocation2 + $0x3c] sm:$0xf]
      %v3207 = vld [vmem:[#allocation2 + $0x40] sm:$0xf]
      %v3208 = vld [vmem:[#allocation2 + $0x44] sm:$0xf]
      %v3209 = vld [vmem:[#allocation2 + $0x48] sm:$0xf]
      %v3210 = vld [vmem:[#allocation2 + $0x4c] sm:$0xf]
      %v3211 = vld [vmem:[#allocation2 + $0x50] sm:$0xf]
      %v3212 = vld [vmem:[#allocation2 + $0x54] sm:$0xf]
      %v3213 = vld [vmem:[#allocation2 + $0x58] sm:$0xf]
      %v3214 = vld [vmem:[#allocation2 + $0x5c] sm:$0xf]
      %v3215 = vld [vmem:[#allocation2 + $0x60] sm:$0xf]
      %v3216 = vld [vmem:[#allocation2 + $0x64] sm:$0xf]
      %v3217 = vld [vmem:[#allocation2 + $0x68] sm:$0xf]
      %v3218 = vld [vmem:[#allocation2 + $0x6c] sm:$0xf]
      %v3219 = vld [vmem:[#allocation2 + $0x70] sm:$0xf]
      %v3220 = vld [vmem:[#allocation2 + $0x74] sm:$0xf]
      %v3221 = vld [vmem:[#allocation2 + $0x78] sm:$0xf]
      %v3222 = vld [vmem:[#allocation2 + $0x7c] sm:$0xf]
      %v3223 = vld [vmem:[#allocation2 + $0x80] sm:$0xf]
      %v3224 = vld [vmem:[#allocation2 + $0x84] sm:$0xf]
      %v3225 = vld [vmem:[#allocation2 + $0x88] sm:$0xf]
      %v3226 = vld [vmem:[#allocation2 + $0x8c] sm:$0xf]
      %v3227 = vld [vmem:[#allocation2 + $0x90] sm:$0xf]
      %v3228 = vld [vmem:[#allocation2 + $0x94] sm:$0xf]
      %v3229 = vld [vmem:[#allocation2 + $0x98] sm:$0xf]
      %v3230 = vld [vmem:[#allocation2 + $0x9c] sm:$0xf]
      %v3231 = vld [vmem:[#allocation2 + $0xa0] sm:$0xf]
      %v3232 = vld [vmem:[#allocation2 + $0xa4] sm:$0xf]
      %v3233 = vld [vmem:[#allocation2 + $0xa8] sm:$0xf]
      %v3234 = vld [vmem:[#allocation2 + $0xac] sm:$0xf]
      %v3235 = vld [vmem:[#allocation2 + $0xb0] sm:$0xf]
      %v3236 = vld [vmem:[#allocation2 + $0xb4] sm:$0xf]
      %v3237 = vld [vmem:[#allocation2 + $0xb8] sm:$0xf]
      %v3238 = vld [vmem:[#allocation2 + $0xbc] sm:$0xf]
      %v3239 = vld [vmem:[#allocation2 + $0xc0] sm:$0xf]
      %v3240 = vld [vmem:[#allocation2 + $0xc4] sm:$0xf]
      %v3241 = vld [vmem:[#allocation2 + $0xc8] sm:$0xf]
      %s3242 = scalar_lea.vmem %s3, 3
      %v3243 = vld [vmem:[%s3242] sm:$0x1]
      %v3292 = vunpack.c.l.b16 %v3194
      %v3293 = vunpack.c.l.b16 %v3195
      %v3294 = vunpack.c.l.b16 %v3196
      %v3295 = vunpack.c.l.b16 %v3197
      %v3296 = vunpack.c.l.b16 %v3198
      %v3297 = vunpack.c.l.b16 %v3199
      %v3298 = vunpack.c.l.b16 %v3200
      %v3299 = vunpack.c.l.b16 %v3201
      %v3300 = vunpack.c.l.b16 %v3202
      %v3301 = vunpack.c.l.b16 %v3203
      %v3302 = vunpack.c.l.b16 %v3204
      %v3303 = vunpack.c.l.b16 %v3205
      %v3304 = vunpack.c.l.b16 %v3206
      %v3305 = vunpack.c.l.b16 %v3207
      %v3306 = vunpack.c.l.b16 %v3208
      %v3307 = vunpack.c.l.b16 %v3209
      %v3308 = vunpack.c.l.b16 %v3210
      %v3309 = vunpack.c.l.b16 %v3211
      %v3310 = vunpack.c.l.b16 %v3212
      %v3311 = vunpack.c.l.b16 %v3213
      %v3312 = vunpack.c.l.b16 %v3214
      %v3313 = vunpack.c.l.b16 %v3215
      %v3314 = vunpack.c.l.b16 %v3216
      %v3315 = vunpack.c.l.b16 %v3217
      %v3316 = vunpack.c.l.b16 %v3218
      %v3317 = vunpack.c.l.b16 %v3219
      %v3318 = vunpack.c.l.b16 %v3220
      %v3319 = vunpack.c.l.b16 %v3221
      %v3320 = vunpack.c.l.b16 %v3222
      %v3321 = vunpack.c.l.b16 %v3223
      %v3322 = vunpack.c.l.b16 %v3224
      %v3323 = vunpack.c.l.b16 %v3225
      %v3324 = vunpack.c.l.b16 %v3226
      %v3325 = vunpack.c.l.b16 %v3227
      %v3326 = vunpack.c.l.b16 %v3228
      %v3327 = vunpack.c.l.b16 %v3229
      %v3328 = vunpack.c.l.b16 %v3230
      %v3329 = vunpack.c.l.b16 %v3231
      %v3330 = vunpack.c.l.b16 %v3232
      %v3331 = vunpack.c.l.b16 %v3233
      %v3332 = vunpack.c.l.b16 %v3234
      %v3333 = vunpack.c.l.b16 %v3235
      %v3334 = vunpack.c.l.b16 %v3236
      %v3335 = vunpack.c.l.b16 %v3237
      %v3336 = vunpack.c.l.b16 %v3238
      %v3337 = vunpack.c.l.b16 %v3239
      %v3338 = vunpack.c.l.b16 %v3240
      %v3339 = vunpack.c.l.b16 %v3241
      %v3340 = vpack.c.b16 %v3293, %v3292
      %v3341 = vpack.c.b16 %v3295, %v3294
      %v3342 = vpack.c.b16 %v3297, %v3296
      %v3343 = vpack.c.b16 %v3299, %v3298
      %v3344 = vpack.c.b16 %v3301, %v3300
      %v3345 = vpack.c.b16 %v3303, %v3302
      %v3346 = vpack.c.b16 %v3305, %v3304
      %v3347 = vpack.c.b16 %v3307, %v3306
      %v3348 = vpack.c.b16 %v3309, %v3308
      %v3349 = vpack.c.b16 %v3311, %v3310
      %v3350 = vpack.c.b16 %v3313, %v3312
      %v3351 = vpack.c.b16 %v3315, %v3314
      %v3352 = vpack.c.b16 %v3317, %v3316
      %v3353 = vpack.c.b16 %v3319, %v3318
      %v3354 = vpack.c.b16 %v3321, %v3320
      %v3355 = vpack.c.b16 %v3323, %v3322
      %v3356 = vpack.c.b16 %v3325, %v3324
      %v3357 = vpack.c.b16 %v3327, %v3326
      %v3358 = vpack.c.b16 %v3329, %v3328
      %v3359 = vpack.c.b16 %v3331, %v3330
      %v3360 = vpack.c.b16 %v3333, %v3332
      %v3361 = vpack.c.b16 %v3335, %v3334
      %v3362 = vpack.c.b16 %v3337, %v3336
      %v3363 = vpack.c.b16 %v3339, %v3338
      %v3365 = vsel %vm1361, %v3340, 0
      %v3368 = vsel %vm1361, %v3341, 0
      %v3371 = vsel %vm1361, %v3342, 0
      %v3374 = vsel %vm1361, %v3343, 0
      %v3377 = vsel %vm1361, %v3344, 0
      %v3380 = vsel %vm1361, %v3345, 0
      %v3383 = vsel %vm1361, %v3346, 0
      %v3386 = vsel %vm1361, %v3347, 0
      %v3389 = vsel %vm1361, %v3348, 0
      %v3392 = vsel %vm1361, %v3349, 0
      %v3395 = vsel %vm1361, %v3350, 0
      %v3398 = vsel %vm1361, %v3351, 0
      %v3401 = vsel %vm1361, %v3352, 0
      %v3404 = vsel %vm1361, %v3353, 0
      %v3407 = vsel %vm1361, %v3354, 0
      %v3410 = vsel %vm1361, %v3355, 0
      %v3413 = vsel %vm1361, %v3356, 0
      %v3416 = vsel %vm1361, %v3357, 0
      %v3419 = vsel %vm1361, %v3358, 0
      %v3422 = vsel %vm1361, %v3359, 0
      %v3425 = vsel %vm1361, %v3360, 0
      %v3428 = vsel %vm1361, %v3361, 0
      %v3431 = vsel %vm1361, %v3362, 0
      %v3434 = vsel %vm1361, %v3363, 0
      %v3437 = vsel %vm1434, %v3243, 0
      %3439 = vmatprep.subr.bf16.mxu0 0
      %3440 = vmatpush1.bf16.msra.mxu0 0
      %3441 = vmatprep.subr.bf16.mxu0 0
      %3442 = vmatpush1.bf16.msra.mxu0 0
      %3443 = vmatprep.subr.bf16.mxu0 0
      %3444 = vmatpush1.bf16.msra.mxu0 0
      %3445 = vmatprep.subr.bf16.mxu0 0
      %3446 = vmatpush1.bf16.msra.mxu0 0
      %3447 = vmatprep.subr.bf16.mxu0 0
      %3448 = vmatpush1.bf16.msra.mxu0 0
      %3449 = vmatprep.subr.bf16.mxu0 0
      %3450 = vmatpush1.bf16.msra.mxu0 0
      %3451 = vmatprep.subr.bf16.mxu0 0
      %3452 = vmatpush1.bf16.msra.mxu0 0
      %3453 = vmatprep.subr.bf16.mxu0 0
      %3454 = vmatpush1.bf16.msra.mxu0 %v3437
      %3455 = vmatprep.subr.bf16.mxu0 0
      %3456 = vmatpush2.bf16.msra.mxu0 0
      %3457 = vmatprep.subr.bf16.mxu0 0
      %3458 = vmatpush2.bf16.msra.mxu0 0
      %3459 = vmatprep.subr.bf16.mxu0 0
      %3460 = vmatpush2.bf16.msra.mxu0 0
      %3461 = vmatprep.subr.bf16.mxu0 0
      %3462 = vmatpush2.bf16.msra.mxu0 0
      %3463 = vmatprep.subr.bf16.mxu0 0
      %3464 = vmatpush2.bf16.msra.mxu0 0
      %3465 = vmatprep.subr.bf16.mxu0 0
      %3466 = vmatpush2.bf16.msra.mxu0 0
      %3467 = vmatprep.subr.bf16.mxu0 0
      %3468 = vmatpush2.bf16.msra.mxu0 0
      %3469 = vmatprep.subr.bf16.mxu0 0
      %3470 = vmatpush2.bf16.msra.mxu0 0
      %3471 = vmatprep.mubr.bf16.mxu0 0
      %3472 = vmatmul.mubr.bf16.gmra.mxu0 %v3365
      %v3473 = vpop.f32.mrf.mxu0
      %v3474 = vadd.f32 0.0, %v3473
      %v3475 = vpop.f32.mrf.mxu0
      %v3476 = vpop.f32.mrf.mxu0
      %v3477 = vadd.f32 0.0, %v3476
      %v3478 = vpop.f32.mrf.mxu0
      %3479 = vmatprep.mubr.bf16.mxu0 0
      %3480 = vmatmul.mubr.bf16.gmra.mxu0 %v3368
      %v3481 = vpop.f32.mrf.mxu0
      %v3482 = vadd.f32 0.0, %v3481
      %v3483 = vpop.f32.mrf.mxu0
      %v3484 = vpop.f32.mrf.mxu0
      %v3485 = vadd.f32 0.0, %v3484
      %v3486 = vpop.f32.mrf.mxu0
      %3487 = vmatprep.mubr.bf16.mxu0 0
      %3488 = vmatmul.mubr.bf16.gmra.mxu0 %v3371
      %v3489 = vpop.f32.mrf.mxu0
      %v3490 = vadd.f32 0.0, %v3489
      %v3491 = vpop.f32.mrf.mxu0
      %v3492 = vpop.f32.mrf.mxu0
      %v3493 = vadd.f32 0.0, %v3492
      %v3494 = vpop.f32.mrf.mxu0
      %3495 = vmatprep.mubr.bf16.mxu0 0
      %3496 = vmatmul.mubr.bf16.gmra.mxu0 %v3374
      %v3497 = vpop.f32.mrf.mxu0
      %v3498 = vadd.f32 0.0, %v3497
      %v3499 = vpop.f32.mrf.mxu0
      %v3500 = vpop.f32.mrf.mxu0
      %v3501 = vadd.f32 0.0, %v3500
      %v3502 = vpop.f32.mrf.mxu0
      %3503 = vmatprep.mubr.bf16.mxu0 0
      %3504 = vmatmul.mubr.bf16.gmra.mxu0 %v3377
      %v3505 = vpop.f32.mrf.mxu0
      %v3506 = vadd.f32 0.0, %v3505
      %v3507 = vpop.f32.mrf.mxu0
      %v3508 = vpop.f32.mrf.mxu0
      %v3509 = vadd.f32 0.0, %v3508
      %v3510 = vpop.f32.mrf.mxu0
      %3511 = vmatprep.mubr.bf16.mxu0 0
      %3512 = vmatmul.mubr.bf16.gmra.mxu0 %v3380
      %v3513 = vpop.f32.mrf.mxu0
      %v3514 = vadd.f32 0.0, %v3513
      %v3515 = vpop.f32.mrf.mxu0
      %v3516 = vpop.f32.mrf.mxu0
      %v3517 = vadd.f32 0.0, %v3516
      %v3518 = vpop.f32.mrf.mxu0
      %3519 = vmatprep.mubr.bf16.mxu0 0
      %3520 = vmatmul.mubr.bf16.gmra.mxu0 %v3383
      %v3521 = vpop.f32.mrf.mxu0
      %v3522 = vadd.f32 0.0, %v3521
      %v3523 = vpop.f32.mrf.mxu0
      %v3524 = vpop.f32.mrf.mxu0
      %v3525 = vadd.f32 0.0, %v3524
      %v3526 = vpop.f32.mrf.mxu0
      %3527 = vmatprep.mubr.bf16.mxu0 0
      %3528 = vmatmul.mubr.bf16.gmra.mxu0 %v3386
      %v3529 = vpop.f32.mrf.mxu0
      %v3530 = vadd.f32 0.0, %v3529
      %v3531 = vpop.f32.mrf.mxu0
      %v3532 = vpop.f32.mrf.mxu0
      %v3533 = vadd.f32 0.0, %v3532
      %v3534 = vpop.f32.mrf.mxu0
      %3535 = vmatprep.mubr.bf16.mxu0 0
      %3536 = vmatmul.mubr.bf16.gmra.mxu0 %v3389
      %v3537 = vpop.f32.mrf.mxu0
      %v3538 = vadd.f32 0.0, %v3537
      %v3539 = vpop.f32.mrf.mxu0
      %v3540 = vpop.f32.mrf.mxu0
      %v3541 = vadd.f32 0.0, %v3540
      %v3542 = vpop.f32.mrf.mxu0
      %3543 = vmatprep.mubr.bf16.mxu0 0
      %3544 = vmatmul.mubr.bf16.gmra.mxu0 %v3392
      %v3545 = vpop.f32.mrf.mxu0
      %v3546 = vadd.f32 0.0, %v3545
      %v3547 = vpop.f32.mrf.mxu0
      %v3548 = vpop.f32.mrf.mxu0
      %v3549 = vadd.f32 0.0, %v3548
      %v3550 = vpop.f32.mrf.mxu0
      %3551 = vmatprep.mubr.bf16.mxu0 0
      %3552 = vmatmul.mubr.bf16.gmra.mxu0 %v3395
      %v3553 = vpop.f32.mrf.mxu0
      %v3554 = vadd.f32 0.0, %v3553
      %v3555 = vpop.f32.mrf.mxu0
      %v3556 = vpop.f32.mrf.mxu0
      %v3557 = vadd.f32 0.0, %v3556
      %v3558 = vpop.f32.mrf.mxu0
      %3559 = vmatprep.mubr.bf16.mxu0 0
      %3560 = vmatmul.mubr.bf16.gmra.mxu0 %v3398
      %v3561 = vpop.f32.mrf.mxu0
      %v3562 = vadd.f32 0.0, %v3561
      %v3563 = vpop.f32.mrf.mxu0
      %v3564 = vpop.f32.mrf.mxu0
      %v3565 = vadd.f32 0.0, %v3564
      %v3566 = vpop.f32.mrf.mxu0
      %3567 = vmatprep.mubr.bf16.mxu0 0
      %3568 = vmatmul.mubr.bf16.gmra.mxu0 %v3401
      %v3569 = vpop.f32.mrf.mxu0
      %v3570 = vadd.f32 0.0, %v3569
      %v3571 = vpop.f32.mrf.mxu0
      %v3572 = vpop.f32.mrf.mxu0
      %v3573 = vadd.f32 0.0, %v3572
      %v3574 = vpop.f32.mrf.mxu0
      %3575 = vmatprep.mubr.bf16.mxu0 0
      %3576 = vmatmul.mubr.bf16.gmra.mxu0 %v3404
      %v3577 = vpop.f32.mrf.mxu0
      %v3578 = vadd.f32 0.0, %v3577
      %v3579 = vpop.f32.mrf.mxu0
      %v3580 = vpop.f32.mrf.mxu0
      %v3581 = vadd.f32 0.0, %v3580
      %v3582 = vpop.f32.mrf.mxu0
      %3583 = vmatprep.mubr.bf16.mxu0 0
      %3584 = vmatmul.mubr.bf16.gmra.mxu0 %v3407
      %v3585 = vpop.f32.mrf.mxu0
      %v3586 = vadd.f32 0.0, %v3585
      %v3587 = vpop.f32.mrf.mxu0
      %v3588 = vpop.f32.mrf.mxu0
      %v3589 = vadd.f32 0.0, %v3588
      %v3590 = vpop.f32.mrf.mxu0
      %3591 = vmatprep.mubr.bf16.mxu0 0
      %3592 = vmatmul.mubr.bf16.gmra.mxu0 %v3410
      %v3593 = vpop.f32.mrf.mxu0
      %v3594 = vadd.f32 0.0, %v3593
      %v3595 = vpop.f32.mrf.mxu0
      %v3596 = vpop.f32.mrf.mxu0
      %v3597 = vadd.f32 0.0, %v3596
      %v3598 = vpop.f32.mrf.mxu0
      %3599 = vmatprep.mubr.bf16.mxu0 0
      %3600 = vmatmul.mubr.bf16.gmra.mxu0 %v3413
      %v3601 = vpop.f32.mrf.mxu0
      %v3602 = vadd.f32 0.0, %v3601
      %v3603 = vpop.f32.mrf.mxu0
      %v3604 = vpop.f32.mrf.mxu0
      %v3605 = vadd.f32 0.0, %v3604
      %v3606 = vpop.f32.mrf.mxu0
      %3607 = vmatprep.mubr.bf16.mxu0 0
      %3608 = vmatmul.mubr.bf16.gmra.mxu0 %v3416
      %v3609 = vpop.f32.mrf.mxu0
      %v3610 = vadd.f32 0.0, %v3609
      %v3611 = vpop.f32.mrf.mxu0
      %v3612 = vpop.f32.mrf.mxu0
      %v3613 = vadd.f32 0.0, %v3612
      %v3614 = vpop.f32.mrf.mxu0
      %3615 = vmatprep.mubr.bf16.mxu0 0
      %3616 = vmatmul.mubr.bf16.gmra.mxu0 %v3419
      %v3617 = vpop.f32.mrf.mxu0
      %v3618 = vadd.f32 0.0, %v3617
      %v3619 = vpop.f32.mrf.mxu0
      %v3620 = vpop.f32.mrf.mxu0
      %v3621 = vadd.f32 0.0, %v3620
      %v3622 = vpop.f32.mrf.mxu0
      %3623 = vmatprep.mubr.bf16.mxu0 0
      %3624 = vmatmul.mubr.bf16.gmra.mxu0 %v3422
      %v3625 = vpop.f32.mrf.mxu0
      %v3626 = vadd.f32 0.0, %v3625
      %v3627 = vpop.f32.mrf.mxu0
      %v3628 = vpop.f32.mrf.mxu0
      %v3629 = vadd.f32 0.0, %v3628
      %v3630 = vpop.f32.mrf.mxu0
      %3631 = vmatprep.mubr.bf16.mxu0 0
      %3632 = vmatmul.mubr.bf16.gmra.mxu0 %v3425
      %v3633 = vpop.f32.mrf.mxu0
      %v3634 = vadd.f32 0.0, %v3633
      %v3635 = vpop.f32.mrf.mxu0
      %v3636 = vpop.f32.mrf.mxu0
      %v3637 = vadd.f32 0.0, %v3636
      %v3638 = vpop.f32.mrf.mxu0
      %3639 = vmatprep.mubr.bf16.mxu0 0
      %3640 = vmatmul.mubr.bf16.gmra.mxu0 %v3428
      %v3641 = vpop.f32.mrf.mxu0
      %v3642 = vadd.f32 0.0, %v3641
      %v3643 = vpop.f32.mrf.mxu0
      %v3644 = vpop.f32.mrf.mxu0
      %v3645 = vadd.f32 0.0, %v3644
      %v3646 = vpop.f32.mrf.mxu0
      %3647 = vmatprep.mubr.bf16.mxu0 0
      %3648 = vmatmul.mubr.bf16.gmra.mxu0 %v3431
      %v3649 = vpop.f32.mrf.mxu0
      %v3650 = vadd.f32 0.0, %v3649
      %v3651 = vpop.f32.mrf.mxu0
      %v3652 = vpop.f32.mrf.mxu0
      %v3653 = vadd.f32 0.0, %v3652
      %v3654 = vpop.f32.mrf.mxu0
      %3655 = vmatprep.mubr.bf16.mxu0 0
      %3656 = vmatmul.mubr.bf16.gmra.mxu0 %v3434
      %v3657 = vpop.f32.mrf.mxu0
      %v3658 = vadd.f32 0.0, %v3657
      %v3659 = vpop.f32.mrf.mxu0
      %v3660 = vpop.f32.mrf.mxu0
      %v3661 = vadd.f32 0.0, %v3660
      %v3662 = vpop.f32.mrf.mxu0
      %3663 = vdwg.mxu0
      %v3664 = vld [vmem:[#allocation3] sm:$0xff]
      %v3665 = vld [vmem:[#allocation3 + $0x8] sm:$0xff]
      %v3666 = vld [vmem:[#allocation3 + $0x10] sm:$0xff]
      %v3667 = vld [vmem:[#allocation3 + $0x18] sm:$0xff]
      %v3668 = vld [vmem:[#allocation3 + $0x20] sm:$0xff]
      %v3669 = vld [vmem:[#allocation3 + $0x28] sm:$0xff]
      %v3670 = vld [vmem:[#allocation3 + $0x30] sm:$0xff]
      %v3671 = vld [vmem:[#allocation3 + $0x38] sm:$0xff]
      %v3672 = vld [vmem:[#allocation3 + $0x40] sm:$0xff]
      %v3673 = vld [vmem:[#allocation3 + $0x48] sm:$0xff]
      %v3674 = vld [vmem:[#allocation3 + $0x50] sm:$0xff]
      %v3675 = vld [vmem:[#allocation3 + $0x58] sm:$0xff]
      %v3676 = vld [vmem:[#allocation3 + $0x60] sm:$0xff]
      %v3677 = vld [vmem:[#allocation3 + $0x68] sm:$0xff]
      %v3678 = vld [vmem:[#allocation3 + $0x70] sm:$0xff]
      %v3679 = vld [vmem:[#allocation3 + $0x78] sm:$0xff]
      %v3680 = vld [vmem:[#allocation3 + $0x80] sm:$0xff]
      %v3681 = vld [vmem:[#allocation3 + $0x88] sm:$0xff]
      %v3682 = vld [vmem:[#allocation3 + $0x90] sm:$0xff]
      %v3683 = vld [vmem:[#allocation3 + $0x98] sm:$0xff]
      %v3684 = vld [vmem:[#allocation3 + $0xa0] sm:$0xff]
      %v3685 = vld [vmem:[#allocation3 + $0xa8] sm:$0xff]
      %v3686 = vld [vmem:[#allocation3 + $0xb0] sm:$0xff]
      %v3687 = vld [vmem:[#allocation3 + $0xb8] sm:$0xff]
      %v3688 = vld [vmem:[#allocation3 + $0xc0] sm:$0xff]
      %v3689 = vld [vmem:[#allocation3 + $0xc8] sm:$0xff]
      %v3690 = vld [vmem:[#allocation3 + $0xd0] sm:$0xff]
      %v3691 = vld [vmem:[#allocation3 + $0xd8] sm:$0xff]
      %v3692 = vld [vmem:[#allocation3 + $0xe0] sm:$0xff]
      %v3693 = vld [vmem:[#allocation3 + $0xe8] sm:$0xff]
      %v3694 = vld [vmem:[#allocation3 + $0xf0] sm:$0xff]
      %v3695 = vld [vmem:[#allocation3 + $0xf8] sm:$0xff]
      %v3696 = vld [vmem:[#allocation3 + $0x100] sm:$0xff]
      %v3697 = vld [vmem:[#allocation3 + $0x108] sm:$0xff]
      %v3698 = vld [vmem:[#allocation3 + $0x110] sm:$0xff]
      %v3699 = vld [vmem:[#allocation3 + $0x118] sm:$0xff]
      %v3700 = vld [vmem:[#allocation3 + $0x120] sm:$0xff]
      %v3701 = vld [vmem:[#allocation3 + $0x128] sm:$0xff]
      %v3702 = vld [vmem:[#allocation3 + $0x130] sm:$0xff]
      %v3703 = vld [vmem:[#allocation3 + $0x138] sm:$0xff]
      %v3704 = vld [vmem:[#allocation3 + $0x140] sm:$0xff]
      %v3705 = vld [vmem:[#allocation3 + $0x148] sm:$0xff]
      %v3706 = vld [vmem:[#allocation3 + $0x150] sm:$0xff]
      %v3707 = vld [vmem:[#allocation3 + $0x158] sm:$0xff]
      %v3708 = vld [vmem:[#allocation3 + $0x160] sm:$0xff]
      %v3709 = vld [vmem:[#allocation3 + $0x168] sm:$0xff]
      %v3710 = vld [vmem:[#allocation3 + $0x170] sm:$0xff]
      %v3711 = vld [vmem:[#allocation3 + $0x178] sm:$0xff]
      %v3712 = vadd.f32 %v3664, %v3474
      %v3713 = vadd.f32 %v3665, %v3477
      %v3714 = vadd.f32 %v3666, %v3482
      %v3715 = vadd.f32 %v3667, %v3485
      %v3716 = vadd.f32 %v3668, %v3490
      %v3717 = vadd.f32 %v3669, %v3493
      %v3718 = vadd.f32 %v3670, %v3498
      %v3719 = vadd.f32 %v3671, %v3501
      %v3720 = vadd.f32 %v3672, %v3506
      %v3721 = vadd.f32 %v3673, %v3509
      %v3722 = vadd.f32 %v3674, %v3514
      %v3723 = vadd.f32 %v3675, %v3517
      %v3724 = vadd.f32 %v3676, %v3522
      %v3725 = vadd.f32 %v3677, %v3525
      %v3726 = vadd.f32 %v3678, %v3530
      %v3727 = vadd.f32 %v3679, %v3533
      %v3728 = vadd.f32 %v3680, %v3538
      %v3729 = vadd.f32 %v3681, %v3541
      %v3730 = vadd.f32 %v3682, %v3546
      %v3731 = vadd.f32 %v3683, %v3549
      %v3732 = vadd.f32 %v3684, %v3554
      %v3733 = vadd.f32 %v3685, %v3557
      %v3734 = vadd.f32 %v3686, %v3562
      %v3735 = vadd.f32 %v3687, %v3565
      %v3736 = vadd.f32 %v3688, %v3570
      %v3737 = vadd.f32 %v3689, %v3573
      %v3738 = vadd.f32 %v3690, %v3578
      %v3739 = vadd.f32 %v3691, %v3581
      %v3740 = vadd.f32 %v3692, %v3586
      %v3741 = vadd.f32 %v3693, %v3589
      %v3742 = vadd.f32 %v3694, %v3594
      %v3743 = vadd.f32 %v3695, %v3597
      %v3744 = vadd.f32 %v3696, %v3602
      %v3745 = vadd.f32 %v3697, %v3605
      %v3746 = vadd.f32 %v3698, %v3610
      %v3747 = vadd.f32 %v3699, %v3613
      %v3748 = vadd.f32 %v3700, %v3618
      %v3749 = vadd.f32 %v3701, %v3621
      %v3750 = vadd.f32 %v3702, %v3626
      %v3751 = vadd.f32 %v3703, %v3629
      %v3752 = vadd.f32 %v3704, %v3634
      %v3753 = vadd.f32 %v3705, %v3637
      %v3754 = vadd.f32 %v3706, %v3642
      %v3755 = vadd.f32 %v3707, %v3645
      %v3756 = vadd.f32 %v3708, %v3650
      %v3757 = vadd.f32 %v3709, %v3653
      %v3758 = vadd.f32 %v3710, %v3658
      %v3759 = vadd.f32 %v3711, %v3661
      %3760 = vst.msk [vmem:[#allocation3] sm:$0xff] %vm423, %v3712
      %3761 = vst.msk [vmem:[#allocation3 + $0x8] sm:$0xff] %vm423, %v3713
      %3762 = vst.msk [vmem:[#allocation3 + $0x10] sm:$0xff] %vm423, %v3714
      %3763 = vst.msk [vmem:[#allocation3 + $0x18] sm:$0xff] %vm423, %v3715
      %3764 = vst.msk [vmem:[#allocation3 + $0x20] sm:$0xff] %vm423, %v3716
      %3765 = vst.msk [vmem:[#allocation3 + $0x28] sm:$0xff] %vm423, %v3717
      %3766 = vst.msk [vmem:[#allocation3 + $0x30] sm:$0xff] %vm423, %v3718
      %3767 = vst.msk [vmem:[#allocation3 + $0x38] sm:$0xff] %vm423, %v3719
      %3768 = vst.msk [vmem:[#allocation3 + $0x40] sm:$0xff] %vm423, %v3720
      %3769 = vst.msk [vmem:[#allocation3 + $0x48] sm:$0xff] %vm423, %v3721
      %3770 = vst.msk [vmem:[#allocation3 + $0x50] sm:$0xff] %vm423, %v3722
      %3771 = vst.msk [vmem:[#allocation3 + $0x58] sm:$0xff] %vm423, %v3723
      %3772 = vst.msk [vmem:[#allocation3 + $0x60] sm:$0xff] %vm423, %v3724
      %3773 = vst.msk [vmem:[#allocation3 + $0x68] sm:$0xff] %vm423, %v3725
      %3774 = vst.msk [vmem:[#allocation3 + $0x70] sm:$0xff] %vm423, %v3726
      %3775 = vst.msk [vmem:[#allocation3 + $0x78] sm:$0xff] %vm423, %v3727
      %3776 = vst.msk [vmem:[#allocation3 + $0x80] sm:$0xff] %vm423, %v3728
      %3777 = vst.msk [vmem:[#allocation3 + $0x88] sm:$0xff] %vm423, %v3729
      %3778 = vst.msk [vmem:[#allocation3 + $0x90] sm:$0xff] %vm423, %v3730
      %3779 = vst.msk [vmem:[#allocation3 + $0x98] sm:$0xff] %vm423, %v3731
      %3780 = vst.msk [vmem:[#allocation3 + $0xa0] sm:$0xff] %vm423, %v3732
      %3781 = vst.msk [vmem:[#allocation3 + $0xa8] sm:$0xff] %vm423, %v3733
      %3782 = vst.msk [vmem:[#allocation3 + $0xb0] sm:$0xff] %vm423, %v3734
      %3783 = vst.msk [vmem:[#allocation3 + $0xb8] sm:$0xff] %vm423, %v3735
      %3784 = vst.msk [vmem:[#allocation3 + $0xc0] sm:$0xff] %vm423, %v3736
      %3785 = vst.msk [vmem:[#allocation3 + $0xc8] sm:$0xff] %vm423, %v3737
      %3786 = vst.msk [vmem:[#allocation3 + $0xd0] sm:$0xff] %vm423, %v3738
      %3787 = vst.msk [vmem:[#allocation3 + $0xd8] sm:$0xff] %vm423, %v3739
      %3788 = vst.msk [vmem:[#allocation3 + $0xe0] sm:$0xff] %vm423, %v3740
      %3789 = vst.msk [vmem:[#allocation3 + $0xe8] sm:$0xff] %vm423, %v3741
      %3790 = vst.msk [vmem:[#allocation3 + $0xf0] sm:$0xff] %vm423, %v3742
      %3791 = vst.msk [vmem:[#allocation3 + $0xf8] sm:$0xff] %vm423, %v3743
      %3792 = vst.msk [vmem:[#allocation3 + $0x100] sm:$0xff] %vm423, %v3744
      %3793 = vst.msk [vmem:[#allocation3 + $0x108] sm:$0xff] %vm423, %v3745
      %3794 = vst.msk [vmem:[#allocation3 + $0x110] sm:$0xff] %vm423, %v3746
      %3795 = vst.msk [vmem:[#allocation3 + $0x118] sm:$0xff] %vm423, %v3747
      %3796 = vst.msk [vmem:[#allocation3 + $0x120] sm:$0xff] %vm423, %v3748
      %3797 = vst.msk [vmem:[#allocation3 + $0x128] sm:$0xff] %vm423, %v3749
      %3798 = vst.msk [vmem:[#allocation3 + $0x130] sm:$0xff] %vm423, %v3750
      %3799 = vst.msk [vmem:[#allocation3 + $0x138] sm:$0xff] %vm423, %v3751
      %3800 = vst.msk [vmem:[#allocation3 + $0x140] sm:$0xff] %vm423, %v3752
      %3801 = vst.msk [vmem:[#allocation3 + $0x148] sm:$0xff] %vm423, %v3753
      %3802 = vst.msk [vmem:[#allocation3 + $0x150] sm:$0xff] %vm423, %v3754
      %3803 = vst.msk [vmem:[#allocation3 + $0x158] sm:$0xff] %vm423, %v3755
      %3804 = vst.msk [vmem:[#allocation3 + $0x160] sm:$0xff] %vm423, %v3756
      %3805 = vst.msk [vmem:[#allocation3 + $0x168] sm:$0xff] %vm423, %v3757
      %3806 = vst.msk [vmem:[#allocation3 + $0x170] sm:$0xff] %vm423, %v3758
      %3807 = vst.msk [vmem:[#allocation3 + $0x178] sm:$0xff] %vm423, %v3759
      %v3808 = vld [vmem:[#allocation2 + $0xc] sm:$0xf]
      %v3809 = vld [vmem:[#allocation2 + $0x10] sm:$0xf]
      %v3810 = vld [vmem:[#allocation2 + $0x14] sm:$0xf]
      %v3811 = vld [vmem:[#allocation2 + $0x18] sm:$0xf]
      %v3812 = vld [vmem:[#allocation2 + $0x1c] sm:$0xf]
      %v3813 = vld [vmem:[#allocation2 + $0x20] sm:$0xf]
      %v3814 = vld [vmem:[#allocation2 + $0x24] sm:$0xf]
      %v3815 = vld [vmem:[#allocation2 + $0x28] sm:$0xf]
      %v3816 = vld [vmem:[#allocation2 + $0x2c] sm:$0xf]
      %v3817 = vld [vmem:[#allocation2 + $0x30] sm:$0xf]
      %v3818 = vld [vmem:[#allocation2 + $0x34] sm:$0xf]
      %v3819 = vld [vmem:[#allocation2 + $0x38] sm:$0xf]
      %v3820 = vld [vmem:[#allocation2 + $0x3c] sm:$0xf]
      %v3821 = vld [vmem:[#allocation2 + $0x40] sm:$0xf]
      %v3822 = vld [vmem:[#allocation2 + $0x44] sm:$0xf]
      %v3823 = vld [vmem:[#allocation2 + $0x48] sm:$0xf]
      %v3824 = vld [vmem:[#allocation2 + $0x4c] sm:$0xf]
      %v3825 = vld [vmem:[#allocation2 + $0x50] sm:$0xf]
      %v3826 = vld [vmem:[#allocation2 + $0x54] sm:$0xf]
      %v3827 = vld [vmem:[#allocation2 + $0x58] sm:$0xf]
      %v3828 = vld [vmem:[#allocation2 + $0x5c] sm:$0xf]
      %v3829 = vld [vmem:[#allocation2 + $0x60] sm:$0xf]
      %v3830 = vld [vmem:[#allocation2 + $0x64] sm:$0xf]
      %v3831 = vld [vmem:[#allocation2 + $0x68] sm:$0xf]
      %v3832 = vld [vmem:[#allocation2 + $0x6c] sm:$0xf]
      %v3833 = vld [vmem:[#allocation2 + $0x70] sm:$0xf]
      %v3834 = vld [vmem:[#allocation2 + $0x74] sm:$0xf]
      %v3835 = vld [vmem:[#allocation2 + $0x78] sm:$0xf]
      %v3836 = vld [vmem:[#allocation2 + $0x7c] sm:$0xf]
      %v3837 = vld [vmem:[#allocation2 + $0x80] sm:$0xf]
      %v3838 = vld [vmem:[#allocation2 + $0x84] sm:$0xf]
      %v3839 = vld [vmem:[#allocation2 + $0x88] sm:$0xf]
      %v3840 = vld [vmem:[#allocation2 + $0x8c] sm:$0xf]
      %v3841 = vld [vmem:[#allocation2 + $0x90] sm:$0xf]
      %v3842 = vld [vmem:[#allocation2 + $0x94] sm:$0xf]
      %v3843 = vld [vmem:[#allocation2 + $0x98] sm:$0xf]
      %v3844 = vld [vmem:[#allocation2 + $0x9c] sm:$0xf]
      %v3845 = vld [vmem:[#allocation2 + $0xa0] sm:$0xf]
      %v3846 = vld [vmem:[#allocation2 + $0xa4] sm:$0xf]
      %v3847 = vld [vmem:[#allocation2 + $0xa8] sm:$0xf]
      %v3848 = vld [vmem:[#allocation2 + $0xac] sm:$0xf]
      %v3849 = vld [vmem:[#allocation2 + $0xb0] sm:$0xf]
      %v3850 = vld [vmem:[#allocation2 + $0xb4] sm:$0xf]
      %v3851 = vld [vmem:[#allocation2 + $0xb8] sm:$0xf]
      %v3852 = vld [vmem:[#allocation2 + $0xbc] sm:$0xf]
      %v3853 = vld [vmem:[#allocation2 + $0xc0] sm:$0xf]
      %v3854 = vld [vmem:[#allocation2 + $0xc4] sm:$0xf]
      %v3855 = vld [vmem:[#allocation2 + $0xc8] sm:$0xf]
      %v3856 = vld [vmem:[#allocation2 + $0xcc] sm:$0x1]
      %s3857 = scalar_lea.vmem %s3, 4
      %v3858 = vld [vmem:[%s3857] sm:$0x1]
      %v3908 = vunpack.c.l.b16 %v3808
      %v3909 = vunpack.c.l.b16 %v3809
      %v3910 = vunpack.c.l.b16 %v3810
      %v3911 = vunpack.c.l.b16 %v3811
      %v3912 = vunpack.c.l.b16 %v3812
      %v3913 = vunpack.c.l.b16 %v3813
      %v3914 = vunpack.c.l.b16 %v3814
      %v3915 = vunpack.c.l.b16 %v3815
      %v3916 = vunpack.c.l.b16 %v3816
      %v3917 = vunpack.c.l.b16 %v3817
      %v3918 = vunpack.c.l.b16 %v3818
      %v3919 = vunpack.c.l.b16 %v3819
      %v3920 = vunpack.c.l.b16 %v3820
      %v3921 = vunpack.c.l.b16 %v3821
      %v3922 = vunpack.c.l.b16 %v3822
      %v3923 = vunpack.c.l.b16 %v3823
      %v3924 = vunpack.c.l.b16 %v3824
      %v3925 = vunpack.c.l.b16 %v3825
      %v3926 = vunpack.c.l.b16 %v3826
      %v3927 = vunpack.c.l.b16 %v3827
      %v3928 = vunpack.c.l.b16 %v3828
      %v3929 = vunpack.c.l.b16 %v3829
      %v3930 = vunpack.c.l.b16 %v3830
      %v3931 = vunpack.c.l.b16 %v3831
      %v3932 = vunpack.c.l.b16 %v3832
      %v3933 = vunpack.c.l.b16 %v3833
      %v3934 = vunpack.c.l.b16 %v3834
      %v3935 = vunpack.c.l.b16 %v3835
      %v3936 = vunpack.c.l.b16 %v3836
      %v3937 = vunpack.c.l.b16 %v3837
      %v3938 = vunpack.c.l.b16 %v3838
      %v3939 = vunpack.c.l.b16 %v3839
      %v3940 = vunpack.c.l.b16 %v3840
      %v3941 = vunpack.c.l.b16 %v3841
      %v3942 = vunpack.c.l.b16 %v3842
      %v3943 = vunpack.c.l.b16 %v3843
      %v3944 = vunpack.c.l.b16 %v3844
      %v3945 = vunpack.c.l.b16 %v3845
      %v3946 = vunpack.c.l.b16 %v3846
      %v3947 = vunpack.c.l.b16 %v3847
      %v3948 = vunpack.c.l.b16 %v3848
      %v3949 = vunpack.c.l.b16 %v3849
      %v3950 = vunpack.c.l.b16 %v3850
      %v3951 = vunpack.c.l.b16 %v3851
      %v3952 = vunpack.c.l.b16 %v3852
      %v3953 = vunpack.c.l.b16 %v3853
      %v3954 = vunpack.c.l.b16 %v3854
      %v3955 = vunpack.c.l.b16 %v3855
      %v3956 = vunpack.c.l.b16 %v3856
      %v3957 = vpack.c.b16 %v3909, %v3908
      %v3958 = vpack.c.b16 %v3911, %v3910
      %v3959 = vpack.c.b16 %v3913, %v3912
      %v3960 = vpack.c.b16 %v3915, %v3914
      %v3961 = vpack.c.b16 %v3917, %v3916
      %v3962 = vpack.c.b16 %v3919, %v3918
      %v3963 = vpack.c.b16 %v3921, %v3920
      %v3964 = vpack.c.b16 %v3923, %v3922
      %v3965 = vpack.c.b16 %v3925, %v3924
      %v3966 = vpack.c.b16 %v3927, %v3926
      %v3967 = vpack.c.b16 %v3929, %v3928
      %v3968 = vpack.c.b16 %v3931, %v3930
      %v3969 = vpack.c.b16 %v3933, %v3932
      %v3970 = vpack.c.b16 %v3935, %v3934
      %v3971 = vpack.c.b16 %v3937, %v3936
      %v3972 = vpack.c.b16 %v3939, %v3938
      %v3973 = vpack.c.b16 %v3941, %v3940
      %v3974 = vpack.c.b16 %v3943, %v3942
      %v3975 = vpack.c.b16 %v3945, %v3944
      %v3976 = vpack.c.b16 %v3947, %v3946
      %v3977 = vpack.c.b16 %v3949, %v3948
      %v3978 = vpack.c.b16 %v3951, %v3950
      %v3979 = vpack.c.b16 %v3953, %v3952
      %v3980 = vpack.c.b16 %v3955, %v3954
      %v3981 = vpack.c.b16 %v3956, %v3956
      %v3983 = vshrl.u32 %v3957, 16
      %v3985 = vshll.u32 %v3957, 16
      %v3987 = vrot.slane %v3985, 1
      %v3988 = vor.u32 %v3983, %v3987
      %v3990 = vshll.u32 %v3958, 16
      %v3992 = vrot.slane %v3990, 1
      %v3993 = vsel %vm1885, %v3988, %v3992
      %v3994 = vshrl.u32 %v3958, 16
      %v3996 = vor.u32 %v3994, %v3992
      %v3998 = vshll.u32 %v3959, 16
      %v4000 = vrot.slane %v3998, 1
      %v4001 = vsel %vm1885, %v3996, %v4000
      %v4002 = vshrl.u32 %v3959, 16
      %v4004 = vor.u32 %v4002, %v4000
      %v4006 = vshll.u32 %v3960, 16
      %v4008 = vrot.slane %v4006, 1
      %v4009 = vsel %vm1885, %v4004, %v4008
      %v4010 = vshrl.u32 %v3960, 16
      %v4012 = vor.u32 %v4010, %v4008
      %v4014 = vshll.u32 %v3961, 16
      %v4016 = vrot.slane %v4014, 1
      %v4017 = vsel %vm1885, %v4012, %v4016
      %v4018 = vshrl.u32 %v3961, 16
      %v4020 = vor.u32 %v4018, %v4016
      %v4022 = vshll.u32 %v3962, 16
      %v4024 = vrot.slane %v4022, 1
      %v4025 = vsel %vm1885, %v4020, %v4024
      %v4026 = vshrl.u32 %v3962, 16
      %v4028 = vor.u32 %v4026, %v4024
      %v4030 = vshll.u32 %v3963, 16
      %v4032 = vrot.slane %v4030, 1
      %v4033 = vsel %vm1885, %v4028, %v4032
      %v4034 = vshrl.u32 %v3963, 16
      %v4036 = vor.u32 %v4034, %v4032
      %v4038 = vshll.u32 %v3964, 16
      %v4040 = vrot.slane %v4038, 1
      %v4041 = vsel %vm1885, %v4036, %v4040
      %v4042 = vshrl.u32 %v3964, 16
      %v4044 = vor.u32 %v4042, %v4040
      %v4046 = vshll.u32 %v3965, 16
      %v4048 = vrot.slane %v4046, 1
      %v4049 = vsel %vm1885, %v4044, %v4048
      %v4050 = vshrl.u32 %v3965, 16
      %v4052 = vor.u32 %v4050, %v4048
      %v4054 = vshll.u32 %v3966, 16
      %v4056 = vrot.slane %v4054, 1
      %v4057 = vsel %vm1885, %v4052, %v4056
      %v4058 = vshrl.u32 %v3966, 16
      %v4060 = vor.u32 %v4058, %v4056
      %v4062 = vshll.u32 %v3967, 16
      %v4064 = vrot.slane %v4062, 1
      %v4065 = vsel %vm1885, %v4060, %v4064
      %v4066 = vshrl.u32 %v3967, 16
      %v4068 = vor.u32 %v4066, %v4064
      %v4070 = vshll.u32 %v3968, 16
      %v4072 = vrot.slane %v4070, 1
      %v4073 = vsel %vm1885, %v4068, %v4072
      %v4074 = vshrl.u32 %v3968, 16
      %v4076 = vor.u32 %v4074, %v4072
      %v4078 = vshll.u32 %v3969, 16
      %v4080 = vrot.slane %v4078, 1
      %v4081 = vsel %vm1885, %v4076, %v4080
      %v4082 = vshrl.u32 %v3969, 16
      %v4084 = vor.u32 %v4082, %v4080
      %v4086 = vshll.u32 %v3970, 16
      %v4088 = vrot.slane %v4086, 1
      %v4089 = vsel %vm1885, %v4084, %v4088
      %v4090 = vshrl.u32 %v3970, 16
      %v4092 = vor.u32 %v4090, %v4088
      %v4094 = vshll.u32 %v3971, 16
      %v4096 = vrot.slane %v4094, 1
      %v4097 = vsel %vm1885, %v4092, %v4096
      %v4098 = vshrl.u32 %v3971, 16
      %v4100 = vor.u32 %v4098, %v4096
      %v4102 = vshll.u32 %v3972, 16
      %v4104 = vrot.slane %v4102, 1
      %v4105 = vsel %vm1885, %v4100, %v4104
      %v4106 = vshrl.u32 %v3972, 16
      %v4108 = vor.u32 %v4106, %v4104
      %v4110 = vshll.u32 %v3973, 16
      %v4112 = vrot.slane %v4110, 1
      %v4113 = vsel %vm1885, %v4108, %v4112
      %v4114 = vshrl.u32 %v3973, 16
      %v4116 = vor.u32 %v4114, %v4112
      %v4118 = vshll.u32 %v3974, 16
      %v4120 = vrot.slane %v4118, 1
      %v4121 = vsel %vm1885, %v4116, %v4120
      %v4122 = vshrl.u32 %v3974, 16
      %v4124 = vor.u32 %v4122, %v4120
      %v4126 = vshll.u32 %v3975, 16
      %v4128 = vrot.slane %v4126, 1
      %v4129 = vsel %vm1885, %v4124, %v4128
      %v4130 = vshrl.u32 %v3975, 16
      %v4132 = vor.u32 %v4130, %v4128
      %v4134 = vshll.u32 %v3976, 16
      %v4136 = vrot.slane %v4134, 1
      %v4137 = vsel %vm1885, %v4132, %v4136
      %v4138 = vshrl.u32 %v3976, 16
      %v4140 = vor.u32 %v4138, %v4136
      %v4142 = vshll.u32 %v3977, 16
      %v4144 = vrot.slane %v4142, 1
      %v4145 = vsel %vm1885, %v4140, %v4144
      %v4146 = vshrl.u32 %v3977, 16
      %v4148 = vor.u32 %v4146, %v4144
      %v4150 = vshll.u32 %v3978, 16
      %v4152 = vrot.slane %v4150, 1
      %v4153 = vsel %vm1885, %v4148, %v4152
      %v4154 = vshrl.u32 %v3978, 16
      %v4156 = vor.u32 %v4154, %v4152
      %v4158 = vshll.u32 %v3979, 16
      %v4160 = vrot.slane %v4158, 1
      %v4161 = vsel %vm1885, %v4156, %v4160
      %v4162 = vshrl.u32 %v3979, 16
      %v4164 = vor.u32 %v4162, %v4160
      %v4166 = vshll.u32 %v3980, 16
      %v4168 = vrot.slane %v4166, 1
      %v4169 = vsel %vm1885, %v4164, %v4168
      %v4170 = vshrl.u32 %v3980, 16
      %v4172 = vor.u32 %v4170, %v4168
      %v4174 = vshll.u32 %v3981, 16
      %v4176 = vrot.slane %v4174, 1
      %v4177 = vsel %vm1885, %v4172, %v4176
      %v4179 = vsel %vm1361, %v3993, 0
      %v4182 = vsel %vm1361, %v4001, 0
      %v4185 = vsel %vm1361, %v4009, 0
      %v4188 = vsel %vm1361, %v4017, 0
      %v4191 = vsel %vm1361, %v4025, 0
      %v4194 = vsel %vm1361, %v4033, 0
      %v4197 = vsel %vm1361, %v4041, 0
      %v4200 = vsel %vm1361, %v4049, 0
      %v4203 = vsel %vm1361, %v4057, 0
      %v4206 = vsel %vm1361, %v4065, 0
      %v4209 = vsel %vm1361, %v4073, 0
      %v4212 = vsel %vm1361, %v4081, 0
      %v4215 = vsel %vm1361, %v4089, 0
      %v4218 = vsel %vm1361, %v4097, 0
      %v4221 = vsel %vm1361, %v4105, 0
      %v4224 = vsel %vm1361, %v4113, 0
      %v4227 = vsel %vm1361, %v4121, 0
      %v4230 = vsel %vm1361, %v4129, 0
      %v4233 = vsel %vm1361, %v4137, 0
      %v4236 = vsel %vm1361, %v4145, 0
      %v4239 = vsel %vm1361, %v4153, 0
      %v4242 = vsel %vm1361, %v4161, 0
      %v4245 = vsel %vm1361, %v4169, 0
      %v4248 = vsel %vm1361, %v4177, 0
      %v4251 = vsel %vm1434, %v3858, 0
      %4253 = vmatprep.subr.bf16.mxu0 0
      %4254 = vmatpush1.bf16.msra.mxu0 0
      %4255 = vmatprep.subr.bf16.mxu0 0
      %4256 = vmatpush1.bf16.msra.mxu0 0
      %4257 = vmatprep.subr.bf16.mxu0 0
      %4258 = vmatpush1.bf16.msra.mxu0 0
      %4259 = vmatprep.subr.bf16.mxu0 0
      %4260 = vmatpush1.bf16.msra.mxu0 0
      %4261 = vmatprep.subr.bf16.mxu0 0
      %4262 = vmatpush1.bf16.msra.mxu0 0
      %4263 = vmatprep.subr.bf16.mxu0 0
      %4264 = vmatpush1.bf16.msra.mxu0 0
      %4265 = vmatprep.subr.bf16.mxu0 0
      %4266 = vmatpush1.bf16.msra.mxu0 0
      %4267 = vmatprep.subr.bf16.mxu0 0
      %4268 = vmatpush1.bf16.msra.mxu0 %v4251
      %4269 = vmatprep.subr.bf16.mxu0 0
      %4270 = vmatpush2.bf16.msra.mxu0 0
      %4271 = vmatprep.subr.bf16.mxu0 0
      %4272 = vmatpush2.bf16.msra.mxu0 0
      %4273 = vmatprep.subr.bf16.mxu0 0
      %4274 = vmatpush2.bf16.msra.mxu0 0
      %4275 = vmatprep.subr.bf16.mxu0 0
      %4276 = vmatpush2.bf16.msra.mxu0 0
      %4277 = vmatprep.subr.bf16.mxu0 0
      %4278 = vmatpush2.bf16.msra.mxu0 0
      %4279 = vmatprep.subr.bf16.mxu0 0
      %4280 = vmatpush2.bf16.msra.mxu0 0
      %4281 = vmatprep.subr.bf16.mxu0 0
      %4282 = vmatpush2.bf16.msra.mxu0 0
      %4283 = vmatprep.subr.bf16.mxu0 0
      %4284 = vmatpush2.bf16.msra.mxu0 0
      %4285 = vmatprep.mubr.bf16.mxu0 0
      %4286 = vmatmul.mubr.bf16.gmra.mxu0 %v4179
      %v4287 = vpop.f32.mrf.mxu0
      %v4288 = vadd.f32 0.0, %v4287
      %v4289 = vpop.f32.mrf.mxu0
      %v4290 = vpop.f32.mrf.mxu0
      %v4291 = vadd.f32 0.0, %v4290
      %v4292 = vpop.f32.mrf.mxu0
      %4293 = vmatprep.mubr.bf16.mxu0 0
      %4294 = vmatmul.mubr.bf16.gmra.mxu0 %v4182
      %v4295 = vpop.f32.mrf.mxu0
      %v4296 = vadd.f32 0.0, %v4295
      %v4297 = vpop.f32.mrf.mxu0
      %v4298 = vpop.f32.mrf.mxu0
      %v4299 = vadd.f32 0.0, %v4298
      %v4300 = vpop.f32.mrf.mxu0
      %4301 = vmatprep.mubr.bf16.mxu0 0
      %4302 = vmatmul.mubr.bf16.gmra.mxu0 %v4185
      %v4303 = vpop.f32.mrf.mxu0
      %v4304 = vadd.f32 0.0, %v4303
      %v4305 = vpop.f32.mrf.mxu0
      %v4306 = vpop.f32.mrf.mxu0
      %v4307 = vadd.f32 0.0, %v4306
      %v4308 = vpop.f32.mrf.mxu0
      %4309 = vmatprep.mubr.bf16.mxu0 0
      %4310 = vmatmul.mubr.bf16.gmra.mxu0 %v4188
      %v4311 = vpop.f32.mrf.mxu0
      %v4312 = vadd.f32 0.0, %v4311
      %v4313 = vpop.f32.mrf.mxu0
      %v4314 = vpop.f32.mrf.mxu0
      %v4315 = vadd.f32 0.0, %v4314
      %v4316 = vpop.f32.mrf.mxu0
      %4317 = vmatprep.mubr.bf16.mxu0 0
      %4318 = vmatmul.mubr.bf16.gmra.mxu0 %v4191
      %v4319 = vpop.f32.mrf.mxu0
      %v4320 = vadd.f32 0.0, %v4319
      %v4321 = vpop.f32.mrf.mxu0
      %v4322 = vpop.f32.mrf.mxu0
      %v4323 = vadd.f32 0.0, %v4322
      %v4324 = vpop.f32.mrf.mxu0
      %4325 = vmatprep.mubr.bf16.mxu0 0
      %4326 = vmatmul.mubr.bf16.gmra.mxu0 %v4194
      %v4327 = vpop.f32.mrf.mxu0
      %v4328 = vadd.f32 0.0, %v4327
      %v4329 = vpop.f32.mrf.mxu0
      %v4330 = vpop.f32.mrf.mxu0
      %v4331 = vadd.f32 0.0, %v4330
      %v4332 = vpop.f32.mrf.mxu0
      %4333 = vmatprep.mubr.bf16.mxu0 0
      %4334 = vmatmul.mubr.bf16.gmra.mxu0 %v4197
      %v4335 = vpop.f32.mrf.mxu0
      %v4336 = vadd.f32 0.0, %v4335
      %v4337 = vpop.f32.mrf.mxu0
      %v4338 = vpop.f32.mrf.mxu0
      %v4339 = vadd.f32 0.0, %v4338
      %v4340 = vpop.f32.mrf.mxu0
      %4341 = vmatprep.mubr.bf16.mxu0 0
      %4342 = vmatmul.mubr.bf16.gmra.mxu0 %v4200
      %v4343 = vpop.f32.mrf.mxu0
      %v4344 = vadd.f32 0.0, %v4343
      %v4345 = vpop.f32.mrf.mxu0
      %v4346 = vpop.f32.mrf.mxu0
      %v4347 = vadd.f32 0.0, %v4346
      %v4348 = vpop.f32.mrf.mxu0
      %4349 = vmatprep.mubr.bf16.mxu0 0
      %4350 = vmatmul.mubr.bf16.gmra.mxu0 %v4203
      %v4351 = vpop.f32.mrf.mxu0
      %v4352 = vadd.f32 0.0, %v4351
      %v4353 = vpop.f32.mrf.mxu0
      %v4354 = vpop.f32.mrf.mxu0
      %v4355 = vadd.f32 0.0, %v4354
      %v4356 = vpop.f32.mrf.mxu0
      %4357 = vmatprep.mubr.bf16.mxu0 0
      %4358 = vmatmul.mubr.bf16.gmra.mxu0 %v4206
      %v4359 = vpop.f32.mrf.mxu0
      %v4360 = vadd.f32 0.0, %v4359
      %v4361 = vpop.f32.mrf.mxu0
      %v4362 = vpop.f32.mrf.mxu0
      %v4363 = vadd.f32 0.0, %v4362
      %v4364 = vpop.f32.mrf.mxu0
      %4365 = vmatprep.mubr.bf16.mxu0 0
      %4366 = vmatmul.mubr.bf16.gmra.mxu0 %v4209
      %v4367 = vpop.f32.mrf.mxu0
      %v4368 = vadd.f32 0.0, %v4367
      %v4369 = vpop.f32.mrf.mxu0
      %v4370 = vpop.f32.mrf.mxu0
      %v4371 = vadd.f32 0.0, %v4370
      %v4372 = vpop.f32.mrf.mxu0
      %4373 = vmatprep.mubr.bf16.mxu0 0
      %4374 = vmatmul.mubr.bf16.gmra.mxu0 %v4212
      %v4375 = vpop.f32.mrf.mxu0
      %v4376 = vadd.f32 0.0, %v4375
      %v4377 = vpop.f32.mrf.mxu0
      %v4378 = vpop.f32.mrf.mxu0
      %v4379 = vadd.f32 0.0, %v4378
      %v4380 = vpop.f32.mrf.mxu0
      %4381 = vmatprep.mubr.bf16.mxu0 0
      %4382 = vmatmul.mubr.bf16.gmra.mxu0 %v4215
      %v4383 = vpop.f32.mrf.mxu0
      %v4384 = vadd.f32 0.0, %v4383
      %v4385 = vpop.f32.mrf.mxu0
      %v4386 = vpop.f32.mrf.mxu0
      %v4387 = vadd.f32 0.0, %v4386
      %v4388 = vpop.f32.mrf.mxu0
      %4389 = vmatprep.mubr.bf16.mxu0 0
      %4390 = vmatmul.mubr.bf16.gmra.mxu0 %v4218
      %v4391 = vpop.f32.mrf.mxu0
      %v4392 = vadd.f32 0.0, %v4391
      %v4393 = vpop.f32.mrf.mxu0
      %v4394 = vpop.f32.mrf.mxu0
      %v4395 = vadd.f32 0.0, %v4394
      %v4396 = vpop.f32.mrf.mxu0
      %4397 = vmatprep.mubr.bf16.mxu0 0
      %4398 = vmatmul.mubr.bf16.gmra.mxu0 %v4221
      %v4399 = vpop.f32.mrf.mxu0
      %v4400 = vadd.f32 0.0, %v4399
      %v4401 = vpop.f32.mrf.mxu0
      %v4402 = vpop.f32.mrf.mxu0
      %v4403 = vadd.f32 0.0, %v4402
      %v4404 = vpop.f32.mrf.mxu0
      %4405 = vmatprep.mubr.bf16.mxu0 0
      %4406 = vmatmul.mubr.bf16.gmra.mxu0 %v4224
      %v4407 = vpop.f32.mrf.mxu0
      %v4408 = vadd.f32 0.0, %v4407
      %v4409 = vpop.f32.mrf.mxu0
      %v4410 = vpop.f32.mrf.mxu0
      %v4411 = vadd.f32 0.0, %v4410
      %v4412 = vpop.f32.mrf.mxu0
      %4413 = vmatprep.mubr.bf16.mxu0 0
      %4414 = vmatmul.mubr.bf16.gmra.mxu0 %v4227
      %v4415 = vpop.f32.mrf.mxu0
      %v4416 = vadd.f32 0.0, %v4415
      %v4417 = vpop.f32.mrf.mxu0
      %v4418 = vpop.f32.mrf.mxu0
      %v4419 = vadd.f32 0.0, %v4418
      %v4420 = vpop.f32.mrf.mxu0
      %4421 = vmatprep.mubr.bf16.mxu0 0
      %4422 = vmatmul.mubr.bf16.gmra.mxu0 %v4230
      %v4423 = vpop.f32.mrf.mxu0
      %v4424 = vadd.f32 0.0, %v4423
      %v4425 = vpop.f32.mrf.mxu0
      %v4426 = vpop.f32.mrf.mxu0
      %v4427 = vadd.f32 0.0, %v4426
      %v4428 = vpop.f32.mrf.mxu0
      %4429 = vmatprep.mubr.bf16.mxu0 0
      %4430 = vmatmul.mubr.bf16.gmra.mxu0 %v4233
      %v4431 = vpop.f32.mrf.mxu0
      %v4432 = vadd.f32 0.0, %v4431
      %v4433 = vpop.f32.mrf.mxu0
      %v4434 = vpop.f32.mrf.mxu0
      %v4435 = vadd.f32 0.0, %v4434
      %v4436 = vpop.f32.mrf.mxu0
      %4437 = vmatprep.mubr.bf16.mxu0 0
      %4438 = vmatmul.mubr.bf16.gmra.mxu0 %v4236
      %v4439 = vpop.f32.mrf.mxu0
      %v4440 = vadd.f32 0.0, %v4439
      %v4441 = vpop.f32.mrf.mxu0
      %v4442 = vpop.f32.mrf.mxu0
      %v4443 = vadd.f32 0.0, %v4442
      %v4444 = vpop.f32.mrf.mxu0
      %4445 = vmatprep.mubr.bf16.mxu0 0
      %4446 = vmatmul.mubr.bf16.gmra.mxu0 %v4239
      %v4447 = vpop.f32.mrf.mxu0
      %v4448 = vadd.f32 0.0, %v4447
      %v4449 = vpop.f32.mrf.mxu0
      %v4450 = vpop.f32.mrf.mxu0
      %v4451 = vadd.f32 0.0, %v4450
      %v4452 = vpop.f32.mrf.mxu0
      %4453 = vmatprep.mubr.bf16.mxu0 0
      %4454 = vmatmul.mubr.bf16.gmra.mxu0 %v4242
      %v4455 = vpop.f32.mrf.mxu0
      %v4456 = vadd.f32 0.0, %v4455
      %v4457 = vpop.f32.mrf.mxu0
      %v4458 = vpop.f32.mrf.mxu0
      %v4459 = vadd.f32 0.0, %v4458
      %v4460 = vpop.f32.mrf.mxu0
      %4461 = vmatprep.mubr.bf16.mxu0 0
      %4462 = vmatmul.mubr.bf16.gmra.mxu0 %v4245
      %v4463 = vpop.f32.mrf.mxu0
      %v4464 = vadd.f32 0.0, %v4463
      %v4465 = vpop.f32.mrf.mxu0
      %v4466 = vpop.f32.mrf.mxu0
      %v4467 = vadd.f32 0.0, %v4466
      %v4468 = vpop.f32.mrf.mxu0
      %4469 = vmatprep.mubr.bf16.mxu0 0
      %4470 = vmatmul.mubr.bf16.gmra.mxu0 %v4248
      %v4471 = vpop.f32.mrf.mxu0
      %v4472 = vadd.f32 0.0, %v4471
      %v4473 = vpop.f32.mrf.mxu0
      %v4474 = vpop.f32.mrf.mxu0
      %v4475 = vadd.f32 0.0, %v4474
      %v4476 = vpop.f32.mrf.mxu0
      %4477 = vdwg.mxu0
      %v4478 = vld [vmem:[#allocation3] sm:$0xff]
      %v4479 = vld [vmem:[#allocation3 + $0x8] sm:$0xff]
      %v4480 = vld [vmem:[#allocation3 + $0x10] sm:$0xff]
      %v4481 = vld [vmem:[#allocation3 + $0x18] sm:$0xff]
      %v4482 = vld [vmem:[#allocation3 + $0x20] sm:$0xff]
      %v4483 = vld [vmem:[#allocation3 + $0x28] sm:$0xff]
      %v4484 = vld [vmem:[#allocation3 + $0x30] sm:$0xff]
      %v4485 = vld [vmem:[#allocation3 + $0x38] sm:$0xff]
      %v4486 = vld [vmem:[#allocation3 + $0x40] sm:$0xff]
      %v4487 = vld [vmem:[#allocation3 + $0x48] sm:$0xff]
      %v4488 = vld [vmem:[#allocation3 + $0x50] sm:$0xff]
      %v4489 = vld [vmem:[#allocation3 + $0x58] sm:$0xff]
      %v4490 = vld [vmem:[#allocation3 + $0x60] sm:$0xff]
      %v4491 = vld [vmem:[#allocation3 + $0x68] sm:$0xff]
      %v4492 = vld [vmem:[#allocation3 + $0x70] sm:$0xff]
      %v4493 = vld [vmem:[#allocation3 + $0x78] sm:$0xff]
      %v4494 = vld [vmem:[#allocation3 + $0x80] sm:$0xff]
      %v4495 = vld [vmem:[#allocation3 + $0x88] sm:$0xff]
      %v4496 = vld [vmem:[#allocation3 + $0x90] sm:$0xff]
      %v4497 = vld [vmem:[#allocation3 + $0x98] sm:$0xff]
      %v4498 = vld [vmem:[#allocation3 + $0xa0] sm:$0xff]
      %v4499 = vld [vmem:[#allocation3 + $0xa8] sm:$0xff]
      %v4500 = vld [vmem:[#allocation3 + $0xb0] sm:$0xff]
      %v4501 = vld [vmem:[#allocation3 + $0xb8] sm:$0xff]
      %v4502 = vld [vmem:[#allocation3 + $0xc0] sm:$0xff]
      %v4503 = vld [vmem:[#allocation3 + $0xc8] sm:$0xff]
      %v4504 = vld [vmem:[#allocation3 + $0xd0] sm:$0xff]
      %v4505 = vld [vmem:[#allocation3 + $0xd8] sm:$0xff]
      %v4506 = vld [vmem:[#allocation3 + $0xe0] sm:$0xff]
      %v4507 = vld [vmem:[#allocation3 + $0xe8] sm:$0xff]
      %v4508 = vld [vmem:[#allocation3 + $0xf0] sm:$0xff]
      %v4509 = vld [vmem:[#allocation3 + $0xf8] sm:$0xff]
      %v4510 = vld [vmem:[#allocation3 + $0x100] sm:$0xff]
      %v4511 = vld [vmem:[#allocation3 + $0x108] sm:$0xff]
      %v4512 = vld [vmem:[#allocation3 + $0x110] sm:$0xff]
      %v4513 = vld [vmem:[#allocation3 + $0x118] sm:$0xff]
      %v4514 = vld [vmem:[#allocation3 + $0x120] sm:$0xff]
      %v4515 = vld [vmem:[#allocation3 + $0x128] sm:$0xff]
      %v4516 = vld [vmem:[#allocation3 + $0x130] sm:$0xff]
      %v4517 = vld [vmem:[#allocation3 + $0x138] sm:$0xff]
      %v4518 = vld [vmem:[#allocation3 + $0x140] sm:$0xff]
      %v4519 = vld [vmem:[#allocation3 + $0x148] sm:$0xff]
      %v4520 = vld [vmem:[#allocation3 + $0x150] sm:$0xff]
      %v4521 = vld [vmem:[#allocation3 + $0x158] sm:$0xff]
      %v4522 = vld [vmem:[#allocation3 + $0x160] sm:$0xff]
      %v4523 = vld [vmem:[#allocation3 + $0x168] sm:$0xff]
      %v4524 = vld [vmem:[#allocation3 + $0x170] sm:$0xff]
      %v4525 = vld [vmem:[#allocation3 + $0x178] sm:$0xff]
      %v4526 = vadd.f32 %v4478, %v4288
      %v4527 = vadd.f32 %v4479, %v4291
      %v4528 = vadd.f32 %v4480, %v4296
      %v4529 = vadd.f32 %v4481, %v4299
      %v4530 = vadd.f32 %v4482, %v4304
      %v4531 = vadd.f32 %v4483, %v4307
      %v4532 = vadd.f32 %v4484, %v4312
      %v4533 = vadd.f32 %v4485, %v4315
      %v4534 = vadd.f32 %v4486, %v4320
      %v4535 = vadd.f32 %v4487, %v4323
      %v4536 = vadd.f32 %v4488, %v4328
      %v4537 = vadd.f32 %v4489, %v4331
      %v4538 = vadd.f32 %v4490, %v4336
      %v4539 = vadd.f32 %v4491, %v4339
      %v4540 = vadd.f32 %v4492, %v4344
      %v4541 = vadd.f32 %v4493, %v4347
      %v4542 = vadd.f32 %v4494, %v4352
      %v4543 = vadd.f32 %v4495, %v4355
      %v4544 = vadd.f32 %v4496, %v4360
      %v4545 = vadd.f32 %v4497, %v4363
      %v4546 = vadd.f32 %v4498, %v4368
      %v4547 = vadd.f32 %v4499, %v4371
      %v4548 = vadd.f32 %v4500, %v4376
      %v4549 = vadd.f32 %v4501, %v4379
      %v4550 = vadd.f32 %v4502, %v4384
      %v4551 = vadd.f32 %v4503, %v4387
      %v4552 = vadd.f32 %v4504, %v4392
      %v4553 = vadd.f32 %v4505, %v4395
      %v4554 = vadd.f32 %v4506, %v4400
      %v4555 = vadd.f32 %v4507, %v4403
      %v4556 = vadd.f32 %v4508, %v4408
      %v4557 = vadd.f32 %v4509, %v4411
      %v4558 = vadd.f32 %v4510, %v4416
      %v4559 = vadd.f32 %v4511, %v4419
      %v4560 = vadd.f32 %v4512, %v4424
      %v4561 = vadd.f32 %v4513, %v4427
      %v4562 = vadd.f32 %v4514, %v4432
      %v4563 = vadd.f32 %v4515, %v4435
      %v4564 = vadd.f32 %v4516, %v4440
      %v4565 = vadd.f32 %v4517, %v4443
      %v4566 = vadd.f32 %v4518, %v4448
      %v4567 = vadd.f32 %v4519, %v4451
      %v4568 = vadd.f32 %v4520, %v4456
      %v4569 = vadd.f32 %v4521, %v4459
      %v4570 = vadd.f32 %v4522, %v4464
      %v4571 = vadd.f32 %v4523, %v4467
      %v4572 = vadd.f32 %v4524, %v4472
      %v4573 = vadd.f32 %v4525, %v4475
      %4574 = vst.msk [vmem:[#allocation3] sm:$0xff] %vm423, %v4526
      %4575 = vst.msk [vmem:[#allocation3 + $0x8] sm:$0xff] %vm423, %v4527
      %4576 = vst.msk [vmem:[#allocation3 + $0x10] sm:$0xff] %vm423, %v4528
      %4577 = vst.msk [vmem:[#allocation3 + $0x18] sm:$0xff] %vm423, %v4529
      %4578 = vst.msk [vmem:[#allocation3 + $0x20] sm:$0xff] %vm423, %v4530
      %4579 = vst.msk [vmem:[#allocation3 + $0x28] sm:$0xff] %vm423, %v4531
      %4580 = vst.msk [vmem:[#allocation3 + $0x30] sm:$0xff] %vm423, %v4532
      %4581 = vst.msk [vmem:[#allocation3 + $0x38] sm:$0xff] %vm423, %v4533
      %4582 = vst.msk [vmem:[#allocation3 + $0x40] sm:$0xff] %vm423, %v4534
      %4583 = vst.msk [vmem:[#allocation3 + $0x48] sm:$0xff] %vm423, %v4535
      %4584 = vst.msk [vmem:[#allocation3 + $0x50] sm:$0xff] %vm423, %v4536
      %4585 = vst.msk [vmem:[#allocation3 + $0x58] sm:$0xff] %vm423, %v4537
      %4586 = vst.msk [vmem:[#allocation3 + $0x60] sm:$0xff] %vm423, %v4538
      %4587 = vst.msk [vmem:[#allocation3 + $0x68] sm:$0xff] %vm423, %v4539
      %4588 = vst.msk [vmem:[#allocation3 + $0x70] sm:$0xff] %vm423, %v4540
      %4589 = vst.msk [vmem:[#allocation3 + $0x78] sm:$0xff] %vm423, %v4541
      %4590 = vst.msk [vmem:[#allocation3 + $0x80] sm:$0xff] %vm423, %v4542
      %4591 = vst.msk [vmem:[#allocation3 + $0x88] sm:$0xff] %vm423, %v4543
      %4592 = vst.msk [vmem:[#allocation3 + $0x90] sm:$0xff] %vm423, %v4544
      %4593 = vst.msk [vmem:[#allocation3 + $0x98] sm:$0xff] %vm423, %v4545
      %4594 = vst.msk [vmem:[#allocation3 + $0xa0] sm:$0xff] %vm423, %v4546
      %4595 = vst.msk [vmem:[#allocation3 + $0xa8] sm:$0xff] %vm423, %v4547
      %4596 = vst.msk [vmem:[#allocation3 + $0xb0] sm:$0xff] %vm423, %v4548
      %4597 = vst.msk [vmem:[#allocation3 + $0xb8] sm:$0xff] %vm423, %v4549
      %4598 = vst.msk [vmem:[#allocation3 + $0xc0] sm:$0xff] %vm423, %v4550
      %4599 = vst.msk [vmem:[#allocation3 + $0xc8] sm:$0xff] %vm423, %v4551
      %4600 = vst.msk [vmem:[#allocation3 + $0xd0] sm:$0xff] %vm423, %v4552
      %4601 = vst.msk [vmem:[#allocation3 + $0xd8] sm:$0xff] %vm423, %v4553
      %4602 = vst.msk [vmem:[#allocation3 + $0xe0] sm:$0xff] %vm423, %v4554
      %4603 = vst.msk [vmem:[#allocation3 + $0xe8] sm:$0xff] %vm423, %v4555
      %4604 = vst.msk [vmem:[#allocation3 + $0xf0] sm:$0xff] %vm423, %v4556
      %4605 = vst.msk [vmem:[#allocation3 + $0xf8] sm:$0xff] %vm423, %v4557
      %4606 = vst.msk [vmem:[#allocation3 + $0x100] sm:$0xff] %vm423, %v4558
      %4607 = vst.msk [vmem:[#allocation3 + $0x108] sm:$0xff] %vm423, %v4559
      %4608 = vst.msk [vmem:[#allocation3 + $0x110] sm:$0xff] %vm423, %v4560
      %4609 = vst.msk [vmem:[#allocation3 + $0x118] sm:$0xff] %vm423, %v4561
      %4610 = vst.msk [vmem:[#allocation3 + $0x120] sm:$0xff] %vm423, %v4562
      %4611 = vst.msk [vmem:[#allocation3 + $0x128] sm:$0xff] %vm423, %v4563
      %4612 = vst.msk [vmem:[#allocation3 + $0x130] sm:$0xff] %vm423, %v4564
      %4613 = vst.msk [vmem:[#allocation3 + $0x138] sm:$0xff] %vm423, %v4565
      %4614 = vst.msk [vmem:[#allocation3 + $0x140] sm:$0xff] %vm423, %v4566
      %4615 = vst.msk [vmem:[#allocation3 + $0x148] sm:$0xff] %vm423, %v4567
      %4616 = vst.msk [vmem:[#allocation3 + $0x150] sm:$0xff] %vm423, %v4568
      %4617 = vst.msk [vmem:[#allocation3 + $0x158] sm:$0xff] %vm423, %v4569
      %4618 = vst.msk [vmem:[#allocation3 + $0x160] sm:$0xff] %vm423, %v4570
      %4619 = vst.msk [vmem:[#allocation3 + $0x168] sm:$0xff] %vm423, %v4571
      %4620 = vst.msk [vmem:[#allocation3 + $0x170] sm:$0xff] %vm423, %v4572
      %4621 = vst.msk [vmem:[#allocation3 + $0x178] sm:$0xff] %vm423, %v4573
      %v4622 = vld [vmem:[#allocation2 + $0xc] sm:$0xe]
      %v4623 = vld [vmem:[#allocation2 + $0x10] sm:$0xf]
      %v4624 = vld [vmem:[#allocation2 + $0x14] sm:$0xf]
      %v4625 = vld [vmem:[#allocation2 + $0x18] sm:$0xf]
      %v4626 = vld [vmem:[#allocation2 + $0x1c] sm:$0xf]
      %v4627 = vld [vmem:[#allocation2 + $0x20] sm:$0xf]
      %v4628 = vld [vmem:[#allocation2 + $0x24] sm:$0xf]
      %v4629 = vld [vmem:[#allocation2 + $0x28] sm:$0xf]
      %v4630 = vld [vmem:[#allocation2 + $0x2c] sm:$0xf]
      %v4631 = vld [vmem:[#allocation2 + $0x30] sm:$0xf]
      %v4632 = vld [vmem:[#allocation2 + $0x34] sm:$0xf]
      %v4633 = vld [vmem:[#allocation2 + $0x38] sm:$0xf]
      %v4634 = vld [vmem:[#allocation2 + $0x3c] sm:$0xf]
      %v4635 = vld [vmem:[#allocation2 + $0x40] sm:$0xf]
      %v4636 = vld [vmem:[#allocation2 + $0x44] sm:$0xf]
      %v4637 = vld [vmem:[#allocation2 + $0x48] sm:$0xf]
      %v4638 = vld [vmem:[#allocation2 + $0x4c] sm:$0xf]
      %v4639 = vld [vmem:[#allocation2 + $0x50] sm:$0xf]
      %v4640 = vld [vmem:[#allocation2 + $0x54] sm:$0xf]
      %v4641 = vld [vmem:[#allocation2 + $0x58] sm:$0xf]
      %v4642 = vld [vmem:[#allocation2 + $0x5c] sm:$0xf]
      %v4643 = vld [vmem:[#allocation2 + $0x60] sm:$0xf]
      %v4644 = vld [vmem:[#allocation2 + $0x64] sm:$0xf]
      %v4645 = vld [vmem:[#allocation2 + $0x68] sm:$0xf]
      %v4646 = vld [vmem:[#allocation2 + $0x6c] sm:$0xf]
      %v4647 = vld [vmem:[#allocation2 + $0x70] sm:$0xf]
      %v4648 = vld [vmem:[#allocation2 + $0x74] sm:$0xf]
      %v4649 = vld [vmem:[#allocation2 + $0x78] sm:$0xf]
      %v4650 = vld [vmem:[#allocation2 + $0x7c] sm:$0xf]
      %v4651 = vld [vmem:[#allocation2 + $0x80] sm:$0xf]
      %v4652 = vld [vmem:[#allocation2 + $0x84] sm:$0xf]
      %v4653 = vld [vmem:[#allocation2 + $0x88] sm:$0xf]
      %v4654 = vld [vmem:[#allocation2 + $0x8c] sm:$0xf]
      %v4655 = vld [vmem:[#allocation2 + $0x90] sm:$0xf]
      %v4656 = vld [vmem:[#allocation2 + $0x94] sm:$0xf]
      %v4657 = vld [vmem:[#allocation2 + $0x98] sm:$0xf]
      %v4658 = vld [vmem:[#allocation2 + $0x9c] sm:$0xf]
      %v4659 = vld [vmem:[#allocation2 + $0xa0] sm:$0xf]
      %v4660 = vld [vmem:[#allocation2 + $0xa4] sm:$0xf]
      %v4661 = vld [vmem:[#allocation2 + $0xa8] sm:$0xf]
      %v4662 = vld [vmem:[#allocation2 + $0xac] sm:$0xf]
      %v4663 = vld [vmem:[#allocation2 + $0xb0] sm:$0xf]
      %v4664 = vld [vmem:[#allocation2 + $0xb4] sm:$0xf]
      %v4665 = vld [vmem:[#allocation2 + $0xb8] sm:$0xf]
      %v4666 = vld [vmem:[#allocation2 + $0xbc] sm:$0xf]
      %v4667 = vld [vmem:[#allocation2 + $0xc0] sm:$0xf]
      %v4668 = vld [vmem:[#allocation2 + $0xc4] sm:$0xf]
      %v4669 = vld [vmem:[#allocation2 + $0xc8] sm:$0xf]
      %v4670 = vld [vmem:[#allocation2 + $0xcc] sm:$0x1]
      %s4671 = scalar_lea.vmem %s3, 5
      %v4672 = vld [vmem:[%s4671] sm:$0x1]
      %v4722 = vunpack.c.l.b16 %v4622
      %v4723 = vunpack.c.l.b16 %v4623
      %v4724 = vunpack.c.l.b16 %v4624
      %v4725 = vunpack.c.l.b16 %v4625
      %v4726 = vunpack.c.l.b16 %v4626
      %v4727 = vunpack.c.l.b16 %v4627
      %v4728 = vunpack.c.l.b16 %v4628
      %v4729 = vunpack.c.l.b16 %v4629
      %v4730 = vunpack.c.l.b16 %v4630
      %v4731 = vunpack.c.l.b16 %v4631
      %v4732 = vunpack.c.l.b16 %v4632
      %v4733 = vunpack.c.l.b16 %v4633
      %v4734 = vunpack.c.l.b16 %v4634
      %v4735 = vunpack.c.l.b16 %v4635
      %v4736 = vunpack.c.l.b16 %v4636
      %v4737 = vunpack.c.l.b16 %v4637
      %v4738 = vunpack.c.l.b16 %v4638
      %v4739 = vunpack.c.l.b16 %v4639
      %v4740 = vunpack.c.l.b16 %v4640
      %v4741 = vunpack.c.l.b16 %v4641
      %v4742 = vunpack.c.l.b16 %v4642
      %v4743 = vunpack.c.l.b16 %v4643
      %v4744 = vunpack.c.l.b16 %v4644
      %v4745 = vunpack.c.l.b16 %v4645
      %v4746 = vunpack.c.l.b16 %v4646
      %v4747 = vunpack.c.l.b16 %v4647
      %v4748 = vunpack.c.l.b16 %v4648
      %v4749 = vunpack.c.l.b16 %v4649
      %v4750 = vunpack.c.l.b16 %v4650
      %v4751 = vunpack.c.l.b16 %v4651
      %v4752 = vunpack.c.l.b16 %v4652
      %v4753 = vunpack.c.l.b16 %v4653
      %v4754 = vunpack.c.l.b16 %v4654
      %v4755 = vunpack.c.l.b16 %v4655
      %v4756 = vunpack.c.l.b16 %v4656
      %v4757 = vunpack.c.l.b16 %v4657
      %v4758 = vunpack.c.l.b16 %v4658
      %v4759 = vunpack.c.l.b16 %v4659
      %v4760 = vunpack.c.l.b16 %v4660
      %v4761 = vunpack.c.l.b16 %v4661
      %v4762 = vunpack.c.l.b16 %v4662
      %v4763 = vunpack.c.l.b16 %v4663
      %v4764 = vunpack.c.l.b16 %v4664
      %v4765 = vunpack.c.l.b16 %v4665
      %v4766 = vunpack.c.l.b16 %v4666
      %v4767 = vunpack.c.l.b16 %v4667
      %v4768 = vunpack.c.l.b16 %v4668
      %v4769 = vunpack.c.l.b16 %v4669
      %v4770 = vunpack.c.l.b16 %v4670
      %v4771 = vpack.c.b16 %v4723, %v4722
      %v4772 = vpack.c.b16 %v4725, %v4724
      %v4773 = vpack.c.b16 %v4727, %v4726
      %v4774 = vpack.c.b16 %v4729, %v4728
      %v4775 = vpack.c.b16 %v4731, %v4730
      %v4776 = vpack.c.b16 %v4733, %v4732
      %v4777 = vpack.c.b16 %v4735, %v4734
      %v4778 = vpack.c.b16 %v4737, %v4736
      %v4779 = vpack.c.b16 %v4739, %v4738
      %v4780 = vpack.c.b16 %v4741, %v4740
      %v4781 = vpack.c.b16 %v4743, %v4742
      %v4782 = vpack.c.b16 %v4745, %v4744
      %v4783 = vpack.c.b16 %v4747, %v4746
      %v4784 = vpack.c.b16 %v4749, %v4748
      %v4785 = vpack.c.b16 %v4751, %v4750
      %v4786 = vpack.c.b16 %v4753, %v4752
      %v4787 = vpack.c.b16 %v4755, %v4754
      %v4788 = vpack.c.b16 %v4757, %v4756
      %v4789 = vpack.c.b16 %v4759, %v4758
      %v4790 = vpack.c.b16 %v4761, %v4760
      %v4791 = vpack.c.b16 %v4763, %v4762
      %v4792 = vpack.c.b16 %v4765, %v4764
      %v4793 = vpack.c.b16 %v4767, %v4766
      %v4794 = vpack.c.b16 %v4769, %v4768
      %v4795 = vpack.c.b16 %v4770, %v4770
      %v4796 = vrot.slane %v4771, 1
      %v4797 = vrot.slane %v4772, 1
      %v4798 = vsel %vm2700, %v4796, %v4797
      %v4799 = vrot.slane %v4773, 1
      %v4800 = vsel %vm2700, %v4797, %v4799
      %v4801 = vrot.slane %v4774, 1
      %v4802 = vsel %vm2700, %v4799, %v4801
      %v4803 = vrot.slane %v4775, 1
      %v4804 = vsel %vm2700, %v4801, %v4803
      %v4805 = vrot.slane %v4776, 1
      %v4806 = vsel %vm2700, %v4803, %v4805
      %v4807 = vrot.slane %v4777, 1
      %v4808 = vsel %vm2700, %v4805, %v4807
      %v4809 = vrot.slane %v4778, 1
      %v4810 = vsel %vm2700, %v4807, %v4809
      %v4811 = vrot.slane %v4779, 1
      %v4812 = vsel %vm2700, %v4809, %v4811
      %v4813 = vrot.slane %v4780, 1
      %v4814 = vsel %vm2700, %v4811, %v4813
      %v4815 = vrot.slane %v4781, 1
      %v4816 = vsel %vm2700, %v4813, %v4815
      %v4817 = vrot.slane %v4782, 1
      %v4818 = vsel %vm2700, %v4815, %v4817
      %v4819 = vrot.slane %v4783, 1
      %v4820 = vsel %vm2700, %v4817, %v4819
      %v4821 = vrot.slane %v4784, 1
      %v4822 = vsel %vm2700, %v4819, %v4821
      %v4823 = vrot.slane %v4785, 1
      %v4824 = vsel %vm2700, %v4821, %v4823
      %v4825 = vrot.slane %v4786, 1
      %v4826 = vsel %vm2700, %v4823, %v4825
      %v4827 = vrot.slane %v4787, 1
      %v4828 = vsel %vm2700, %v4825, %v4827
      %v4829 = vrot.slane %v4788, 1
      %v4830 = vsel %vm2700, %v4827, %v4829
      %v4831 = vrot.slane %v4789, 1
      %v4832 = vsel %vm2700, %v4829, %v4831
      %v4833 = vrot.slane %v4790, 1
      %v4834 = vsel %vm2700, %v4831, %v4833
      %v4835 = vrot.slane %v4791, 1
      %v4836 = vsel %vm2700, %v4833, %v4835
      %v4837 = vrot.slane %v4792, 1
      %v4838 = vsel %vm2700, %v4835, %v4837
      %v4839 = vrot.slane %v4793, 1
      %v4840 = vsel %vm2700, %v4837, %v4839
      %v4841 = vrot.slane %v4794, 1
      %v4842 = vsel %vm2700, %v4839, %v4841
      %v4843 = vrot.slane %v4795, 1
      %v4844 = vsel %vm2700, %v4841, %v4843
      %v4846 = vsel %vm1361, %v4798, 0
      %v4849 = vsel %vm1361, %v4800, 0
      %v4852 = vsel %vm1361, %v4802, 0
      %v4855 = vsel %vm1361, %v4804, 0
      %v4858 = vsel %vm1361, %v4806, 0
      %v4861 = vsel %vm1361, %v4808, 0
      %v4864 = vsel %vm1361, %v4810, 0
      %v4867 = vsel %vm1361, %v4812, 0
      %v4870 = vsel %vm1361, %v4814, 0
      %v4873 = vsel %vm1361, %v4816, 0
      %v4876 = vsel %vm1361, %v4818, 0
      %v4879 = vsel %vm1361, %v4820, 0
      %v4882 = vsel %vm1361, %v4822, 0
      %v4885 = vsel %vm1361, %v4824, 0
      %v4888 = vsel %vm1361, %v4826, 0
      %v4891 = vsel %vm1361, %v4828, 0
      %v4894 = vsel %vm1361, %v4830, 0
      %v4897 = vsel %vm1361, %v4832, 0
      %v4900 = vsel %vm1361, %v4834, 0
      %v4903 = vsel %vm1361, %v4836, 0
      %v4906 = vsel %vm1361, %v4838, 0
      %v4909 = vsel %vm1361, %v4840, 0
      %v4912 = vsel %vm1361, %v4842, 0
      %v4915 = vsel %vm1361, %v4844, 0
      %v4918 = vsel %vm1434, %v4672, 0
      %4920 = vmatprep.subr.bf16.mxu0 0
      %4921 = vmatpush1.bf16.msra.mxu0 0
      %4922 = vmatprep.subr.bf16.mxu0 0
      %4923 = vmatpush1.bf16.msra.mxu0 0
      %4924 = vmatprep.subr.bf16.mxu0 0
      %4925 = vmatpush1.bf16.msra.mxu0 0
      %4926 = vmatprep.subr.bf16.mxu0 0
      %4927 = vmatpush1.bf16.msra.mxu0 0
      %4928 = vmatprep.subr.bf16.mxu0 0
      %4929 = vmatpush1.bf16.msra.mxu0 0
      %4930 = vmatprep.subr.bf16.mxu0 0
      %4931 = vmatpush1.bf16.msra.mxu0 0
      %4932 = vmatprep.subr.bf16.mxu0 0
      %4933 = vmatpush1.bf16.msra.mxu0 0
      %4934 = vmatprep.subr.bf16.mxu0 0
      %4935 = vmatpush1.bf16.msra.mxu0 %v4918
      %4936 = vmatprep.subr.bf16.mxu0 0
      %4937 = vmatpush2.bf16.msra.mxu0 0
      %4938 = vmatprep.subr.bf16.mxu0 0
      %4939 = vmatpush2.bf16.msra.mxu0 0
      %4940 = vmatprep.subr.bf16.mxu0 0
      %4941 = vmatpush2.bf16.msra.mxu0 0
      %4942 = vmatprep.subr.bf16.mxu0 0
      %4943 = vmatpush2.bf16.msra.mxu0 0
      %4944 = vmatprep.subr.bf16.mxu0 0
      %4945 = vmatpush2.bf16.msra.mxu0 0
      %4946 = vmatprep.subr.bf16.mxu0 0
      %4947 = vmatpush2.bf16.msra.mxu0 0
      %4948 = vmatprep.subr.bf16.mxu0 0
      %4949 = vmatpush2.bf16.msra.mxu0 0
      %4950 = vmatprep.subr.bf16.mxu0 0
      %4951 = vmatpush2.bf16.msra.mxu0 0
      %4952 = vmatprep.mubr.bf16.mxu0 0
      %4953 = vmatmul.mubr.bf16.gmra.mxu0 %v4846
      %v4954 = vpop.f32.mrf.mxu0
      %v4955 = vadd.f32 0.0, %v4954
      %v4956 = vpop.f32.mrf.mxu0
      %v4957 = vpop.f32.mrf.mxu0
      %v4958 = vadd.f32 0.0, %v4957
      %v4959 = vpop.f32.mrf.mxu0
      %4960 = vmatprep.mubr.bf16.mxu0 0
      %4961 = vmatmul.mubr.bf16.gmra.mxu0 %v4849
      %v4962 = vpop.f32.mrf.mxu0
      %v4963 = vadd.f32 0.0, %v4962
      %v4964 = vpop.f32.mrf.mxu0
      %v4965 = vpop.f32.mrf.mxu0
      %v4966 = vadd.f32 0.0, %v4965
      %v4967 = vpop.f32.mrf.mxu0
      %4968 = vmatprep.mubr.bf16.mxu0 0
      %4969 = vmatmul.mubr.bf16.gmra.mxu0 %v4852
      %v4970 = vpop.f32.mrf.mxu0
      %v4971 = vadd.f32 0.0, %v4970
      %v4972 = vpop.f32.mrf.mxu0
      %v4973 = vpop.f32.mrf.mxu0
      %v4974 = vadd.f32 0.0, %v4973
      %v4975 = vpop.f32.mrf.mxu0
      %4976 = vmatprep.mubr.bf16.mxu0 0
      %4977 = vmatmul.mubr.bf16.gmra.mxu0 %v4855
      %v4978 = vpop.f32.mrf.mxu0
      %v4979 = vadd.f32 0.0, %v4978
      %v4980 = vpop.f32.mrf.mxu0
      %v4981 = vpop.f32.mrf.mxu0
      %v4982 = vadd.f32 0.0, %v4981
      %v4983 = vpop.f32.mrf.mxu0
      %4984 = vmatprep.mubr.bf16.mxu0 0
      %4985 = vmatmul.mubr.bf16.gmra.mxu0 %v4858
      %v4986 = vpop.f32.mrf.mxu0
      %v4987 = vadd.f32 0.0, %v4986
      %v4988 = vpop.f32.mrf.mxu0
      %v4989 = vpop.f32.mrf.mxu0
      %v4990 = vadd.f32 0.0, %v4989
      %v4991 = vpop.f32.mrf.mxu0
      %4992 = vmatprep.mubr.bf16.mxu0 0
      %4993 = vmatmul.mubr.bf16.gmra.mxu0 %v4861
      %v4994 = vpop.f32.mrf.mxu0
      %v4995 = vadd.f32 0.0, %v4994
      %v4996 = vpop.f32.mrf.mxu0
      %v4997 = vpop.f32.mrf.mxu0
      %v4998 = vadd.f32 0.0, %v4997
      %v4999 = vpop.f32.mrf.mxu0
      %5000 = vmatprep.mubr.bf16.mxu0 0
      %5001 = vmatmul.mubr.bf16.gmra.mxu0 %v4864
      %v5002 = vpop.f32.mrf.mxu0
      %v5003 = vadd.f32 0.0, %v5002
      %v5004 = vpop.f32.mrf.mxu0
      %v5005 = vpop.f32.mrf.mxu0
      %v5006 = vadd.f32 0.0, %v5005
      %v5007 = vpop.f32.mrf.mxu0
      %5008 = vmatprep.mubr.bf16.mxu0 0
      %5009 = vmatmul.mubr.bf16.gmra.mxu0 %v4867
      %v5010 = vpop.f32.mrf.mxu0
      %v5011 = vadd.f32 0.0, %v5010
      %v5012 = vpop.f32.mrf.mxu0
      %v5013 = vpop.f32.mrf.mxu0
      %v5014 = vadd.f32 0.0, %v5013
      %v5015 = vpop.f32.mrf.mxu0
      %5016 = vmatprep.mubr.bf16.mxu0 0
      %5017 = vmatmul.mubr.bf16.gmra.mxu0 %v4870
      %v5018 = vpop.f32.mrf.mxu0
      %v5019 = vadd.f32 0.0, %v5018
      %v5020 = vpop.f32.mrf.mxu0
      %v5021 = vpop.f32.mrf.mxu0
      %v5022 = vadd.f32 0.0, %v5021
      %v5023 = vpop.f32.mrf.mxu0
      %5024 = vmatprep.mubr.bf16.mxu0 0
      %5025 = vmatmul.mubr.bf16.gmra.mxu0 %v4873
      %v5026 = vpop.f32.mrf.mxu0
      %v5027 = vadd.f32 0.0, %v5026
      %v5028 = vpop.f32.mrf.mxu0
      %v5029 = vpop.f32.mrf.mxu0
      %v5030 = vadd.f32 0.0, %v5029
      %v5031 = vpop.f32.mrf.mxu0
      %5032 = vmatprep.mubr.bf16.mxu0 0
      %5033 = vmatmul.mubr.bf16.gmra.mxu0 %v4876
      %v5034 = vpop.f32.mrf.mxu0
      %v5035 = vadd.f32 0.0, %v5034
      %v5036 = vpop.f32.mrf.mxu0
      %v5037 = vpop.f32.mrf.mxu0
      %v5038 = vadd.f32 0.0, %v5037
      %v5039 = vpop.f32.mrf.mxu0
      %5040 = vmatprep.mubr.bf16.mxu0 0
      %5041 = vmatmul.mubr.bf16.gmra.mxu0 %v4879
      %v5042 = vpop.f32.mrf.mxu0
      %v5043 = vadd.f32 0.0, %v5042
      %v5044 = vpop.f32.mrf.mxu0
      %v5045 = vpop.f32.mrf.mxu0
      %v5046 = vadd.f32 0.0, %v5045
      %v5047 = vpop.f32.mrf.mxu0
      %5048 = vmatprep.mubr.bf16.mxu0 0
      %5049 = vmatmul.mubr.bf16.gmra.mxu0 %v4882
      %v5050 = vpop.f32.mrf.mxu0
      %v5051 = vadd.f32 0.0, %v5050
      %v5052 = vpop.f32.mrf.mxu0
      %v5053 = vpop.f32.mrf.mxu0
      %v5054 = vadd.f32 0.0, %v5053
      %v5055 = vpop.f32.mrf.mxu0
      %5056 = vmatprep.mubr.bf16.mxu0 0
      %5057 = vmatmul.mubr.bf16.gmra.mxu0 %v4885
      %v5058 = vpop.f32.mrf.mxu0
      %v5059 = vadd.f32 0.0, %v5058
      %v5060 = vpop.f32.mrf.mxu0
      %v5061 = vpop.f32.mrf.mxu0
      %v5062 = vadd.f32 0.0, %v5061
      %v5063 = vpop.f32.mrf.mxu0
      %5064 = vmatprep.mubr.bf16.mxu0 0
      %5065 = vmatmul.mubr.bf16.gmra.mxu0 %v4888
      %v5066 = vpop.f32.mrf.mxu0
      %v5067 = vadd.f32 0.0, %v5066
      %v5068 = vpop.f32.mrf.mxu0
      %v5069 = vpop.f32.mrf.mxu0
      %v5070 = vadd.f32 0.0, %v5069
      %v5071 = vpop.f32.mrf.mxu0
      %5072 = vmatprep.mubr.bf16.mxu0 0
      %5073 = vmatmul.mubr.bf16.gmra.mxu0 %v4891
      %v5074 = vpop.f32.mrf.mxu0
      %v5075 = vadd.f32 0.0, %v5074
      %v5076 = vpop.f32.mrf.mxu0
      %v5077 = vpop.f32.mrf.mxu0
      %v5078 = vadd.f32 0.0, %v5077
      %v5079 = vpop.f32.mrf.mxu0
      %5080 = vmatprep.mubr.bf16.mxu0 0
      %5081 = vmatmul.mubr.bf16.gmra.mxu0 %v4894
      %v5082 = vpop.f32.mrf.mxu0
      %v5083 = vadd.f32 0.0, %v5082
      %v5084 = vpop.f32.mrf.mxu0
      %v5085 = vpop.f32.mrf.mxu0
      %v5086 = vadd.f32 0.0, %v5085
      %v5087 = vpop.f32.mrf.mxu0
      %5088 = vmatprep.mubr.bf16.mxu0 0
      %5089 = vmatmul.mubr.bf16.gmra.mxu0 %v4897
      %v5090 = vpop.f32.mrf.mxu0
      %v5091 = vadd.f32 0.0, %v5090
      %v5092 = vpop.f32.mrf.mxu0
      %v5093 = vpop.f32.mrf.mxu0
      %v5094 = vadd.f32 0.0, %v5093
      %v5095 = vpop.f32.mrf.mxu0
      %5096 = vmatprep.mubr.bf16.mxu0 0
      %5097 = vmatmul.mubr.bf16.gmra.mxu0 %v4900
      %v5098 = vpop.f32.mrf.mxu0
      %v5099 = vadd.f32 0.0, %v5098
      %v5100 = vpop.f32.mrf.mxu0
      %v5101 = vpop.f32.mrf.mxu0
      %v5102 = vadd.f32 0.0, %v5101
      %v5103 = vpop.f32.mrf.mxu0
      %5104 = vmatprep.mubr.bf16.mxu0 0
      %5105 = vmatmul.mubr.bf16.gmra.mxu0 %v4903
      %v5106 = vpop.f32.mrf.mxu0
      %v5107 = vadd.f32 0.0, %v5106
      %v5108 = vpop.f32.mrf.mxu0
      %v5109 = vpop.f32.mrf.mxu0
      %v5110 = vadd.f32 0.0, %v5109
      %v5111 = vpop.f32.mrf.mxu0
      %5112 = vmatprep.mubr.bf16.mxu0 0
      %5113 = vmatmul.mubr.bf16.gmra.mxu0 %v4906
      %v5114 = vpop.f32.mrf.mxu0
      %v5115 = vadd.f32 0.0, %v5114
      %v5116 = vpop.f32.mrf.mxu0
      %v5117 = vpop.f32.mrf.mxu0
      %v5118 = vadd.f32 0.0, %v5117
      %v5119 = vpop.f32.mrf.mxu0
      %5120 = vmatprep.mubr.bf16.mxu0 0
      %5121 = vmatmul.mubr.bf16.gmra.mxu0 %v4909
      %v5122 = vpop.f32.mrf.mxu0
      %v5123 = vadd.f32 0.0, %v5122
      %v5124 = vpop.f32.mrf.mxu0
      %v5125 = vpop.f32.mrf.mxu0
      %v5126 = vadd.f32 0.0, %v5125
      %v5127 = vpop.f32.mrf.mxu0
      %5128 = vmatprep.mubr.bf16.mxu0 0
      %5129 = vmatmul.mubr.bf16.gmra.mxu0 %v4912
      %v5130 = vpop.f32.mrf.mxu0
      %v5131 = vadd.f32 0.0, %v5130
      %v5132 = vpop.f32.mrf.mxu0
      %v5133 = vpop.f32.mrf.mxu0
      %v5134 = vadd.f32 0.0, %v5133
      %v5135 = vpop.f32.mrf.mxu0
      %5136 = vmatprep.mubr.bf16.mxu0 0
      %5137 = vmatmul.mubr.bf16.gmra.mxu0 %v4915
      %v5138 = vpop.f32.mrf.mxu0
      %v5139 = vadd.f32 0.0, %v5138
      %v5140 = vpop.f32.mrf.mxu0
      %v5141 = vpop.f32.mrf.mxu0
      %v5142 = vadd.f32 0.0, %v5141
      %v5143 = vpop.f32.mrf.mxu0
      %5144 = vdwg.mxu0
      %v5145 = vld [vmem:[#allocation3] sm:$0xff]
      %v5146 = vld [vmem:[#allocation3 + $0x8] sm:$0xff]
      %v5147 = vld [vmem:[#allocation3 + $0x10] sm:$0xff]
      %v5148 = vld [vmem:[#allocation3 + $0x18] sm:$0xff]
      %v5149 = vld [vmem:[#allocation3 + $0x20] sm:$0xff]
      %v5150 = vld [vmem:[#allocation3 + $0x28] sm:$0xff]
      %v5151 = vld [vmem:[#allocation3 + $0x30] sm:$0xff]
      %v5152 = vld [vmem:[#allocation3 + $0x38] sm:$0xff]
      %v5153 = vld [vmem:[#allocation3 + $0x40] sm:$0xff]
      %v5154 = vld [vmem:[#allocation3 + $0x48] sm:$0xff]
      %v5155 = vld [vmem:[#allocation3 + $0x50] sm:$0xff]
      %v5156 = vld [vmem:[#allocation3 + $0x58] sm:$0xff]
      %v5157 = vld [vmem:[#allocation3 + $0x60] sm:$0xff]
      %v5158 = vld [vmem:[#allocation3 + $0x68] sm:$0xff]
      %v5159 = vld [vmem:[#allocation3 + $0x70] sm:$0xff]
      %v5160 = vld [vmem:[#allocation3 + $0x78] sm:$0xff]
      %v5161 = vld [vmem:[#allocation3 + $0x80] sm:$0xff]
      %v5162 = vld [vmem:[#allocation3 + $0x88] sm:$0xff]
      %v5163 = vld [vmem:[#allocation3 + $0x90] sm:$0xff]
      %v5164 = vld [vmem:[#allocation3 + $0x98] sm:$0xff]
      %v5165 = vld [vmem:[#allocation3 + $0xa0] sm:$0xff]
      %v5166 = vld [vmem:[#allocation3 + $0xa8] sm:$0xff]
      %v5167 = vld [vmem:[#allocation3 + $0xb0] sm:$0xff]
      %v5168 = vld [vmem:[#allocation3 + $0xb8] sm:$0xff]
      %v5169 = vld [vmem:[#allocation3 + $0xc0] sm:$0xff]
      %v5170 = vld [vmem:[#allocation3 + $0xc8] sm:$0xff]
      %v5171 = vld [vmem:[#allocation3 + $0xd0] sm:$0xff]
      %v5172 = vld [vmem:[#allocation3 + $0xd8] sm:$0xff]
      %v5173 = vld [vmem:[#allocation3 + $0xe0] sm:$0xff]
      %v5174 = vld [vmem:[#allocation3 + $0xe8] sm:$0xff]
      %v5175 = vld [vmem:[#allocation3 + $0xf0] sm:$0xff]
      %v5176 = vld [vmem:[#allocation3 + $0xf8] sm:$0xff]
      %v5177 = vld [vmem:[#allocation3 + $0x100] sm:$0xff]
      %v5178 = vld [vmem:[#allocation3 + $0x108] sm:$0xff]
      %v5179 = vld [vmem:[#allocation3 + $0x110] sm:$0xff]
      %v5180 = vld [vmem:[#allocation3 + $0x118] sm:$0xff]
      %v5181 = vld [vmem:[#allocation3 + $0x120] sm:$0xff]
      %v5182 = vld [vmem:[#allocation3 + $0x128] sm:$0xff]
      %v5183 = vld [vmem:[#allocation3 + $0x130] sm:$0xff]
      %v5184 = vld [vmem:[#allocation3 + $0x138] sm:$0xff]
      %v5185 = vld [vmem:[#allocation3 + $0x140] sm:$0xff]
      %v5186 = vld [vmem:[#allocation3 + $0x148] sm:$0xff]
      %v5187 = vld [vmem:[#allocation3 + $0x150] sm:$0xff]
      %v5188 = vld [vmem:[#allocation3 + $0x158] sm:$0xff]
      %v5189 = vld [vmem:[#allocation3 + $0x160] sm:$0xff]
      %v5190 = vld [vmem:[#allocation3 + $0x168] sm:$0xff]
      %v5191 = vld [vmem:[#allocation3 + $0x170] sm:$0xff]
      %v5192 = vld [vmem:[#allocation3 + $0x178] sm:$0xff]
      %v5193 = vadd.f32 %v5145, %v4955
      %v5194 = vadd.f32 %v5146, %v4958
      %v5195 = vadd.f32 %v5147, %v4963
      %v5196 = vadd.f32 %v5148, %v4966
      %v5197 = vadd.f32 %v5149, %v4971
      %v5198 = vadd.f32 %v5150, %v4974
      %v5199 = vadd.f32 %v5151, %v4979
      %v5200 = vadd.f32 %v5152, %v4982
      %v5201 = vadd.f32 %v5153, %v4987
      %v5202 = vadd.f32 %v5154, %v4990
      %v5203 = vadd.f32 %v5155, %v4995
      %v5204 = vadd.f32 %v5156, %v4998
      %v5205 = vadd.f32 %v5157, %v5003
      %v5206 = vadd.f32 %v5158, %v5006
      %v5207 = vadd.f32 %v5159, %v5011
      %v5208 = vadd.f32 %v5160, %v5014
      %v5209 = vadd.f32 %v5161, %v5019
      %v5210 = vadd.f32 %v5162, %v5022
      %v5211 = vadd.f32 %v5163, %v5027
      %v5212 = vadd.f32 %v5164, %v5030
      %v5213 = vadd.f32 %v5165, %v5035
      %v5214 = vadd.f32 %v5166, %v5038
      %v5215 = vadd.f32 %v5167, %v5043
      %v5216 = vadd.f32 %v5168, %v5046
      %v5217 = vadd.f32 %v5169, %v5051
      %v5218 = vadd.f32 %v5170, %v5054
      %v5219 = vadd.f32 %v5171, %v5059
      %v5220 = vadd.f32 %v5172, %v5062
      %v5221 = vadd.f32 %v5173, %v5067
      %v5222 = vadd.f32 %v5174, %v5070
      %v5223 = vadd.f32 %v5175, %v5075
      %v5224 = vadd.f32 %v5176, %v5078
      %v5225 = vadd.f32 %v5177, %v5083
      %v5226 = vadd.f32 %v5178, %v5086
      %v5227 = vadd.f32 %v5179, %v5091
      %v5228 = vadd.f32 %v5180, %v5094
      %v5229 = vadd.f32 %v5181, %v5099
      %v5230 = vadd.f32 %v5182, %v5102
      %v5231 = vadd.f32 %v5183, %v5107
      %v5232 = vadd.f32 %v5184, %v5110
      %v5233 = vadd.f32 %v5185, %v5115
      %v5234 = vadd.f32 %v5186, %v5118
      %v5235 = vadd.f32 %v5187, %v5123
      %v5236 = vadd.f32 %v5188, %v5126
      %v5237 = vadd.f32 %v5189, %v5131
      %v5238 = vadd.f32 %v5190, %v5134
      %v5239 = vadd.f32 %v5191, %v5139
      %v5240 = vadd.f32 %v5192, %v5142
      %5241 = vst.msk [vmem:[#allocation3] sm:$0xff] %vm423, %v5193
      %5242 = vst.msk [vmem:[#allocation3 + $0x8] sm:$0xff] %vm423, %v5194
      %5243 = vst.msk [vmem:[#allocation3 + $0x10] sm:$0xff] %vm423, %v5195
      %5244 = vst.msk [vmem:[#allocation3 + $0x18] sm:$0xff] %vm423, %v5196
      %5245 = vst.msk [vmem:[#allocation3 + $0x20] sm:$0xff] %vm423, %v5197
      %5246 = vst.msk [vmem:[#allocation3 + $0x28] sm:$0xff] %vm423, %v5198
      %5247 = vst.msk [vmem:[#allocation3 + $0x30] sm:$0xff] %vm423, %v5199
      %5248 = vst.msk [vmem:[#allocation3 + $0x38] sm:$0xff] %vm423, %v5200
      %5249 = vst.msk [vmem:[#allocation3 + $0x40] sm:$0xff] %vm423, %v5201
      %5250 = vst.msk [vmem:[#allocation3 + $0x48] sm:$0xff] %vm423, %v5202
      %5251 = vst.msk [vmem:[#allocation3 + $0x50] sm:$0xff] %vm423, %v5203
      %5252 = vst.msk [vmem:[#allocation3 + $0x58] sm:$0xff] %vm423, %v5204
      %5253 = vst.msk [vmem:[#allocation3 + $0x60] sm:$0xff] %vm423, %v5205
      %5254 = vst.msk [vmem:[#allocation3 + $0x68] sm:$0xff] %vm423, %v5206
      %5255 = vst.msk [vmem:[#allocation3 + $0x70] sm:$0xff] %vm423, %v5207
      %5256 = vst.msk [vmem:[#allocation3 + $0x78] sm:$0xff] %vm423, %v5208
      %5257 = vst.msk [vmem:[#allocation3 + $0x80] sm:$0xff] %vm423, %v5209
      %5258 = vst.msk [vmem:[#allocation3 + $0x88] sm:$0xff] %vm423, %v5210
      %5259 = vst.msk [vmem:[#allocation3 + $0x90] sm:$0xff] %vm423, %v5211
      %5260 = vst.msk [vmem:[#allocation3 + $0x98] sm:$0xff] %vm423, %v5212
      %5261 = vst.msk [vmem:[#allocation3 + $0xa0] sm:$0xff] %vm423, %v5213
      %5262 = vst.msk [vmem:[#allocation3 + $0xa8] sm:$0xff] %vm423, %v5214
      %5263 = vst.msk [vmem:[#allocation3 + $0xb0] sm:$0xff] %vm423, %v5215
      %5264 = vst.msk [vmem:[#allocation3 + $0xb8] sm:$0xff] %vm423, %v5216
      %5265 = vst.msk [vmem:[#allocation3 + $0xc0] sm:$0xff] %vm423, %v5217
      %5266 = vst.msk [vmem:[#allocation3 + $0xc8] sm:$0xff] %vm423, %v5218
      %5267 = vst.msk [vmem:[#allocation3 + $0xd0] sm:$0xff] %vm423, %v5219
      %5268 = vst.msk [vmem:[#allocation3 + $0xd8] sm:$0xff] %vm423, %v5220
      %5269 = vst.msk [vmem:[#allocation3 + $0xe0] sm:$0xff] %vm423, %v5221
      %5270 = vst.msk [vmem:[#allocation3 + $0xe8] sm:$0xff] %vm423, %v5222
      %5271 = vst.msk [vmem:[#allocation3 + $0xf0] sm:$0xff] %vm423, %v5223
      %5272 = vst.msk [vmem:[#allocation3 + $0xf8] sm:$0xff] %vm423, %v5224
      %5273 = vst.msk [vmem:[#allocation3 + $0x100] sm:$0xff] %vm423, %v5225
      %5274 = vst.msk [vmem:[#allocation3 + $0x108] sm:$0xff] %vm423, %v5226
      %5275 = vst.msk [vmem:[#allocation3 + $0x110] sm:$0xff] %vm423, %v5227
      %5276 = vst.msk [vmem:[#allocation3 + $0x118] sm:$0xff] %vm423, %v5228
      %5277 = vst.msk [vmem:[#allocation3 + $0x120] sm:$0xff] %vm423, %v5229
      %5278 = vst.msk [vmem:[#allocation3 + $0x128] sm:$0xff] %vm423, %v5230
      %5279 = vst.msk [vmem:[#allocation3 + $0x130] sm:$0xff] %vm423, %v5231
      %5280 = vst.msk [vmem:[#allocation3 + $0x138] sm:$0xff] %vm423, %v5232
      %5281 = vst.msk [vmem:[#allocation3 + $0x140] sm:$0xff] %vm423, %v5233
      %5282 = vst.msk [vmem:[#allocation3 + $0x148] sm:$0xff] %vm423, %v5234
      %5283 = vst.msk [vmem:[#allocation3 + $0x150] sm:$0xff] %vm423, %v5235
      %5284 = vst.msk [vmem:[#allocation3 + $0x158] sm:$0xff] %vm423, %v5236
      %5285 = vst.msk [vmem:[#allocation3 + $0x160] sm:$0xff] %vm423, %v5237
      %5286 = vst.msk [vmem:[#allocation3 + $0x168] sm:$0xff] %vm423, %v5238
      %5287 = vst.msk [vmem:[#allocation3 + $0x170] sm:$0xff] %vm423, %v5239
      %5288 = vst.msk [vmem:[#allocation3 + $0x178] sm:$0xff] %vm423, %v5240
      %v5289 = vld [vmem:[#allocation2 + $0x18] sm:$0xf]
      %v5290 = vld [vmem:[#allocation2 + $0x1c] sm:$0xf]
      %v5291 = vld [vmem:[#allocation2 + $0x20] sm:$0xf]
      %v5292 = vld [vmem:[#allocation2 + $0x24] sm:$0xf]
      %v5293 = vld [vmem:[#allocation2 + $0x28] sm:$0xf]
      %v5294 = vld [vmem:[#allocation2 + $0x2c] sm:$0xf]
      %v5295 = vld [vmem:[#allocation2 + $0x30] sm:$0xf]
      %v5296 = vld [vmem:[#allocation2 + $0x34] sm:$0xf]
      %v5297 = vld [vmem:[#allocation2 + $0x38] sm:$0xf]
      %v5298 = vld [vmem:[#allocation2 + $0x3c] sm:$0xf]
      %v5299 = vld [vmem:[#allocation2 + $0x40] sm:$0xf]
      %v5300 = vld [vmem:[#allocation2 + $0x44] sm:$0xf]
      %v5301 = vld [vmem:[#allocation2 + $0x48] sm:$0xf]
      %v5302 = vld [vmem:[#allocation2 + $0x4c] sm:$0xf]
      %v5303 = vld [vmem:[#allocation2 + $0x50] sm:$0xf]
      %v5304 = vld [vmem:[#allocation2 + $0x54] sm:$0xf]
      %v5305 = vld [vmem:[#allocation2 + $0x58] sm:$0xf]
      %v5306 = vld [vmem:[#allocation2 + $0x5c] sm:$0xf]
      %v5307 = vld [vmem:[#allocation2 + $0x60] sm:$0xf]
      %v5308 = vld [vmem:[#allocation2 + $0x64] sm:$0xf]
      %v5309 = vld [vmem:[#allocation2 + $0x68] sm:$0xf]
      %v5310 = vld [vmem:[#allocation2 + $0x6c] sm:$0xf]
      %v5311 = vld [vmem:[#allocation2 + $0x70] sm:$0xf]
      %v5312 = vld [vmem:[#allocation2 + $0x74] sm:$0xf]
      %v5313 = vld [vmem:[#allocation2 + $0x78] sm:$0xf]
      %v5314 = vld [vmem:[#allocation2 + $0x7c] sm:$0xf]
      %v5315 = vld [vmem:[#allocation2 + $0x80] sm:$0xf]
      %v5316 = vld [vmem:[#allocation2 + $0x84] sm:$0xf]
      %v5317 = vld [vmem:[#allocation2 + $0x88] sm:$0xf]
      %v5318 = vld [vmem:[#allocation2 + $0x8c] sm:$0xf]
      %v5319 = vld [vmem:[#allocation2 + $0x90] sm:$0xf]
      %v5320 = vld [vmem:[#allocation2 + $0x94] sm:$0xf]
      %v5321 = vld [vmem:[#allocation2 + $0x98] sm:$0xf]
      %v5322 = vld [vmem:[#allocation2 + $0x9c] sm:$0xf]
      %v5323 = vld [vmem:[#allocation2 + $0xa0] sm:$0xf]
      %v5324 = vld [vmem:[#allocation2 + $0xa4] sm:$0xf]
      %v5325 = vld [vmem:[#allocation2 + $0xa8] sm:$0xf]
      %v5326 = vld [vmem:[#allocation2 + $0xac] sm:$0xf]
      %v5327 = vld [vmem:[#allocation2 + $0xb0] sm:$0xf]
      %v5328 = vld [vmem:[#allocation2 + $0xb4] sm:$0xf]
      %v5329 = vld [vmem:[#allocation2 + $0xb8] sm:$0xf]
      %v5330 = vld [vmem:[#allocation2 + $0xbc] sm:$0xf]
      %v5331 = vld [vmem:[#allocation2 + $0xc0] sm:$0xf]
      %v5332 = vld [vmem:[#allocation2 + $0xc4] sm:$0xf]
      %v5333 = vld [vmem:[#allocation2 + $0xc8] sm:$0xf]
      %v5334 = vld [vmem:[#allocation2 + $0xcc] sm:$0xf]
      %v5335 = vld [vmem:[#allocation2 + $0xd0] sm:$0xf]
      %v5336 = vld [vmem:[#allocation2 + $0xd4] sm:$0xf]
      %s5337 = scalar_lea.vmem %s3, 6
      %v5338 = vld [vmem:[%s5337] sm:$0x1]
      %v5387 = vunpack.c.l.b16 %v5289
      %v5388 = vunpack.c.l.b16 %v5290
      %v5389 = vunpack.c.l.b16 %v5291
      %v5390 = vunpack.c.l.b16 %v5292
      %v5391 = vunpack.c.l.b16 %v5293
      %v5392 = vunpack.c.l.b16 %v5294
      %v5393 = vunpack.c.l.b16 %v5295
      %v5394 = vunpack.c.l.b16 %v5296
      %v5395 = vunpack.c.l.b16 %v5297
      %v5396 = vunpack.c.l.b16 %v5298
      %v5397 = vunpack.c.l.b16 %v5299
      %v5398 = vunpack.c.l.b16 %v5300
      %v5399 = vunpack.c.l.b16 %v5301
      %v5400 = vunpack.c.l.b16 %v5302
      %v5401 = vunpack.c.l.b16 %v5303
      %v5402 = vunpack.c.l.b16 %v5304
      %v5403 = vunpack.c.l.b16 %v5305
      %v5404 = vunpack.c.l.b16 %v5306
      %v5405 = vunpack.c.l.b16 %v5307
      %v5406 = vunpack.c.l.b16 %v5308
      %v5407 = vunpack.c.l.b16 %v5309
      %v5408 = vunpack.c.l.b16 %v5310
      %v5409 = vunpack.c.l.b16 %v5311
      %v5410 = vunpack.c.l.b16 %v5312
      %v5411 = vunpack.c.l.b16 %v5313
      %v5412 = vunpack.c.l.b16 %v5314
      %v5413 = vunpack.c.l.b16 %v5315
      %v5414 = vunpack.c.l.b16 %v5316
      %v5415 = vunpack.c.l.b16 %v5317
      %v5416 = vunpack.c.l.b16 %v5318
      %v5417 = vunpack.c.l.b16 %v5319
      %v5418 = vunpack.c.l.b16 %v5320
      %v5419 = vunpack.c.l.b16 %v5321
      %v5420 = vunpack.c.l.b16 %v5322
      %v5421 = vunpack.c.l.b16 %v5323
      %v5422 = vunpack.c.l.b16 %v5324
      %v5423 = vunpack.c.l.b16 %v5325
      %v5424 = vunpack.c.l.b16 %v5326
      %v5425 = vunpack.c.l.b16 %v5327
      %v5426 = vunpack.c.l.b16 %v5328
      %v5427 = vunpack.c.l.b16 %v5329
      %v5428 = vunpack.c.l.b16 %v5330
      %v5429 = vunpack.c.l.b16 %v5331
      %v5430 = vunpack.c.l.b16 %v5332
      %v5431 = vunpack.c.l.b16 %v5333
      %v5432 = vunpack.c.l.b16 %v5334
      %v5433 = vunpack.c.l.b16 %v5335
      %v5434 = vunpack.c.l.b16 %v5336
      %v5435 = vpack.c.b16 %v5388, %v5387
      %v5436 = vpack.c.b16 %v5390, %v5389
      %v5437 = vpack.c.b16 %v5392, %v5391
      %v5438 = vpack.c.b16 %v5394, %v5393
      %v5439 = vpack.c.b16 %v5396, %v5395
      %v5440 = vpack.c.b16 %v5398, %v5397
      %v5441 = vpack.c.b16 %v5400, %v5399
      %v5442 = vpack.c.b16 %v5402, %v5401
      %v5443 = vpack.c.b16 %v5404, %v5403
      %v5444 = vpack.c.b16 %v5406, %v5405
      %v5445 = vpack.c.b16 %v5408, %v5407
      %v5446 = vpack.c.b16 %v5410, %v5409
      %v5447 = vpack.c.b16 %v5412, %v5411
      %v5448 = vpack.c.b16 %v5414, %v5413
      %v5449 = vpack.c.b16 %v5416, %v5415
      %v5450 = vpack.c.b16 %v5418, %v5417
      %v5451 = vpack.c.b16 %v5420, %v5419
      %v5452 = vpack.c.b16 %v5422, %v5421
      %v5453 = vpack.c.b16 %v5424, %v5423
      %v5454 = vpack.c.b16 %v5426, %v5425
      %v5455 = vpack.c.b16 %v5428, %v5427
      %v5456 = vpack.c.b16 %v5430, %v5429
      %v5457 = vpack.c.b16 %v5432, %v5431
      %v5458 = vpack.c.b16 %v5434, %v5433
      %v5460 = vsel %vm1361, %v5435, 0
      %v5463 = vsel %vm1361, %v5436, 0
      %v5466 = vsel %vm1361, %v5437, 0
      %v5469 = vsel %vm1361, %v5438, 0
      %v5472 = vsel %vm1361, %v5439, 0
      %v5475 = vsel %vm1361, %v5440, 0
      %v5478 = vsel %vm1361, %v5441, 0
      %v5481 = vsel %vm1361, %v5442, 0
      %v5484 = vsel %vm1361, %v5443, 0
      %v5487 = vsel %vm1361, %v5444, 0
      %v5490 = vsel %vm1361, %v5445, 0
      %v5493 = vsel %vm1361, %v5446, 0
      %v5496 = vsel %vm1361, %v5447, 0
      %v5499 = vsel %vm1361, %v5448, 0
      %v5502 = vsel %vm1361, %v5449, 0
      %v5505 = vsel %vm1361, %v5450, 0
      %v5508 = vsel %vm1361, %v5451, 0
      %v5511 = vsel %vm1361, %v5452, 0
      %v5514 = vsel %vm1361, %v5453, 0
      %v5517 = vsel %vm1361, %v5454, 0
      %v5520 = vsel %vm1361, %v5455, 0
      %v5523 = vsel %vm1361, %v5456, 0
      %v5526 = vsel %vm1361, %v5457, 0
      %v5529 = vsel %vm1361, %v5458, 0
      %v5532 = vsel %vm1434, %v5338, 0
      %5534 = vmatprep.subr.bf16.mxu0 0
      %5535 = vmatpush1.bf16.msra.mxu0 0
      %5536 = vmatprep.subr.bf16.mxu0 0
      %5537 = vmatpush1.bf16.msra.mxu0 0
      %5538 = vmatprep.subr.bf16.mxu0 0
      %5539 = vmatpush1.bf16.msra.mxu0 0
      %5540 = vmatprep.subr.bf16.mxu0 0
      %5541 = vmatpush1.bf16.msra.mxu0 0
      %5542 = vmatprep.subr.bf16.mxu0 0
      %5543 = vmatpush1.bf16.msra.mxu0 0
      %5544 = vmatprep.subr.bf16.mxu0 0
      %5545 = vmatpush1.bf16.msra.mxu0 0
      %5546 = vmatprep.subr.bf16.mxu0 0
      %5547 = vmatpush1.bf16.msra.mxu0 0
      %5548 = vmatprep.subr.bf16.mxu0 0
      %5549 = vmatpush1.bf16.msra.mxu0 %v5532
      %5550 = vmatprep.subr.bf16.mxu0 0
      %5551 = vmatpush2.bf16.msra.mxu0 0
      %5552 = vmatprep.subr.bf16.mxu0 0
      %5553 = vmatpush2.bf16.msra.mxu0 0
      %5554 = vmatprep.subr.bf16.mxu0 0
      %5555 = vmatpush2.bf16.msra.mxu0 0
      %5556 = vmatprep.subr.bf16.mxu0 0
      %5557 = vmatpush2.bf16.msra.mxu0 0
      %5558 = vmatprep.subr.bf16.mxu0 0
      %5559 = vmatpush2.bf16.msra.mxu0 0
      %5560 = vmatprep.subr.bf16.mxu0 0
      %5561 = vmatpush2.bf16.msra.mxu0 0
      %5562 = vmatprep.subr.bf16.mxu0 0
      %5563 = vmatpush2.bf16.msra.mxu0 0
      %5564 = vmatprep.subr.bf16.mxu0 0
      %5565 = vmatpush2.bf16.msra.mxu0 0
      %5566 = vmatprep.mubr.bf16.mxu0 0
      %5567 = vmatmul.mubr.bf16.gmra.mxu0 %v5460
      %v5568 = vpop.f32.mrf.mxu0
      %v5569 = vadd.f32 0.0, %v5568
      %v5570 = vpop.f32.mrf.mxu0
      %v5571 = vpop.f32.mrf.mxu0
      %v5572 = vadd.f32 0.0, %v5571
      %v5573 = vpop.f32.mrf.mxu0
      %5574 = vmatprep.mubr.bf16.mxu0 0
      %5575 = vmatmul.mubr.bf16.gmra.mxu0 %v5463
      %v5576 = vpop.f32.mrf.mxu0
      %v5577 = vadd.f32 0.0, %v5576
      %v5578 = vpop.f32.mrf.mxu0
      %v5579 = vpop.f32.mrf.mxu0
      %v5580 = vadd.f32 0.0, %v5579
      %v5581 = vpop.f32.mrf.mxu0
      %5582 = vmatprep.mubr.bf16.mxu0 0
      %5583 = vmatmul.mubr.bf16.gmra.mxu0 %v5466
      %v5584 = vpop.f32.mrf.mxu0
      %v5585 = vadd.f32 0.0, %v5584
      %v5586 = vpop.f32.mrf.mxu0
      %v5587 = vpop.f32.mrf.mxu0
      %v5588 = vadd.f32 0.0, %v5587
      %v5589 = vpop.f32.mrf.mxu0
      %5590 = vmatprep.mubr.bf16.mxu0 0
      %5591 = vmatmul.mubr.bf16.gmra.mxu0 %v5469
      %v5592 = vpop.f32.mrf.mxu0
      %v5593 = vadd.f32 0.0, %v5592
      %v5594 = vpop.f32.mrf.mxu0
      %v5595 = vpop.f32.mrf.mxu0
      %v5596 = vadd.f32 0.0, %v5595
      %v5597 = vpop.f32.mrf.mxu0
      %5598 = vmatprep.mubr.bf16.mxu0 0
      %5599 = vmatmul.mubr.bf16.gmra.mxu0 %v5472
      %v5600 = vpop.f32.mrf.mxu0
      %v5601 = vadd.f32 0.0, %v5600
      %v5602 = vpop.f32.mrf.mxu0
      %v5603 = vpop.f32.mrf.mxu0
      %v5604 = vadd.f32 0.0, %v5603
      %v5605 = vpop.f32.mrf.mxu0
      %5606 = vmatprep.mubr.bf16.mxu0 0
      %5607 = vmatmul.mubr.bf16.gmra.mxu0 %v5475
      %v5608 = vpop.f32.mrf.mxu0
      %v5609 = vadd.f32 0.0, %v5608
      %v5610 = vpop.f32.mrf.mxu0
      %v5611 = vpop.f32.mrf.mxu0
      %v5612 = vadd.f32 0.0, %v5611
      %v5613 = vpop.f32.mrf.mxu0
      %5614 = vmatprep.mubr.bf16.mxu0 0
      %5615 = vmatmul.mubr.bf16.gmra.mxu0 %v5478
      %v5616 = vpop.f32.mrf.mxu0
      %v5617 = vadd.f32 0.0, %v5616
      %v5618 = vpop.f32.mrf.mxu0
      %v5619 = vpop.f32.mrf.mxu0
      %v5620 = vadd.f32 0.0, %v5619
      %v5621 = vpop.f32.mrf.mxu0
      %5622 = vmatprep.mubr.bf16.mxu0 0
      %5623 = vmatmul.mubr.bf16.gmra.mxu0 %v5481
      %v5624 = vpop.f32.mrf.mxu0
      %v5625 = vadd.f32 0.0, %v5624
      %v5626 = vpop.f32.mrf.mxu0
      %v5627 = vpop.f32.mrf.mxu0
      %v5628 = vadd.f32 0.0, %v5627
      %v5629 = vpop.f32.mrf.mxu0
      %5630 = vmatprep.mubr.bf16.mxu0 0
      %5631 = vmatmul.mubr.bf16.gmra.mxu0 %v5484
      %v5632 = vpop.f32.mrf.mxu0
      %v5633 = vadd.f32 0.0, %v5632
      %v5634 = vpop.f32.mrf.mxu0
      %v5635 = vpop.f32.mrf.mxu0
      %v5636 = vadd.f32 0.0, %v5635
      %v5637 = vpop.f32.mrf.mxu0
      %5638 = vmatprep.mubr.bf16.mxu0 0
      %5639 = vmatmul.mubr.bf16.gmra.mxu0 %v5487
      %v5640 = vpop.f32.mrf.mxu0
      %v5641 = vadd.f32 0.0, %v5640
      %v5642 = vpop.f32.mrf.mxu0
      %v5643 = vpop.f32.mrf.mxu0
      %v5644 = vadd.f32 0.0, %v5643
      %v5645 = vpop.f32.mrf.mxu0
      %5646 = vmatprep.mubr.bf16.mxu0 0
      %5647 = vmatmul.mubr.bf16.gmra.mxu0 %v5490
      %v5648 = vpop.f32.mrf.mxu0
      %v5649 = vadd.f32 0.0, %v5648
      %v5650 = vpop.f32.mrf.mxu0
      %v5651 = vpop.f32.mrf.mxu0
      %v5652 = vadd.f32 0.0, %v5651
      %v5653 = vpop.f32.mrf.mxu0
      %5654 = vmatprep.mubr.bf16.mxu0 0
      %5655 = vmatmul.mubr.bf16.gmra.mxu0 %v5493
      %v5656 = vpop.f32.mrf.mxu0
      %v5657 = vadd.f32 0.0, %v5656
      %v5658 = vpop.f32.mrf.mxu0
      %v5659 = vpop.f32.mrf.mxu0
      %v5660 = vadd.f32 0.0, %v5659
      %v5661 = vpop.f32.mrf.mxu0
      %5662 = vmatprep.mubr.bf16.mxu0 0
      %5663 = vmatmul.mubr.bf16.gmra.mxu0 %v5496
      %v5664 = vpop.f32.mrf.mxu0
      %v5665 = vadd.f32 0.0, %v5664
      %v5666 = vpop.f32.mrf.mxu0
      %v5667 = vpop.f32.mrf.mxu0
      %v5668 = vadd.f32 0.0, %v5667
      %v5669 = vpop.f32.mrf.mxu0
      %5670 = vmatprep.mubr.bf16.mxu0 0
      %5671 = vmatmul.mubr.bf16.gmra.mxu0 %v5499
      %v5672 = vpop.f32.mrf.mxu0
      %v5673 = vadd.f32 0.0, %v5672
      %v5674 = vpop.f32.mrf.mxu0
      %v5675 = vpop.f32.mrf.mxu0
      %v5676 = vadd.f32 0.0, %v5675
      %v5677 = vpop.f32.mrf.mxu0
      %5678 = vmatprep.mubr.bf16.mxu0 0
      %5679 = vmatmul.mubr.bf16.gmra.mxu0 %v5502
      %v5680 = vpop.f32.mrf.mxu0
      %v5681 = vadd.f32 0.0, %v5680
      %v5682 = vpop.f32.mrf.mxu0
      %v5683 = vpop.f32.mrf.mxu0
      %v5684 = vadd.f32 0.0, %v5683
      %v5685 = vpop.f32.mrf.mxu0
      %5686 = vmatprep.mubr.bf16.mxu0 0
      %5687 = vmatmul.mubr.bf16.gmra.mxu0 %v5505
      %v5688 = vpop.f32.mrf.mxu0
      %v5689 = vadd.f32 0.0, %v5688
      %v5690 = vpop.f32.mrf.mxu0
      %v5691 = vpop.f32.mrf.mxu0
      %v5692 = vadd.f32 0.0, %v5691
      %v5693 = vpop.f32.mrf.mxu0
      %5694 = vmatprep.mubr.bf16.mxu0 0
      %5695 = vmatmul.mubr.bf16.gmra.mxu0 %v5508
      %v5696 = vpop.f32.mrf.mxu0
      %v5697 = vadd.f32 0.0, %v5696
      %v5698 = vpop.f32.mrf.mxu0
      %v5699 = vpop.f32.mrf.mxu0
      %v5700 = vadd.f32 0.0, %v5699
      %v5701 = vpop.f32.mrf.mxu0
      %5702 = vmatprep.mubr.bf16.mxu0 0
      %5703 = vmatmul.mubr.bf16.gmra.mxu0 %v5511
      %v5704 = vpop.f32.mrf.mxu0
      %v5705 = vadd.f32 0.0, %v5704
      %v5706 = vpop.f32.mrf.mxu0
      %v5707 = vpop.f32.mrf.mxu0
      %v5708 = vadd.f32 0.0, %v5707
      %v5709 = vpop.f32.mrf.mxu0
      %5710 = vmatprep.mubr.bf16.mxu0 0
      %5711 = vmatmul.mubr.bf16.gmra.mxu0 %v5514
      %v5712 = vpop.f32.mrf.mxu0
      %v5713 = vadd.f32 0.0, %v5712
      %v5714 = vpop.f32.mrf.mxu0
      %v5715 = vpop.f32.mrf.mxu0
      %v5716 = vadd.f32 0.0, %v5715
      %v5717 = vpop.f32.mrf.mxu0
      %5718 = vmatprep.mubr.bf16.mxu0 0
      %5719 = vmatmul.mubr.bf16.gmra.mxu0 %v5517
      %v5720 = vpop.f32.mrf.mxu0
      %v5721 = vadd.f32 0.0, %v5720
      %v5722 = vpop.f32.mrf.mxu0
      %v5723 = vpop.f32.mrf.mxu0
      %v5724 = vadd.f32 0.0, %v5723
      %v5725 = vpop.f32.mrf.mxu0
      %5726 = vmatprep.mubr.bf16.mxu0 0
      %5727 = vmatmul.mubr.bf16.gmra.mxu0 %v5520
      %v5728 = vpop.f32.mrf.mxu0
      %v5729 = vadd.f32 0.0, %v5728
      %v5730 = vpop.f32.mrf.mxu0
      %v5731 = vpop.f32.mrf.mxu0
      %v5732 = vadd.f32 0.0, %v5731
      %v5733 = vpop.f32.mrf.mxu0
      %5734 = vmatprep.mubr.bf16.mxu0 0
      %5735 = vmatmul.mubr.bf16.gmra.mxu0 %v5523
      %v5736 = vpop.f32.mrf.mxu0
      %v5737 = vadd.f32 0.0, %v5736
      %v5738 = vpop.f32.mrf.mxu0
      %v5739 = vpop.f32.mrf.mxu0
      %v5740 = vadd.f32 0.0, %v5739
      %v5741 = vpop.f32.mrf.mxu0
      %5742 = vmatprep.mubr.bf16.mxu0 0
      %5743 = vmatmul.mubr.bf16.gmra.mxu0 %v5526
      %v5744 = vpop.f32.mrf.mxu0
      %v5745 = vadd.f32 0.0, %v5744
      %v5746 = vpop.f32.mrf.mxu0
      %v5747 = vpop.f32.mrf.mxu0
      %v5748 = vadd.f32 0.0, %v5747
      %v5749 = vpop.f32.mrf.mxu0
      %5750 = vmatprep.mubr.bf16.mxu0 0
      %5751 = vmatmul.mubr.bf16.gmra.mxu0 %v5529
      %v5752 = vpop.f32.mrf.mxu0
      %v5753 = vadd.f32 0.0, %v5752
      %v5754 = vpop.f32.mrf.mxu0
      %v5755 = vpop.f32.mrf.mxu0
      %v5756 = vadd.f32 0.0, %v5755
      %v5757 = vpop.f32.mrf.mxu0
      %5758 = vdwg.mxu0
      %v5759 = vld [vmem:[#allocation3] sm:$0xff]
      %v5760 = vld [vmem:[#allocation3 + $0x8] sm:$0xff]
      %v5761 = vld [vmem:[#allocation3 + $0x10] sm:$0xff]
      %v5762 = vld [vmem:[#allocation3 + $0x18] sm:$0xff]
      %v5763 = vld [vmem:[#allocation3 + $0x20] sm:$0xff]
      %v5764 = vld [vmem:[#allocation3 + $0x28] sm:$0xff]
      %v5765 = vld [vmem:[#allocation3 + $0x30] sm:$0xff]
      %v5766 = vld [vmem:[#allocation3 + $0x38] sm:$0xff]
      %v5767 = vld [vmem:[#allocation3 + $0x40] sm:$0xff]
      %v5768 = vld [vmem:[#allocation3 + $0x48] sm:$0xff]
      %v5769 = vld [vmem:[#allocation3 + $0x50] sm:$0xff]
      %v5770 = vld [vmem:[#allocation3 + $0x58] sm:$0xff]
      %v5771 = vld [vmem:[#allocation3 + $0x60] sm:$0xff]
      %v5772 = vld [vmem:[#allocation3 + $0x68] sm:$0xff]
      %v5773 = vld [vmem:[#allocation3 + $0x70] sm:$0xff]
      %v5774 = vld [vmem:[#allocation3 + $0x78] sm:$0xff]
      %v5775 = vld [vmem:[#allocation3 + $0x80] sm:$0xff]
      %v5776 = vld [vmem:[#allocation3 + $0x88] sm:$0xff]
      %v5777 = vld [vmem:[#allocation3 + $0x90] sm:$0xff]
      %v5778 = vld [vmem:[#allocation3 + $0x98] sm:$0xff]
      %v5779 = vld [vmem:[#allocation3 + $0xa0] sm:$0xff]
      %v5780 = vld [vmem:[#allocation3 + $0xa8] sm:$0xff]
      %v5781 = vld [vmem:[#allocation3 + $0xb0] sm:$0xff]
      %v5782 = vld [vmem:[#allocation3 + $0xb8] sm:$0xff]
      %v5783 = vld [vmem:[#allocation3 + $0xc0] sm:$0xff]
      %v5784 = vld [vmem:[#allocation3 + $0xc8] sm:$0xff]
      %v5785 = vld [vmem:[#allocation3 + $0xd0] sm:$0xff]
      %v5786 = vld [vmem:[#allocation3 + $0xd8] sm:$0xff]
      %v5787 = vld [vmem:[#allocation3 + $0xe0] sm:$0xff]
      %v5788 = vld [vmem:[#allocation3 + $0xe8] sm:$0xff]
      %v5789 = vld [vmem:[#allocation3 + $0xf0] sm:$0xff]
      %v5790 = vld [vmem:[#allocation3 + $0xf8] sm:$0xff]
      %v5791 = vld [vmem:[#allocation3 + $0x100] sm:$0xff]
      %v5792 = vld [vmem:[#allocation3 + $0x108] sm:$0xff]
      %v5793 = vld [vmem:[#allocation3 + $0x110] sm:$0xff]
      %v5794 = vld [vmem:[#allocation3 + $0x118] sm:$0xff]
      %v5795 = vld [vmem:[#allocation3 + $0x120] sm:$0xff]
      %v5796 = vld [vmem:[#allocation3 + $0x128] sm:$0xff]
      %v5797 = vld [vmem:[#allocation3 + $0x130] sm:$0xff]
      %v5798 = vld [vmem:[#allocation3 + $0x138] sm:$0xff]
      %v5799 = vld [vmem:[#allocation3 + $0x140] sm:$0xff]
      %v5800 = vld [vmem:[#allocation3 + $0x148] sm:$0xff]
      %v5801 = vld [vmem:[#allocation3 + $0x150] sm:$0xff]
      %v5802 = vld [vmem:[#allocation3 + $0x158] sm:$0xff]
      %v5803 = vld [vmem:[#allocation3 + $0x160] sm:$0xff]
      %v5804 = vld [vmem:[#allocation3 + $0x168] sm:$0xff]
      %v5805 = vld [vmem:[#allocation3 + $0x170] sm:$0xff]
      %v5806 = vld [vmem:[#allocation3 + $0x178] sm:$0xff]
      %v5807 = vadd.f32 %v5759, %v5569
      %v5808 = vadd.f32 %v5760, %v5572
      %v5809 = vadd.f32 %v5761, %v5577
      %v5810 = vadd.f32 %v5762, %v5580
      %v5811 = vadd.f32 %v5763, %v5585
      %v5812 = vadd.f32 %v5764, %v5588
      %v5813 = vadd.f32 %v5765, %v5593
      %v5814 = vadd.f32 %v5766, %v5596
      %v5815 = vadd.f32 %v5767, %v5601
      %v5816 = vadd.f32 %v5768, %v5604
      %v5817 = vadd.f32 %v5769, %v5609
      %v5818 = vadd.f32 %v5770, %v5612
      %v5819 = vadd.f32 %v5771, %v5617
      %v5820 = vadd.f32 %v5772, %v5620
      %v5821 = vadd.f32 %v5773, %v5625
      %v5822 = vadd.f32 %v5774, %v5628
      %v5823 = vadd.f32 %v5775, %v5633
      %v5824 = vadd.f32 %v5776, %v5636
      %v5825 = vadd.f32 %v5777, %v5641
      %v5826 = vadd.f32 %v5778, %v5644
      %v5827 = vadd.f32 %v5779, %v5649
      %v5828 = vadd.f32 %v5780, %v5652
      %v5829 = vadd.f32 %v5781, %v5657
      %v5830 = vadd.f32 %v5782, %v5660
      %v5831 = vadd.f32 %v5783, %v5665
      %v5832 = vadd.f32 %v5784, %v5668
      %v5833 = vadd.f32 %v5785, %v5673
      %v5834 = vadd.f32 %v5786, %v5676
      %v5835 = vadd.f32 %v5787, %v5681
      %v5836 = vadd.f32 %v5788, %v5684
      %v5837 = vadd.f32 %v5789, %v5689
      %v5838 = vadd.f32 %v5790, %v5692
      %v5839 = vadd.f32 %v5791, %v5697
      %v5840 = vadd.f32 %v5792, %v5700
      %v5841 = vadd.f32 %v5793, %v5705
      %v5842 = vadd.f32 %v5794, %v5708
      %v5843 = vadd.f32 %v5795, %v5713
      %v5844 = vadd.f32 %v5796, %v5716
      %v5845 = vadd.f32 %v5797, %v5721
      %v5846 = vadd.f32 %v5798, %v5724
      %v5847 = vadd.f32 %v5799, %v5729
      %v5848 = vadd.f32 %v5800, %v5732
      %v5849 = vadd.f32 %v5801, %v5737
      %v5850 = vadd.f32 %v5802, %v5740
      %v5851 = vadd.f32 %v5803, %v5745
      %v5852 = vadd.f32 %v5804, %v5748
      %v5853 = vadd.f32 %v5805, %v5753
      %v5854 = vadd.f32 %v5806, %v5756
      %5855 = vst.msk [vmem:[#allocation3] sm:$0xff] %vm423, %v5807
      %5856 = vst.msk [vmem:[#allocation3 + $0x8] sm:$0xff] %vm423, %v5808
      %5857 = vst.msk [vmem:[#allocation3 + $0x10] sm:$0xff] %vm423, %v5809
      %5858 = vst.msk [vmem:[#allocation3 + $0x18] sm:$0xff] %vm423, %v5810
      %5859 = vst.msk [vmem:[#allocation3 + $0x20] sm:$0xff] %vm423, %v5811
      %5860 = vst.msk [vmem:[#allocation3 + $0x28] sm:$0xff] %vm423, %v5812
      %5861 = vst.msk [vmem:[#allocation3 + $0x30] sm:$0xff] %vm423, %v5813
      %5862 = vst.msk [vmem:[#allocation3 + $0x38] sm:$0xff] %vm423, %v5814
      %5863 = vst.msk [vmem:[#allocation3 + $0x40] sm:$0xff] %vm423, %v5815
      %5864 = vst.msk [vmem:[#allocation3 + $0x48] sm:$0xff] %vm423, %v5816
      %5865 = vst.msk [vmem:[#allocation3 + $0x50] sm:$0xff] %vm423, %v5817
      %5866 = vst.msk [vmem:[#allocation3 + $0x58] sm:$0xff] %vm423, %v5818
      %5867 = vst.msk [vmem:[#allocation3 + $0x60] sm:$0xff] %vm423, %v5819
      %5868 = vst.msk [vmem:[#allocation3 + $0x68] sm:$0xff] %vm423, %v5820
      %5869 = vst.msk [vmem:[#allocation3 + $0x70] sm:$0xff] %vm423, %v5821
      %5870 = vst.msk [vmem:[#allocation3 + $0x78] sm:$0xff] %vm423, %v5822
      %5871 = vst.msk [vmem:[#allocation3 + $0x80] sm:$0xff] %vm423, %v5823
      %5872 = vst.msk [vmem:[#allocation3 + $0x88] sm:$0xff] %vm423, %v5824
      %5873 = vst.msk [vmem:[#allocation3 + $0x90] sm:$0xff] %vm423, %v5825
      %5874 = vst.msk [vmem:[#allocation3 + $0x98] sm:$0xff] %vm423, %v5826
      %5875 = vst.msk [vmem:[#allocation3 + $0xa0] sm:$0xff] %vm423, %v5827
      %5876 = vst.msk [vmem:[#allocation3 + $0xa8] sm:$0xff] %vm423, %v5828
      %5877 = vst.msk [vmem:[#allocation3 + $0xb0] sm:$0xff] %vm423, %v5829
      %5878 = vst.msk [vmem:[#allocation3 + $0xb8] sm:$0xff] %vm423, %v5830
      %5879 = vst.msk [vmem:[#allocation3 + $0xc0] sm:$0xff] %vm423, %v5831
      %5880 = vst.msk [vmem:[#allocation3 + $0xc8] sm:$0xff] %vm423, %v5832
      %5881 = vst.msk [vmem:[#allocation3 + $0xd0] sm:$0xff] %vm423, %v5833
      %5882 = vst.msk [vmem:[#allocation3 + $0xd8] sm:$0xff] %vm423, %v5834
      %5883 = vst.msk [vmem:[#allocation3 + $0xe0] sm:$0xff] %vm423, %v5835
      %5884 = vst.msk [vmem:[#allocation3 + $0xe8] sm:$0xff] %vm423, %v5836
      %5885 = vst.msk [vmem:[#allocation3 + $0xf0] sm:$0xff] %vm423, %v5837
      %5886 = vst.msk [vmem:[#allocation3 + $0xf8] sm:$0xff] %vm423, %v5838
      %5887 = vst.msk [vmem:[#allocation3 + $0x100] sm:$0xff] %vm423, %v5839
      %5888 = vst.msk [vmem:[#allocation3 + $0x108] sm:$0xff] %vm423, %v5840
      %5889 = vst.msk [vmem:[#allocation3 + $0x110] sm:$0xff] %vm423, %v5841
      %5890 = vst.msk [vmem:[#allocation3 + $0x118] sm:$0xff] %vm423, %v5842
      %5891 = vst.msk [vmem:[#allocation3 + $0x120] sm:$0xff] %vm423, %v5843
      %5892 = vst.msk [vmem:[#allocation3 + $0x128] sm:$0xff] %vm423, %v5844
      %5893 = vst.msk [vmem:[#allocation3 + $0x130] sm:$0xff] %vm423, %v5845
      %5894 = vst.msk [vmem:[#allocation3 + $0x138] sm:$0xff] %vm423, %v5846
      %5895 = vst.msk [vmem:[#allocation3 + $0x140] sm:$0xff] %vm423, %v5847
      %5896 = vst.msk [vmem:[#allocation3 + $0x148] sm:$0xff] %vm423, %v5848
      %5897 = vst.msk [vmem:[#allocation3 + $0x150] sm:$0xff] %vm423, %v5849
      %5898 = vst.msk [vmem:[#allocation3 + $0x158] sm:$0xff] %vm423, %v5850
      %5899 = vst.msk [vmem:[#allocation3 + $0x160] sm:$0xff] %vm423, %v5851
      %5900 = vst.msk [vmem:[#allocation3 + $0x168] sm:$0xff] %vm423, %v5852
      %5901 = vst.msk [vmem:[#allocation3 + $0x170] sm:$0xff] %vm423, %v5853
      %5902 = vst.msk [vmem:[#allocation3 + $0x178] sm:$0xff] %vm423, %v5854
      %v5903 = vld [vmem:[#allocation2 + $0x18] sm:$0xf]
      %v5904 = vld [vmem:[#allocation2 + $0x1c] sm:$0xf]
      %v5905 = vld [vmem:[#allocation2 + $0x20] sm:$0xf]
      %v5906 = vld [vmem:[#allocation2 + $0x24] sm:$0xf]
      %v5907 = vld [vmem:[#allocation2 + $0x28] sm:$0xf]
      %v5908 = vld [vmem:[#allocation2 + $0x2c] sm:$0xf]
      %v5909 = vld [vmem:[#allocation2 + $0x30] sm:$0xf]
      %v5910 = vld [vmem:[#allocation2 + $0x34] sm:$0xf]
      %v5911 = vld [vmem:[#allocation2 + $0x38] sm:$0xf]
      %v5912 = vld [vmem:[#allocation2 + $0x3c] sm:$0xf]
      %v5913 = vld [vmem:[#allocation2 + $0x40] sm:$0xf]
      %v5914 = vld [vmem:[#allocation2 + $0x44] sm:$0xf]
      %v5915 = vld [vmem:[#allocation2 + $0x48] sm:$0xf]
      %v5916 = vld [vmem:[#allocation2 + $0x4c] sm:$0xf]
      %v5917 = vld [vmem:[#allocation2 + $0x50] sm:$0xf]
      %v5918 = vld [vmem:[#allocation2 + $0x54] sm:$0xf]
      %v5919 = vld [vmem:[#allocation2 + $0x58] sm:$0xf]
      %v5920 = vld [vmem:[#allocation2 + $0x5c] sm:$0xf]
      %v5921 = vld [vmem:[#allocation2 + $0x60] sm:$0xf]
      %v5922 = vld [vmem:[#allocation2 + $0x64] sm:$0xf]
      %v5923 = vld [vmem:[#allocation2 + $0x68] sm:$0xf]
      %v5924 = vld [vmem:[#allocation2 + $0x6c] sm:$0xf]
      %v5925 = vld [vmem:[#allocation2 + $0x70] sm:$0xf]
      %v5926 = vld [vmem:[#allocation2 + $0x74] sm:$0xf]
      %v5927 = vld [vmem:[#allocation2 + $0x78] sm:$0xf]
      %v5928 = vld [vmem:[#allocation2 + $0x7c] sm:$0xf]
      %v5929 = vld [vmem:[#allocation2 + $0x80] sm:$0xf]
      %v5930 = vld [vmem:[#allocation2 + $0x84] sm:$0xf]
      %v5931 = vld [vmem:[#allocation2 + $0x88] sm:$0xf]
      %v5932 = vld [vmem:[#allocation2 + $0x8c] sm:$0xf]
      %v5933 = vld [vmem:[#allocation2 + $0x90] sm:$0xf]
      %v5934 = vld [vmem:[#allocation2 + $0x94] sm:$0xf]
      %v5935 = vld [vmem:[#allocation2 + $0x98] sm:$0xf]
      %v5936 = vld [vmem:[#allocation2 + $0x9c] sm:$0xf]
      %v5937 = vld [vmem:[#allocation2 + $0xa0] sm:$0xf]
      %v5938 = vld [vmem:[#allocation2 + $0xa4] sm:$0xf]
      %v5939 = vld [vmem:[#allocation2 + $0xa8] sm:$0xf]
      %v5940 = vld [vmem:[#allocation2 + $0xac] sm:$0xf]
      %v5941 = vld [vmem:[#allocation2 + $0xb0] sm:$0xf]
      %v5942 = vld [vmem:[#allocation2 + $0xb4] sm:$0xf]
      %v5943 = vld [vmem:[#allocation2 + $0xb8] sm:$0xf]
      %v5944 = vld [vmem:[#allocation2 + $0xbc] sm:$0xf]
      %v5945 = vld [vmem:[#allocation2 + $0xc0] sm:$0xf]
      %v5946 = vld [vmem:[#allocation2 + $0xc4] sm:$0xf]
      %v5947 = vld [vmem:[#allocation2 + $0xc8] sm:$0xf]
      %v5948 = vld [vmem:[#allocation2 + $0xcc] sm:$0xf]
      %v5949 = vld [vmem:[#allocation2 + $0xd0] sm:$0xf]
      %v5950 = vld [vmem:[#allocation2 + $0xd4] sm:$0xf]
      %v5951 = vld [vmem:[#allocation2 + $0xd8] sm:$0x1]
      %s5952 = scalar_lea.vmem %s3, 7
      %v5953 = vld [vmem:[%s5952] sm:$0x1]
      %v6003 = vunpack.c.l.b16 %v5903
      %v6004 = vunpack.c.l.b16 %v5904
      %v6005 = vunpack.c.l.b16 %v5905
      %v6006 = vunpack.c.l.b16 %v5906
      %v6007 = vunpack.c.l.b16 %v5907
      %v6008 = vunpack.c.l.b16 %v5908
      %v6009 = vunpack.c.l.b16 %v5909
      %v6010 = vunpack.c.l.b16 %v5910
      %v6011 = vunpack.c.l.b16 %v5911
      %v6012 = vunpack.c.l.b16 %v5912
      %v6013 = vunpack.c.l.b16 %v5913
      %v6014 = vunpack.c.l.b16 %v5914
      %v6015 = vunpack.c.l.b16 %v5915
      %v6016 = vunpack.c.l.b16 %v5916
      %v6017 = vunpack.c.l.b16 %v5917
      %v6018 = vunpack.c.l.b16 %v5918
      %v6019 = vunpack.c.l.b16 %v5919
      %v6020 = vunpack.c.l.b16 %v5920
      %v6021 = vunpack.c.l.b16 %v5921
      %v6022 = vunpack.c.l.b16 %v5922
      %v6023 = vunpack.c.l.b16 %v5923
      %v6024 = vunpack.c.l.b16 %v5924
      %v6025 = vunpack.c.l.b16 %v5925
      %v6026 = vunpack.c.l.b16 %v5926
      %v6027 = vunpack.c.l.b16 %v5927
      %v6028 = vunpack.c.l.b16 %v5928
      %v6029 = vunpack.c.l.b16 %v5929
      %v6030 = vunpack.c.l.b16 %v5930
      %v6031 = vunpack.c.l.b16 %v5931
      %v6032 = vunpack.c.l.b16 %v5932
      %v6033 = vunpack.c.l.b16 %v5933
      %v6034 = vunpack.c.l.b16 %v5934
      %v6035 = vunpack.c.l.b16 %v5935
      %v6036 = vunpack.c.l.b16 %v5936
      %v6037 = vunpack.c.l.b16 %v5937
      %v6038 = vunpack.c.l.b16 %v5938
      %v6039 = vunpack.c.l.b16 %v5939
      %v6040 = vunpack.c.l.b16 %v5940
      %v6041 = vunpack.c.l.b16 %v5941
      %v6042 = vunpack.c.l.b16 %v5942
      %v6043 = vunpack.c.l.b16 %v5943
      %v6044 = vunpack.c.l.b16 %v5944
      %v6045 = vunpack.c.l.b16 %v5945
      %v6046 = vunpack.c.l.b16 %v5946
      %v6047 = vunpack.c.l.b16 %v5947
      %v6048 = vunpack.c.l.b16 %v5948
      %v6049 = vunpack.c.l.b16 %v5949
      %v6050 = vunpack.c.l.b16 %v5950
      %v6051 = vunpack.c.l.b16 %v5951
      %v6052 = vpack.c.b16 %v6004, %v6003
      %v6053 = vpack.c.b16 %v6006, %v6005
      %v6054 = vpack.c.b16 %v6008, %v6007
      %v6055 = vpack.c.b16 %v6010, %v6009
      %v6056 = vpack.c.b16 %v6012, %v6011
      %v6057 = vpack.c.b16 %v6014, %v6013
      %v6058 = vpack.c.b16 %v6016, %v6015
      %v6059 = vpack.c.b16 %v6018, %v6017
      %v6060 = vpack.c.b16 %v6020, %v6019
      %v6061 = vpack.c.b16 %v6022, %v6021
      %v6062 = vpack.c.b16 %v6024, %v6023
      %v6063 = vpack.c.b16 %v6026, %v6025
      %v6064 = vpack.c.b16 %v6028, %v6027
      %v6065 = vpack.c.b16 %v6030, %v6029
      %v6066 = vpack.c.b16 %v6032, %v6031
      %v6067 = vpack.c.b16 %v6034, %v6033
      %v6068 = vpack.c.b16 %v6036, %v6035
      %v6069 = vpack.c.b16 %v6038, %v6037
      %v6070 = vpack.c.b16 %v6040, %v6039
      %v6071 = vpack.c.b16 %v6042, %v6041
      %v6072 = vpack.c.b16 %v6044, %v6043
      %v6073 = vpack.c.b16 %v6046, %v6045
      %v6074 = vpack.c.b16 %v6048, %v6047
      %v6075 = vpack.c.b16 %v6050, %v6049
      %v6076 = vpack.c.b16 %v6051, %v6051
      %v6078 = vshrl.u32 %v6052, 16
      %v6080 = vshll.u32 %v6052, 16
      %v6082 = vrot.slane %v6080, 1
      %v6083 = vor.u32 %v6078, %v6082
      %v6085 = vshll.u32 %v6053, 16
      %v6087 = vrot.slane %v6085, 1
      %v6088 = vsel %vm1885, %v6083, %v6087
      %v6089 = vshrl.u32 %v6053, 16
      %v6091 = vor.u32 %v6089, %v6087
      %v6093 = vshll.u32 %v6054, 16
      %v6095 = vrot.slane %v6093, 1
      %v6096 = vsel %vm1885, %v6091, %v6095
      %v6097 = vshrl.u32 %v6054, 16
      %v6099 = vor.u32 %v6097, %v6095
      %v6101 = vshll.u32 %v6055, 16
      %v6103 = vrot.slane %v6101, 1
      %v6104 = vsel %vm1885, %v6099, %v6103
      %v6105 = vshrl.u32 %v6055, 16
      %v6107 = vor.u32 %v6105, %v6103
      %v6109 = vshll.u32 %v6056, 16
      %v6111 = vrot.slane %v6109, 1
      %v6112 = vsel %vm1885, %v6107, %v6111
      %v6113 = vshrl.u32 %v6056, 16
      %v6115 = vor.u32 %v6113, %v6111
      %v6117 = vshll.u32 %v6057, 16
      %v6119 = vrot.slane %v6117, 1
      %v6120 = vsel %vm1885, %v6115, %v6119
      %v6121 = vshrl.u32 %v6057, 16
      %v6123 = vor.u32 %v6121, %v6119
      %v6125 = vshll.u32 %v6058, 16
      %v6127 = vrot.slane %v6125, 1
      %v6128 = vsel %vm1885, %v6123, %v6127
      %v6129 = vshrl.u32 %v6058, 16
      %v6131 = vor.u32 %v6129, %v6127
      %v6133 = vshll.u32 %v6059, 16
      %v6135 = vrot.slane %v6133, 1
      %v6136 = vsel %vm1885, %v6131, %v6135
      %v6137 = vshrl.u32 %v6059, 16
      %v6139 = vor.u32 %v6137, %v6135
      %v6141 = vshll.u32 %v6060, 16
      %v6143 = vrot.slane %v6141, 1
      %v6144 = vsel %vm1885, %v6139, %v6143
      %v6145 = vshrl.u32 %v6060, 16
      %v6147 = vor.u32 %v6145, %v6143
      %v6149 = vshll.u32 %v6061, 16
      %v6151 = vrot.slane %v6149, 1
      %v6152 = vsel %vm1885, %v6147, %v6151
      %v6153 = vshrl.u32 %v6061, 16
      %v6155 = vor.u32 %v6153, %v6151
      %v6157 = vshll.u32 %v6062, 16
      %v6159 = vrot.slane %v6157, 1
      %v6160 = vsel %vm1885, %v6155, %v6159
      %v6161 = vshrl.u32 %v6062, 16
      %v6163 = vor.u32 %v6161, %v6159
      %v6165 = vshll.u32 %v6063, 16
      %v6167 = vrot.slane %v6165, 1
      %v6168 = vsel %vm1885, %v6163, %v6167
      %v6169 = vshrl.u32 %v6063, 16
      %v6171 = vor.u32 %v6169, %v6167
      %v6173 = vshll.u32 %v6064, 16
      %v6175 = vrot.slane %v6173, 1
      %v6176 = vsel %vm1885, %v6171, %v6175
      %v6177 = vshrl.u32 %v6064, 16
      %v6179 = vor.u32 %v6177, %v6175
      %v6181 = vshll.u32 %v6065, 16
      %v6183 = vrot.slane %v6181, 1
      %v6184 = vsel %vm1885, %v6179, %v6183
      %v6185 = vshrl.u32 %v6065, 16
      %v6187 = vor.u32 %v6185, %v6183
      %v6189 = vshll.u32 %v6066, 16
      %v6191 = vrot.slane %v6189, 1
      %v6192 = vsel %vm1885, %v6187, %v6191
      %v6193 = vshrl.u32 %v6066, 16
      %v6195 = vor.u32 %v6193, %v6191
      %v6197 = vshll.u32 %v6067, 16
      %v6199 = vrot.slane %v6197, 1
      %v6200 = vsel %vm1885, %v6195, %v6199
      %v6201 = vshrl.u32 %v6067, 16
      %v6203 = vor.u32 %v6201, %v6199
      %v6205 = vshll.u32 %v6068, 16
      %v6207 = vrot.slane %v6205, 1
      %v6208 = vsel %vm1885, %v6203, %v6207
      %v6209 = vshrl.u32 %v6068, 16
      %v6211 = vor.u32 %v6209, %v6207
      %v6213 = vshll.u32 %v6069, 16
      %v6215 = vrot.slane %v6213, 1
      %v6216 = vsel %vm1885, %v6211, %v6215
      %v6217 = vshrl.u32 %v6069, 16
      %v6219 = vor.u32 %v6217, %v6215
      %v6221 = vshll.u32 %v6070, 16
      %v6223 = vrot.slane %v6221, 1
      %v6224 = vsel %vm1885, %v6219, %v6223
      %v6225 = vshrl.u32 %v6070, 16
      %v6227 = vor.u32 %v6225, %v6223
      %v6229 = vshll.u32 %v6071, 16
      %v6231 = vrot.slane %v6229, 1
      %v6232 = vsel %vm1885, %v6227, %v6231
      %v6233 = vshrl.u32 %v6071, 16
      %v6235 = vor.u32 %v6233, %v6231
      %v6237 = vshll.u32 %v6072, 16
      %v6239 = vrot.slane %v6237, 1
      %v6240 = vsel %vm1885, %v6235, %v6239
      %v6241 = vshrl.u32 %v6072, 16
      %v6243 = vor.u32 %v6241, %v6239
      %v6245 = vshll.u32 %v6073, 16
      %v6247 = vrot.slane %v6245, 1
      %v6248 = vsel %vm1885, %v6243, %v6247
      %v6249 = vshrl.u32 %v6073, 16
      %v6251 = vor.u32 %v6249, %v6247
      %v6253 = vshll.u32 %v6074, 16
      %v6255 = vrot.slane %v6253, 1
      %v6256 = vsel %vm1885, %v6251, %v6255
      %v6257 = vshrl.u32 %v6074, 16
      %v6259 = vor.u32 %v6257, %v6255
      %v6261 = vshll.u32 %v6075, 16
      %v6263 = vrot.slane %v6261, 1
      %v6264 = vsel %vm1885, %v6259, %v6263
      %v6265 = vshrl.u32 %v6075, 16
      %v6267 = vor.u32 %v6265, %v6263
      %v6269 = vshll.u32 %v6076, 16
      %v6271 = vrot.slane %v6269, 1
      %v6272 = vsel %vm1885, %v6267, %v6271
      %v6274 = vsel %vm1361, %v6088, 0
      %v6277 = vsel %vm1361, %v6096, 0
      %v6280 = vsel %vm1361, %v6104, 0
      %v6283 = vsel %vm1361, %v6112, 0
      %v6286 = vsel %vm1361, %v6120, 0
      %v6289 = vsel %vm1361, %v6128, 0
      %v6292 = vsel %vm1361, %v6136, 0
      %v6295 = vsel %vm1361, %v6144, 0
      %v6298 = vsel %vm1361, %v6152, 0
      %v6301 = vsel %vm1361, %v6160, 0
      %v6304 = vsel %vm1361, %v6168, 0
      %v6307 = vsel %vm1361, %v6176, 0
      %v6310 = vsel %vm1361, %v6184, 0
      %v6313 = vsel %vm1361, %v6192, 0
      %v6316 = vsel %vm1361, %v6200, 0
      %v6319 = vsel %vm1361, %v6208, 0
      %v6322 = vsel %vm1361, %v6216, 0
      %v6325 = vsel %vm1361, %v6224, 0
      %v6328 = vsel %vm1361, %v6232, 0
      %v6331 = vsel %vm1361, %v6240, 0
      %v6334 = vsel %vm1361, %v6248, 0
      %v6337 = vsel %vm1361, %v6256, 0
      %v6340 = vsel %vm1361, %v6264, 0
      %v6343 = vsel %vm1361, %v6272, 0
      %v6346 = vsel %vm1434, %v5953, 0
      %6348 = vmatprep.subr.bf16.mxu0 0
      %6349 = vmatpush1.bf16.msra.mxu0 0
      %6350 = vmatprep.subr.bf16.mxu0 0
      %6351 = vmatpush1.bf16.msra.mxu0 0
      %6352 = vmatprep.subr.bf16.mxu0 0
      %6353 = vmatpush1.bf16.msra.mxu0 0
      %6354 = vmatprep.subr.bf16.mxu0 0
      %6355 = vmatpush1.bf16.msra.mxu0 0
      %6356 = vmatprep.subr.bf16.mxu0 0
      %6357 = vmatpush1.bf16.msra.mxu0 0
      %6358 = vmatprep.subr.bf16.mxu0 0
      %6359 = vmatpush1.bf16.msra.mxu0 0
      %6360 = vmatprep.subr.bf16.mxu0 0
      %6361 = vmatpush1.bf16.msra.mxu0 0
      %6362 = vmatprep.subr.bf16.mxu0 0
      %6363 = vmatpush1.bf16.msra.mxu0 %v6346
      %6364 = vmatprep.subr.bf16.mxu0 0
      %6365 = vmatpush2.bf16.msra.mxu0 0
      %6366 = vmatprep.subr.bf16.mxu0 0
      %6367 = vmatpush2.bf16.msra.mxu0 0
      %6368 = vmatprep.subr.bf16.mxu0 0
      %6369 = vmatpush2.bf16.msra.mxu0 0
      %6370 = vmatprep.subr.bf16.mxu0 0
      %6371 = vmatpush2.bf16.msra.mxu0 0
      %6372 = vmatprep.subr.bf16.mxu0 0
      %6373 = vmatpush2.bf16.msra.mxu0 0
      %6374 = vmatprep.subr.bf16.mxu0 0
      %6375 = vmatpush2.bf16.msra.mxu0 0
      %6376 = vmatprep.subr.bf16.mxu0 0
      %6377 = vmatpush2.bf16.msra.mxu0 0
      %6378 = vmatprep.subr.bf16.mxu0 0
      %6379 = vmatpush2.bf16.msra.mxu0 0
      %6380 = vmatprep.mubr.bf16.mxu0 0
      %6381 = vmatmul.mubr.bf16.gmra.mxu0 %v6274
      %v6382 = vpop.f32.mrf.mxu0
      %v6383 = vadd.f32 0.0, %v6382
      %v6384 = vpop.f32.mrf.mxu0
      %v6385 = vpop.f32.mrf.mxu0
      %v6386 = vadd.f32 0.0, %v6385
      %v6387 = vpop.f32.mrf.mxu0
      %6388 = vmatprep.mubr.bf16.mxu0 0
      %6389 = vmatmul.mubr.bf16.gmra.mxu0 %v6277
      %v6390 = vpop.f32.mrf.mxu0
      %v6391 = vadd.f32 0.0, %v6390
      %v6392 = vpop.f32.mrf.mxu0
      %v6393 = vpop.f32.mrf.mxu0
      %v6394 = vadd.f32 0.0, %v6393
      %v6395 = vpop.f32.mrf.mxu0
      %6396 = vmatprep.mubr.bf16.mxu0 0
      %6397 = vmatmul.mubr.bf16.gmra.mxu0 %v6280
      %v6398 = vpop.f32.mrf.mxu0
      %v6399 = vadd.f32 0.0, %v6398
      %v6400 = vpop.f32.mrf.mxu0
      %v6401 = vpop.f32.mrf.mxu0
      %v6402 = vadd.f32 0.0, %v6401
      %v6403 = vpop.f32.mrf.mxu0
      %6404 = vmatprep.mubr.bf16.mxu0 0
      %6405 = vmatmul.mubr.bf16.gmra.mxu0 %v6283
      %v6406 = vpop.f32.mrf.mxu0
      %v6407 = vadd.f32 0.0, %v6406
      %v6408 = vpop.f32.mrf.mxu0
      %v6409 = vpop.f32.mrf.mxu0
      %v6410 = vadd.f32 0.0, %v6409
      %v6411 = vpop.f32.mrf.mxu0
      %6412 = vmatprep.mubr.bf16.mxu0 0
      %6413 = vmatmul.mubr.bf16.gmra.mxu0 %v6286
      %v6414 = vpop.f32.mrf.mxu0
      %v6415 = vadd.f32 0.0, %v6414
      %v6416 = vpop.f32.mrf.mxu0
      %v6417 = vpop.f32.mrf.mxu0
      %v6418 = vadd.f32 0.0, %v6417
      %v6419 = vpop.f32.mrf.mxu0
      %6420 = vmatprep.mubr.bf16.mxu0 0
      %6421 = vmatmul.mubr.bf16.gmra.mxu0 %v6289
      %v6422 = vpop.f32.mrf.mxu0
      %v6423 = vadd.f32 0.0, %v6422
      %v6424 = vpop.f32.mrf.mxu0
      %v6425 = vpop.f32.mrf.mxu0
      %v6426 = vadd.f32 0.0, %v6425
      %v6427 = vpop.f32.mrf.mxu0
      %6428 = vmatprep.mubr.bf16.mxu0 0
      %6429 = vmatmul.mubr.bf16.gmra.mxu0 %v6292
      %v6430 = vpop.f32.mrf.mxu0
      %v6431 = vadd.f32 0.0, %v6430
      %v6432 = vpop.f32.mrf.mxu0
      %v6433 = vpop.f32.mrf.mxu0
      %v6434 = vadd.f32 0.0, %v6433
      %v6435 = vpop.f32.mrf.mxu0
      %6436 = vmatprep.mubr.bf16.mxu0 0
      %6437 = vmatmul.mubr.bf16.gmra.mxu0 %v6295
      %v6438 = vpop.f32.mrf.mxu0
      %v6439 = vadd.f32 0.0, %v6438
      %v6440 = vpop.f32.mrf.mxu0
      %v6441 = vpop.f32.mrf.mxu0
      %v6442 = vadd.f32 0.0, %v6441
      %v6443 = vpop.f32.mrf.mxu0
      %6444 = vmatprep.mubr.bf16.mxu0 0
      %6445 = vmatmul.mubr.bf16.gmra.mxu0 %v6298
      %v6446 = vpop.f32.mrf.mxu0
      %v6447 = vadd.f32 0.0, %v6446
      %v6448 = vpop.f32.mrf.mxu0
      %v6449 = vpop.f32.mrf.mxu0
      %v6450 = vadd.f32 0.0, %v6449
      %v6451 = vpop.f32.mrf.mxu0
      %6452 = vmatprep.mubr.bf16.mxu0 0
      %6453 = vmatmul.mubr.bf16.gmra.mxu0 %v6301
      %v6454 = vpop.f32.mrf.mxu0
      %v6455 = vadd.f32 0.0, %v6454
      %v6456 = vpop.f32.mrf.mxu0
      %v6457 = vpop.f32.mrf.mxu0
      %v6458 = vadd.f32 0.0, %v6457
      %v6459 = vpop.f32.mrf.mxu0
      %6460 = vmatprep.mubr.bf16.mxu0 0
      %6461 = vmatmul.mubr.bf16.gmra.mxu0 %v6304
      %v6462 = vpop.f32.mrf.mxu0
      %v6463 = vadd.f32 0.0, %v6462
      %v6464 = vpop.f32.mrf.mxu0
      %v6465 = vpop.f32.mrf.mxu0
      %v6466 = vadd.f32 0.0, %v6465
      %v6467 = vpop.f32.mrf.mxu0
      %6468 = vmatprep.mubr.bf16.mxu0 0
      %6469 = vmatmul.mubr.bf16.gmra.mxu0 %v6307
      %v6470 = vpop.f32.mrf.mxu0
      %v6471 = vadd.f32 0.0, %v6470
      %v6472 = vpop.f32.mrf.mxu0
      %v6473 = vpop.f32.mrf.mxu0
      %v6474 = vadd.f32 0.0, %v6473
      %v6475 = vpop.f32.mrf.mxu0
      %6476 = vmatprep.mubr.bf16.mxu0 0
      %6477 = vmatmul.mubr.bf16.gmra.mxu0 %v6310
      %v6478 = vpop.f32.mrf.mxu0
      %v6479 = vadd.f32 0.0, %v6478
      %v6480 = vpop.f32.mrf.mxu0
      %v6481 = vpop.f32.mrf.mxu0
      %v6482 = vadd.f32 0.0, %v6481
      %v6483 = vpop.f32.mrf.mxu0
      %6484 = vmatprep.mubr.bf16.mxu0 0
      %6485 = vmatmul.mubr.bf16.gmra.mxu0 %v6313
      %v6486 = vpop.f32.mrf.mxu0
      %v6487 = vadd.f32 0.0, %v6486
      %v6488 = vpop.f32.mrf.mxu0
      %v6489 = vpop.f32.mrf.mxu0
      %v6490 = vadd.f32 0.0, %v6489
      %v6491 = vpop.f32.mrf.mxu0
      %6492 = vmatprep.mubr.bf16.mxu0 0
      %6493 = vmatmul.mubr.bf16.gmra.mxu0 %v6316
      %v6494 = vpop.f32.mrf.mxu0
      %v6495 = vadd.f32 0.0, %v6494
      %v6496 = vpop.f32.mrf.mxu0
      %v6497 = vpop.f32.mrf.mxu0
      %v6498 = vadd.f32 0.0, %v6497
      %v6499 = vpop.f32.mrf.mxu0
      %6500 = vmatprep.mubr.bf16.mxu0 0
      %6501 = vmatmul.mubr.bf16.gmra.mxu0 %v6319
      %v6502 = vpop.f32.mrf.mxu0
      %v6503 = vadd.f32 0.0, %v6502
      %v6504 = vpop.f32.mrf.mxu0
      %v6505 = vpop.f32.mrf.mxu0
      %v6506 = vadd.f32 0.0, %v6505
      %v6507 = vpop.f32.mrf.mxu0
      %6508 = vmatprep.mubr.bf16.mxu0 0
      %6509 = vmatmul.mubr.bf16.gmra.mxu0 %v6322
      %v6510 = vpop.f32.mrf.mxu0
      %v6511 = vadd.f32 0.0, %v6510
      %v6512 = vpop.f32.mrf.mxu0
      %v6513 = vpop.f32.mrf.mxu0
      %v6514 = vadd.f32 0.0, %v6513
      %v6515 = vpop.f32.mrf.mxu0
      %6516 = vmatprep.mubr.bf16.mxu0 0
      %6517 = vmatmul.mubr.bf16.gmra.mxu0 %v6325
      %v6518 = vpop.f32.mrf.mxu0
      %v6519 = vadd.f32 0.0, %v6518
      %v6520 = vpop.f32.mrf.mxu0
      %v6521 = vpop.f32.mrf.mxu0
      %v6522 = vadd.f32 0.0, %v6521
      %v6523 = vpop.f32.mrf.mxu0
      %6524 = vmatprep.mubr.bf16.mxu0 0
      %6525 = vmatmul.mubr.bf16.gmra.mxu0 %v6328
      %v6526 = vpop.f32.mrf.mxu0
      %v6527 = vadd.f32 0.0, %v6526
      %v6528 = vpop.f32.mrf.mxu0
      %v6529 = vpop.f32.mrf.mxu0
      %v6530 = vadd.f32 0.0, %v6529
      %v6531 = vpop.f32.mrf.mxu0
      %6532 = vmatprep.mubr.bf16.mxu0 0
      %6533 = vmatmul.mubr.bf16.gmra.mxu0 %v6331
      %v6534 = vpop.f32.mrf.mxu0
      %v6535 = vadd.f32 0.0, %v6534
      %v6536 = vpop.f32.mrf.mxu0
      %v6537 = vpop.f32.mrf.mxu0
      %v6538 = vadd.f32 0.0, %v6537
      %v6539 = vpop.f32.mrf.mxu0
      %6540 = vmatprep.mubr.bf16.mxu0 0
      %6541 = vmatmul.mubr.bf16.gmra.mxu0 %v6334
      %v6542 = vpop.f32.mrf.mxu0
      %v6543 = vadd.f32 0.0, %v6542
      %v6544 = vpop.f32.mrf.mxu0
      %v6545 = vpop.f32.mrf.mxu0
      %v6546 = vadd.f32 0.0, %v6545
      %v6547 = vpop.f32.mrf.mxu0
      %6548 = vmatprep.mubr.bf16.mxu0 0
      %6549 = vmatmul.mubr.bf16.gmra.mxu0 %v6337
      %v6550 = vpop.f32.mrf.mxu0
      %v6551 = vadd.f32 0.0, %v6550
      %v6552 = vpop.f32.mrf.mxu0
      %v6553 = vpop.f32.mrf.mxu0
      %v6554 = vadd.f32 0.0, %v6553
      %v6555 = vpop.f32.mrf.mxu0
      %6556 = vmatprep.mubr.bf16.mxu0 0
      %6557 = vmatmul.mubr.bf16.gmra.mxu0 %v6340
      %v6558 = vpop.f32.mrf.mxu0
      %v6559 = vadd.f32 0.0, %v6558
      %v6560 = vpop.f32.mrf.mxu0
      %v6561 = vpop.f32.mrf.mxu0
      %v6562 = vadd.f32 0.0, %v6561
      %v6563 = vpop.f32.mrf.mxu0
      %6564 = vmatprep.mubr.bf16.mxu0 0
      %6565 = vmatmul.mubr.bf16.gmra.mxu0 %v6343
      %v6566 = vpop.f32.mrf.mxu0
      %v6567 = vadd.f32 0.0, %v6566
      %v6568 = vpop.f32.mrf.mxu0
      %v6569 = vpop.f32.mrf.mxu0
      %v6570 = vadd.f32 0.0, %v6569
      %v6571 = vpop.f32.mrf.mxu0
      %6572 = vdwg.mxu0
      %v6573 = vld [vmem:[#allocation3] sm:$0xff]
      %v6574 = vld [vmem:[#allocation3 + $0x8] sm:$0xff]
      %v6575 = vld [vmem:[#allocation3 + $0x10] sm:$0xff]
      %v6576 = vld [vmem:[#allocation3 + $0x18] sm:$0xff]
      %v6577 = vld [vmem:[#allocation3 + $0x20] sm:$0xff]
      %v6578 = vld [vmem:[#allocation3 + $0x28] sm:$0xff]
      %v6579 = vld [vmem:[#allocation3 + $0x30] sm:$0xff]
      %v6580 = vld [vmem:[#allocation3 + $0x38] sm:$0xff]
      %v6581 = vld [vmem:[#allocation3 + $0x40] sm:$0xff]
      %v6582 = vld [vmem:[#allocation3 + $0x48] sm:$0xff]
      %v6583 = vld [vmem:[#allocation3 + $0x50] sm:$0xff]
      %v6584 = vld [vmem:[#allocation3 + $0x58] sm:$0xff]
      %v6585 = vld [vmem:[#allocation3 + $0x60] sm:$0xff]
      %v6586 = vld [vmem:[#allocation3 + $0x68] sm:$0xff]
      %v6587 = vld [vmem:[#allocation3 + $0x70] sm:$0xff]
      %v6588 = vld [vmem:[#allocation3 + $0x78] sm:$0xff]
      %v6589 = vld [vmem:[#allocation3 + $0x80] sm:$0xff]
      %v6590 = vld [vmem:[#allocation3 + $0x88] sm:$0xff]
      %v6591 = vld [vmem:[#allocation3 + $0x90] sm:$0xff]
      %v6592 = vld [vmem:[#allocation3 + $0x98] sm:$0xff]
      %v6593 = vld [vmem:[#allocation3 + $0xa0] sm:$0xff]
      %v6594 = vld [vmem:[#allocation3 + $0xa8] sm:$0xff]
      %v6595 = vld [vmem:[#allocation3 + $0xb0] sm:$0xff]
      %v6596 = vld [vmem:[#allocation3 + $0xb8] sm:$0xff]
      %v6597 = vld [vmem:[#allocation3 + $0xc0] sm:$0xff]
      %v6598 = vld [vmem:[#allocation3 + $0xc8] sm:$0xff]
      %v6599 = vld [vmem:[#allocation3 + $0xd0] sm:$0xff]
      %v6600 = vld [vmem:[#allocation3 + $0xd8] sm:$0xff]
      %v6601 = vld [vmem:[#allocation3 + $0xe0] sm:$0xff]
      %v6602 = vld [vmem:[#allocation3 + $0xe8] sm:$0xff]
      %v6603 = vld [vmem:[#allocation3 + $0xf0] sm:$0xff]
      %v6604 = vld [vmem:[#allocation3 + $0xf8] sm:$0xff]
      %v6605 = vld [vmem:[#allocation3 + $0x100] sm:$0xff]
      %v6606 = vld [vmem:[#allocation3 + $0x108] sm:$0xff]
      %v6607 = vld [vmem:[#allocation3 + $0x110] sm:$0xff]
      %v6608 = vld [vmem:[#allocation3 + $0x118] sm:$0xff]
      %v6609 = vld [vmem:[#allocation3 + $0x120] sm:$0xff]
      %v6610 = vld [vmem:[#allocation3 + $0x128] sm:$0xff]
      %v6611 = vld [vmem:[#allocation3 + $0x130] sm:$0xff]
      %v6612 = vld [vmem:[#allocation3 + $0x138] sm:$0xff]
      %v6613 = vld [vmem:[#allocation3 + $0x140] sm:$0xff]
      %v6614 = vld [vmem:[#allocation3 + $0x148] sm:$0xff]
      %v6615 = vld [vmem:[#allocation3 + $0x150] sm:$0xff]
      %v6616 = vld [vmem:[#allocation3 + $0x158] sm:$0xff]
      %v6617 = vld [vmem:[#allocation3 + $0x160] sm:$0xff]
      %v6618 = vld [vmem:[#allocation3 + $0x168] sm:$0xff]
      %v6619 = vld [vmem:[#allocation3 + $0x170] sm:$0xff]
      %v6620 = vld [vmem:[#allocation3 + $0x178] sm:$0xff]
      %v6621 = vadd.f32 %v6573, %v6383
      %v6622 = vadd.f32 %v6574, %v6386
      %v6623 = vadd.f32 %v6575, %v6391
      %v6624 = vadd.f32 %v6576, %v6394
      %v6625 = vadd.f32 %v6577, %v6399
      %v6626 = vadd.f32 %v6578, %v6402
      %v6627 = vadd.f32 %v6579, %v6407
      %v6628 = vadd.f32 %v6580, %v6410
      %v6629 = vadd.f32 %v6581, %v6415
      %v6630 = vadd.f32 %v6582, %v6418
      %v6631 = vadd.f32 %v6583, %v6423
      %v6632 = vadd.f32 %v6584, %v6426
      %v6633 = vadd.f32 %v6585, %v6431
      %v6634 = vadd.f32 %v6586, %v6434
      %v6635 = vadd.f32 %v6587, %v6439
      %v6636 = vadd.f32 %v6588, %v6442
      %v6637 = vadd.f32 %v6589, %v6447
      %v6638 = vadd.f32 %v6590, %v6450
      %v6639 = vadd.f32 %v6591, %v6455
      %v6640 = vadd.f32 %v6592, %v6458
      %v6641 = vadd.f32 %v6593, %v6463
      %v6642 = vadd.f32 %v6594, %v6466
      %v6643 = vadd.f32 %v6595, %v6471
      %v6644 = vadd.f32 %v6596, %v6474
      %v6645 = vadd.f32 %v6597, %v6479
      %v6646 = vadd.f32 %v6598, %v6482
      %v6647 = vadd.f32 %v6599, %v6487
      %v6648 = vadd.f32 %v6600, %v6490
      %v6649 = vadd.f32 %v6601, %v6495
      %v6650 = vadd.f32 %v6602, %v6498
      %v6651 = vadd.f32 %v6603, %v6503
      %v6652 = vadd.f32 %v6604, %v6506
      %v6653 = vadd.f32 %v6605, %v6511
      %v6654 = vadd.f32 %v6606, %v6514
      %v6655 = vadd.f32 %v6607, %v6519
      %v6656 = vadd.f32 %v6608, %v6522
      %v6657 = vadd.f32 %v6609, %v6527
      %v6658 = vadd.f32 %v6610, %v6530
      %v6659 = vadd.f32 %v6611, %v6535
      %v6660 = vadd.f32 %v6612, %v6538
      %v6661 = vadd.f32 %v6613, %v6543
      %v6662 = vadd.f32 %v6614, %v6546
      %v6663 = vadd.f32 %v6615, %v6551
      %v6664 = vadd.f32 %v6616, %v6554
      %v6665 = vadd.f32 %v6617, %v6559
      %v6666 = vadd.f32 %v6618, %v6562
      %v6667 = vadd.f32 %v6619, %v6567
      %v6668 = vadd.f32 %v6620, %v6570
      %6669 = vst.msk [vmem:[#allocation3] sm:$0xff] %vm423, %v6621
      %6670 = vst.msk [vmem:[#allocation3 + $0x8] sm:$0xff] %vm423, %v6622
      %6671 = vst.msk [vmem:[#allocation3 + $0x10] sm:$0xff] %vm423, %v6623
      %6672 = vst.msk [vmem:[#allocation3 + $0x18] sm:$0xff] %vm423, %v6624
      %6673 = vst.msk [vmem:[#allocation3 + $0x20] sm:$0xff] %vm423, %v6625
      %6674 = vst.msk [vmem:[#allocation3 + $0x28] sm:$0xff] %vm423, %v6626
      %6675 = vst.msk [vmem:[#allocation3 + $0x30] sm:$0xff] %vm423, %v6627
      %6676 = vst.msk [vmem:[#allocation3 + $0x38] sm:$0xff] %vm423, %v6628
      %6677 = vst.msk [vmem:[#allocation3 + $0x40] sm:$0xff] %vm423, %v6629
      %6678 = vst.msk [vmem:[#allocation3 + $0x48] sm:$0xff] %vm423, %v6630
      %6679 = vst.msk [vmem:[#allocation3 + $0x50] sm:$0xff] %vm423, %v6631
      %6680 = vst.msk [vmem:[#allocation3 + $0x58] sm:$0xff] %vm423, %v6632
      %6681 = vst.msk [vmem:[#allocation3 + $0x60] sm:$0xff] %vm423, %v6633
      %6682 = vst.msk [vmem:[#allocation3 + $0x68] sm:$0xff] %vm423, %v6634
      %6683 = vst.msk [vmem:[#allocation3 + $0x70] sm:$0xff] %vm423, %v6635
      %6684 = vst.msk [vmem:[#allocation3 + $0x78] sm:$0xff] %vm423, %v6636
      %6685 = vst.msk [vmem:[#allocation3 + $0x80] sm:$0xff] %vm423, %v6637
      %6686 = vst.msk [vmem:[#allocation3 + $0x88] sm:$0xff] %vm423, %v6638
      %6687 = vst.msk [vmem:[#allocation3 + $0x90] sm:$0xff] %vm423, %v6639
      %6688 = vst.msk [vmem:[#allocation3 + $0x98] sm:$0xff] %vm423, %v6640
      %6689 = vst.msk [vmem:[#allocation3 + $0xa0] sm:$0xff] %vm423, %v6641
      %6690 = vst.msk [vmem:[#allocation3 + $0xa8] sm:$0xff] %vm423, %v6642
      %6691 = vst.msk [vmem:[#allocation3 + $0xb0] sm:$0xff] %vm423, %v6643
      %6692 = vst.msk [vmem:[#allocation3 + $0xb8] sm:$0xff] %vm423, %v6644
      %6693 = vst.msk [vmem:[#allocation3 + $0xc0] sm:$0xff] %vm423, %v6645
      %6694 = vst.msk [vmem:[#allocation3 + $0xc8] sm:$0xff] %vm423, %v6646
      %6695 = vst.msk [vmem:[#allocation3 + $0xd0] sm:$0xff] %vm423, %v6647
      %6696 = vst.msk [vmem:[#allocation3 + $0xd8] sm:$0xff] %vm423, %v6648
      %6697 = vst.msk [vmem:[#allocation3 + $0xe0] sm:$0xff] %vm423, %v6649
      %6698 = vst.msk [vmem:[#allocation3 + $0xe8] sm:$0xff] %vm423, %v6650
      %6699 = vst.msk [vmem:[#allocation3 + $0xf0] sm:$0xff] %vm423, %v6651
      %6700 = vst.msk [vmem:[#allocation3 + $0xf8] sm:$0xff] %vm423, %v6652
      %6701 = vst.msk [vmem:[#allocation3 + $0x100] sm:$0xff] %vm423, %v6653
      %6702 = vst.msk [vmem:[#allocation3 + $0x108] sm:$0xff] %vm423, %v6654
      %6703 = vst.msk [vmem:[#allocation3 + $0x110] sm:$0xff] %vm423, %v6655
      %6704 = vst.msk [vmem:[#allocation3 + $0x118] sm:$0xff] %vm423, %v6656
      %6705 = vst.msk [vmem:[#allocation3 + $0x120] sm:$0xff] %vm423, %v6657
      %6706 = vst.msk [vmem:[#allocation3 + $0x128] sm:$0xff] %vm423, %v6658
      %6707 = vst.msk [vmem:[#allocation3 + $0x130] sm:$0xff] %vm423, %v6659
      %6708 = vst.msk [vmem:[#allocation3 + $0x138] sm:$0xff] %vm423, %v6660
      %6709 = vst.msk [vmem:[#allocation3 + $0x140] sm:$0xff] %vm423, %v6661
      %6710 = vst.msk [vmem:[#allocation3 + $0x148] sm:$0xff] %vm423, %v6662
      %6711 = vst.msk [vmem:[#allocation3 + $0x150] sm:$0xff] %vm423, %v6663
      %6712 = vst.msk [vmem:[#allocation3 + $0x158] sm:$0xff] %vm423, %v6664
      %6713 = vst.msk [vmem:[#allocation3 + $0x160] sm:$0xff] %vm423, %v6665
      %6714 = vst.msk [vmem:[#allocation3 + $0x168] sm:$0xff] %vm423, %v6666
      %6715 = vst.msk [vmem:[#allocation3 + $0x170] sm:$0xff] %vm423, %v6667
      %6716 = vst.msk [vmem:[#allocation3 + $0x178] sm:$0xff] %vm423, %v6668
      %v6717 = vld [vmem:[#allocation2 + $0x18] sm:$0xe]
      %v6718 = vld [vmem:[#allocation2 + $0x1c] sm:$0xf]
      %v6719 = vld [vmem:[#allocation2 + $0x20] sm:$0xf]
      %v6720 = vld [vmem:[#allocation2 + $0x24] sm:$0xf]
      %v6721 = vld [vmem:[#allocation2 + $0x28] sm:$0xf]
      %v6722 = vld [vmem:[#allocation2 + $0x2c] sm:$0xf]
      %v6723 = vld [vmem:[#allocation2 + $0x30] sm:$0xf]
      %v6724 = vld [vmem:[#allocation2 + $0x34] sm:$0xf]
      %v6725 = vld [vmem:[#allocation2 + $0x38] sm:$0xf]
      %v6726 = vld [vmem:[#allocation2 + $0x3c] sm:$0xf]
      %v6727 = vld [vmem:[#allocation2 + $0x40] sm:$0xf]
      %v6728 = vld [vmem:[#allocation2 + $0x44] sm:$0xf]
      %v6729 = vld [vmem:[#allocation2 + $0x48] sm:$0xf]
      %v6730 = vld [vmem:[#allocation2 + $0x4c] sm:$0xf]
      %v6731 = vld [vmem:[#allocation2 + $0x50] sm:$0xf]
      %v6732 = vld [vmem:[#allocation2 + $0x54] sm:$0xf]
      %v6733 = vld [vmem:[#allocation2 + $0x58] sm:$0xf]
      %v6734 = vld [vmem:[#allocation2 + $0x5c] sm:$0xf]
      %v6735 = vld [vmem:[#allocation2 + $0x60] sm:$0xf]
      %v6736 = vld [vmem:[#allocation2 + $0x64] sm:$0xf]
      %v6737 = vld [vmem:[#allocation2 + $0x68] sm:$0xf]
      %v6738 = vld [vmem:[#allocation2 + $0x6c] sm:$0xf]
      %v6739 = vld [vmem:[#allocation2 + $0x70] sm:$0xf]
      %v6740 = vld [vmem:[#allocation2 + $0x74] sm:$0xf]
      %v6741 = vld [vmem:[#allocation2 + $0x78] sm:$0xf]
      %v6742 = vld [vmem:[#allocation2 + $0x7c] sm:$0xf]
      %v6743 = vld [vmem:[#allocation2 + $0x80] sm:$0xf]
      %v6744 = vld [vmem:[#allocation2 + $0x84] sm:$0xf]
      %v6745 = vld [vmem:[#allocation2 + $0x88] sm:$0xf]
      %v6746 = vld [vmem:[#allocation2 + $0x8c] sm:$0xf]
      %v6747 = vld [vmem:[#allocation2 + $0x90] sm:$0xf]
      %v6748 = vld [vmem:[#allocation2 + $0x94] sm:$0xf]
      %v6749 = vld [vmem:[#allocation2 + $0x98] sm:$0xf]
      %v6750 = vld [vmem:[#allocation2 + $0x9c] sm:$0xf]
      %v6751 = vld [vmem:[#allocation2 + $0xa0] sm:$0xf]
      %v6752 = vld [vmem:[#allocation2 + $0xa4] sm:$0xf]
      %v6753 = vld [vmem:[#allocation2 + $0xa8] sm:$0xf]
      %v6754 = vld [vmem:[#allocation2 + $0xac] sm:$0xf]
      %v6755 = vld [vmem:[#allocation2 + $0xb0] sm:$0xf]
      %v6756 = vld [vmem:[#allocation2 + $0xb4] sm:$0xf]
      %v6757 = vld [vmem:[#allocation2 + $0xb8] sm:$0xf]
      %v6758 = vld [vmem:[#allocation2 + $0xbc] sm:$0xf]
      %v6759 = vld [vmem:[#allocation2 + $0xc0] sm:$0xf]
      %v6760 = vld [vmem:[#allocation2 + $0xc4] sm:$0xf]
      %v6761 = vld [vmem:[#allocation2 + $0xc8] sm:$0xf]
      %v6762 = vld [vmem:[#allocation2 + $0xcc] sm:$0xf]
      %v6763 = vld [vmem:[#allocation2 + $0xd0] sm:$0xf]
      %v6764 = vld [vmem:[#allocation2 + $0xd4] sm:$0xf]
      %v6765 = vld [vmem:[#allocation2 + $0xd8] sm:$0x1]
      %s6766 = scalar_lea.vmem %s3, 8
      %v6767 = vld [vmem:[%s6766] sm:$0x1]
      %v6817 = vunpack.c.l.b16 %v6717
      %v6818 = vunpack.c.l.b16 %v6718
      %v6819 = vunpack.c.l.b16 %v6719
      %v6820 = vunpack.c.l.b16 %v6720
      %v6821 = vunpack.c.l.b16 %v6721
      %v6822 = vunpack.c.l.b16 %v6722
      %v6823 = vunpack.c.l.b16 %v6723
      %v6824 = vunpack.c.l.b16 %v6724
      %v6825 = vunpack.c.l.b16 %v6725
      %v6826 = vunpack.c.l.b16 %v6726
      %v6827 = vunpack.c.l.b16 %v6727
      %v6828 = vunpack.c.l.b16 %v6728
      %v6829 = vunpack.c.l.b16 %v6729
      %v6830 = vunpack.c.l.b16 %v6730
      %v6831 = vunpack.c.l.b16 %v6731
      %v6832 = vunpack.c.l.b16 %v6732
      %v6833 = vunpack.c.l.b16 %v6733
      %v6834 = vunpack.c.l.b16 %v6734
      %v6835 = vunpack.c.l.b16 %v6735
      %v6836 = vunpack.c.l.b16 %v6736
      %v6837 = vunpack.c.l.b16 %v6737
      %v6838 = vunpack.c.l.b16 %v6738
      %v6839 = vunpack.c.l.b16 %v6739
      %v6840 = vunpack.c.l.b16 %v6740
      %v6841 = vunpack.c.l.b16 %v6741
      %v6842 = vunpack.c.l.b16 %v6742
      %v6843 = vunpack.c.l.b16 %v6743
      %v6844 = vunpack.c.l.b16 %v6744
      %v6845 = vunpack.c.l.b16 %v6745
      %v6846 = vunpack.c.l.b16 %v6746
      %v6847 = vunpack.c.l.b16 %v6747
      %v6848 = vunpack.c.l.b16 %v6748
      %v6849 = vunpack.c.l.b16 %v6749
      %v6850 = vunpack.c.l.b16 %v6750
      %v6851 = vunpack.c.l.b16 %v6751
      %v6852 = vunpack.c.l.b16 %v6752
      %v6853 = vunpack.c.l.b16 %v6753
      %v6854 = vunpack.c.l.b16 %v6754
      %v6855 = vunpack.c.l.b16 %v6755
      %v6856 = vunpack.c.l.b16 %v6756
      %v6857 = vunpack.c.l.b16 %v6757
      %v6858 = vunpack.c.l.b16 %v6758
      %v6859 = vunpack.c.l.b16 %v6759
      %v6860 = vunpack.c.l.b16 %v6760
      %v6861 = vunpack.c.l.b16 %v6761
      %v6862 = vunpack.c.l.b16 %v6762
      %v6863 = vunpack.c.l.b16 %v6763
      %v6864 = vunpack.c.l.b16 %v6764
      %v6865 = vunpack.c.l.b16 %v6765
      %v6866 = vpack.c.b16 %v6818, %v6817
      %v6867 = vpack.c.b16 %v6820, %v6819
      %v6868 = vpack.c.b16 %v6822, %v6821
      %v6869 = vpack.c.b16 %v6824, %v6823
      %v6870 = vpack.c.b16 %v6826, %v6825
      %v6871 = vpack.c.b16 %v6828, %v6827
      %v6872 = vpack.c.b16 %v6830, %v6829
      %v6873 = vpack.c.b16 %v6832, %v6831
      %v6874 = vpack.c.b16 %v6834, %v6833
      %v6875 = vpack.c.b16 %v6836, %v6835
      %v6876 = vpack.c.b16 %v6838, %v6837
      %v6877 = vpack.c.b16 %v6840, %v6839
      %v6878 = vpack.c.b16 %v6842, %v6841
      %v6879 = vpack.c.b16 %v6844, %v6843
      %v6880 = vpack.c.b16 %v6846, %v6845
      %v6881 = vpack.c.b16 %v6848, %v6847
      %v6882 = vpack.c.b16 %v6850, %v6849
      %v6883 = vpack.c.b16 %v6852, %v6851
      %v6884 = vpack.c.b16 %v6854, %v6853
      %v6885 = vpack.c.b16 %v6856, %v6855
      %v6886 = vpack.c.b16 %v6858, %v6857
      %v6887 = vpack.c.b16 %v6860, %v6859
      %v6888 = vpack.c.b16 %v6862, %v6861
      %v6889 = vpack.c.b16 %v6864, %v6863
      %v6890 = vpack.c.b16 %v6865, %v6865
      %v6891 = vrot.slane %v6866, 1
      %v6892 = vrot.slane %v6867, 1
      %v6893 = vsel %vm2700, %v6891, %v6892
      %v6894 = vrot.slane %v6868, 1
      %v6895 = vsel %vm2700, %v6892, %v6894
      %v6896 = vrot.slane %v6869, 1
      %v6897 = vsel %vm2700, %v6894, %v6896
      %v6898 = vrot.slane %v6870, 1
      %v6899 = vsel %vm2700, %v6896, %v6898
      %v6900 = vrot.slane %v6871, 1
      %v6901 = vsel %vm2700, %v6898, %v6900
      %v6902 = vrot.slane %v6872, 1
      %v6903 = vsel %vm2700, %v6900, %v6902
      %v6904 = vrot.slane %v6873, 1
      %v6905 = vsel %vm2700, %v6902, %v6904
      %v6906 = vrot.slane %v6874, 1
      %v6907 = vsel %vm2700, %v6904, %v6906
      %v6908 = vrot.slane %v6875, 1
      %v6909 = vsel %vm2700, %v6906, %v6908
      %v6910 = vrot.slane %v6876, 1
      %v6911 = vsel %vm2700, %v6908, %v6910
      %v6912 = vrot.slane %v6877, 1
      %v6913 = vsel %vm2700, %v6910, %v6912
      %v6914 = vrot.slane %v6878, 1
      %v6915 = vsel %vm2700, %v6912, %v6914
      %v6916 = vrot.slane %v6879, 1
      %v6917 = vsel %vm2700, %v6914, %v6916
      %v6918 = vrot.slane %v6880, 1
      %v6919 = vsel %vm2700, %v6916, %v6918
      %v6920 = vrot.slane %v6881, 1
      %v6921 = vsel %vm2700, %v6918, %v6920
      %v6922 = vrot.slane %v6882, 1
      %v6923 = vsel %vm2700, %v6920, %v6922
      %v6924 = vrot.slane %v6883, 1
      %v6925 = vsel %vm2700, %v6922, %v6924
      %v6926 = vrot.slane %v6884, 1
      %v6927 = vsel %vm2700, %v6924, %v6926
      %v6928 = vrot.slane %v6885, 1
      %v6929 = vsel %vm2700, %v6926, %v6928
      %v6930 = vrot.slane %v6886, 1
      %v6931 = vsel %vm2700, %v6928, %v6930
      %v6932 = vrot.slane %v6887, 1
      %v6933 = vsel %vm2700, %v6930, %v6932
      %v6934 = vrot.slane %v6888, 1
      %v6935 = vsel %vm2700, %v6932, %v6934
      %v6936 = vrot.slane %v6889, 1
      %v6937 = vsel %vm2700, %v6934, %v6936
      %v6938 = vrot.slane %v6890, 1
      %v6939 = vsel %vm2700, %v6936, %v6938
      %v6941 = vsel %vm1361, %v6893, 0
      %v6944 = vsel %vm1361, %v6895, 0
      %v6947 = vsel %vm1361, %v6897, 0
      %v6950 = vsel %vm1361, %v6899, 0
      %v6953 = vsel %vm1361, %v6901, 0
      %v6956 = vsel %vm1361, %v6903, 0
      %v6959 = vsel %vm1361, %v6905, 0
      %v6962 = vsel %vm1361, %v6907, 0
      %v6965 = vsel %vm1361, %v6909, 0
      %v6968 = vsel %vm1361, %v6911, 0
      %v6971 = vsel %vm1361, %v6913, 0
      %v6974 = vsel %vm1361, %v6915, 0
      %v6977 = vsel %vm1361, %v6917, 0
      %v6980 = vsel %vm1361, %v6919, 0
      %v6983 = vsel %vm1361, %v6921, 0
      %v6986 = vsel %vm1361, %v6923, 0
      %v6989 = vsel %vm1361, %v6925, 0
      %v6992 = vsel %vm1361, %v6927, 0
      %v6995 = vsel %vm1361, %v6929, 0
      %v6998 = vsel %vm1361, %v6931, 0
      %v7001 = vsel %vm1361, %v6933, 0
      %v7004 = vsel %vm1361, %v6935, 0
      %v7007 = vsel %vm1361, %v6937, 0
      %v7010 = vsel %vm1361, %v6939, 0
      %v7013 = vsel %vm1434, %v6767, 0
      %7015 = vmatprep.subr.bf16.mxu0 0
      %7016 = vmatpush1.bf16.msra.mxu0 0
      %7017 = vmatprep.subr.bf16.mxu0 0
      %7018 = vmatpush1.bf16.msra.mxu0 0
      %7019 = vmatprep.subr.bf16.mxu0 0
      %7020 = vmatpush1.bf16.msra.mxu0 0
      %7021 = vmatprep.subr.bf16.mxu0 0
      %7022 = vmatpush1.bf16.msra.mxu0 0
      %7023 = vmatprep.subr.bf16.mxu0 0
      %7024 = vmatpush1.bf16.msra.mxu0 0
      %7025 = vmatprep.subr.bf16.mxu0 0
      %7026 = vmatpush1.bf16.msra.mxu0 0
      %7027 = vmatprep.subr.bf16.mxu0 0
      %7028 = vmatpush1.bf16.msra.mxu0 0
      %7029 = vmatprep.subr.bf16.mxu0 0
      %7030 = vmatpush1.bf16.msra.mxu0 %v7013
      %7031 = vmatprep.subr.bf16.mxu0 0
      %7032 = vmatpush2.bf16.msra.mxu0 0
      %7033 = vmatprep.subr.bf16.mxu0 0
      %7034 = vmatpush2.bf16.msra.mxu0 0
      %7035 = vmatprep.subr.bf16.mxu0 0
      %7036 = vmatpush2.bf16.msra.mxu0 0
      %7037 = vmatprep.subr.bf16.mxu0 0
      %7038 = vmatpush2.bf16.msra.mxu0 0
      %7039 = vmatprep.subr.bf16.mxu0 0
      %7040 = vmatpush2.bf16.msra.mxu0 0
      %7041 = vmatprep.subr.bf16.mxu0 0
      %7042 = vmatpush2.bf16.msra.mxu0 0
      %7043 = vmatprep.subr.bf16.mxu0 0
      %7044 = vmatpush2.bf16.msra.mxu0 0
      %7045 = vmatprep.subr.bf16.mxu0 0
      %7046 = vmatpush2.bf16.msra.mxu0 0
      %7047 = vmatprep.mubr.bf16.mxu0 0
      %7048 = vmatmul.mubr.bf16.gmra.mxu0 %v6941
      %v7049 = vpop.f32.mrf.mxu0
      %v7050 = vadd.f32 0.0, %v7049
      %v7051 = vpop.f32.mrf.mxu0
      %v7052 = vpop.f32.mrf.mxu0
      %v7053 = vadd.f32 0.0, %v7052
      %v7054 = vpop.f32.mrf.mxu0
      %7055 = vmatprep.mubr.bf16.mxu0 0
      %7056 = vmatmul.mubr.bf16.gmra.mxu0 %v6944
      %v7057 = vpop.f32.mrf.mxu0
      %v7058 = vadd.f32 0.0, %v7057
      %v7059 = vpop.f32.mrf.mxu0
      %v7060 = vpop.f32.mrf.mxu0
      %v7061 = vadd.f32 0.0, %v7060
      %v7062 = vpop.f32.mrf.mxu0
      %7063 = vmatprep.mubr.bf16.mxu0 0
      %7064 = vmatmul.mubr.bf16.gmra.mxu0 %v6947
      %v7065 = vpop.f32.mrf.mxu0
      %v7066 = vadd.f32 0.0, %v7065
      %v7067 = vpop.f32.mrf.mxu0
      %v7068 = vpop.f32.mrf.mxu0
      %v7069 = vadd.f32 0.0, %v7068
      %v7070 = vpop.f32.mrf.mxu0
      %7071 = vmatprep.mubr.bf16.mxu0 0
      %7072 = vmatmul.mubr.bf16.gmra.mxu0 %v6950
      %v7073 = vpop.f32.mrf.mxu0
      %v7074 = vadd.f32 0.0, %v7073
      %v7075 = vpop.f32.mrf.mxu0
      %v7076 = vpop.f32.mrf.mxu0
      %v7077 = vadd.f32 0.0, %v7076
      %v7078 = vpop.f32.mrf.mxu0
      %7079 = vmatprep.mubr.bf16.mxu0 0
      %7080 = vmatmul.mubr.bf16.gmra.mxu0 %v6953
      %v7081 = vpop.f32.mrf.mxu0
      %v7082 = vadd.f32 0.0, %v7081
      %v7083 = vpop.f32.mrf.mxu0
      %v7084 = vpop.f32.mrf.mxu0
      %v7085 = vadd.f32 0.0, %v7084
      %v7086 = vpop.f32.mrf.mxu0
      %7087 = vmatprep.mubr.bf16.mxu0 0
      %7088 = vmatmul.mubr.bf16.gmra.mxu0 %v6956
      %v7089 = vpop.f32.mrf.mxu0
      %v7090 = vadd.f32 0.0, %v7089
      %v7091 = vpop.f32.mrf.mxu0
      %v7092 = vpop.f32.mrf.mxu0
      %v7093 = vadd.f32 0.0, %v7092
      %v7094 = vpop.f32.mrf.mxu0
      %7095 = vmatprep.mubr.bf16.mxu0 0
      %7096 = vmatmul.mubr.bf16.gmra.mxu0 %v6959
      %v7097 = vpop.f32.mrf.mxu0
      %v7098 = vadd.f32 0.0, %v7097
      %v7099 = vpop.f32.mrf.mxu0
      %v7100 = vpop.f32.mrf.mxu0
      %v7101 = vadd.f32 0.0, %v7100
      %v7102 = vpop.f32.mrf.mxu0
      %7103 = vmatprep.mubr.bf16.mxu0 0
      %7104 = vmatmul.mubr.bf16.gmra.mxu0 %v6962
      %v7105 = vpop.f32.mrf.mxu0
      %v7106 = vadd.f32 0.0, %v7105
      %v7107 = vpop.f32.mrf.mxu0
      %v7108 = vpop.f32.mrf.mxu0
      %v7109 = vadd.f32 0.0, %v7108
      %v7110 = vpop.f32.mrf.mxu0
      %7111 = vmatprep.mubr.bf16.mxu0 0
      %7112 = vmatmul.mubr.bf16.gmra.mxu0 %v6965
      %v7113 = vpop.f32.mrf.mxu0
      %v7114 = vadd.f32 0.0, %v7113
      %v7115 = vpop.f32.mrf.mxu0
      %v7116 = vpop.f32.mrf.mxu0
      %v7117 = vadd.f32 0.0, %v7116
      %v7118 = vpop.f32.mrf.mxu0
      %7119 = vmatprep.mubr.bf16.mxu0 0
      %7120 = vmatmul.mubr.bf16.gmra.mxu0 %v6968
      %v7121 = vpop.f32.mrf.mxu0
      %v7122 = vadd.f32 0.0, %v7121
      %v7123 = vpop.f32.mrf.mxu0
      %v7124 = vpop.f32.mrf.mxu0
      %v7125 = vadd.f32 0.0, %v7124
      %v7126 = vpop.f32.mrf.mxu0
      %7127 = vmatprep.mubr.bf16.mxu0 0
      %7128 = vmatmul.mubr.bf16.gmra.mxu0 %v6971
      %v7129 = vpop.f32.mrf.mxu0
      %v7130 = vadd.f32 0.0, %v7129
      %v7131 = vpop.f32.mrf.mxu0
      %v7132 = vpop.f32.mrf.mxu0
      %v7133 = vadd.f32 0.0, %v7132
      %v7134 = vpop.f32.mrf.mxu0
      %7135 = vmatprep.mubr.bf16.mxu0 0
      %7136 = vmatmul.mubr.bf16.gmra.mxu0 %v6974
      %v7137 = vpop.f32.mrf.mxu0
      %v7138 = vadd.f32 0.0, %v7137
      %v7139 = vpop.f32.mrf.mxu0
      %v7140 = vpop.f32.mrf.mxu0
      %v7141 = vadd.f32 0.0, %v7140
      %v7142 = vpop.f32.mrf.mxu0
      %7143 = vmatprep.mubr.bf16.mxu0 0
      %7144 = vmatmul.mubr.bf16.gmra.mxu0 %v6977
      %v7145 = vpop.f32.mrf.mxu0
      %v7146 = vadd.f32 0.0, %v7145
      %v7147 = vpop.f32.mrf.mxu0
      %v7148 = vpop.f32.mrf.mxu0
      %v7149 = vadd.f32 0.0, %v7148
      %v7150 = vpop.f32.mrf.mxu0
      %7151 = vmatprep.mubr.bf16.mxu0 0
      %7152 = vmatmul.mubr.bf16.gmra.mxu0 %v6980
      %v7153 = vpop.f32.mrf.mxu0
      %v7154 = vadd.f32 0.0, %v7153
      %v7155 = vpop.f32.mrf.mxu0
      %v7156 = vpop.f32.mrf.mxu0
      %v7157 = vadd.f32 0.0, %v7156
      %v7158 = vpop.f32.mrf.mxu0
      %7159 = vmatprep.mubr.bf16.mxu0 0
      %7160 = vmatmul.mubr.bf16.gmra.mxu0 %v6983
      %v7161 = vpop.f32.mrf.mxu0
      %v7162 = vadd.f32 0.0, %v7161
      %v7163 = vpop.f32.mrf.mxu0
      %v7164 = vpop.f32.mrf.mxu0
      %v7165 = vadd.f32 0.0, %v7164
      %v7166 = vpop.f32.mrf.mxu0
      %7167 = vmatprep.mubr.bf16.mxu0 0
      %7168 = vmatmul.mubr.bf16.gmra.mxu0 %v6986
      %v7169 = vpop.f32.mrf.mxu0
      %v7170 = vadd.f32 0.0, %v7169
      %v7171 = vpop.f32.mrf.mxu0
      %v7172 = vpop.f32.mrf.mxu0
      %v7173 = vadd.f32 0.0, %v7172
      %v7174 = vpop.f32.mrf.mxu0
      %7175 = vmatprep.mubr.bf16.mxu0 0
      %7176 = vmatmul.mubr.bf16.gmra.mxu0 %v6989
      %v7177 = vpop.f32.mrf.mxu0
      %v7178 = vadd.f32 0.0, %v7177
      %v7179 = vpop.f32.mrf.mxu0
      %v7180 = vpop.f32.mrf.mxu0
      %v7181 = vadd.f32 0.0, %v7180
      %v7182 = vpop.f32.mrf.mxu0
      %7183 = vmatprep.mubr.bf16.mxu0 0
      %7184 = vmatmul.mubr.bf16.gmra.mxu0 %v6992
      %v7185 = vpop.f32.mrf.mxu0
      %v7186 = vadd.f32 0.0, %v7185
      %v7187 = vpop.f32.mrf.mxu0
      %v7188 = vpop.f32.mrf.mxu0
      %v7189 = vadd.f32 0.0, %v7188
      %v7190 = vpop.f32.mrf.mxu0
      %7191 = vmatprep.mubr.bf16.mxu0 0
      %7192 = vmatmul.mubr.bf16.gmra.mxu0 %v6995
      %v7193 = vpop.f32.mrf.mxu0
      %v7194 = vadd.f32 0.0, %v7193
      %v7195 = vpop.f32.mrf.mxu0
      %v7196 = vpop.f32.mrf.mxu0
      %v7197 = vadd.f32 0.0, %v7196
      %v7198 = vpop.f32.mrf.mxu0
      %7199 = vmatprep.mubr.bf16.mxu0 0
      %7200 = vmatmul.mubr.bf16.gmra.mxu0 %v6998
      %v7201 = vpop.f32.mrf.mxu0
      %v7202 = vadd.f32 0.0, %v7201
      %v7203 = vpop.f32.mrf.mxu0
      %v7204 = vpop.f32.mrf.mxu0
      %v7205 = vadd.f32 0.0, %v7204
      %v7206 = vpop.f32.mrf.mxu0
      %7207 = vmatprep.mubr.bf16.mxu0 0
      %7208 = vmatmul.mubr.bf16.gmra.mxu0 %v7001
      %v7209 = vpop.f32.mrf.mxu0
      %v7210 = vadd.f32 0.0, %v7209
      %v7211 = vpop.f32.mrf.mxu0
      %v7212 = vpop.f32.mrf.mxu0
      %v7213 = vadd.f32 0.0, %v7212
      %v7214 = vpop.f32.mrf.mxu0
      %7215 = vmatprep.mubr.bf16.mxu0 0
      %7216 = vmatmul.mubr.bf16.gmra.mxu0 %v7004
      %v7217 = vpop.f32.mrf.mxu0
      %v7218 = vadd.f32 0.0, %v7217
      %v7219 = vpop.f32.mrf.mxu0
      %v7220 = vpop.f32.mrf.mxu0
      %v7221 = vadd.f32 0.0, %v7220
      %v7222 = vpop.f32.mrf.mxu0
      %7223 = vmatprep.mubr.bf16.mxu0 0
      %7224 = vmatmul.mubr.bf16.gmra.mxu0 %v7007
      %v7225 = vpop.f32.mrf.mxu0
      %v7226 = vadd.f32 0.0, %v7225
      %v7227 = vpop.f32.mrf.mxu0
      %v7228 = vpop.f32.mrf.mxu0
      %v7229 = vadd.f32 0.0, %v7228
      %v7230 = vpop.f32.mrf.mxu0
      %7231 = vmatprep.mubr.bf16.mxu0 0
      %7232 = vmatmul.mubr.bf16.gmra.mxu0 %v7010
      %v7233 = vpop.f32.mrf.mxu0
      %v7234 = vadd.f32 0.0, %v7233
      %v7235 = vpop.f32.mrf.mxu0
      %v7236 = vpop.f32.mrf.mxu0
      %v7237 = vadd.f32 0.0, %v7236
      %v7238 = vpop.f32.mrf.mxu0
      %7239 = vdwg.mxu0
      %v7240 = vld [vmem:[#allocation3] sm:$0xff]
      %v7241 = vld [vmem:[#allocation3 + $0x8] sm:$0xff]
      %v7242 = vld [vmem:[#allocation3 + $0x10] sm:$0xff]
      %v7243 = vld [vmem:[#allocation3 + $0x18] sm:$0xff]
      %v7244 = vld [vmem:[#allocation3 + $0x20] sm:$0xff]
      %v7245 = vld [vmem:[#allocation3 + $0x28] sm:$0xff]
      %v7246 = vld [vmem:[#allocation3 + $0x30] sm:$0xff]
      %v7247 = vld [vmem:[#allocation3 + $0x38] sm:$0xff]
      %v7248 = vld [vmem:[#allocation3 + $0x40] sm:$0xff]
      %v7249 = vld [vmem:[#allocation3 + $0x48] sm:$0xff]
      %v7250 = vld [vmem:[#allocation3 + $0x50] sm:$0xff]
      %v7251 = vld [vmem:[#allocation3 + $0x58] sm:$0xff]
      %v7252 = vld [vmem:[#allocation3 + $0x60] sm:$0xff]
      %v7253 = vld [vmem:[#allocation3 + $0x68] sm:$0xff]
      %v7254 = vld [vmem:[#allocation3 + $0x70] sm:$0xff]
      %v7255 = vld [vmem:[#allocation3 + $0x78] sm:$0xff]
      %v7256 = vld [vmem:[#allocation3 + $0x80] sm:$0xff]
      %v7257 = vld [vmem:[#allocation3 + $0x88] sm:$0xff]
      %v7258 = vld [vmem:[#allocation3 + $0x90] sm:$0xff]
      %v7259 = vld [vmem:[#allocation3 + $0x98] sm:$0xff]
      %v7260 = vld [vmem:[#allocation3 + $0xa0] sm:$0xff]
      %v7261 = vld [vmem:[#allocation3 + $0xa8] sm:$0xff]
      %v7262 = vld [vmem:[#allocation3 + $0xb0] sm:$0xff]
      %v7263 = vld [vmem:[#allocation3 + $0xb8] sm:$0xff]
      %v7264 = vld [vmem:[#allocation3 + $0xc0] sm:$0xff]
      %v7265 = vld [vmem:[#allocation3 + $0xc8] sm:$0xff]
      %v7266 = vld [vmem:[#allocation3 + $0xd0] sm:$0xff]
      %v7267 = vld [vmem:[#allocation3 + $0xd8] sm:$0xff]
      %v7268 = vld [vmem:[#allocation3 + $0xe0] sm:$0xff]
      %v7269 = vld [vmem:[#allocation3 + $0xe8] sm:$0xff]
      %v7270 = vld [vmem:[#allocation3 + $0xf0] sm:$0xff]
      %v7271 = vld [vmem:[#allocation3 + $0xf8] sm:$0xff]
      %v7272 = vld [vmem:[#allocation3 + $0x100] sm:$0xff]
      %v7273 = vld [vmem:[#allocation3 + $0x108] sm:$0xff]
      %v7274 = vld [vmem:[#allocation3 + $0x110] sm:$0xff]
      %v7275 = vld [vmem:[#allocation3 + $0x118] sm:$0xff]
      %v7276 = vld [vmem:[#allocation3 + $0x120] sm:$0xff]
      %v7277 = vld [vmem:[#allocation3 + $0x128] sm:$0xff]
      %v7278 = vld [vmem:[#allocation3 + $0x130] sm:$0xff]
      %v7279 = vld [vmem:[#allocation3 + $0x138] sm:$0xff]
      %v7280 = vld [vmem:[#allocation3 + $0x140] sm:$0xff]
      %v7281 = vld [vmem:[#allocation3 + $0x148] sm:$0xff]
      %v7282 = vld [vmem:[#allocation3 + $0x150] sm:$0xff]
      %v7283 = vld [vmem:[#allocation3 + $0x158] sm:$0xff]
      %v7284 = vld [vmem:[#allocation3 + $0x160] sm:$0xff]
      %v7285 = vld [vmem:[#allocation3 + $0x168] sm:$0xff]
      %v7286 = vld [vmem:[#allocation3 + $0x170] sm:$0xff]
      %v7287 = vld [vmem:[#allocation3 + $0x178] sm:$0xff]
      %v7288 = vadd.f32 %v7240, %v7050
      %v7289 = vadd.f32 %v7241, %v7053
      %v7290 = vadd.f32 %v7242, %v7058
      %v7291 = vadd.f32 %v7243, %v7061
      %v7292 = vadd.f32 %v7244, %v7066
      %v7293 = vadd.f32 %v7245, %v7069
      %v7294 = vadd.f32 %v7246, %v7074
      %v7295 = vadd.f32 %v7247, %v7077
      %v7296 = vadd.f32 %v7248, %v7082
      %v7297 = vadd.f32 %v7249, %v7085
      %v7298 = vadd.f32 %v7250, %v7090
      %v7299 = vadd.f32 %v7251, %v7093
      %v7300 = vadd.f32 %v7252, %v7098
      %v7301 = vadd.f32 %v7253, %v7101
      %v7302 = vadd.f32 %v7254, %v7106
      %v7303 = vadd.f32 %v7255, %v7109
      %v7304 = vadd.f32 %v7256, %v7114
      %v7305 = vadd.f32 %v7257, %v7117
      %v7306 = vadd.f32 %v7258, %v7122
      %v7307 = vadd.f32 %v7259, %v7125
      %v7308 = vadd.f32 %v7260, %v7130
      %v7309 = vadd.f32 %v7261, %v7133
      %v7310 = vadd.f32 %v7262, %v7138
      %v7311 = vadd.f32 %v7263, %v7141
      %v7312 = vadd.f32 %v7264, %v7146
      %v7313 = vadd.f32 %v7265, %v7149
      %v7314 = vadd.f32 %v7266, %v7154
      %v7315 = vadd.f32 %v7267, %v7157
      %v7316 = vadd.f32 %v7268, %v7162
      %v7317 = vadd.f32 %v7269, %v7165
      %v7318 = vadd.f32 %v7270, %v7170
      %v7319 = vadd.f32 %v7271, %v7173
      %v7320 = vadd.f32 %v7272, %v7178
      %v7321 = vadd.f32 %v7273, %v7181
      %v7322 = vadd.f32 %v7274, %v7186
      %v7323 = vadd.f32 %v7275, %v7189
      %v7324 = vadd.f32 %v7276, %v7194
      %v7325 = vadd.f32 %v7277, %v7197
      %v7326 = vadd.f32 %v7278, %v7202
      %v7327 = vadd.f32 %v7279, %v7205
      %v7328 = vadd.f32 %v7280, %v7210
      %v7329 = vadd.f32 %v7281, %v7213
      %v7330 = vadd.f32 %v7282, %v7218
      %v7331 = vadd.f32 %v7283, %v7221
      %v7332 = vadd.f32 %v7284, %v7226
      %v7333 = vadd.f32 %v7285, %v7229
      %v7334 = vadd.f32 %v7286, %v7234
      %v7335 = vadd.f32 %v7287, %v7237
      %7336 = vst.msk [vmem:[#allocation3] sm:$0xff] %vm423, %v7288
      %7337 = vst.msk [vmem:[#allocation3 + $0x8] sm:$0xff] %vm423, %v7289
      %7338 = vst.msk [vmem:[#allocation3 + $0x10] sm:$0xff] %vm423, %v7290
      %7339 = vst.msk [vmem:[#allocation3 + $0x18] sm:$0xff] %vm423, %v7291
      %7340 = vst.msk [vmem:[#allocation3 + $0x20] sm:$0xff] %vm423, %v7292
      %7341 = vst.msk [vmem:[#allocation3 + $0x28] sm:$0xff] %vm423, %v7293
      %7342 = vst.msk [vmem:[#allocation3 + $0x30] sm:$0xff] %vm423, %v7294
      %7343 = vst.msk [vmem:[#allocation3 + $0x38] sm:$0xff] %vm423, %v7295
      %7344 = vst.msk [vmem:[#allocation3 + $0x40] sm:$0xff] %vm423, %v7296
      %7345 = vst.msk [vmem:[#allocation3 + $0x48] sm:$0xff] %vm423, %v7297
      %7346 = vst.msk [vmem:[#allocation3 + $0x50] sm:$0xff] %vm423, %v7298
      %7347 = vst.msk [vmem:[#allocation3 + $0x58] sm:$0xff] %vm423, %v7299
      %7348 = vst.msk [vmem:[#allocation3 + $0x60] sm:$0xff] %vm423, %v7300
      %7349 = vst.msk [vmem:[#allocation3 + $0x68] sm:$0xff] %vm423, %v7301
      %7350 = vst.msk [vmem:[#allocation3 + $0x70] sm:$0xff] %vm423, %v7302
      %7351 = vst.msk [vmem:[#allocation3 + $0x78] sm:$0xff] %vm423, %v7303
      %7352 = vst.msk [vmem:[#allocation3 + $0x80] sm:$0xff] %vm423, %v7304
      %7353 = vst.msk [vmem:[#allocation3 + $0x88] sm:$0xff] %vm423, %v7305
      %7354 = vst.msk [vmem:[#allocation3 + $0x90] sm:$0xff] %vm423, %v7306
      %7355 = vst.msk [vmem:[#allocation3 + $0x98] sm:$0xff] %vm423, %v7307
      %7356 = vst.msk [vmem:[#allocation3 + $0xa0] sm:$0xff] %vm423, %v7308
      %7357 = vst.msk [vmem:[#allocation3 + $0xa8] sm:$0xff] %vm423, %v7309
      %7358 = vst.msk [vmem:[#allocation3 + $0xb0] sm:$0xff] %vm423, %v7310
      %7359 = vst.msk [vmem:[#allocation3 + $0xb8] sm:$0xff] %vm423, %v7311
      %7360 = vst.msk [vmem:[#allocation3 + $0xc0] sm:$0xff] %vm423, %v7312
      %7361 = vst.msk [vmem:[#allocation3 + $0xc8] sm:$0xff] %vm423, %v7313
      %7362 = vst.msk [vmem:[#allocation3 + $0xd0] sm:$0xff] %vm423, %v7314
      %7363 = vst.msk [vmem:[#allocation3 + $0xd8] sm:$0xff] %vm423, %v7315
      %7364 = vst.msk [vmem:[#allocation3 + $0xe0] sm:$0xff] %vm423, %v7316
      %7365 = vst.msk [vmem:[#allocation3 + $0xe8] sm:$0xff] %vm423, %v7317
      %7366 = vst.msk [vmem:[#allocation3 + $0xf0] sm:$0xff] %vm423, %v7318
      %7367 = vst.msk [vmem:[#allocation3 + $0xf8] sm:$0xff] %vm423, %v7319
      %7368 = vst.msk [vmem:[#allocation3 + $0x100] sm:$0xff] %vm423, %v7320
      %7369 = vst.msk [vmem:[#allocation3 + $0x108] sm:$0xff] %vm423, %v7321
      %7370 = vst.msk [vmem:[#allocation3 + $0x110] sm:$0xff] %vm423, %v7322
      %7371 = vst.msk [vmem:[#allocation3 + $0x118] sm:$0xff] %vm423, %v7323
      %7372 = vst.msk [vmem:[#allocation3 + $0x120] sm:$0xff] %vm423, %v7324
      %7373 = vst.msk [vmem:[#allocation3 + $0x128] sm:$0xff] %vm423, %v7325
      %7374 = vst.msk [vmem:[#allocation3 + $0x130] sm:$0xff] %vm423, %v7326
      %7375 = vst.msk [vmem:[#allocation3 + $0x138] sm:$0xff] %vm423, %v7327
      %7376 = vst.msk [vmem:[#allocation3 + $0x140] sm:$0xff] %vm423, %v7328
      %7377 = vst.msk [vmem:[#allocation3 + $0x148] sm:$0xff] %vm423, %v7329
      %7378 = vst.msk [vmem:[#allocation3 + $0x150] sm:$0xff] %vm423, %v7330
      %7379 = vst.msk [vmem:[#allocation3 + $0x158] sm:$0xff] %vm423, %v7331
      %7380 = vst.msk [vmem:[#allocation3 + $0x160] sm:$0xff] %vm423, %v7332
      %7381 = vst.msk [vmem:[#allocation3 + $0x168] sm:$0xff] %vm423, %v7333
      %7382 = vst.msk [vmem:[#allocation3 + $0x170] sm:$0xff] %vm423, %v7334
      %7383 = vst.msk [vmem:[#allocation3 + $0x178] sm:$0xff] %vm423, %v7335
      %v7384 = vld [vmem:[#allocation3] sm:$0xff]
      %v7385 = vld [vmem:[#allocation3 + $0x8] sm:$0xff]
      %v7386 = vld [vmem:[#allocation3 + $0x10] sm:$0xff]
      %v7387 = vld [vmem:[#allocation3 + $0x18] sm:$0xff]
      %v7388 = vld [vmem:[#allocation3 + $0x20] sm:$0xff]
      %v7389 = vld [vmem:[#allocation3 + $0x28] sm:$0xff]
      %v7390 = vld [vmem:[#allocation3 + $0x30] sm:$0xff]
      %v7391 = vld [vmem:[#allocation3 + $0x38] sm:$0xff]
      %v7392 = vld [vmem:[#allocation3 + $0x40] sm:$0xff]
      %v7393 = vld [vmem:[#allocation3 + $0x48] sm:$0xff]
      %v7394 = vld [vmem:[#allocation3 + $0x50] sm:$0xff]
      %v7395 = vld [vmem:[#allocation3 + $0x58] sm:$0xff]
      %v7396 = vld [vmem:[#allocation3 + $0x60] sm:$0xff]
      %v7397 = vld [vmem:[#allocation3 + $0x68] sm:$0xff]
      %v7398 = vld [vmem:[#allocation3 + $0x70] sm:$0xff]
      %v7399 = vld [vmem:[#allocation3 + $0x78] sm:$0xff]
      %v7400 = vld [vmem:[#allocation3 + $0x80] sm:$0xff]
      %v7401 = vld [vmem:[#allocation3 + $0x88] sm:$0xff]
      %v7402 = vld [vmem:[#allocation3 + $0x90] sm:$0xff]
      %v7403 = vld [vmem:[#allocation3 + $0x98] sm:$0xff]
      %v7404 = vld [vmem:[#allocation3 + $0xa0] sm:$0xff]
      %v7405 = vld [vmem:[#allocation3 + $0xa8] sm:$0xff]
      %v7406 = vld [vmem:[#allocation3 + $0xb0] sm:$0xff]
      %v7407 = vld [vmem:[#allocation3 + $0xb8] sm:$0xff]
      %v7408 = vld [vmem:[#allocation3 + $0xc0] sm:$0xff]
      %v7409 = vld [vmem:[#allocation3 + $0xc8] sm:$0xff]
      %v7410 = vld [vmem:[#allocation3 + $0xd0] sm:$0xff]
      %v7411 = vld [vmem:[#allocation3 + $0xd8] sm:$0xff]
      %v7412 = vld [vmem:[#allocation3 + $0xe0] sm:$0xff]
      %v7413 = vld [vmem:[#allocation3 + $0xe8] sm:$0xff]
      %v7414 = vld [vmem:[#allocation3 + $0xf0] sm:$0xff]
      %v7415 = vld [vmem:[#allocation3 + $0xf8] sm:$0xff]
      %v7416 = vld [vmem:[#allocation3 + $0x100] sm:$0xff]
      %v7417 = vld [vmem:[#allocation3 + $0x108] sm:$0xff]
      %v7418 = vld [vmem:[#allocation3 + $0x110] sm:$0xff]
      %v7419 = vld [vmem:[#allocation3 + $0x118] sm:$0xff]
      %v7420 = vld [vmem:[#allocation3 + $0x120] sm:$0xff]
      %v7421 = vld [vmem:[#allocation3 + $0x128] sm:$0xff]
      %v7422 = vld [vmem:[#allocation3 + $0x130] sm:$0xff]
      %v7423 = vld [vmem:[#allocation3 + $0x138] sm:$0xff]
      %v7424 = vld [vmem:[#allocation3 + $0x140] sm:$0xff]
      %v7425 = vld [vmem:[#allocation3 + $0x148] sm:$0xff]
      %v7426 = vld [vmem:[#allocation3 + $0x150] sm:$0xff]
      %v7427 = vld [vmem:[#allocation3 + $0x158] sm:$0xff]
      %v7428 = vld [vmem:[#allocation3 + $0x160] sm:$0xff]
      %v7429 = vld [vmem:[#allocation3 + $0x168] sm:$0xff]
      %v7430 = vld [vmem:[#allocation3 + $0x170] sm:$0xff]
      %v7431 = vld [vmem:[#allocation3 + $0x178] sm:$0xff]
      %v7432 = vld [vmem:[%s4] sm:$0x1]
      %v7434 = vlaneseq
      %v7435 = vshrl.u32 %v7434, 7
      %v7436 = vsub.s32 0, %v7435
      %v7437 = vrot.slane %v7432, %v7436
      %v7439 = vadd.f32 %v7384, %v7437
      %v7440 = vadd.f32 %v7385, %v7437
      %v7441 = vadd.f32 %v7386, %v7437
      %v7442 = vadd.f32 %v7387, %v7437
      %v7443 = vadd.f32 %v7388, %v7437
      %v7444 = vadd.f32 %v7389, %v7437
      %v7445 = vadd.f32 %v7390, %v7437
      %v7446 = vadd.f32 %v7391, %v7437
      %v7447 = vadd.f32 %v7392, %v7437
      %v7448 = vadd.f32 %v7393, %v7437
      %v7449 = vadd.f32 %v7394, %v7437
      %v7450 = vadd.f32 %v7395, %v7437
      %v7451 = vadd.f32 %v7396, %v7437
      %v7452 = vadd.f32 %v7397, %v7437
      %v7453 = vadd.f32 %v7398, %v7437
      %v7454 = vadd.f32 %v7399, %v7437
      %v7455 = vadd.f32 %v7400, %v7437
      %v7456 = vadd.f32 %v7401, %v7437
      %v7457 = vadd.f32 %v7402, %v7437
      %v7458 = vadd.f32 %v7403, %v7437
      %v7459 = vadd.f32 %v7404, %v7437
      %v7460 = vadd.f32 %v7405, %v7437
      %v7461 = vadd.f32 %v7406, %v7437
      %v7462 = vadd.f32 %v7407, %v7437
      %v7463 = vadd.f32 %v7408, %v7437
      %v7464 = vadd.f32 %v7409, %v7437
      %v7465 = vadd.f32 %v7410, %v7437
      %v7466 = vadd.f32 %v7411, %v7437
      %v7467 = vadd.f32 %v7412, %v7437
      %v7468 = vadd.f32 %v7413, %v7437
      %v7469 = vadd.f32 %v7414, %v7437
      %v7470 = vadd.f32 %v7415, %v7437
      %v7471 = vadd.f32 %v7416, %v7437
      %v7472 = vadd.f32 %v7417, %v7437
      %v7473 = vadd.f32 %v7418, %v7437
      %v7474 = vadd.f32 %v7419, %v7437
      %v7475 = vadd.f32 %v7420, %v7437
      %v7476 = vadd.f32 %v7421, %v7437
      %v7477 = vadd.f32 %v7422, %v7437
      %v7478 = vadd.f32 %v7423, %v7437
      %v7479 = vadd.f32 %v7424, %v7437
      %v7480 = vadd.f32 %v7425, %v7437
      %v7481 = vadd.f32 %v7426, %v7437
      %v7482 = vadd.f32 %v7427, %v7437
      %v7483 = vadd.f32 %v7428, %v7437
      %v7484 = vadd.f32 %v7429, %v7437
      %v7485 = vadd.f32 %v7430, %v7437
      %v7486 = vadd.f32 %v7431, %v7437
      %vm7487 = vcmp.gt.f32.partialorder %v7439, 0.0
      %vm7488 = vcmp.gt.f32.partialorder %v7440, 0.0
      %vm7489 = vcmp.gt.f32.partialorder %v7441, 0.0
      %vm7490 = vcmp.gt.f32.partialorder %v7442, 0.0
      %vm7491 = vcmp.gt.f32.partialorder %v7443, 0.0
      %vm7492 = vcmp.gt.f32.partialorder %v7444, 0.0
      %vm7493 = vcmp.gt.f32.partialorder %v7445, 0.0
      %vm7494 = vcmp.gt.f32.partialorder %v7446, 0.0
      %vm7495 = vcmp.gt.f32.partialorder %v7447, 0.0
      %vm7496 = vcmp.gt.f32.partialorder %v7448, 0.0
      %vm7497 = vcmp.gt.f32.partialorder %v7449, 0.0
      %vm7498 = vcmp.gt.f32.partialorder %v7450, 0.0
      %vm7499 = vcmp.gt.f32.partialorder %v7451, 0.0
      %vm7500 = vcmp.gt.f32.partialorder %v7452, 0.0
      %vm7501 = vcmp.gt.f32.partialorder %v7453, 0.0
      %vm7502 = vcmp.gt.f32.partialorder %v7454, 0.0
      %vm7503 = vcmp.gt.f32.partialorder %v7455, 0.0
      %vm7504 = vcmp.gt.f32.partialorder %v7456, 0.0
      %vm7505 = vcmp.gt.f32.partialorder %v7457, 0.0
      %vm7506 = vcmp.gt.f32.partialorder %v7458, 0.0
      %vm7507 = vcmp.gt.f32.partialorder %v7459, 0.0
      %vm7508 = vcmp.gt.f32.partialorder %v7460, 0.0
      %vm7509 = vcmp.gt.f32.partialorder %v7461, 0.0
      %vm7510 = vcmp.gt.f32.partialorder %v7462, 0.0
      %vm7511 = vcmp.gt.f32.partialorder %v7463, 0.0
      %vm7512 = vcmp.gt.f32.partialorder %v7464, 0.0
      %vm7513 = vcmp.gt.f32.partialorder %v7465, 0.0
      %vm7514 = vcmp.gt.f32.partialorder %v7466, 0.0
      %vm7515 = vcmp.gt.f32.partialorder %v7467, 0.0
      %vm7516 = vcmp.gt.f32.partialorder %v7468, 0.0
      %vm7517 = vcmp.gt.f32.partialorder %v7469, 0.0
      %vm7518 = vcmp.gt.f32.partialorder %v7470, 0.0
      %vm7519 = vcmp.gt.f32.partialorder %v7471, 0.0
      %vm7520 = vcmp.gt.f32.partialorder %v7472, 0.0
      %vm7521 = vcmp.gt.f32.partialorder %v7473, 0.0
      %vm7522 = vcmp.gt.f32.partialorder %v7474, 0.0
      %vm7523 = vcmp.gt.f32.partialorder %v7475, 0.0
      %vm7524 = vcmp.gt.f32.partialorder %v7476, 0.0
      %vm7525 = vcmp.gt.f32.partialorder %v7477, 0.0
      %vm7526 = vcmp.gt.f32.partialorder %v7478, 0.0
      %vm7527 = vcmp.gt.f32.partialorder %v7479, 0.0
      %vm7528 = vcmp.gt.f32.partialorder %v7480, 0.0
      %vm7529 = vcmp.gt.f32.partialorder %v7481, 0.0
      %vm7530 = vcmp.gt.f32.partialorder %v7482, 0.0
      %vm7531 = vcmp.gt.f32.partialorder %v7483, 0.0
      %vm7532 = vcmp.gt.f32.partialorder %v7484, 0.0
      %vm7533 = vcmp.gt.f32.partialorder %v7485, 0.0
      %vm7534 = vcmp.gt.f32.partialorder %v7486, 0.0
      %v7535 = vmul.f32 %v7439, 0.1
      %v7536 = vmul.f32 %v7440, 0.1
      %v7537 = vmul.f32 %v7441, 0.1
      %v7538 = vmul.f32 %v7442, 0.1
      %v7539 = vmul.f32 %v7443, 0.1
      %v7540 = vmul.f32 %v7444, 0.1
      %v7541 = vmul.f32 %v7445, 0.1
      %v7542 = vmul.f32 %v7446, 0.1
      %v7543 = vmul.f32 %v7447, 0.1
      %v7544 = vmul.f32 %v7448, 0.1
      %v7545 = vmul.f32 %v7449, 0.1
      %v7546 = vmul.f32 %v7450, 0.1
      %v7547 = vmul.f32 %v7451, 0.1
      %v7548 = vmul.f32 %v7452, 0.1
      %v7549 = vmul.f32 %v7453, 0.1
      %v7550 = vmul.f32 %v7454, 0.1
      %v7551 = vmul.f32 %v7455, 0.1
      %v7552 = vmul.f32 %v7456, 0.1
      %v7553 = vmul.f32 %v7457, 0.1
      %v7554 = vmul.f32 %v7458, 0.1
      %v7555 = vmul.f32 %v7459, 0.1
      %v7556 = vmul.f32 %v7460, 0.1
      %v7557 = vmul.f32 %v7461, 0.1
      %v7558 = vmul.f32 %v7462, 0.1
      %v7559 = vmul.f32 %v7463, 0.1
      %v7560 = vmul.f32 %v7464, 0.1
      %v7561 = vmul.f32 %v7465, 0.1
      %v7562 = vmul.f32 %v7466, 0.1
      %v7563 = vmul.f32 %v7467, 0.1
      %v7564 = vmul.f32 %v7468, 0.1
      %v7565 = vmul.f32 %v7469, 0.1
      %v7566 = vmul.f32 %v7470, 0.1
      %v7567 = vmul.f32 %v7471, 0.1
      %v7568 = vmul.f32 %v7472, 0.1
      %v7569 = vmul.f32 %v7473, 0.1
      %v7570 = vmul.f32 %v7474, 0.1
      %v7571 = vmul.f32 %v7475, 0.1
      %v7572 = vmul.f32 %v7476, 0.1
      %v7573 = vmul.f32 %v7477, 0.1
      %v7574 = vmul.f32 %v7478, 0.1
      %v7575 = vmul.f32 %v7479, 0.1
      %v7576 = vmul.f32 %v7480, 0.1
      %v7577 = vmul.f32 %v7481, 0.1
      %v7578 = vmul.f32 %v7482, 0.1
      %v7579 = vmul.f32 %v7483, 0.1
      %v7580 = vmul.f32 %v7484, 0.1
      %v7581 = vmul.f32 %v7485, 0.1
      %v7582 = vmul.f32 %v7486, 0.1
      %v7583 = vsel %vm7487, %v7439, %v7535
      %v7584 = vsel %vm7488, %v7440, %v7536
      %v7585 = vsel %vm7489, %v7441, %v7537
      %v7586 = vsel %vm7490, %v7442, %v7538
      %v7587 = vsel %vm7491, %v7443, %v7539
      %v7588 = vsel %vm7492, %v7444, %v7540
      %v7589 = vsel %vm7493, %v7445, %v7541
      %v7590 = vsel %vm7494, %v7446, %v7542
      %v7591 = vsel %vm7495, %v7447, %v7543
      %v7592 = vsel %vm7496, %v7448, %v7544
      %v7593 = vsel %vm7497, %v7449, %v7545
      %v7594 = vsel %vm7498, %v7450, %v7546
      %v7595 = vsel %vm7499, %v7451, %v7547
      %v7596 = vsel %vm7500, %v7452, %v7548
      %v7597 = vsel %vm7501, %v7453, %v7549
      %v7598 = vsel %vm7502, %v7454, %v7550
      %v7599 = vsel %vm7503, %v7455, %v7551
      %v7600 = vsel %vm7504, %v7456, %v7552
      %v7601 = vsel %vm7505, %v7457, %v7553
      %v7602 = vsel %vm7506, %v7458, %v7554
      %v7603 = vsel %vm7507, %v7459, %v7555
      %v7604 = vsel %vm7508, %v7460, %v7556
      %v7605 = vsel %vm7509, %v7461, %v7557
      %v7606 = vsel %vm7510, %v7462, %v7558
      %v7607 = vsel %vm7511, %v7463, %v7559
      %v7608 = vsel %vm7512, %v7464, %v7560
      %v7609 = vsel %vm7513, %v7465, %v7561
      %v7610 = vsel %vm7514, %v7466, %v7562
      %v7611 = vsel %vm7515, %v7467, %v7563
      %v7612 = vsel %vm7516, %v7468, %v7564
      %v7613 = vsel %vm7517, %v7469, %v7565
      %v7614 = vsel %vm7518, %v7470, %v7566
      %v7615 = vsel %vm7519, %v7471, %v7567
      %v7616 = vsel %vm7520, %v7472, %v7568
      %v7617 = vsel %vm7521, %v7473, %v7569
      %v7618 = vsel %vm7522, %v7474, %v7570
      %v7619 = vsel %vm7523, %v7475, %v7571
      %v7620 = vsel %vm7524, %v7476, %v7572
      %v7621 = vsel %vm7525, %v7477, %v7573
      %v7622 = vsel %vm7526, %v7478, %v7574
      %v7623 = vsel %vm7527, %v7479, %v7575
      %v7624 = vsel %vm7528, %v7480, %v7576
      %v7625 = vsel %vm7529, %v7481, %v7577
      %v7626 = vsel %vm7530, %v7482, %v7578
      %v7627 = vsel %vm7531, %v7483, %v7579
      %v7628 = vsel %vm7532, %v7484, %v7580
      %v7629 = vsel %vm7533, %v7485, %v7581
      %v7630 = vsel %vm7534, %v7486, %v7582
      %v7631 = vld [vmem:[%s219 + $0xc] sm:$0xf]
      %v7632 = vld [vmem:[%s219 + $0x10] sm:$0xf]
      %v7633 = vld [vmem:[%s219 + $0x14] sm:$0xf]
      %v7634 = vld [vmem:[%s219 + $0x18] sm:$0xf]
      %v7635 = vld [vmem:[%s219 + $0x1c] sm:$0xf]
      %v7636 = vld [vmem:[%s219 + $0x20] sm:$0xf]
      %v7637 = vld [vmem:[%s219 + $0x24] sm:$0xf]
      %v7638 = vld [vmem:[%s219 + $0x28] sm:$0xf]
      %v7639 = vld [vmem:[%s219 + $0x2c] sm:$0xf]
      %v7640 = vld [vmem:[%s219 + $0x30] sm:$0xf]
      %v7641 = vld [vmem:[%s219 + $0x34] sm:$0xf]
      %v7642 = vld [vmem:[%s219 + $0x38] sm:$0xf]
      %v7643 = vld [vmem:[%s219 + $0x3c] sm:$0xf]
      %v7644 = vld [vmem:[%s219 + $0x40] sm:$0xf]
      %v7645 = vld [vmem:[%s219 + $0x44] sm:$0xf]
      %v7646 = vld [vmem:[%s219 + $0x48] sm:$0xf]
      %v7647 = vld [vmem:[%s219 + $0x4c] sm:$0xf]
      %v7648 = vld [vmem:[%s219 + $0x50] sm:$0xf]
      %v7649 = vld [vmem:[%s219 + $0x54] sm:$0xf]
      %v7650 = vld [vmem:[%s219 + $0x58] sm:$0xf]
      %v7651 = vld [vmem:[%s219 + $0x5c] sm:$0xf]
      %v7652 = vld [vmem:[%s219 + $0x60] sm:$0xf]
      %v7653 = vld [vmem:[%s219 + $0x64] sm:$0xf]
      %v7654 = vld [vmem:[%s219 + $0x68] sm:$0xf]
      %v7655 = vld [vmem:[%s219 + $0x6c] sm:$0xf]
      %v7656 = vld [vmem:[%s219 + $0x70] sm:$0xf]
      %v7657 = vld [vmem:[%s219 + $0x74] sm:$0xf]
      %v7658 = vld [vmem:[%s219 + $0x78] sm:$0xf]
      %v7659 = vld [vmem:[%s219 + $0x7c] sm:$0xf]
      %v7660 = vld [vmem:[%s219 + $0x80] sm:$0xf]
      %v7661 = vld [vmem:[%s219 + $0x84] sm:$0xf]
      %v7662 = vld [vmem:[%s219 + $0x88] sm:$0xf]
      %v7663 = vld [vmem:[%s219 + $0x8c] sm:$0xf]
      %v7664 = vld [vmem:[%s219 + $0x90] sm:$0xf]
      %v7665 = vld [vmem:[%s219 + $0x94] sm:$0xf]
      %v7666 = vld [vmem:[%s219 + $0x98] sm:$0xf]
      %v7667 = vld [vmem:[%s219 + $0x9c] sm:$0xf]
      %v7668 = vld [vmem:[%s219 + $0xa0] sm:$0xf]
      %v7669 = vld [vmem:[%s219 + $0xa4] sm:$0xf]
      %v7670 = vld [vmem:[%s219 + $0xa8] sm:$0xf]
      %v7671 = vld [vmem:[%s219 + $0xac] sm:$0xf]
      %v7672 = vld [vmem:[%s219 + $0xb0] sm:$0xf]
      %v7673 = vld [vmem:[%s219 + $0xb4] sm:$0xf]
      %v7674 = vld [vmem:[%s219 + $0xb8] sm:$0xf]
      %v7675 = vld [vmem:[%s219 + $0xbc] sm:$0xf]
      %v7676 = vld [vmem:[%s219 + $0xc0] sm:$0xf]
      %v7677 = vld [vmem:[%s219 + $0xc4] sm:$0xf]
      %v7678 = vld [vmem:[%s219 + $0xc8] sm:$0xf]
      %v7679 = vld [vmem:[%s219 + $0xcc] sm:$0x1]
      %v7680 = vunpack.c.l.bf16 %v7631
      %v7681 = vunpack.c.l.bf16 %v7632
      %v7682 = vunpack.c.l.bf16 %v7633
      %v7683 = vunpack.c.l.bf16 %v7634
      %v7684 = vunpack.c.l.bf16 %v7635
      %v7685 = vunpack.c.l.bf16 %v7636
      %v7686 = vunpack.c.l.bf16 %v7637
      %v7687 = vunpack.c.l.bf16 %v7638
      %v7688 = vunpack.c.l.bf16 %v7639
      %v7689 = vunpack.c.l.bf16 %v7640
      %v7690 = vunpack.c.l.bf16 %v7641
      %v7691 = vunpack.c.l.bf16 %v7642
      %v7692 = vunpack.c.l.bf16 %v7643
      %v7693 = vunpack.c.l.bf16 %v7644
      %v7694 = vunpack.c.l.bf16 %v7645
      %v7695 = vunpack.c.l.bf16 %v7646
      %v7696 = vunpack.c.l.bf16 %v7647
      %v7697 = vunpack.c.l.bf16 %v7648
      %v7698 = vunpack.c.l.bf16 %v7649
      %v7699 = vunpack.c.l.bf16 %v7650
      %v7700 = vunpack.c.l.bf16 %v7651
      %v7701 = vunpack.c.l.bf16 %v7652
      %v7702 = vunpack.c.l.bf16 %v7653
      %v7703 = vunpack.c.l.bf16 %v7654
      %v7704 = vunpack.c.l.bf16 %v7655
      %v7705 = vunpack.c.l.bf16 %v7656
      %v7706 = vunpack.c.l.bf16 %v7657
      %v7707 = vunpack.c.l.bf16 %v7658
      %v7708 = vunpack.c.l.bf16 %v7659
      %v7709 = vunpack.c.l.bf16 %v7660
      %v7710 = vunpack.c.l.bf16 %v7661
      %v7711 = vunpack.c.l.bf16 %v7662
      %v7712 = vunpack.c.l.bf16 %v7663
      %v7713 = vunpack.c.l.bf16 %v7664
      %v7714 = vunpack.c.l.bf16 %v7665
      %v7715 = vunpack.c.l.bf16 %v7666
      %v7716 = vunpack.c.l.bf16 %v7667
      %v7717 = vunpack.c.l.bf16 %v7668
      %v7718 = vunpack.c.l.bf16 %v7669
      %v7719 = vunpack.c.l.bf16 %v7670
      %v7720 = vunpack.c.l.bf16 %v7671
      %v7721 = vunpack.c.l.bf16 %v7672
      %v7722 = vunpack.c.l.bf16 %v7673
      %v7723 = vunpack.c.l.bf16 %v7674
      %v7724 = vunpack.c.l.bf16 %v7675
      %v7725 = vunpack.c.l.bf16 %v7676
      %v7726 = vunpack.c.l.bf16 %v7677
      %v7727 = vunpack.c.l.bf16 %v7678
      %v7728 = vunpack.c.l.bf16 %v7679
      %vm7778 = vcmask 1046528
      %v7779 = vrot.slane %v7680, 1
      %v7780 = vrot.slane %v7681, 1
      %v7781 = vsel %vm7778, %v7779, %v7780
      %v7782 = vrot.slane %v7682, 1
      %v7783 = vsel %vm7778, %v7780, %v7782
      %v7784 = vrot.slane %v7683, 1
      %v7785 = vsel %vm7778, %v7782, %v7784
      %v7786 = vrot.slane %v7684, 1
      %v7787 = vsel %vm7778, %v7784, %v7786
      %v7788 = vrot.slane %v7685, 1
      %v7789 = vsel %vm7778, %v7786, %v7788
      %v7790 = vrot.slane %v7686, 1
      %v7791 = vsel %vm7778, %v7788, %v7790
      %v7792 = vrot.slane %v7687, 1
      %v7793 = vsel %vm7778, %v7790, %v7792
      %v7794 = vrot.slane %v7688, 1
      %v7795 = vsel %vm7778, %v7792, %v7794
      %v7796 = vrot.slane %v7689, 1
      %v7797 = vsel %vm7778, %v7794, %v7796
      %v7798 = vrot.slane %v7690, 1
      %v7799 = vsel %vm7778, %v7796, %v7798
      %v7800 = vrot.slane %v7691, 1
      %v7801 = vsel %vm7778, %v7798, %v7800
      %v7802 = vrot.slane %v7692, 1
      %v7803 = vsel %vm7778, %v7800, %v7802
      %v7804 = vrot.slane %v7693, 1
      %v7805 = vsel %vm7778, %v7802, %v7804
      %v7806 = vrot.slane %v7694, 1
      %v7807 = vsel %vm7778, %v7804, %v7806
      %v7808 = vrot.slane %v7695, 1
      %v7809 = vsel %vm7778, %v7806, %v7808
      %v7810 = vrot.slane %v7696, 1
      %v7811 = vsel %vm7778, %v7808, %v7810
      %v7812 = vrot.slane %v7697, 1
      %v7813 = vsel %vm7778, %v7810, %v7812
      %v7814 = vrot.slane %v7698, 1
      %v7815 = vsel %vm7778, %v7812, %v7814
      %v7816 = vrot.slane %v7699, 1
      %v7817 = vsel %vm7778, %v7814, %v7816
      %v7818 = vrot.slane %v7700, 1
      %v7819 = vsel %vm7778, %v7816, %v7818
      %v7820 = vrot.slane %v7701, 1
      %v7821 = vsel %vm7778, %v7818, %v7820
      %v7822 = vrot.slane %v7702, 1
      %v7823 = vsel %vm7778, %v7820, %v7822
      %v7824 = vrot.slane %v7703, 1
      %v7825 = vsel %vm7778, %v7822, %v7824
      %v7826 = vrot.slane %v7704, 1
      %v7827 = vsel %vm7778, %v7824, %v7826
      %v7828 = vrot.slane %v7705, 1
      %v7829 = vsel %vm7778, %v7826, %v7828
      %v7830 = vrot.slane %v7706, 1
      %v7831 = vsel %vm7778, %v7828, %v7830
      %v7832 = vrot.slane %v7707, 1
      %v7833 = vsel %vm7778, %v7830, %v7832
      %v7834 = vrot.slane %v7708, 1
      %v7835 = vsel %vm7778, %v7832, %v7834
      %v7836 = vrot.slane %v7709, 1
      %v7837 = vsel %vm7778, %v7834, %v7836
      %v7838 = vrot.slane %v7710, 1
      %v7839 = vsel %vm7778, %v7836, %v7838
      %v7840 = vrot.slane %v7711, 1
      %v7841 = vsel %vm7778, %v7838, %v7840
      %v7842 = vrot.slane %v7712, 1
      %v7843 = vsel %vm7778, %v7840, %v7842
      %v7844 = vrot.slane %v7713, 1
      %v7845 = vsel %vm7778, %v7842, %v7844
      %v7846 = vrot.slane %v7714, 1
      %v7847 = vsel %vm7778, %v7844, %v7846
      %v7848 = vrot.slane %v7715, 1
      %v7849 = vsel %vm7778, %v7846, %v7848
      %v7850 = vrot.slane %v7716, 1
      %v7851 = vsel %vm7778, %v7848, %v7850
      %v7852 = vrot.slane %v7717, 1
      %v7853 = vsel %vm7778, %v7850, %v7852
      %v7854 = vrot.slane %v7718, 1
      %v7855 = vsel %vm7778, %v7852, %v7854
      %v7856 = vrot.slane %v7719, 1
      %v7857 = vsel %vm7778, %v7854, %v7856
      %v7858 = vrot.slane %v7720, 1
      %v7859 = vsel %vm7778, %v7856, %v7858
      %v7860 = vrot.slane %v7721, 1
      %v7861 = vsel %vm7778, %v7858, %v7860
      %v7862 = vrot.slane %v7722, 1
      %v7863 = vsel %vm7778, %v7860, %v7862
      %v7864 = vrot.slane %v7723, 1
      %v7865 = vsel %vm7778, %v7862, %v7864
      %v7866 = vrot.slane %v7724, 1
      %v7867 = vsel %vm7778, %v7864, %v7866
      %v7868 = vrot.slane %v7725, 1
      %v7869 = vsel %vm7778, %v7866, %v7868
      %v7870 = vrot.slane %v7726, 1
      %v7871 = vsel %vm7778, %v7868, %v7870
      %v7872 = vrot.slane %v7727, 1
      %v7873 = vsel %vm7778, %v7870, %v7872
      %v7874 = vrot.slane %v7728, 1
      %v7875 = vsel %vm7778, %v7872, %v7874
      %v7924 = vadd.f32 %v7583, %v7781
      %v7925 = vadd.f32 %v7584, %v7783
      %v7926 = vadd.f32 %v7585, %v7785
      %v7927 = vadd.f32 %v7586, %v7787
      %v7928 = vadd.f32 %v7587, %v7789
      %v7929 = vadd.f32 %v7588, %v7791
      %v7930 = vadd.f32 %v7589, %v7793
      %v7931 = vadd.f32 %v7590, %v7795
      %v7932 = vadd.f32 %v7591, %v7797
      %v7933 = vadd.f32 %v7592, %v7799
      %v7934 = vadd.f32 %v7593, %v7801
      %v7935 = vadd.f32 %v7594, %v7803
      %v7936 = vadd.f32 %v7595, %v7805
      %v7937 = vadd.f32 %v7596, %v7807
      %v7938 = vadd.f32 %v7597, %v7809
      %v7939 = vadd.f32 %v7598, %v7811
      %v7940 = vadd.f32 %v7599, %v7813
      %v7941 = vadd.f32 %v7600, %v7815
      %v7942 = vadd.f32 %v7601, %v7817
      %v7943 = vadd.f32 %v7602, %v7819
      %v7944 = vadd.f32 %v7603, %v7821
      %v7945 = vadd.f32 %v7604, %v7823
      %v7946 = vadd.f32 %v7605, %v7825
      %v7947 = vadd.f32 %v7606, %v7827
      %v7948 = vadd.f32 %v7607, %v7829
      %v7949 = vadd.f32 %v7608, %v7831
      %v7950 = vadd.f32 %v7609, %v7833
      %v7951 = vadd.f32 %v7610, %v7835
      %v7952 = vadd.f32 %v7611, %v7837
      %v7953 = vadd.f32 %v7612, %v7839
      %v7954 = vadd.f32 %v7613, %v7841
      %v7955 = vadd.f32 %v7614, %v7843
      %v7956 = vadd.f32 %v7615, %v7845
      %v7957 = vadd.f32 %v7616, %v7847
      %v7958 = vadd.f32 %v7617, %v7849
      %v7959 = vadd.f32 %v7618, %v7851
      %v7960 = vadd.f32 %v7619, %v7853
      %v7961 = vadd.f32 %v7620, %v7855
      %v7962 = vadd.f32 %v7621, %v7857
      %v7963 = vadd.f32 %v7622, %v7859
      %v7964 = vadd.f32 %v7623, %v7861
      %v7965 = vadd.f32 %v7624, %v7863
      %v7966 = vadd.f32 %v7625, %v7865
      %v7967 = vadd.f32 %v7626, %v7867
      %v7968 = vadd.f32 %v7627, %v7869
      %v7969 = vadd.f32 %v7628, %v7871
      %v7970 = vadd.f32 %v7629, %v7873
      %v7971 = vadd.f32 %v7630, %v7875
      %v7972 = vpack.c.bf16 %v7925, %v7924
      %v7973 = vpack.c.bf16 %v7927, %v7926
      %v7974 = vpack.c.bf16 %v7929, %v7928
      %v7975 = vpack.c.bf16 %v7931, %v7930
      %v7976 = vpack.c.bf16 %v7933, %v7932
      %v7977 = vpack.c.bf16 %v7935, %v7934
      %v7978 = vpack.c.bf16 %v7937, %v7936
      %v7979 = vpack.c.bf16 %v7939, %v7938
      %v7980 = vpack.c.bf16 %v7941, %v7940
      %v7981 = vpack.c.bf16 %v7943, %v7942
      %v7982 = vpack.c.bf16 %v7945, %v7944
      %v7983 = vpack.c.bf16 %v7947, %v7946
      %v7984 = vpack.c.bf16 %v7949, %v7948
      %v7985 = vpack.c.bf16 %v7951, %v7950
      %v7986 = vpack.c.bf16 %v7953, %v7952
      %v7987 = vpack.c.bf16 %v7955, %v7954
      %v7988 = vpack.c.bf16 %v7957, %v7956
      %v7989 = vpack.c.bf16 %v7959, %v7958
      %v7990 = vpack.c.bf16 %v7961, %v7960
      %v7991 = vpack.c.bf16 %v7963, %v7962
      %v7992 = vpack.c.bf16 %v7965, %v7964
      %v7993 = vpack.c.bf16 %v7967, %v7966
      %v7994 = vpack.c.bf16 %v7969, %v7968
      %v7995 = vpack.c.bf16 %v7971, %v7970
      %v8020 = vunpack.c.l.b16 %v7972
      %v8021 = vunpack.c.h.b16 %v7972
      %v8022 = vunpack.c.l.b16 %v7973
      %v8023 = vunpack.c.h.b16 %v7973
      %v8024 = vunpack.c.l.b16 %v7974
      %v8025 = vunpack.c.h.b16 %v7974
      %v8026 = vunpack.c.l.b16 %v7975
      %v8027 = vunpack.c.h.b16 %v7975
      %v8028 = vunpack.c.l.b16 %v7976
      %v8029 = vunpack.c.h.b16 %v7976
      %v8030 = vunpack.c.l.b16 %v7977
      %v8031 = vunpack.c.h.b16 %v7977
      %v8032 = vunpack.c.l.b16 %v7978
      %v8033 = vunpack.c.h.b16 %v7978
      %v8034 = vunpack.c.l.b16 %v7979
      %v8035 = vunpack.c.h.b16 %v7979
      %v8036 = vunpack.c.l.b16 %v7980
      %v8037 = vunpack.c.h.b16 %v7980
      %v8038 = vunpack.c.l.b16 %v7981
      %v8039 = vunpack.c.h.b16 %v7981
      %v8040 = vunpack.c.l.b16 %v7982
      %v8041 = vunpack.c.h.b16 %v7982
      %v8042 = vunpack.c.l.b16 %v7983
      %v8043 = vunpack.c.h.b16 %v7983
      %v8044 = vunpack.c.l.b16 %v7984
      %v8045 = vunpack.c.h.b16 %v7984
      %v8046 = vunpack.c.l.b16 %v7985
      %v8047 = vunpack.c.h.b16 %v7985
      %v8048 = vunpack.c.l.b16 %v7986
      %v8049 = vunpack.c.h.b16 %v7986
      %v8050 = vunpack.c.l.b16 %v7987
      %v8051 = vunpack.c.h.b16 %v7987
      %v8052 = vunpack.c.l.b16 %v7988
      %v8053 = vunpack.c.h.b16 %v7988
      %v8054 = vunpack.c.l.b16 %v7989
      %v8055 = vunpack.c.h.b16 %v7989
      %v8056 = vunpack.c.l.b16 %v7990
      %v8057 = vunpack.c.h.b16 %v7990
      %v8058 = vunpack.c.l.b16 %v7991
      %v8059 = vunpack.c.h.b16 %v7991
      %v8060 = vunpack.c.l.b16 %v7992
      %v8061 = vunpack.c.h.b16 %v7992
      %v8062 = vunpack.c.l.b16 %v7993
      %v8063 = vunpack.c.h.b16 %v7993
      %v8064 = vunpack.c.l.b16 %v7994
      %v8065 = vunpack.c.h.b16 %v7994
      %v8066 = vunpack.c.l.b16 %v7995
      %v8067 = vunpack.c.h.b16 %v7995
      %v8068 = vpack.c.b16 %v8020, %v8020
      %v8069 = vpack.c.b16 %v8021, %v8021
      %v8070 = vpack.c.b16 %v8022, %v8022
      %v8071 = vpack.c.b16 %v8023, %v8023
      %v8072 = vpack.c.b16 %v8024, %v8024
      %v8073 = vpack.c.b16 %v8025, %v8025
      %v8074 = vpack.c.b16 %v8026, %v8026
      %v8075 = vpack.c.b16 %v8027, %v8027
      %v8076 = vpack.c.b16 %v8028, %v8028
      %v8077 = vpack.c.b16 %v8029, %v8029
      %v8078 = vpack.c.b16 %v8030, %v8030
      %v8079 = vpack.c.b16 %v8031, %v8031
      %v8080 = vpack.c.b16 %v8032, %v8032
      %v8081 = vpack.c.b16 %v8033, %v8033
      %v8082 = vpack.c.b16 %v8034, %v8034
      %v8083 = vpack.c.b16 %v8035, %v8035
      %v8084 = vpack.c.b16 %v8036, %v8036
      %v8085 = vpack.c.b16 %v8037, %v8037
      %v8086 = vpack.c.b16 %v8038, %v8038
      %v8087 = vpack.c.b16 %v8039, %v8039
      %v8088 = vpack.c.b16 %v8040, %v8040
      %v8089 = vpack.c.b16 %v8041, %v8041
      %v8090 = vpack.c.b16 %v8042, %v8042
      %v8091 = vpack.c.b16 %v8043, %v8043
      %v8092 = vpack.c.b16 %v8044, %v8044
      %v8093 = vpack.c.b16 %v8045, %v8045
      %v8094 = vpack.c.b16 %v8046, %v8046
      %v8095 = vpack.c.b16 %v8047, %v8047
      %v8096 = vpack.c.b16 %v8048, %v8048
      %v8097 = vpack.c.b16 %v8049, %v8049
      %v8098 = vpack.c.b16 %v8050, %v8050
      %v8099 = vpack.c.b16 %v8051, %v8051
      %v8100 = vpack.c.b16 %v8052, %v8052
      %v8101 = vpack.c.b16 %v8053, %v8053
      %v8102 = vpack.c.b16 %v8054, %v8054
      %v8103 = vpack.c.b16 %v8055, %v8055
      %v8104 = vpack.c.b16 %v8056, %v8056
      %v8105 = vpack.c.b16 %v8057, %v8057
      %v8106 = vpack.c.b16 %v8058, %v8058
      %v8107 = vpack.c.b16 %v8059, %v8059
      %v8108 = vpack.c.b16 %v8060, %v8060
      %v8109 = vpack.c.b16 %v8061, %v8061
      %v8110 = vpack.c.b16 %v8062, %v8062
      %v8111 = vpack.c.b16 %v8063, %v8063
      %v8112 = vpack.c.b16 %v8064, %v8064
      %v8113 = vpack.c.b16 %v8065, %v8065
      %v8114 = vpack.c.b16 %v8066, %v8066
      %v8115 = vpack.c.b16 %v8067, %v8067
      %vm8164 = vcmask 27648
      %8165 = vst.msk [vmem:[%s224] sm:$0xf] %vm8164, %v8068
      %8166 = vst.msk [vmem:[%s224 + $0x4] sm:$0xf] %vm8164, %v8069
      %8167 = vst.msk [vmem:[%s224 + $0x8] sm:$0xf] %vm8164, %v8070
      %8168 = vst.msk [vmem:[%s224 + $0xc] sm:$0xf] %vm8164, %v8071
      %8169 = vst.msk [vmem:[%s224 + $0x10] sm:$0xf] %vm8164, %v8072
      %8170 = vst.msk [vmem:[%s224 + $0x14] sm:$0xf] %vm8164, %v8073
      %8171 = vst.msk [vmem:[%s224 + $0x18] sm:$0xf] %vm8164, %v8074
      %8172 = vst.msk [vmem:[%s224 + $0x1c] sm:$0xf] %vm8164, %v8075
      %8173 = vst.msk [vmem:[%s224 + $0x20] sm:$0xf] %vm8164, %v8076
      %8174 = vst.msk [vmem:[%s224 + $0x24] sm:$0xf] %vm8164, %v8077
      %8175 = vst.msk [vmem:[%s224 + $0x28] sm:$0xf] %vm8164, %v8078
      %8176 = vst.msk [vmem:[%s224 + $0x2c] sm:$0xf] %vm8164, %v8079
      %8177 = vst.msk [vmem:[%s224 + $0x30] sm:$0xf] %vm8164, %v8080
      %8178 = vst.msk [vmem:[%s224 + $0x34] sm:$0xf] %vm8164, %v8081
      %8179 = vst.msk [vmem:[%s224 + $0x38] sm:$0xf] %vm8164, %v8082
      %8180 = vst.msk [vmem:[%s224 + $0x3c] sm:$0xf] %vm8164, %v8083
      %8181 = vst.msk [vmem:[%s224 + $0x40] sm:$0xf] %vm8164, %v8084
      %8182 = vst.msk [vmem:[%s224 + $0x44] sm:$0xf] %vm8164, %v8085
      %8183 = vst.msk [vmem:[%s224 + $0x48] sm:$0xf] %vm8164, %v8086
      %8184 = vst.msk [vmem:[%s224 + $0x4c] sm:$0xf] %vm8164, %v8087
      %8185 = vst.msk [vmem:[%s224 + $0x50] sm:$0xf] %vm8164, %v8088
      %8186 = vst.msk [vmem:[%s224 + $0x54] sm:$0xf] %vm8164, %v8089
      %8187 = vst.msk [vmem:[%s224 + $0x58] sm:$0xf] %vm8164, %v8090
      %8188 = vst.msk [vmem:[%s224 + $0x5c] sm:$0xf] %vm8164, %v8091
      %8189 = vst.msk [vmem:[%s224 + $0x60] sm:$0xf] %vm8164, %v8092
      %8190 = vst.msk [vmem:[%s224 + $0x64] sm:$0xf] %vm8164, %v8093
      %8191 = vst.msk [vmem:[%s224 + $0x68] sm:$0xf] %vm8164, %v8094
      %8192 = vst.msk [vmem:[%s224 + $0x6c] sm:$0xf] %vm8164, %v8095
      %8193 = vst.msk [vmem:[%s224 + $0x70] sm:$0xf] %vm8164, %v8096
      %8194 = vst.msk [vmem:[%s224 + $0x74] sm:$0xf] %vm8164, %v8097
      %8195 = vst.msk [vmem:[%s224 + $0x78] sm:$0xf] %vm8164, %v8098
      %8196 = vst.msk [vmem:[%s224 + $0x7c] sm:$0xf] %vm8164, %v8099
      %8197 = vst.msk [vmem:[%s224 + $0x80] sm:$0xf] %vm8164, %v8100
      %8198 = vst.msk [vmem:[%s224 + $0x84] sm:$0xf] %vm8164, %v8101
      %8199 = vst.msk [vmem:[%s224 + $0x88] sm:$0xf] %vm8164, %v8102
      %8200 = vst.msk [vmem:[%s224 + $0x8c] sm:$0xf] %vm8164, %v8103
      %8201 = vst.msk [vmem:[%s224 + $0x90] sm:$0xf] %vm8164, %v8104
      %8202 = vst.msk [vmem:[%s224 + $0x94] sm:$0xf] %vm8164, %v8105
      %8203 = vst.msk [vmem:[%s224 + $0x98] sm:$0xf] %vm8164, %v8106
      %8204 = vst.msk [vmem:[%s224 + $0x9c] sm:$0xf] %vm8164, %v8107
      %8205 = vst.msk [vmem:[%s224 + $0xa0] sm:$0xf] %vm8164, %v8108
      %8206 = vst.msk [vmem:[%s224 + $0xa4] sm:$0xf] %vm8164, %v8109
      %8207 = vst.msk [vmem:[%s224 + $0xa8] sm:$0xf] %vm8164, %v8110
      %8208 = vst.msk [vmem:[%s224 + $0xac] sm:$0xf] %vm8164, %v8111
      %8209 = vst.msk [vmem:[%s224 + $0xb0] sm:$0xf] %vm8164, %v8112
      %8210 = vst.msk [vmem:[%s224 + $0xb4] sm:$0xf] %vm8164, %v8113
      %8211 = vst.msk [vmem:[%s224 + $0xb8] sm:$0xf] %vm8164, %v8114
      %8212 = vst.msk [vmem:[%s224 + $0xbc] sm:$0xf] %vm8164, %v8115
      %p8213 = scmp.lt.s32.totalorder %s16, 1
      %s8214 = scalar_select %p8213, %s16, 1
      %s8215 = smul.addr %s8214, 48
      %s8216 = smul.addr %s8215, 4
      %s8217 = scalar_lea.vmem %s5, %s8216
      // Predicated region
      $region41: #{residual_block_forward.2} parent=39 // pred_check
        %p8218 = pneg %p144
      $region42: #{residual_block_forward.2} parent=39 // pred_check_branch
        %8220 = sbr.rel (%p8218) target = $region44
      $region43: #{residual_block_forward.2} parent=39 // pred_region
        _
      $region44: #{residual_block_forward.2} parent=39 // pred_fallthru
        _
    $region40: #{residual_block_forward.2} parent=5 // pred_fallthru
      _
    %p8221 = scmp.le.s32.totalorder 2, %s11
    // Predicated region
    $region45: #{residual_block_forward.2} parent=5 // pred_check
      %p8222 = pneg %p8221
    $region46: #{residual_block_forward.2} parent=5 // pred_check_branch
      %8224 = sbr.rel (%p8222) target = $region48
    $region47: #{residual_block_forward.2} parent=5 // pred_region
      %s8225 = ssub.s32 %s11, 2
      // Predicated region
      $region49: #{residual_block_forward.2} parent=47 // pred_check
        %p8226 = pneg %p150
      $region50: #{residual_block_forward.2} parent=47 // pred_check_branch
        %8228 = sbr.rel (%p8226) target = $region52
      $region51: #{residual_block_forward.2} parent=47 // pred_region
        %p8229 = scmp.lt.s32.totalorder %s17, 1
        %s8230 = scalar_select %p8229, %s17, 1
        %s8231 = smul.addr %s8230, 48
        %s8232 = smul.addr %s8231, 4
        %s8233 = scalar_lea.vmem %s5, %s8232
      $region52: #{residual_block_forward.2} parent=47 // pred_fallthru
        _
    $region48: #{residual_block_forward.2} parent=5 // pred_fallthru
      _
  $region6: #{residual_block_forward.2} parent=0 // loop_footer
    %s15 = sadd.s32 1, %s11
  $region7: #{residual_block_forward.2} parent=0 // loop_footer_branch
    %10 = sbr.rel target = $region3
  $region8: #{residual_block_forward.2} parent=0 // loop_exit
    _

</llo_original>
